<compile_context>
chip_gen: v5e
topology: v5e:2x2
jax: 0.10.0
libtpu: 0.0.40
codegen_flags: <defaults>
</compile_context>

<pallas_src>
import math

import jax
import jax.numpy as jnp
import numpy as np
from jax.experimental import pallas as pl
from jax.experimental.pallas import tpu as pltpu

# ---- fixed module dimensions (from the PyTorch spec) -------------------------
D_C = 10        # Key input
H_KEY = 50      # Key hidden
D_W = 30        # number of harmonics (Key/Encoder output)
D_X = 784       # image (28*28)
H_ENC = 400     # Encoder / Decoder hidden
D_SIG = 100     # synthesized signal length == Decoder input
D_W_PAD = 128   # lane-dense padding of the 30-wide heads
D_X_PAD = 896   # lane-dense padding of the 784-wide decoder output (7*128)

TWO_PI = 2.0 * math.pi
PI = math.pi


def _sigmoid(z, *, approx=False):
    # exp lowers to the EUP (its own VLIW slot); reciprocal is exact for values
    # that feed further compute, approximate (EUP vrcp) for store-only results.
    return pl.reciprocal(1.0 + jnp.exp(-z), approx=approx)


def _vae_kernel(x_ref, c_ref, t_ref, noise_ref,
                wk1_ref, bk1_ref, wk2_ref, bk2_ref,
                we1_ref, be1_ref, we2_ref, be2_ref,
                ws_ref, bs_ref, wg_ref, bg_ref,
                wd2_ref, bd2_ref,
                xo_ref, w_ref, ph_ref):
    f32 = jnp.float32

    # ---- Key head: amplitudes w (padded cols >= D_W hold sigmoid(0)=0.5) ----
    hk = jnp.dot(c_ref[...], wk1_ref[...], preferred_element_type=f32)
    hk = jnp.maximum(hk + bk1_ref[...], 0.0)
    w_full = _sigmoid(jnp.dot(hk, wk2_ref[...], preferred_element_type=f32)
                      + bk2_ref[...])                      # (TB, 128)

    # ---- Encoder head: phases --------------------------------------------------
    he = jnp.dot(x_ref[...], we1_ref[...], preferred_element_type=f32)
    he = jnp.maximum(he + be1_ref[...], 0.0)
    ph_full = _sigmoid(jnp.dot(he, we2_ref[...], preferred_element_type=f32)
                       + be2_ref[...])                     # (TB, 128)

    # ---- Fourier synthesis: noise + sum_k sin(2*pi*w_k*t + pi*phase_k) ---------
    # Unrolled over the 30 harmonics; every op is a clean 2-D (TB, 100) tile,
    # sin goes to the EUP. Only the first D_W (un-padded) columns are used.
    t = t_ref[...]                                         # (1, 100)
    z = noise_ref[...]                                     # (TB, 100) accumulator
    for k in range(D_W):
        wk = w_full[:, k:k + 1]                            # (TB, 1)
        pk = ph_full[:, k:k + 1]                           # (TB, 1)
        z = z + jnp.sin(TWO_PI * wk * t + PI * pk)         # (TB, 100)

    # ---- Decoder: GLU(100 -> 400), then sigmoid(Linear(400 -> 784)) ------------
    sgate = _sigmoid(jnp.dot(z, ws_ref[...], preferred_element_type=f32)
                     + bs_ref[...])
    ggate = jnp.maximum(jnp.dot(z, wg_ref[...], preferred_element_type=f32)
                        + bg_ref[...], 0.0)
    h = sgate * ggate
    xo = _sigmoid(jnp.dot(h, wd2_ref[...], preferred_element_type=f32)
                  + bd2_ref[...], approx=True)             # (TB, 896) store-only

    # Lane-dense unmasked stores.
    xo_ref[...] = xo.astype(xo_ref.dtype)
    w_ref[...] = w_full.astype(w_ref.dtype)
    ph_ref[...] = ph_full.astype(ph_ref.dtype)


def _round_up(n, m):
    return ((n + m - 1) // m) * m


def _pad_cols(a, ncols):
    """Zero-pad the last dim of a 2-D array to `ncols` (pad cols exactly 0)."""
    return jnp.zeros((a.shape[0], ncols), a.dtype).at[:, : a.shape[1]].set(a)


def vae_forward(x, c, t, noise, p):
    """Full VAE forward.

    x:     [N, ...] image, flattened to [N, 784]
    c:     [N, 10]   Key input
    t:     [100]     time grid (broadcast into the sinusoid)
    noise: [N, 100]  the `torch.randn_like` noise, generated by the caller so
                     the forward stays deterministic/testable.
    Returns (x_recon [N,784], w [N,30,100], phase [N,30,100]).
    """
    x2 = x.reshape(-1, D_X).astype(jnp.float32)
    N = x2.shape[0]
    T = t.shape[-1]
    assert T == D_SIG and c.shape == (N, D_C) and noise.shape == (N, D_SIG)

    # Lane-dense padded weights for the three stored outputs (pad cols are 0).
    wk2p, bk2p = _pad_cols(p["wk2"], D_W_PAD), _pad_cols(p["bk2"], D_W_PAD)
    we2p, be2p = _pad_cols(p["we2"], D_W_PAD), _pad_cols(p["be2"], D_W_PAD)
    wd2p, bd2p = _pad_cols(p["wd2"], D_X_PAD), _pad_cols(p["bd2"], D_X_PAD)

    # Batch tiling: TB <= 128 keeps the (lane-padded, double-buffered) tiles and
    # resident weights well under the 32 MiB scoped-VMEM default on every chip.
    TB = min(128, _round_up(N, 8))
    Npad = _round_up(N, TB)
    pad_rows = Npad - N
    xp = jnp.pad(x2, ((0, pad_rows), (0, 0)))
    cp = jnp.pad(c.astype(jnp.float32), ((0, pad_rows), (0, 0)))
    noisep = jnp.pad(noise.astype(jnp.float32), ((0, pad_rows), (0, 0)))
    t2 = t.reshape(1, D_SIG).astype(jnp.float32)
    grid = (Npad // TB,)

    def row_spec(rows, cols):      # tiled over the batch axis
        return pl.BlockSpec((rows, cols), lambda i: (i, 0))

    def const_spec(shape):         # resident in VMEM across all grid steps
        return pl.BlockSpec(shape, lambda i: (0, 0))

    in_specs = [
        row_spec(TB, D_X),               # x
        row_spec(TB, D_C),               # c
        const_spec((1, D_SIG)),          # t
        row_spec(TB, D_SIG),             # noise
        const_spec((D_C, H_KEY)),        # Key fc1
        const_spec((1, H_KEY)),
        const_spec((H_KEY, D_W_PAD)),    # Key fc2 (padded)
        const_spec((1, D_W_PAD)),
        const_spec((D_X, H_ENC)),        # Enc fc1
        const_spec((1, H_ENC)),
        const_spec((H_ENC, D_W_PAD)),    # Enc fc2 (padded)
        const_spec((1, D_W_PAD)),
        const_spec((D_SIG, H_ENC)),      # GLU s
        const_spec((1, H_ENC)),
        const_spec((D_SIG, H_ENC)),      # GLU g
        const_spec((1, H_ENC)),
        const_spec((H_ENC, D_X_PAD)),    # Dec fc2 (padded)
        const_spec((1, D_X_PAD)),
    ]
    out_shape = (
        jax.ShapeDtypeStruct((Npad, D_X_PAD), jnp.float32),
        jax.ShapeDtypeStruct((Npad, D_W_PAD), jnp.float32),
        jax.ShapeDtypeStruct((Npad, D_W_PAD), jnp.float32),
    )
    out_specs = (row_spec(TB, D_X_PAD), row_spec(TB, D_W_PAD), row_spec(TB, D_W_PAD))

    # Advisory cost estimate (kernel is matmul + transcendental bound per row).
    flops_per_row = 2 * (D_C * H_KEY + H_KEY * D_W_PAD + D_X * H_ENC
                         + H_ENC * D_W_PAD + 2 * D_SIG * H_ENC + H_ENC * D_X_PAD
                         ) + 6 * D_W * D_SIG
    trans_per_row = (2 * D_W_PAD + H_ENC + D_X_PAD) + D_W * D_SIG
    weight_bytes = 4 * (D_C * H_KEY + H_KEY * D_W_PAD + D_X * H_ENC
                        + H_ENC * D_W_PAD + 2 * D_SIG * H_ENC + H_ENC * D_X_PAD
                        + H_KEY + 2 * D_W_PAD + 3 * H_ENC + D_X_PAD)
    io_bytes_per_row = 4 * (D_X + D_C + D_SIG + D_X_PAD + 2 * D_W_PAD)
    cost = pl.CostEstimate(
        flops=Npad * flops_per_row,
        transcendentals=Npad * trans_per_row,
        bytes_accessed=Npad * io_bytes_per_row + weight_bytes,
    )

    xo_p, w_p, ph_p = pl.pallas_call(
        _vae_kernel,
        out_shape=out_shape,
        grid=grid,
        in_specs=in_specs,
        out_specs=out_specs,
        compiler_params=pltpu.CompilerParams(
            dimension_semantics=("parallel",)),   # lets v7x use both TensorCores
        cost_estimate=cost,
    )(xp, cp, t2, noisep,
      p["wk1"], p["bk1"], wk2p, bk2p,
      p["we1"], p["be1"], we2p, be2p,
      p["ws"], p["bs"], p["wg"], p["bg"],
      wd2p, bd2p)

    # Strip batch/lane padding; replicate w/phase over the time axis (the
    # PyTorch `.repeat(1, 1, 100)`) as a cheap broadcast in the wrapper.
    x_recon = xo_p[:N, :D_X]
    w0 = w_p[:N, :D_W]
    ph0 = ph_p[:N, :D_W]
    w_rep = jnp.broadcast_to(w0[:, :, None], (N, D_W, T))
    ph_rep = jnp.broadcast_to(ph0[:, :, None], (N, D_W, T))
    return x_recon, w_rep, ph_rep


# ---------------------------- parameters & reference --------------------------
def init_params(key):
    """nn.Linear-style init; weights stored transposed [in, out], biases [1, out]."""
    ks = jax.random.split(key, 14)

    def linear(kw, kb, fan_in, fan_out):
        bound = 1.0 / float(np.sqrt(fan_in))
        w = jax.random.uniform(kw, (fan_in, fan_out), jnp.float32, -bound, bound)
        b = jax.random.uniform(kb, (1, fan_out), jnp.float32, -bound, bound)
        return w, b

    p = {}
    p["wk1"], p["bk1"] = linear(ks[0], ks[1], D_C, H_KEY)      # Key.fc1
    p["wk2"], p["bk2"] = linear(ks[2], ks[3], H_KEY, D_W)      # Key.fc2
    p["we1"], p["be1"] = linear(ks[4], ks[5], D_X, H_ENC)      # Encoder.fc1
    p["we2"], p["be2"] = linear(ks[6], ks[7], H_ENC, D_W)      # Encoder.fc2
    p["ws"], p["bs"] = linear(ks[8], ks[9], D_SIG, H_ENC)      # Decoder GLU .s
    p["wg"], p["bg"] = linear(ks[10], ks[11], D_SIG, H_ENC)    # Decoder GLU .g
    p["wd2"], p["bd2"] = linear(ks[12], ks[13], H_ENC, D_X)    # Decoder.fc2
    return p


def vae_reference(x, c, t, noise, p):
    """Plain-JAX reference (same math, same noise)."""
    x2 = x.reshape(-1, D_X)
    N = x2.shape[0]
    sg = lambda z: 1.0 / (1.0 + jnp.exp(-z))
    w0 = sg(jnp.maximum(c @ p["wk1"] + p["bk1"], 0.0) @ p["wk2"] + p["bk2"])
    ph0 = sg(jnp.maximum(x2 @ p["we1"] + p["be1"], 0.0) @ p["we2"] + p["be2"])
    arg = 2.0 * np.pi * w0[:, :, None] * t[None, None, :] + np.pi * ph0[:, :, None]
    z = jnp.sin(arg).sum(axis=1) + noise
    s = sg(z @ p["ws"] + p["bs"])
    g = jnp.maximum(z @ p["wg"] + p["bg"], 0.0)
    xo = sg((s * g) @ p["wd2"] + p["bd2"])
    T = t.shape[-1]
    return (xo,
            jnp.broadcast_to(w0[:, :, None], (N, D_W, T)),
            jnp.broadcast_to(ph0[:, :, None], (N, D_W, T)))


if __name__ == "__main__":
    key = jax.random.PRNGKey(0)
    k_params, k_x, k_c, k_noise = jax.random.split(key, 4)
    params = init_params(k_params)

    N = 2
    x = jax.random.normal(k_x, (N, 1, 28, 28), jnp.float32)    # MNIST-like input
    c = jax.random.normal(k_c, (N, D_C), jnp.float32)
    t = jnp.linspace(0.0, 1.0, D_SIG, dtype=jnp.float32)
    # torch.randn_like(x) equivalent, generated outside the kernel for determinism.
    noise = jax.random.normal(k_noise, (N, D_SIG), jnp.float32)

    fwd = jax.jit(vae_forward)
    x_rec, w_rep, ph_rep = jax.block_until_ready(fwd(x, c, t, noise, params))

    x_ref, w_ref, ph_ref = vae_reference(x, c, t, noise, params)
    assert x_rec.shape == (N, D_X)
    assert w_rep.shape == (N, D_W, D_SIG) and ph_rep.shape == (N, D_W, D_SIG)
    assert jnp.allclose(w_rep, w_ref, atol=1e-4, rtol=1e-4)
    assert jnp.allclose(ph_rep, ph_ref, atol=1e-4, rtol=1e-4)
    # Final sigmoid uses the approximate EUP reciprocal (~2^-12 rel. error).
    assert jnp.allclose(x_rec, x_ref, atol=2e-3, rtol=2e-3)

    print("KERNEL_OK")
</pallas_src>

<mosaic_0001>
module attributes {stable_mosaic.version = 11 : i64} {
  func.func @_vae_kernel(%arg0: i32, %arg1: memref<8x784xf32, #tpu.memory_space<vmem>>, %arg2: memref<8x10xf32, #tpu.memory_space<vmem>>, %arg3: memref<1x100xf32, #tpu.memory_space<vmem>>, %arg4: memref<8x100xf32, #tpu.memory_space<vmem>>, %arg5: memref<10x50xf32, #tpu.memory_space<vmem>>, %arg6: memref<1x50xf32, #tpu.memory_space<vmem>>, %arg7: memref<50x128xf32, #tpu.memory_space<vmem>>, %arg8: memref<1x128xf32, #tpu.memory_space<vmem>>, %arg9: memref<784x400xf32, #tpu.memory_space<vmem>>, %arg10: memref<1x400xf32, #tpu.memory_space<vmem>>, %arg11: memref<400x128xf32, #tpu.memory_space<vmem>>, %arg12: memref<1x128xf32, #tpu.memory_space<vmem>>, %arg13: memref<100x400xf32, #tpu.memory_space<vmem>>, %arg14: memref<1x400xf32, #tpu.memory_space<vmem>>, %arg15: memref<100x400xf32, #tpu.memory_space<vmem>>, %arg16: memref<1x400xf32, #tpu.memory_space<vmem>>, %arg17: memref<400x896xf32, #tpu.memory_space<vmem>>, %arg18: memref<1x896xf32, #tpu.memory_space<vmem>>, %arg19: memref<8x896xf32, #tpu.memory_space<vmem>>, %arg20: memref<8x128xf32, #tpu.memory_space<vmem>>, %arg21: memref<8x128xf32, #tpu.memory_space<vmem>>) attributes {dimension_semantics = [#tpu.dimension_semantics<parallel>], iteration_bounds = array<i64: 1>, scalar_prefetch = 0 : i64, scratch_operands = 0 : i64, tpu.core_type = #tpu.core_type<tc>, window_params = [{transform_indices = @transform_0, window_bounds = array<i64: 8, 784>}, {transform_indices = @transform_1, window_bounds = array<i64: 8, 10>}, {pipeline_mode = #tpu.pipeline_mode<synchronous>, transform_indices = @transform_2, window_bounds = array<i64: 1, 100>}, {transform_indices = @transform_3, window_bounds = array<i64: 8, 100>}, {pipeline_mode = #tpu.pipeline_mode<synchronous>, transform_indices = @transform_4, window_bounds = array<i64: 10, 50>}, {pipeline_mode = #tpu.pipeline_mode<synchronous>, transform_indices = @transform_5, window_bounds = array<i64: 1, 50>}, {pipeline_mode = #tpu.pipeline_mode<synchronous>, transform_indices = @transform_6, window_bounds = array<i64: 50, 128>}, {pipeline_mode = #tpu.pipeline_mode<synchronous>, transform_indices = @transform_7, window_bounds = array<i64: 1, 128>}, {pipeline_mode = #tpu.pipeline_mode<synchronous>, transform_indices = @transform_8, window_bounds = array<i64: 784, 400>}, {pipeline_mode = #tpu.pipeline_mode<synchronous>, transform_indices = @transform_9, window_bounds = array<i64: 1, 400>}, {pipeline_mode = #tpu.pipeline_mode<synchronous>, transform_indices = @transform_10, window_bounds = array<i64: 400, 128>}, {pipeline_mode = #tpu.pipeline_mode<synchronous>, transform_indices = @transform_11, window_bounds = array<i64: 1, 128>}, {pipeline_mode = #tpu.pipeline_mode<synchronous>, transform_indices = @transform_12, window_bounds = array<i64: 100, 400>}, {pipeline_mode = #tpu.pipeline_mode<synchronous>, transform_indices = @transform_13, window_bounds = array<i64: 1, 400>}, {pipeline_mode = #tpu.pipeline_mode<synchronous>, transform_indices = @transform_14, window_bounds = array<i64: 100, 400>}, {pipeline_mode = #tpu.pipeline_mode<synchronous>, transform_indices = @transform_15, window_bounds = array<i64: 1, 400>}, {pipeline_mode = #tpu.pipeline_mode<synchronous>, transform_indices = @transform_16, window_bounds = array<i64: 400, 896>}, {pipeline_mode = #tpu.pipeline_mode<synchronous>, transform_indices = @transform_17, window_bounds = array<i64: 1, 896>}, {transform_indices = @transform_18, window_bounds = array<i64: 8, 896>}, {transform_indices = @transform_19, window_bounds = array<i64: 8, 128>}, {transform_indices = @transform_20, window_bounds = array<i64: 8, 128>}]} {
    %c0 = arith.constant 0 : index
    %c0_0 = arith.constant 0 : index
    %0 = vector.load %arg2[%c0, %c0_0] : memref<8x10xf32, #tpu.memory_space<vmem>>, vector<8x10xf32>
    %c0_1 = arith.constant 0 : index
    %c0_2 = arith.constant 0 : index
    %1 = vector.load %arg5[%c0_1, %c0_2] : memref<10x50xf32, #tpu.memory_space<vmem>>, vector<10x50xf32>
    %cst = arith.constant dense<0.000000e+00> : vector<8x50xf32>
    %2 = tpu.matmul %0, %1, %cst {dimension_numbers = #tpu.dot_dimension_numbers<[1], [0], [0], [1], [0, 0, 1, 1], [], []>} : vector<8x10xf32>, vector<10x50xf32>, vector<8x50xf32> -> vector<8x50xf32>
    %c0_3 = arith.constant 0 : index
    %c0_4 = arith.constant 0 : index
    %3 = vector.load %arg6[%c0_3, %c0_4] : memref<1x50xf32, #tpu.memory_space<vmem>>, vector<1x50xf32>
    %4 = vector.broadcast %3 : vector<1x50xf32> to vector<8x50xf32>
    %5 = arith.addf %2, %4 : vector<8x50xf32>
    %cst_5 = arith.constant 0.000000e+00 : f32
    %6 = vector.broadcast %cst_5 : f32 to vector<8x50xf32>
    %7 = arith.maximumf %5, %6 : vector<8x50xf32>
    %c0_6 = arith.constant 0 : index
    %c0_7 = arith.constant 0 : index
    %8 = vector.load %arg7[%c0_6, %c0_7] : memref<50x128xf32, #tpu.memory_space<vmem>>, vector<50x128xf32>
    %cst_8 = arith.constant dense<0.000000e+00> : vector<8x128xf32>
    %9 = tpu.matmul %7, %8, %cst_8 {dimension_numbers = #tpu.dot_dimension_numbers<[1], [0], [0], [1], [0, 0, 1, 1], [], []>} : vector<8x50xf32>, vector<50x128xf32>, vector<8x128xf32> -> vector<8x128xf32>
    %c0_9 = arith.constant 0 : index
    %c0_10 = arith.constant 0 : index
    %10 = vector.load %arg8[%c0_9, %c0_10] : memref<1x128xf32, #tpu.memory_space<vmem>>, vector<1x128xf32>
    %11 = vector.broadcast %10 : vector<1x128xf32> to vector<8x128xf32>
    %12 = arith.addf %9, %11 : vector<8x128xf32>
    %cst_11 = arith.constant 0.000000e+00 : f32
    %13 = vector.broadcast %cst_11 : f32 to vector<8x128xf32>
    %14 = arith.subf %13, %12 : vector<8x128xf32>
    %15 = math.exp %14 : vector<8x128xf32>
    %cst_12 = arith.constant 1.000000e+00 : f32
    %16 = vector.broadcast %cst_12 : f32 to vector<8x128xf32>
    %17 = arith.addf %16, %15 : vector<8x128xf32>
    %18 = tpu.reciprocal %17 : vector<8x128xf32> -> vector<8x128xf32>
    %c0_13 = arith.constant 0 : index
    %c0_14 = arith.constant 0 : index
    %19 = vector.load %arg1[%c0_13, %c0_14] : memref<8x784xf32, #tpu.memory_space<vmem>>, vector<8x784xf32>
    %c0_15 = arith.constant 0 : index
    %c0_16 = arith.constant 0 : index
    %20 = vector.load %arg9[%c0_15, %c0_16] : memref<784x400xf32, #tpu.memory_space<vmem>>, vector<784x400xf32>
    %cst_17 = arith.constant dense<0.000000e+00> : vector<8x400xf32>
    %21 = tpu.matmul %19, %20, %cst_17 {dimension_numbers = #tpu.dot_dimension_numbers<[1], [0], [0], [1], [0, 0, 1, 1], [], []>} : vector<8x784xf32>, vector<784x400xf32>, vector<8x400xf32> -> vector<8x400xf32>
    %c0_18 = arith.constant 0 : index
    %c0_19 = arith.constant 0 : index
    %22 = vector.load %arg10[%c0_18, %c0_19] : memref<1x400xf32, #tpu.memory_space<vmem>>, vector<1x400xf32>
    %23 = vector.broadcast %22 : vector<1x400xf32> to vector<8x400xf32>
    %24 = arith.addf %21, %23 : vector<8x400xf32>
    %cst_20 = arith.constant 0.000000e+00 : f32
    %25 = vector.broadcast %cst_20 : f32 to vector<8x400xf32>
    %26 = arith.maximumf %24, %25 : vector<8x400xf32>
    %c0_21 = arith.constant 0 : index
    %c0_22 = arith.constant 0 : index
    %27 = vector.load %arg11[%c0_21, %c0_22] : memref<400x128xf32, #tpu.memory_space<vmem>>, vector<400x128xf32>
    %cst_23 = arith.constant dense<0.000000e+00> : vector<8x128xf32>
    %28 = tpu.matmul %26, %27, %cst_23 {dimension_numbers = #tpu.dot_dimension_numbers<[1], [0], [0], [1], [0, 0, 1, 1], [], []>} : vector<8x400xf32>, vector<400x128xf32>, vector<8x128xf32> -> vector<8x128xf32>
    %c0_24 = arith.constant 0 : index
    %c0_25 = arith.constant 0 : index
    %29 = vector.load %arg12[%c0_24, %c0_25] : memref<1x128xf32, #tpu.memory_space<vmem>>, vector<1x128xf32>
    %30 = vector.broadcast %29 : vector<1x128xf32> to vector<8x128xf32>
    %31 = arith.addf %28, %30 : vector<8x128xf32>
    %cst_26 = arith.constant 0.000000e+00 : f32
    %32 = vector.broadcast %cst_26 : f32 to vector<8x128xf32>
    %33 = arith.subf %32, %31 : vector<8x128xf32>
    %34 = math.exp %33 : vector<8x128xf32>
    %cst_27 = arith.constant 1.000000e+00 : f32
    %35 = vector.broadcast %cst_27 : f32 to vector<8x128xf32>
    %36 = arith.addf %35, %34 : vector<8x128xf32>
    %37 = tpu.reciprocal %36 : vector<8x128xf32> -> vector<8x128xf32>
    %c0_28 = arith.constant 0 : index
    %c0_29 = arith.constant 0 : index
    %38 = vector.load %arg3[%c0_28, %c0_29] : memref<1x100xf32, #tpu.memory_space<vmem>>, vector<1x100xf32>
    %c0_30 = arith.constant 0 : index
    %c0_31 = arith.constant 0 : index
    %39 = vector.load %arg4[%c0_30, %c0_31] : memref<8x100xf32, #tpu.memory_space<vmem>>, vector<8x100xf32>
    %40 = vector.extract_strided_slice %18 {offsets = [0, 0], sizes = [8, 1], strides = [1, 1]} : vector<8x128xf32> to vector<8x1xf32>
    %41 = vector.extract_strided_slice %37 {offsets = [0, 0], sizes = [8, 1], strides = [1, 1]} : vector<8x128xf32> to vector<8x1xf32>
    %cst_32 = arith.constant 6.28318548 : f32
    %42 = vector.broadcast %cst_32 : f32 to vector<8x1xf32>
    %43 = arith.mulf %42, %40 : vector<8x1xf32>
    %44 = vector.broadcast %43 : vector<8x1xf32> to vector<8x100xf32>
    %45 = vector.broadcast %38 : vector<1x100xf32> to vector<8x100xf32>
    %46 = arith.mulf %44, %45 : vector<8x100xf32>
    %cst_33 = arith.constant 3.14159274 : f32
    %47 = vector.broadcast %cst_33 : f32 to vector<8x1xf32>
    %48 = arith.mulf %47, %41 : vector<8x1xf32>
    %49 = vector.broadcast %48 : vector<8x1xf32> to vector<8x100xf32>
    %50 = arith.addf %46, %49 : vector<8x100xf32>
    %51 = math.sin %50 : vector<8x100xf32>
    %52 = arith.addf %39, %51 : vector<8x100xf32>
    %53 = vector.extract_strided_slice %18 {offsets = [0, 1], sizes = [8, 1], strides = [1, 1]} : vector<8x128xf32> to vector<8x1xf32>
    %54 = vector.extract_strided_slice %37 {offsets = [0, 1], sizes = [8, 1], strides = [1, 1]} : vector<8x128xf32> to vector<8x1xf32>
    %cst_34 = arith.constant 6.28318548 : f32
    %55 = vector.broadcast %cst_34 : f32 to vector<8x1xf32>
    %56 = arith.mulf %55, %53 : vector<8x1xf32>
    %57 = vector.broadcast %56 : vector<8x1xf32> to vector<8x100xf32>
    %58 = vector.broadcast %38 : vector<1x100xf32> to vector<8x100xf32>
    %59 = arith.mulf %57, %58 : vector<8x100xf32>
    %cst_35 = arith.constant 3.14159274 : f32
    %60 = vector.broadcast %cst_35 : f32 to vector<8x1xf32>
    %61 = arith.mulf %60, %54 : vector<8x1xf32>
    %62 = vector.broadcast %61 : vector<8x1xf32> to vector<8x100xf32>
    %63 = arith.addf %59, %62 : vector<8x100xf32>
    %64 = math.sin %63 : vector<8x100xf32>
    %65 = arith.addf %52, %64 : vector<8x100xf32>
    %66 = vector.extract_strided_slice %18 {offsets = [0, 2], sizes = [8, 1], strides = [1, 1]} : vector<8x128xf32> to vector<8x1xf32>
    %67 = vector.extract_strided_slice %37 {offsets = [0, 2], sizes = [8, 1], strides = [1, 1]} : vector<8x128xf32> to vector<8x1xf32>
    %cst_36 = arith.constant 6.28318548 : f32
    %68 = vector.broadcast %cst_36 : f32 to vector<8x1xf32>
    %69 = arith.mulf %68, %66 : vector<8x1xf32>
    %70 = vector.broadcast %69 : vector<8x1xf32> to vector<8x100xf32>
    %71 = vector.broadcast %38 : vector<1x100xf32> to vector<8x100xf32>
    %72 = arith.mulf %70, %71 : vector<8x100xf32>
    %cst_37 = arith.constant 3.14159274 : f32
    %73 = vector.broadcast %cst_37 : f32 to vector<8x1xf32>
    %74 = arith.mulf %73, %67 : vector<8x1xf32>
    %75 = vector.broadcast %74 : vector<8x1xf32> to vector<8x100xf32>
    %76 = arith.addf %72, %75 : vector<8x100xf32>
    %77 = math.sin %76 : vector<8x100xf32>
    %78 = arith.addf %65, %77 : vector<8x100xf32>
    %79 = vector.extract_strided_slice %18 {offsets = [0, 3], sizes = [8, 1], strides = [1, 1]} : vector<8x128xf32> to vector<8x1xf32>
    %80 = vector.extract_strided_slice %37 {offsets = [0, 3], sizes = [8, 1], strides = [1, 1]} : vector<8x128xf32> to vector<8x1xf32>
    %cst_38 = arith.constant 6.28318548 : f32
    %81 = vector.broadcast %cst_38 : f32 to vector<8x1xf32>
    %82 = arith.mulf %81, %79 : vector<8x1xf32>
    %83 = vector.broadcast %82 : vector<8x1xf32> to vector<8x100xf32>
    %84 = vector.broadcast %38 : vector<1x100xf32> to vector<8x100xf32>
    %85 = arith.mulf %83, %84 : vector<8x100xf32>
    %cst_39 = arith.constant 3.14159274 : f32
    %86 = vector.broadcast %cst_39 : f32 to vector<8x1xf32>
    %87 = arith.mulf %86, %80 : vector<8x1xf32>
    %88 = vector.broadcast %87 : vector<8x1xf32> to vector<8x100xf32>
    %89 = arith.addf %85, %88 : vector<8x100xf32>
    %90 = math.sin %89 : vector<8x100xf32>
    %91 = arith.addf %78, %90 : vector<8x100xf32>
    %92 = vector.extract_strided_slice %18 {offsets = [0, 4], sizes = [8, 1], strides = [1, 1]} : vector<8x128xf32> to vector<8x1xf32>
    %93 = vector.extract_strided_slice %37 {offsets = [0, 4], sizes = [8, 1], strides = [1, 1]} : vector<8x128xf32> to vector<8x1xf32>
    %cst_40 = arith.constant 6.28318548 : f32
    %94 = vector.broadcast %cst_40 : f32 to vector<8x1xf32>
    %95 = arith.mulf %94, %92 : vector<8x1xf32>
    %96 = vector.broadcast %95 : vector<8x1xf32> to vector<8x100xf32>
    %97 = vector.broadcast %38 : vector<1x100xf32> to vector<8x100xf32>
    %98 = arith.mulf %96, %97 : vector<8x100xf32>
    %cst_41 = arith.constant 3.14159274 : f32
    %99 = vector.broadcast %cst_41 : f32 to vector<8x1xf32>
    %100 = arith.mulf %99, %93 : vector<8x1xf32>
    %101 = vector.broadcast %100 : vector<8x1xf32> to vector<8x100xf32>
    %102 = arith.addf %98, %101 : vector<8x100xf32>
    %103 = math.sin %102 : vector<8x100xf32>
    %104 = arith.addf %91, %103 : vector<8x100xf32>
    %105 = vector.extract_strided_slice %18 {offsets = [0, 5], sizes = [8, 1], strides = [1, 1]} : vector<8x128xf32> to vector<8x1xf32>
    %106 = vector.extract_strided_slice %37 {offsets = [0, 5], sizes = [8, 1], strides = [1, 1]} : vector<8x128xf32> to vector<8x1xf32>
    %cst_42 = arith.constant 6.28318548 : f32
    %107 = vector.broadcast %cst_42 : f32 to vector<8x1xf32>
    %108 = arith.mulf %107, %105 : vector<8x1xf32>
    %109 = vector.broadcast %108 : vector<8x1xf32> to vector<8x100xf32>
    %110 = vector.broadcast %38 : vector<1x100xf32> to vector<8x100xf32>
    %111 = arith.mulf %109, %110 : vector<8x100xf32>
    %cst_43 = arith.constant 3.14159274 : f32
    %112 = vector.broadcast %cst_43 : f32 to vector<8x1xf32>
    %113 = arith.mulf %112, %106 : vector<8x1xf32>
    %114 = vector.broadcast %113 : vector<8x1xf32> to vector<8x100xf32>
    %115 = arith.addf %111, %114 : vector<8x100xf32>
    %116 = math.sin %115 : vector<8x100xf32>
    %117 = arith.addf %104, %116 : vector<8x100xf32>
    %118 = vector.extract_strided_slice %18 {offsets = [0, 6], sizes = [8, 1], strides = [1, 1]} : vector<8x128xf32> to vector<8x1xf32>
    %119 = vector.extract_strided_slice %37 {offsets = [0, 6], sizes = [8, 1], strides = [1, 1]} : vector<8x128xf32> to vector<8x1xf32>
    %cst_44 = arith.constant 6.28318548 : f32
    %120 = vector.broadcast %cst_44 : f32 to vector<8x1xf32>
    %121 = arith.mulf %120, %118 : vector<8x1xf32>
    %122 = vector.broadcast %121 : vector<8x1xf32> to vector<8x100xf32>
    %123 = vector.broadcast %38 : vector<1x100xf32> to vector<8x100xf32>
    %124 = arith.mulf %122, %123 : vector<8x100xf32>
    %cst_45 = arith.constant 3.14159274 : f32
    %125 = vector.broadcast %cst_45 : f32 to vector<8x1xf32>
    %126 = arith.mulf %125, %119 : vector<8x1xf32>
    %127 = vector.broadcast %126 : vector<8x1xf32> to vector<8x100xf32>
    %128 = arith.addf %124, %127 : vector<8x100xf32>
    %129 = math.sin %128 : vector<8x100xf32>
    %130 = arith.addf %117, %129 : vector<8x100xf32>
    %131 = vector.extract_strided_slice %18 {offsets = [0, 7], sizes = [8, 1], strides = [1, 1]} : vector<8x128xf32> to vector<8x1xf32>
    %132 = vector.extract_strided_slice %37 {offsets = [0, 7], sizes = [8, 1], strides = [1, 1]} : vector<8x128xf32> to vector<8x1xf32>
    %cst_46 = arith.constant 6.28318548 : f32
    %133 = vector.broadcast %cst_46 : f32 to vector<8x1xf32>
    %134 = arith.mulf %133, %131 : vector<8x1xf32>
    %135 = vector.broadcast %134 : vector<8x1xf32> to vector<8x100xf32>
    %136 = vector.broadcast %38 : vector<1x100xf32> to vector<8x100xf32>
    %137 = arith.mulf %135, %136 : vector<8x100xf32>
    %cst_47 = arith.constant 3.14159274 : f32
    %138 = vector.broadcast %cst_47 : f32 to vector<8x1xf32>
    %139 = arith.mulf %138, %132 : vector<8x1xf32>
    %140 = vector.broadcast %139 : vector<8x1xf32> to vector<8x100xf32>
    %141 = arith.addf %137, %140 : vector<8x100xf32>
    %142 = math.sin %141 : vector<8x100xf32>
    %143 = arith.addf %130, %142 : vector<8x100xf32>
    %144 = vector.extract_strided_slice %18 {offsets = [0, 8], sizes = [8, 1], strides = [1, 1]} : vector<8x128xf32> to vector<8x1xf32>
    %145 = vector.extract_strided_slice %37 {offsets = [0, 8], sizes = [8, 1], strides = [1, 1]} : vector<8x128xf32> to vector<8x1xf32>
    %cst_48 = arith.constant 6.28318548 : f32
    %146 = vector.broadcast %cst_48 : f32 to vector<8x1xf32>
    %147 = arith.mulf %146, %144 : vector<8x1xf32>
    %148 = vector.broadcast %147 : vector<8x1xf32> to vector<8x100xf32>
    %149 = vector.broadcast %38 : vector<1x100xf32> to vector<8x100xf32>
    %150 = arith.mulf %148, %149 : vector<8x100xf32>
    %cst_49 = arith.constant 3.14159274 : f32
    %151 = vector.broadcast %cst_49 : f32 to vector<8x1xf32>
    %152 = arith.mulf %151, %145 : vector<8x1xf32>
    %153 = vector.broadcast %152 : vector<8x1xf32> to vector<8x100xf32>
    %154 = arith.addf %150, %153 : vector<8x100xf32>
    %155 = math.sin %154 : vector<8x100xf32>
    %156 = arith.addf %143, %155 : vector<8x100xf32>
    %157 = vector.extract_strided_slice %18 {offsets = [0, 9], sizes = [8, 1], strides = [1, 1]} : vector<8x128xf32> to vector<8x1xf32>
    %158 = vector.extract_strided_slice %37 {offsets = [0, 9], sizes = [8, 1], strides = [1, 1]} : vector<8x128xf32> to vector<8x1xf32>
    %cst_50 = arith.constant 6.28318548 : f32
    %159 = vector.broadcast %cst_50 : f32 to vector<8x1xf32>
    %160 = arith.mulf %159, %157 : vector<8x1xf32>
    %161 = vector.broadcast %160 : vector<8x1xf32> to vector<8x100xf32>
    %162 = vector.broadcast %38 : vector<1x100xf32> to vector<8x100xf32>
    %163 = arith.mulf %161, %162 : vector<8x100xf32>
    %cst_51 = arith.constant 3.14159274 : f32
    %164 = vector.broadcast %cst_51 : f32 to vector<8x1xf32>
    %165 = arith.mulf %164, %158 : vector<8x1xf32>
    %166 = vector.broadcast %165 : vector<8x1xf32> to vector<8x100xf32>
    %167 = arith.addf %163, %166 : vector<8x100xf32>
    %168 = math.sin %167 : vector<8x100xf32>
    %169 = arith.addf %156, %168 : vector<8x100xf32>
    %170 = vector.extract_strided_slice %18 {offsets = [0, 10], sizes = [8, 1], strides = [1, 1]} : vector<8x128xf32> to vector<8x1xf32>
    %171 = vector.extract_strided_slice %37 {offsets = [0, 10], sizes = [8, 1], strides = [1, 1]} : vector<8x128xf32> to vector<8x1xf32>
    %cst_52 = arith.constant 6.28318548 : f32
    %172 = vector.broadcast %cst_52 : f32 to vector<8x1xf32>
    %173 = arith.mulf %172, %170 : vector<8x1xf32>
    %174 = vector.broadcast %173 : vector<8x1xf32> to vector<8x100xf32>
    %175 = vector.broadcast %38 : vector<1x100xf32> to vector<8x100xf32>
    %176 = arith.mulf %174, %175 : vector<8x100xf32>
    %cst_53 = arith.constant 3.14159274 : f32
    %177 = vector.broadcast %cst_53 : f32 to vector<8x1xf32>
    %178 = arith.mulf %177, %171 : vector<8x1xf32>
    %179 = vector.broadcast %178 : vector<8x1xf32> to vector<8x100xf32>
    %180 = arith.addf %176, %179 : vector<8x100xf32>
    %181 = math.sin %180 : vector<8x100xf32>
    %182 = arith.addf %169, %181 : vector<8x100xf32>
    %183 = vector.extract_strided_slice %18 {offsets = [0, 11], sizes = [8, 1], strides = [1, 1]} : vector<8x128xf32> to vector<8x1xf32>
    %184 = vector.extract_strided_slice %37 {offsets = [0, 11], sizes = [8, 1], strides = [1, 1]} : vector<8x128xf32> to vector<8x1xf32>
    %cst_54 = arith.constant 6.28318548 : f32
    %185 = vector.broadcast %cst_54 : f32 to vector<8x1xf32>
    %186 = arith.mulf %185, %183 : vector<8x1xf32>
    %187 = vector.broadcast %186 : vector<8x1xf32> to vector<8x100xf32>
    %188 = vector.broadcast %38 : vector<1x100xf32> to vector<8x100xf32>
    %189 = arith.mulf %187, %188 : vector<8x100xf32>
    %cst_55 = arith.constant 3.14159274 : f32
    %190 = vector.broadcast %cst_55 : f32 to vector<8x1xf32>
    %191 = arith.mulf %190, %184 : vector<8x1xf32>
    %192 = vector.broadcast %191 : vector<8x1xf32> to vector<8x100xf32>
    %193 = arith.addf %189, %192 : vector<8x100xf32>
    %194 = math.sin %193 : vector<8x100xf32>
    %195 = arith.addf %182, %194 : vector<8x100xf32>
    %196 = vector.extract_strided_slice %18 {offsets = [0, 12], sizes = [8, 1], strides = [1, 1]} : vector<8x128xf32> to vector<8x1xf32>
    %197 = vector.extract_strided_slice %37 {offsets = [0, 12], sizes = [8, 1], strides = [1, 1]} : vector<8x128xf32> to vector<8x1xf32>
    %cst_56 = arith.constant 6.28318548 : f32
    %198 = vector.broadcast %cst_56 : f32 to vector<8x1xf32>
    %199 = arith.mulf %198, %196 : vector<8x1xf32>
    %200 = vector.broadcast %199 : vector<8x1xf32> to vector<8x100xf32>
    %201 = vector.broadcast %38 : vector<1x100xf32> to vector<8x100xf32>
    %202 = arith.mulf %200, %201 : vector<8x100xf32>
    %cst_57 = arith.constant 3.14159274 : f32
    %203 = vector.broadcast %cst_57 : f32 to vector<8x1xf32>
    %204 = arith.mulf %203, %197 : vector<8x1xf32>
    %205 = vector.broadcast %204 : vector<8x1xf32> to vector<8x100xf32>
    %206 = arith.addf %202, %205 : vector<8x100xf32>
    %207 = math.sin %206 : vector<8x100xf32>
    %208 = arith.addf %195, %207 : vector<8x100xf32>
    %209 = vector.extract_strided_slice %18 {offsets = [0, 13], sizes = [8, 1], strides = [1, 1]} : vector<8x128xf32> to vector<8x1xf32>
    %210 = vector.extract_strided_slice %37 {offsets = [0, 13], sizes = [8, 1], strides = [1, 1]} : vector<8x128xf32> to vector<8x1xf32>
    %cst_58 = arith.constant 6.28318548 : f32
    %211 = vector.broadcast %cst_58 : f32 to vector<8x1xf32>
    %212 = arith.mulf %211, %209 : vector<8x1xf32>
    %213 = vector.broadcast %212 : vector<8x1xf32> to vector<8x100xf32>
    %214 = vector.broadcast %38 : vector<1x100xf32> to vector<8x100xf32>
    %215 = arith.mulf %213, %214 : vector<8x100xf32>
    %cst_59 = arith.constant 3.14159274 : f32
    %216 = vector.broadcast %cst_59 : f32 to vector<8x1xf32>
    %217 = arith.mulf %216, %210 : vector<8x1xf32>
    %218 = vector.broadcast %217 : vector<8x1xf32> to vector<8x100xf32>
    %219 = arith.addf %215, %218 : vector<8x100xf32>
    %220 = math.sin %219 : vector<8x100xf32>
    %221 = arith.addf %208, %220 : vector<8x100xf32>
    %222 = vector.extract_strided_slice %18 {offsets = [0, 14], sizes = [8, 1], strides = [1, 1]} : vector<8x128xf32> to vector<8x1xf32>
    %223 = vector.extract_strided_slice %37 {offsets = [0, 14], sizes = [8, 1], strides = [1, 1]} : vector<8x128xf32> to vector<8x1xf32>
    %cst_60 = arith.constant 6.28318548 : f32
    %224 = vector.broadcast %cst_60 : f32 to vector<8x1xf32>
    %225 = arith.mulf %224, %222 : vector<8x1xf32>
    %226 = vector.broadcast %225 : vector<8x1xf32> to vector<8x100xf32>
    %227 = vector.broadcast %38 : vector<1x100xf32> to vector<8x100xf32>
    %228 = arith.mulf %226, %227 : vector<8x100xf32>
    %cst_61 = arith.constant 3.14159274 : f32
    %229 = vector.broadcast %cst_61 : f32 to vector<8x1xf32>
    %230 = arith.mulf %229, %223 : vector<8x1xf32>
    %231 = vector.broadcast %230 : vector<8x1xf32> to vector<8x100xf32>
    %232 = arith.addf %228, %231 : vector<8x100xf32>
    %233 = math.sin %232 : vector<8x100xf32>
    %234 = arith.addf %221, %233 : vector<8x100xf32>
    %235 = vector.extract_strided_slice %18 {offsets = [0, 15], sizes = [8, 1], strides = [1, 1]} : vector<8x128xf32> to vector<8x1xf32>
    %236 = vector.extract_strided_slice %37 {offsets = [0, 15], sizes = [8, 1], strides = [1, 1]} : vector<8x128xf32> to vector<8x1xf32>
    %cst_62 = arith.constant 6.28318548 : f32
    %237 = vector.broadcast %cst_62 : f32 to vector<8x1xf32>
    %238 = arith.mulf %237, %235 : vector<8x1xf32>
    %239 = vector.broadcast %238 : vector<8x1xf32> to vector<8x100xf32>
    %240 = vector.broadcast %38 : vector<1x100xf32> to vector<8x100xf32>
    %241 = arith.mulf %239, %240 : vector<8x100xf32>
    %cst_63 = arith.constant 3.14159274 : f32
    %242 = vector.broadcast %cst_63 : f32 to vector<8x1xf32>
    %243 = arith.mulf %242, %236 : vector<8x1xf32>
    %244 = vector.broadcast %243 : vector<8x1xf32> to vector<8x100xf32>
    %245 = arith.addf %241, %244 : vector<8x100xf32>
    %246 = math.sin %245 : vector<8x100xf32>
    %247 = arith.addf %234, %246 : vector<8x100xf32>
    %248 = vector.extract_strided_slice %18 {offsets = [0, 16], sizes = [8, 1], strides = [1, 1]} : vector<8x128xf32> to vector<8x1xf32>
    %249 = vector.extract_strided_slice %37 {offsets = [0, 16], sizes = [8, 1], strides = [1, 1]} : vector<8x128xf32> to vector<8x1xf32>
    %cst_64 = arith.constant 6.28318548 : f32
    %250 = vector.broadcast %cst_64 : f32 to vector<8x1xf32>
    %251 = arith.mulf %250, %248 : vector<8x1xf32>
    %252 = vector.broadcast %251 : vector<8x1xf32> to vector<8x100xf32>
    %253 = vector.broadcast %38 : vector<1x100xf32> to vector<8x100xf32>
    %254 = arith.mulf %252, %253 : vector<8x100xf32>
    %cst_65 = arith.constant 3.14159274 : f32
    %255 = vector.broadcast %cst_65 : f32 to vector<8x1xf32>
    %256 = arith.mulf %255, %249 : vector<8x1xf32>
    %257 = vector.broadcast %256 : vector<8x1xf32> to vector<8x100xf32>
    %258 = arith.addf %254, %257 : vector<8x100xf32>
    %259 = math.sin %258 : vector<8x100xf32>
    %260 = arith.addf %247, %259 : vector<8x100xf32>
    %261 = vector.extract_strided_slice %18 {offsets = [0, 17], sizes = [8, 1], strides = [1, 1]} : vector<8x128xf32> to vector<8x1xf32>
    %262 = vector.extract_strided_slice %37 {offsets = [0, 17], sizes = [8, 1], strides = [1, 1]} : vector<8x128xf32> to vector<8x1xf32>
    %cst_66 = arith.constant 6.28318548 : f32
    %263 = vector.broadcast %cst_66 : f32 to vector<8x1xf32>
    %264 = arith.mulf %263, %261 : vector<8x1xf32>
    %265 = vector.broadcast %264 : vector<8x1xf32> to vector<8x100xf32>
    %266 = vector.broadcast %38 : vector<1x100xf32> to vector<8x100xf32>
    %267 = arith.mulf %265, %266 : vector<8x100xf32>
    %cst_67 = arith.constant 3.14159274 : f32
    %268 = vector.broadcast %cst_67 : f32 to vector<8x1xf32>
    %269 = arith.mulf %268, %262 : vector<8x1xf32>
    %270 = vector.broadcast %269 : vector<8x1xf32> to vector<8x100xf32>
    %271 = arith.addf %267, %270 : vector<8x100xf32>
    %272 = math.sin %271 : vector<8x100xf32>
    %273 = arith.addf %260, %272 : vector<8x100xf32>
    %274 = vector.extract_strided_slice %18 {offsets = [0, 18], sizes = [8, 1], strides = [1, 1]} : vector<8x128xf32> to vector<8x1xf32>
    %275 = vector.extract_strided_slice %37 {offsets = [0, 18], sizes = [8, 1], strides = [1, 1]} : vector<8x128xf32> to vector<8x1xf32>
    %cst_68 = arith.constant 6.28318548 : f32
    %276 = vector.broadcast %cst_68 : f32 to vector<8x1xf32>
    %277 = arith.mulf %276, %274 : vector<8x1xf32>
    %278 = vector.broadcast %277 : vector<8x1xf32> to vector<8x100xf32>
    %279 = vector.broadcast %38 : vector<1x100xf32> to vector<8x100xf32>
    %280 = arith.mulf %278, %279 : vector<8x100xf32>
    %cst_69 = arith.constant 3.14159274 : f32
    %281 = vector.broadcast %cst_69 : f32 to vector<8x1xf32>
    %282 = arith.mulf %281, %275 : vector<8x1xf32>
    %283 = vector.broadcast %282 : vector<8x1xf32> to vector<8x100xf32>
    %284 = arith.addf %280, %283 : vector<8x100xf32>
    %285 = math.sin %284 : vector<8x100xf32>
    %286 = arith.addf %273, %285 : vector<8x100xf32>
    %287 = vector.extract_strided_slice %18 {offsets = [0, 19], sizes = [8, 1], strides = [1, 1]} : vector<8x128xf32> to vector<8x1xf32>
    %288 = vector.extract_strided_slice %37 {offsets = [0, 19], sizes = [8, 1], strides = [1, 1]} : vector<8x128xf32> to vector<8x1xf32>
    %cst_70 = arith.constant 6.28318548 : f32
    %289 = vector.broadcast %cst_70 : f32 to vector<8x1xf32>
    %290 = arith.mulf %289, %287 : vector<8x1xf32>
    %291 = vector.broadcast %290 : vector<8x1xf32> to vector<8x100xf32>
    %292 = vector.broadcast %38 : vector<1x100xf32> to vector<8x100xf32>
    %293 = arith.mulf %291, %292 : vector<8x100xf32>
    %cst_71 = arith.constant 3.14159274 : f32
    %294 = vector.broadcast %cst_71 : f32 to vector<8x1xf32>
    %295 = arith.mulf %294, %288 : vector<8x1xf32>
    %296 = vector.broadcast %295 : vector<8x1xf32> to vector<8x100xf32>
    %297 = arith.addf %293, %296 : vector<8x100xf32>
    %298 = math.sin %297 : vector<8x100xf32>
    %299 = arith.addf %286, %298 : vector<8x100xf32>
    %300 = vector.extract_strided_slice %18 {offsets = [0, 20], sizes = [8, 1], strides = [1, 1]} : vector<8x128xf32> to vector<8x1xf32>
    %301 = vector.extract_strided_slice %37 {offsets = [0, 20], sizes = [8, 1], strides = [1, 1]} : vector<8x128xf32> to vector<8x1xf32>
    %cst_72 = arith.constant 6.28318548 : f32
    %302 = vector.broadcast %cst_72 : f32 to vector<8x1xf32>
    %303 = arith.mulf %302, %300 : vector<8x1xf32>
    %304 = vector.broadcast %303 : vector<8x1xf32> to vector<8x100xf32>
    %305 = vector.broadcast %38 : vector<1x100xf32> to vector<8x100xf32>
    %306 = arith.mulf %304, %305 : vector<8x100xf32>
    %cst_73 = arith.constant 3.14159274 : f32
    %307 = vector.broadcast %cst_73 : f32 to vector<8x1xf32>
    %308 = arith.mulf %307, %301 : vector<8x1xf32>
    %309 = vector.broadcast %308 : vector<8x1xf32> to vector<8x100xf32>
    %310 = arith.addf %306, %309 : vector<8x100xf32>
    %311 = math.sin %310 : vector<8x100xf32>
    %312 = arith.addf %299, %311 : vector<8x100xf32>
    %313 = vector.extract_strided_slice %18 {offsets = [0, 21], sizes = [8, 1], strides = [1, 1]} : vector<8x128xf32> to vector<8x1xf32>
    %314 = vector.extract_strided_slice %37 {offsets = [0, 21], sizes = [8, 1], strides = [1, 1]} : vector<8x128xf32> to vector<8x1xf32>
    %cst_74 = arith.constant 6.28318548 : f32
    %315 = vector.broadcast %cst_74 : f32 to vector<8x1xf32>
    %316 = arith.mulf %315, %313 : vector<8x1xf32>
    %317 = vector.broadcast %316 : vector<8x1xf32> to vector<8x100xf32>
    %318 = vector.broadcast %38 : vector<1x100xf32> to vector<8x100xf32>
    %319 = arith.mulf %317, %318 : vector<8x100xf32>
    %cst_75 = arith.constant 3.14159274 : f32
    %320 = vector.broadcast %cst_75 : f32 to vector<8x1xf32>
    %321 = arith.mulf %320, %314 : vector<8x1xf32>
    %322 = vector.broadcast %321 : vector<8x1xf32> to vector<8x100xf32>
    %323 = arith.addf %319, %322 : vector<8x100xf32>
    %324 = math.sin %323 : vector<8x100xf32>
    %325 = arith.addf %312, %324 : vector<8x100xf32>
    %326 = vector.extract_strided_slice %18 {offsets = [0, 22], sizes = [8, 1], strides = [1, 1]} : vector<8x128xf32> to vector<8x1xf32>
    %327 = vector.extract_strided_slice %37 {offsets = [0, 22], sizes = [8, 1], strides = [1, 1]} : vector<8x128xf32> to vector<8x1xf32>
    %cst_76 = arith.constant 6.28318548 : f32
    %328 = vector.broadcast %cst_76 : f32 to vector<8x1xf32>
    %329 = arith.mulf %328, %326 : vector<8x1xf32>
    %330 = vector.broadcast %329 : vector<8x1xf32> to vector<8x100xf32>
    %331 = vector.broadcast %38 : vector<1x100xf32> to vector<8x100xf32>
    %332 = arith.mulf %330, %331 : vector<8x100xf32>
    %cst_77 = arith.constant 3.14159274 : f32
    %333 = vector.broadcast %cst_77 : f32 to vector<8x1xf32>
    %334 = arith.mulf %333, %327 : vector<8x1xf32>
    %335 = vector.broadcast %334 : vector<8x1xf32> to vector<8x100xf32>
    %336 = arith.addf %332, %335 : vector<8x100xf32>
    %337 = math.sin %336 : vector<8x100xf32>
    %338 = arith.addf %325, %337 : vector<8x100xf32>
    %339 = vector.extract_strided_slice %18 {offsets = [0, 23], sizes = [8, 1], strides = [1, 1]} : vector<8x128xf32> to vector<8x1xf32>
    %340 = vector.extract_strided_slice %37 {offsets = [0, 23], sizes = [8, 1], strides = [1, 1]} : vector<8x128xf32> to vector<8x1xf32>
    %cst_78 = arith.constant 6.28318548 : f32
    %341 = vector.broadcast %cst_78 : f32 to vector<8x1xf32>
    %342 = arith.mulf %341, %339 : vector<8x1xf32>
    %343 = vector.broadcast %342 : vector<8x1xf32> to vector<8x100xf32>
    %344 = vector.broadcast %38 : vector<1x100xf32> to vector<8x100xf32>
    %345 = arith.mulf %343, %344 : vector<8x100xf32>
    %cst_79 = arith.constant 3.14159274 : f32
    %346 = vector.broadcast %cst_79 : f32 to vector<8x1xf32>
    %347 = arith.mulf %346, %340 : vector<8x1xf32>
    %348 = vector.broadcast %347 : vector<8x1xf32> to vector<8x100xf32>
    %349 = arith.addf %345, %348 : vector<8x100xf32>
    %350 = math.sin %349 : vector<8x100xf32>
    %351 = arith.addf %338, %350 : vector<8x100xf32>
    %352 = vector.extract_strided_slice %18 {offsets = [0, 24], sizes = [8, 1], strides = [1, 1]} : vector<8x128xf32> to vector<8x1xf32>
    %353 = vector.extract_strided_slice %37 {offsets = [0, 24], sizes = [8, 1], strides = [1, 1]} : vector<8x128xf32> to vector<8x1xf32>
    %cst_80 = arith.constant 6.28318548 : f32
    %354 = vector.broadcast %cst_80 : f32 to vector<8x1xf32>
    %355 = arith.mulf %354, %352 : vector<8x1xf32>
    %356 = vector.broadcast %355 : vector<8x1xf32> to vector<8x100xf32>
    %357 = vector.broadcast %38 : vector<1x100xf32> to vector<8x100xf32>
    %358 = arith.mulf %356, %357 : vector<8x100xf32>
    %cst_81 = arith.constant 3.14159274 : f32
    %359 = vector.broadcast %cst_81 : f32 to vector<8x1xf32>
    %360 = arith.mulf %359, %353 : vector<8x1xf32>
    %361 = vector.broadcast %360 : vector<8x1xf32> to vector<8x100xf32>
    %362 = arith.addf %358, %361 : vector<8x100xf32>
    %363 = math.sin %362 : vector<8x100xf32>
    %364 = arith.addf %351, %363 : vector<8x100xf32>
    %365 = vector.extract_strided_slice %18 {offsets = [0, 25], sizes = [8, 1], strides = [1, 1]} : vector<8x128xf32> to vector<8x1xf32>
    %366 = vector.extract_strided_slice %37 {offsets = [0, 25], sizes = [8, 1], strides = [1, 1]} : vector<8x128xf32> to vector<8x1xf32>
    %cst_82 = arith.constant 6.28318548 : f32
    %367 = vector.broadcast %cst_82 : f32 to vector<8x1xf32>
    %368 = arith.mulf %367, %365 : vector<8x1xf32>
    %369 = vector.broadcast %368 : vector<8x1xf32> to vector<8x100xf32>
    %370 = vector.broadcast %38 : vector<1x100xf32> to vector<8x100xf32>
    %371 = arith.mulf %369, %370 : vector<8x100xf32>
    %cst_83 = arith.constant 3.14159274 : f32
    %372 = vector.broadcast %cst_83 : f32 to vector<8x1xf32>
    %373 = arith.mulf %372, %366 : vector<8x1xf32>
    %374 = vector.broadcast %373 : vector<8x1xf32> to vector<8x100xf32>
    %375 = arith.addf %371, %374 : vector<8x100xf32>
    %376 = math.sin %375 : vector<8x100xf32>
    %377 = arith.addf %364, %376 : vector<8x100xf32>
    %378 = vector.extract_strided_slice %18 {offsets = [0, 26], sizes = [8, 1], strides = [1, 1]} : vector<8x128xf32> to vector<8x1xf32>
    %379 = vector.extract_strided_slice %37 {offsets = [0, 26], sizes = [8, 1], strides = [1, 1]} : vector<8x128xf32> to vector<8x1xf32>
    %cst_84 = arith.constant 6.28318548 : f32
    %380 = vector.broadcast %cst_84 : f32 to vector<8x1xf32>
    %381 = arith.mulf %380, %378 : vector<8x1xf32>
    %382 = vector.broadcast %381 : vector<8x1xf32> to vector<8x100xf32>
    %383 = vector.broadcast %38 : vector<1x100xf32> to vector<8x100xf32>
    %384 = arith.mulf %382, %383 : vector<8x100xf32>
    %cst_85 = arith.constant 3.14159274 : f32
    %385 = vector.broadcast %cst_85 : f32 to vector<8x1xf32>
    %386 = arith.mulf %385, %379 : vector<8x1xf32>
    %387 = vector.broadcast %386 : vector<8x1xf32> to vector<8x100xf32>
    %388 = arith.addf %384, %387 : vector<8x100xf32>
    %389 = math.sin %388 : vector<8x100xf32>
    %390 = arith.addf %377, %389 : vector<8x100xf32>
    %391 = vector.extract_strided_slice %18 {offsets = [0, 27], sizes = [8, 1], strides = [1, 1]} : vector<8x128xf32> to vector<8x1xf32>
    %392 = vector.extract_strided_slice %37 {offsets = [0, 27], sizes = [8, 1], strides = [1, 1]} : vector<8x128xf32> to vector<8x1xf32>
    %cst_86 = arith.constant 6.28318548 : f32
    %393 = vector.broadcast %cst_86 : f32 to vector<8x1xf32>
    %394 = arith.mulf %393, %391 : vector<8x1xf32>
    %395 = vector.broadcast %394 : vector<8x1xf32> to vector<8x100xf32>
    %396 = vector.broadcast %38 : vector<1x100xf32> to vector<8x100xf32>
    %397 = arith.mulf %395, %396 : vector<8x100xf32>
    %cst_87 = arith.constant 3.14159274 : f32
    %398 = vector.broadcast %cst_87 : f32 to vector<8x1xf32>
    %399 = arith.mulf %398, %392 : vector<8x1xf32>
    %400 = vector.broadcast %399 : vector<8x1xf32> to vector<8x100xf32>
    %401 = arith.addf %397, %400 : vector<8x100xf32>
    %402 = math.sin %401 : vector<8x100xf32>
    %403 = arith.addf %390, %402 : vector<8x100xf32>
    %404 = vector.extract_strided_slice %18 {offsets = [0, 28], sizes = [8, 1], strides = [1, 1]} : vector<8x128xf32> to vector<8x1xf32>
    %405 = vector.extract_strided_slice %37 {offsets = [0, 28], sizes = [8, 1], strides = [1, 1]} : vector<8x128xf32> to vector<8x1xf32>
    %cst_88 = arith.constant 6.28318548 : f32
    %406 = vector.broadcast %cst_88 : f32 to vector<8x1xf32>
    %407 = arith.mulf %406, %404 : vector<8x1xf32>
    %408 = vector.broadcast %407 : vector<8x1xf32> to vector<8x100xf32>
    %409 = vector.broadcast %38 : vector<1x100xf32> to vector<8x100xf32>
    %410 = arith.mulf %408, %409 : vector<8x100xf32>
    %cst_89 = arith.constant 3.14159274 : f32
    %411 = vector.broadcast %cst_89 : f32 to vector<8x1xf32>
    %412 = arith.mulf %411, %405 : vector<8x1xf32>
    %413 = vector.broadcast %412 : vector<8x1xf32> to vector<8x100xf32>
    %414 = arith.addf %410, %413 : vector<8x100xf32>
    %415 = math.sin %414 : vector<8x100xf32>
    %416 = arith.addf %403, %415 : vector<8x100xf32>
    %417 = vector.extract_strided_slice %18 {offsets = [0, 29], sizes = [8, 1], strides = [1, 1]} : vector<8x128xf32> to vector<8x1xf32>
    %418 = vector.extract_strided_slice %37 {offsets = [0, 29], sizes = [8, 1], strides = [1, 1]} : vector<8x128xf32> to vector<8x1xf32>
    %cst_90 = arith.constant 6.28318548 : f32
    %419 = vector.broadcast %cst_90 : f32 to vector<8x1xf32>
    %420 = arith.mulf %419, %417 : vector<8x1xf32>
    %421 = vector.broadcast %420 : vector<8x1xf32> to vector<8x100xf32>
    %422 = vector.broadcast %38 : vector<1x100xf32> to vector<8x100xf32>
    %423 = arith.mulf %421, %422 : vector<8x100xf32>
    %cst_91 = arith.constant 3.14159274 : f32
    %424 = vector.broadcast %cst_91 : f32 to vector<8x1xf32>
    %425 = arith.mulf %424, %418 : vector<8x1xf32>
    %426 = vector.broadcast %425 : vector<8x1xf32> to vector<8x100xf32>
    %427 = arith.addf %423, %426 : vector<8x100xf32>
    %428 = math.sin %427 : vector<8x100xf32>
    %429 = arith.addf %416, %428 : vector<8x100xf32>
    %c0_92 = arith.constant 0 : index
    %c0_93 = arith.constant 0 : index
    %430 = vector.load %arg13[%c0_92, %c0_93] : memref<100x400xf32, #tpu.memory_space<vmem>>, vector<100x400xf32>
    %cst_94 = arith.constant dense<0.000000e+00> : vector<8x400xf32>
    %431 = tpu.matmul %429, %430, %cst_94 {dimension_numbers = #tpu.dot_dimension_numbers<[1], [0], [0], [1], [0, 0, 1, 1], [], []>} : vector<8x100xf32>, vector<100x400xf32>, vector<8x400xf32> -> vector<8x400xf32>
    %c0_95 = arith.constant 0 : index
    %c0_96 = arith.constant 0 : index
    %432 = vector.load %arg14[%c0_95, %c0_96] : memref<1x400xf32, #tpu.memory_space<vmem>>, vector<1x400xf32>
    %433 = vector.broadcast %432 : vector<1x400xf32> to vector<8x400xf32>
    %434 = arith.addf %431, %433 : vector<8x400xf32>
    %cst_97 = arith.constant 0.000000e+00 : f32
    %435 = vector.broadcast %cst_97 : f32 to vector<8x400xf32>
    %436 = arith.subf %435, %434 : vector<8x400xf32>
    %437 = math.exp %436 : vector<8x400xf32>
    %cst_98 = arith.constant 1.000000e+00 : f32
    %438 = vector.broadcast %cst_98 : f32 to vector<8x400xf32>
    %439 = arith.addf %438, %437 : vector<8x400xf32>
    %440 = tpu.reciprocal %439 : vector<8x400xf32> -> vector<8x400xf32>
    %c0_99 = arith.constant 0 : index
    %c0_100 = arith.constant 0 : index
    %441 = vector.load %arg15[%c0_99, %c0_100] : memref<100x400xf32, #tpu.memory_space<vmem>>, vector<100x400xf32>
    %cst_101 = arith.constant dense<0.000000e+00> : vector<8x400xf32>
    %442 = tpu.matmul %429, %441, %cst_101 {dimension_numbers = #tpu.dot_dimension_numbers<[1], [0], [0], [1], [0, 0, 1, 1], [], []>} : vector<8x100xf32>, vector<100x400xf32>, vector<8x400xf32> -> vector<8x400xf32>
    %c0_102 = arith.constant 0 : index
    %c0_103 = arith.constant 0 : index
    %443 = vector.load %arg16[%c0_102, %c0_103] : memref<1x400xf32, #tpu.memory_space<vmem>>, vector<1x400xf32>
    %444 = vector.broadcast %443 : vector<1x400xf32> to vector<8x400xf32>
    %445 = arith.addf %442, %444 : vector<8x400xf32>
    %cst_104 = arith.constant 0.000000e+00 : f32
    %446 = vector.broadcast %cst_104 : f32 to vector<8x400xf32>
    %447 = arith.maximumf %445, %446 : vector<8x400xf32>
    %448 = arith.mulf %440, %447 : vector<8x400xf32>
    %c0_105 = arith.constant 0 : index
    %c0_106 = arith.constant 0 : index
    %449 = vector.load %arg17[%c0_105, %c0_106] : memref<400x896xf32, #tpu.memory_space<vmem>>, vector<400x896xf32>
    %cst_107 = arith.constant dense<0.000000e+00> : vector<8x896xf32>
    %450 = tpu.matmul %448, %449, %cst_107 {dimension_numbers = #tpu.dot_dimension_numbers<[1], [0], [0], [1], [0, 0, 1, 1], [], []>} : vector<8x400xf32>, vector<400x896xf32>, vector<8x896xf32> -> vector<8x896xf32>
    %c0_108 = arith.constant 0 : index
    %c0_109 = arith.constant 0 : index
    %451 = vector.load %arg18[%c0_108, %c0_109] : memref<1x896xf32, #tpu.memory_space<vmem>>, vector<1x896xf32>
    %452 = vector.broadcast %451 : vector<1x896xf32> to vector<8x896xf32>
    %453 = arith.addf %450, %452 : vector<8x896xf32>
    %cst_110 = arith.constant 0.000000e+00 : f32
    %454 = vector.broadcast %cst_110 : f32 to vector<8x896xf32>
    %455 = arith.subf %454, %453 : vector<8x896xf32>
    %456 = math.exp %455 : vector<8x896xf32>
    %cst_111 = arith.constant 1.000000e+00 : f32
    %457 = vector.broadcast %cst_111 : f32 to vector<8x896xf32>
    %458 = arith.addf %457, %456 : vector<8x896xf32>
    %459 = tpu.reciprocal %458 {approx = true} : vector<8x896xf32> -> vector<8x896xf32>
    %c0_112 = arith.constant 0 : index
    %c0_113 = arith.constant 0 : index
    %460 = vector.load %arg19[%c0_112, %c0_113] : memref<8x896xf32, #tpu.memory_space<vmem>>, vector<8x896xf32>
    tpu.vector_store %arg19[%c0_112, %c0_113], %459 {strides = array<i32>} : memref<8x896xf32, #tpu.memory_space<vmem>>, vector<8x896xf32>,
    %c0_114 = arith.constant 0 : index
    %c0_115 = arith.constant 0 : index
    %461 = vector.load %arg20[%c0_114, %c0_115] : memref<8x128xf32, #tpu.memory_space<vmem>>, vector<8x128xf32>
    tpu.vector_store %arg20[%c0_114, %c0_115], %18 {strides = array<i32>} : memref<8x128xf32, #tpu.memory_space<vmem>>, vector<8x128xf32>,
    %c0_116 = arith.constant 0 : index
    %c0_117 = arith.constant 0 : index
    %462 = vector.load %arg21[%c0_116, %c0_117] : memref<8x128xf32, #tpu.memory_space<vmem>>, vector<8x128xf32>
    tpu.vector_store %arg21[%c0_116, %c0_117], %37 {strides = array<i32>} : memref<8x128xf32, #tpu.memory_space<vmem>>, vector<8x128xf32>,
    return
  }
  func.func @transform_0(%arg0: i32) -> (i32, i32) {
    %c0_i32 = arith.constant 0 : i32
    %c0_i32_0 = arith.constant 0 : i32
    return %arg0, %c0_i32 : i32, i32
  }
  func.func @transform_1(%arg0: i32) -> (i32, i32) {
    %c0_i32 = arith.constant 0 : i32
    %c0_i32_0 = arith.constant 0 : i32
    return %arg0, %c0_i32 : i32, i32
  }
  func.func @transform_2(%arg0: i32) -> (i32, i32) {
    %c0_i32 = arith.constant 0 : i32
    %c0_i32_0 = arith.constant 0 : i32
    %c0_i32_1 = arith.constant 0 : i32
    return %c0_i32, %c0_i32_0 : i32, i32
  }
  func.func @transform_3(%arg0: i32) -> (i32, i32) {
    %c0_i32 = arith.constant 0 : i32
    %c0_i32_0 = arith.constant 0 : i32
    return %arg0, %c0_i32 : i32, i32
  }
  func.func @transform_4(%arg0: i32) -> (i32, i32) {
    %c0_i32 = arith.constant 0 : i32
    %c0_i32_0 = arith.constant 0 : i32
    %c0_i32_1 = arith.constant 0 : i32
    return %c0_i32, %c0_i32_0 : i32, i32
  }
  func.func @transform_5(%arg0: i32) -> (i32, i32) {
    %c0_i32 = arith.constant 0 : i32
    %c0_i32_0 = arith.constant 0 : i32
    %c0_i32_1 = arith.constant 0 : i32
    return %c0_i32, %c0_i32_0 : i32, i32
  }
  func.func @transform_6(%arg0: i32) -> (i32, i32) {
    %c0_i32 = arith.constant 0 : i32
    %c0_i32_0 = arith.constant 0 : i32
    %c0_i32_1 = arith.constant 0 : i32
    return %c0_i32, %c0_i32_0 : i32, i32
  }
  func.func @transform_7(%arg0: i32) -> (i32, i32) {
    %c0_i32 = arith.constant 0 : i32
    %c0_i32_0 = arith.constant 0 : i32
    %c0_i32_1 = arith.constant 0 : i32
    return %c0_i32, %c0_i32_0 : i32, i32
  }
  func.func @transform_8(%arg0: i32) -> (i32, i32) {
    %c0_i32 = arith.constant 0 : i32
    %c0_i32_0 = arith.constant 0 : i32
    %c0_i32_1 = arith.constant 0 : i32
    return %c0_i32, %c0_i32_0 : i32, i32
  }
  func.func @transform_9(%arg0: i32) -> (i32, i32) {
    %c0_i32 = arith.constant 0 : i32
    %c0_i32_0 = arith.constant 0 : i32
    %c0_i32_1 = arith.constant 0 : i32
    return %c0_i32, %c0_i32_0 : i32, i32
  }
  func.func @transform_10(%arg0: i32) -> (i32, i32) {
    %c0_i32 = arith.constant 0 : i32
    %c0_i32_0 = arith.constant 0 : i32
    %c0_i32_1 = arith.constant 0 : i32
    return %c0_i32, %c0_i32_0 : i32, i32
  }
  func.func @transform_11(%arg0: i32) -> (i32, i32) {
    %c0_i32 = arith.constant 0 : i32
    %c0_i32_0 = arith.constant 0 : i32
    %c0_i32_1 = arith.constant 0 : i32
    return %c0_i32, %c0_i32_0 : i32, i32
  }
  func.func @transform_12(%arg0: i32) -> (i32, i32) {
    %c0_i32 = arith.constant 0 : i32
    %c0_i32_0 = arith.constant 0 : i32
    %c0_i32_1 = arith.constant 0 : i32
    return %c0_i32, %c0_i32_0 : i32, i32
  }
  func.func @transform_13(%arg0: i32) -> (i32, i32) {
    %c0_i32 = arith.constant 0 : i32
    %c0_i32_0 = arith.constant 0 : i32
    %c0_i32_1 = arith.constant 0 : i32
    return %c0_i32, %c0_i32_0 : i32, i32
  }
  func.func @transform_14(%arg0: i32) -> (i32, i32) {
    %c0_i32 = arith.constant 0 : i32
    %c0_i32_0 = arith.constant 0 : i32
    %c0_i32_1 = arith.constant 0 : i32
    return %c0_i32, %c0_i32_0 : i32, i32
  }
  func.func @transform_15(%arg0: i32) -> (i32, i32) {
    %c0_i32 = arith.constant 0 : i32
    %c0_i32_0 = arith.constant 0 : i32
    %c0_i32_1 = arith.constant 0 : i32
    return %c0_i32, %c0_i32_0 : i32, i32
  }
  func.func @transform_16(%arg0: i32) -> (i32, i32) {
    %c0_i32 = arith.constant 0 : i32
    %c0_i32_0 = arith.constant 0 : i32
    %c0_i32_1 = arith.constant 0 : i32
    return %c0_i32, %c0_i32_0 : i32, i32
  }
  func.func @transform_17(%arg0: i32) -> (i32, i32) {
    %c0_i32 = arith.constant 0 : i32
    %c0_i32_0 = arith.constant 0 : i32
    %c0_i32_1 = arith.constant 0 : i32
    return %c0_i32, %c0_i32_0 : i32, i32
  }
  func.func @transform_18(%arg0: i32) -> (i32, i32) {
    %c0_i32 = arith.constant 0 : i32
    %c0_i32_0 = arith.constant 0 : i32
    return %arg0, %c0_i32 : i32, i32
  }
  func.func @transform_19(%arg0: i32) -> (i32, i32) {
    %c0_i32 = arith.constant 0 : i32
    %c0_i32_0 = arith.constant 0 : i32
    return %arg0, %c0_i32 : i32, i32
  }
  func.func @transform_20(%arg0: i32) -> (i32, i32) {
    %c0_i32 = arith.constant 0 : i32
    %c0_i32_0 = arith.constant 0 : i32
    return %arg0, %c0_i32 : i32, i32
  }
}

</mosaic_0001>

<llo_original>
// kernel: vae_forward.1
$region0: #{vae_forward.1}
  #allocation0 [shape = 'u32[]', space=smem, size = 0x4, offset = 0x4, fixed_abs, tag = 'smem constant byte address 0x4 - core index']
  #allocation1 [shape = 'u32[72,128]{1,0:T(1,128)}', space=vmem, size = 0x9000, scoped, tag = 'internal scratch']
  %s0 = inlined_call_operand.vmem [shape: f32[8,784], index: 0, kind: input, shape index: {}]
  %s1 = inlined_call_operand.vmem [shape: f32[8,10], index: 1, kind: input, shape index: {}]
  %s2 = inlined_call_operand.vmem [shape: f32[1,100], index: 2, kind: input, shape index: {}]
  %s3 = inlined_call_operand.vmem [shape: f32[8,100], index: 3, kind: input, shape index: {}]
  %s4 = inlined_call_operand.vmem [shape: f32[10,50], index: 4, kind: input, shape index: {}]
  %s5 = inlined_call_operand.vmem [shape: f32[1,50], index: 5, kind: input, shape index: {}]
  %s6 = inlined_call_operand.vmem [shape: f32[50,128], index: 6, kind: input, shape index: {}]
  %s7 = inlined_call_operand.vmem [shape: f32[1,128], index: 7, kind: input, shape index: {}]
  %s8 = inlined_call_operand.vmem [shape: f32[784,400], index: 8, kind: input, shape index: {}]
  %s9 = inlined_call_operand.vmem [shape: f32[1,400], index: 9, kind: input, shape index: {}]
  %s10 = inlined_call_operand.vmem [shape: f32[400,128], index: 10, kind: input, shape index: {}]
  %s11 = inlined_call_operand.vmem [shape: f32[1,128], index: 11, kind: input, shape index: {}]
  %s12 = inlined_call_operand.vmem [shape: f32[100,400], index: 12, kind: input, shape index: {}]
  %s13 = inlined_call_operand.vmem [shape: f32[1,400], index: 13, kind: input, shape index: {}]
  %s14 = inlined_call_operand.vmem [shape: f32[100,400], index: 14, kind: input, shape index: {}]
  %s15 = inlined_call_operand.vmem [shape: f32[1,400], index: 15, kind: input, shape index: {}]
  %s16 = inlined_call_operand.vmem [shape: f32[400,896], index: 16, kind: input, shape index: {}]
  %s17 = inlined_call_operand.vmem [shape: f32[1,896], index: 17, kind: input, shape index: {}]
  %s18 = inlined_call_operand.vmem [shape: f32[8,896], index: 18, kind: output, shape index: {0}]
  %s19 = inlined_call_operand.vmem [shape: f32[8,128], index: 19, kind: output, shape index: {1}]
  %s20 = inlined_call_operand.vmem [shape: f32[8,128], index: 20, kind: output, shape index: {2}]
  %21 = xla_tuple %s18, %s19, %s20
  %s22 = sld [smem:[#allocation0]]
  $region98: #{vae_forward.1} parent=0
    _
  %s24 = ssub.s32 1, %s22
  %s25 = scalar_select 0, %s24, %s22
  // Predicated region
  $region2: #{vae_forward.1} parent=0 // pred_check
    _
  $region3: #{vae_forward.1} parent=0 // pred_check_branch
    %27 = sbr.rel (0) target = $region5
  $region4: #{vae_forward.1} parent=0 // pred_region
    _
  $region5: #{vae_forward.1} parent=0 // pred_fallthru
    _
  // Predicated region
  $region6: #{vae_forward.1} parent=0 // pred_check
    _
  $region7: #{vae_forward.1} parent=0 // pred_check_branch
    %29 = sbr.rel (0) target = $region9
  $region8: #{vae_forward.1} parent=0 // pred_region
    _
  $region9: #{vae_forward.1} parent=0 // pred_fallthru
    _
  // Predicated region
  $region10: #{vae_forward.1} parent=0 // pred_check
    _
  $region11: #{vae_forward.1} parent=0 // pred_check_branch
    %31 = sbr.rel (0) target = $region13
  $region12: #{vae_forward.1} parent=0 // pred_region
    _
  $region13: #{vae_forward.1} parent=0 // pred_fallthru
    _
  // Predicated region
  $region14: #{vae_forward.1} parent=0 // pred_check
    _
  $region15: #{vae_forward.1} parent=0 // pred_check_branch
    %33 = sbr.rel (0) target = $region17
  $region16: #{vae_forward.1} parent=0 // pred_region
    _
  $region17: #{vae_forward.1} parent=0 // pred_fallthru
    _
  // Predicated region
  $region18: #{vae_forward.1} parent=0 // pred_check
    _
  $region19: #{vae_forward.1} parent=0 // pred_check_branch
    %35 = sbr.rel (0) target = $region21
  $region20: #{vae_forward.1} parent=0 // pred_region
    _
  $region21: #{vae_forward.1} parent=0 // pred_fallthru
    _
  // Predicated region
  $region22: #{vae_forward.1} parent=0 // pred_check
    _
  $region23: #{vae_forward.1} parent=0 // pred_check_branch
    %37 = sbr.rel (0) target = $region25
  $region24: #{vae_forward.1} parent=0 // pred_region
    _
  $region25: #{vae_forward.1} parent=0 // pred_fallthru
    _
  // Predicated region
  $region26: #{vae_forward.1} parent=0 // pred_check
    _
  $region27: #{vae_forward.1} parent=0 // pred_check_branch
    %39 = sbr.rel (0) target = $region29
  $region28: #{vae_forward.1} parent=0 // pred_region
    _
  $region29: #{vae_forward.1} parent=0 // pred_fallthru
    _
  // Predicated region
  $region30: #{vae_forward.1} parent=0 // pred_check
    _
  $region31: #{vae_forward.1} parent=0 // pred_check_branch
    %41 = sbr.rel (0) target = $region33
  $region32: #{vae_forward.1} parent=0 // pred_region
    _
  $region33: #{vae_forward.1} parent=0 // pred_fallthru
    _
  // Predicated region
  $region34: #{vae_forward.1} parent=0 // pred_check
    _
  $region35: #{vae_forward.1} parent=0 // pred_check_branch
    %43 = sbr.rel (0) target = $region37
  $region36: #{vae_forward.1} parent=0 // pred_region
    _
  $region37: #{vae_forward.1} parent=0 // pred_fallthru
    _
  // Predicated region
  $region38: #{vae_forward.1} parent=0 // pred_check
    _
  $region39: #{vae_forward.1} parent=0 // pred_check_branch
    %45 = sbr.rel (0) target = $region41
  $region40: #{vae_forward.1} parent=0 // pred_region
    _
  $region41: #{vae_forward.1} parent=0 // pred_fallthru
    _
  // Predicated region
  $region42: #{vae_forward.1} parent=0 // pred_check
    _
  $region43: #{vae_forward.1} parent=0 // pred_check_branch
    %47 = sbr.rel (0) target = $region45
  $region44: #{vae_forward.1} parent=0 // pred_region
    _
  $region45: #{vae_forward.1} parent=0 // pred_fallthru
    _
  // Predicated region
  $region46: #{vae_forward.1} parent=0 // pred_check
    _
  $region47: #{vae_forward.1} parent=0 // pred_check_branch
    %49 = sbr.rel (0) target = $region49
  $region48: #{vae_forward.1} parent=0 // pred_region
    _
  $region49: #{vae_forward.1} parent=0 // pred_fallthru
    _
  // Predicated region
  $region50: #{vae_forward.1} parent=0 // pred_check
    _
  $region51: #{vae_forward.1} parent=0 // pred_check_branch
    %51 = sbr.rel (0) target = $region53
  $region52: #{vae_forward.1} parent=0 // pred_region
    _
  $region53: #{vae_forward.1} parent=0 // pred_fallthru
    _
  // Predicated region
  $region54: #{vae_forward.1} parent=0 // pred_check
    _
  $region55: #{vae_forward.1} parent=0 // pred_check_branch
    %53 = sbr.rel (0) target = $region57
  $region56: #{vae_forward.1} parent=0 // pred_region
    _
  $region57: #{vae_forward.1} parent=0 // pred_fallthru
    _
  // Predicated region
  $region58: #{vae_forward.1} parent=0 // pred_check
    _
  $region59: #{vae_forward.1} parent=0 // pred_check_branch
    %55 = sbr.rel (0) target = $region61
  $region60: #{vae_forward.1} parent=0 // pred_region
    _
  $region61: #{vae_forward.1} parent=0 // pred_fallthru
    _
  // Predicated region
  $region62: #{vae_forward.1} parent=0 // pred_check
    _
  $region63: #{vae_forward.1} parent=0 // pred_check_branch
    %57 = sbr.rel (0) target = $region65
  $region64: #{vae_forward.1} parent=0 // pred_region
    _
  $region65: #{vae_forward.1} parent=0 // pred_fallthru
    _
  // Predicated region
  $region66: #{vae_forward.1} parent=0 // pred_check
    _
  $region67: #{vae_forward.1} parent=0 // pred_check_branch
    %59 = sbr.rel (0) target = $region69
  $region68: #{vae_forward.1} parent=0 // pred_region
    _
  $region69: #{vae_forward.1} parent=0 // pred_fallthru
    _
  // Predicated region
  $region70: #{vae_forward.1} parent=0 // pred_check
    _
  $region71: #{vae_forward.1} parent=0 // pred_check_branch
    %61 = sbr.rel (0) target = $region73
  $region72: #{vae_forward.1} parent=0 // pred_region
    _
  $region73: #{vae_forward.1} parent=0 // pred_fallthru
    _
  %v62 = vld [vmem:[%s1] sm:$0xff]
  %v63 = vld [vmem:[%s4] sm:$0xff]
  %v64 = vld [vmem:[%s4 + $0x8] sm:$0x3]
  %v65 = vld [vmem:[%s5] sm:$0x1]
  %v67 = vperm.slane %v65, 0
  %vm69 = vcmask 80896
  %v71 = vsel %vm69, %v62, 0
  %vm73 = vcmask 1041408
  %v75 = vsel %vm73, %v64, 0
  %77 = vmatpush.msra.mxu0 0.0
  %78 = vmatpush.msra.mxu0 0.0
  %79 = vmatpush.msra.mxu0 0.0
  %80 = vmatpush.msra.mxu0 0.0
  %81 = vmatpush.msra.mxu0 0.0
  %82 = vmatpush.msra.mxu0 0.0
  %83 = vmatpush.msra.mxu0 0.0
  %84 = vmatpush.msra.mxu0 0.0
  %85 = vmatpush.msra.mxu0 0.0
  %86 = vmatpush.msra.mxu0 0.0
  %87 = vmatpush.msra.mxu0 0.0
  %88 = vmatpush.msra.mxu0 0.0
  %89 = vmatpush.msra.mxu0 0.0
  %90 = vmatpush.msra.mxu0 0.0
  %91 = vmatpush.msra.mxu0 %v75
  %92 = vmatpush.msra.mxu0 %v63
  %93 = vmatmul.f32.gmra.mxu0 %v71
  %v94 = vpop.f32.mrf.mxu0
  %v95 = vadd.f32 %v67, %v94
  %96 = vdwg.mxu0
  %v97 = vmax.f32 %v95, 0.0
  %v98 = vld [vmem:[%s6] sm:$0xff]
  %v99 = vld [vmem:[%s6 + $0x8] sm:$0xff]
  %v100 = vld [vmem:[%s6 + $0x10] sm:$0xff]
  %v101 = vld [vmem:[%s6 + $0x18] sm:$0xff]
  %v102 = vld [vmem:[%s6 + $0x20] sm:$0xff]
  %v103 = vld [vmem:[%s6 + $0x28] sm:$0xff]
  %v104 = vld [vmem:[%s6 + $0x30] sm:$0x3]
  %v105 = vld [vmem:[%s7] sm:$0x1]
  %v107 = vperm.slane %v105, 0
  %vm109 = vcmask 408576
  %v111 = vsel %vm109, %v97, 0
  %v114 = vsel %vm73, %v104, 0
  %116 = vmatpush.msra.mxu0 0.0
  %117 = vmatpush.msra.mxu0 0.0
  %118 = vmatpush.msra.mxu0 0.0
  %119 = vmatpush.msra.mxu0 0.0
  %120 = vmatpush.msra.mxu0 0.0
  %121 = vmatpush.msra.mxu0 0.0
  %122 = vmatpush.msra.mxu0 0.0
  %123 = vmatpush.msra.mxu0 0.0
  %124 = vmatpush.msra.mxu0 0.0
  %125 = vmatpush.msra.mxu0 %v114
  %126 = vmatpush.msra.mxu0 %v103
  %127 = vmatpush.msra.mxu0 %v102
  %128 = vmatpush.msra.mxu0 %v101
  %129 = vmatpush.msra.mxu0 %v100
  %130 = vmatpush.msra.mxu0 %v99
  %131 = vmatpush.msra.mxu0 %v98
  %132 = vmatmul.f32.gmra.mxu0 %v111
  %v133 = vpop.f32.mrf.mxu0
  %v134 = vadd.f32 %v107, %v133
  %135 = vdwg.mxu0
  %v136 = vsub.f32 0.0, %v134
  %v137 = vmul.f32 %v136, 1.442695
  %v138 = vpow.pop %v137
  %v139 = vadd.f32 %v138, 1.0
  %v140 = vrcp.pop %v139
  %v141 = vmul.f32 %v139, %v140
  %v142 = vsub.f32 1.0, %v141
  %v143 = vmul.f32 %v140, %v142
  %v144 = vadd.f32 %v140, %v143
  %vm145 = vweird.f32 %v139
  %vm146 = vweird.f32 %v140
  %vm147 = vmor %vm145, %vm146
  %v148 = vsel %vm147, %v140, %v144
  %v149 = vand.u32 2147483647, %v139
  %vm150 = vcmp.eq.f32.partialorder %v149, 8.507059e+37
  %v151 = vand.u32 %v139, 2147483648
  %v152 = vor.u32 1.1754944e-38, %v151
  %v153 = vsel %vm150, %v152, %v148
  %v154 = vld [vmem:[%s0] sm:$0xff]
  %v155 = vld [vmem:[%s0 + $0x8] sm:$0xff]
  %v156 = vld [vmem:[%s0 + $0x10] sm:$0xff]
  %v157 = vld [vmem:[%s0 + $0x18] sm:$0xff]
  %v158 = vld [vmem:[%s0 + $0x20] sm:$0xff]
  %v159 = vld [vmem:[%s0 + $0x28] sm:$0xff]
  %v160 = vld [vmem:[%s0 + $0x30] sm:$0xff]
  %v161 = vld [vmem:[%s8] sm:$0xff]
  %v162 = vld [vmem:[%s8 + $0x8] sm:$0xff]
  %v163 = vld [vmem:[%s8 + $0x10] sm:$0xff]
  %v164 = vld [vmem:[%s8 + $0x18] sm:$0xff]
  %v165 = vld [vmem:[%s8 + $0x20] sm:$0xff]
  %v166 = vld [vmem:[%s8 + $0x28] sm:$0xff]
  %v167 = vld [vmem:[%s8 + $0x30] sm:$0xff]
  %v168 = vld [vmem:[%s8 + $0x38] sm:$0xff]
  %v169 = vld [vmem:[%s8 + $0x40] sm:$0xff]
  %v170 = vld [vmem:[%s8 + $0x48] sm:$0xff]
  %v171 = vld [vmem:[%s8 + $0x50] sm:$0xff]
  %v172 = vld [vmem:[%s8 + $0x58] sm:$0xff]
  %v173 = vld [vmem:[%s8 + $0x60] sm:$0xff]
  %v174 = vld [vmem:[%s8 + $0x68] sm:$0xff]
  %v175 = vld [vmem:[%s8 + $0x70] sm:$0xff]
  %v176 = vld [vmem:[%s8 + $0x78] sm:$0xff]
  %v177 = vld [vmem:[%s8 + $0x80] sm:$0xff]
  %v178 = vld [vmem:[%s8 + $0x88] sm:$0xff]
  %v179 = vld [vmem:[%s8 + $0x90] sm:$0xff]
  %v180 = vld [vmem:[%s8 + $0x98] sm:$0xff]
  %v181 = vld [vmem:[%s8 + $0xa0] sm:$0xff]
  %v182 = vld [vmem:[%s8 + $0xa8] sm:$0xff]
  %v183 = vld [vmem:[%s8 + $0xb0] sm:$0xff]
  %v184 = vld [vmem:[%s8 + $0xb8] sm:$0xff]
  %v185 = vld [vmem:[%s8 + $0xc0] sm:$0xff]
  %v186 = vld [vmem:[%s8 + $0xc8] sm:$0xff]
  %v187 = vld [vmem:[%s8 + $0xd0] sm:$0xff]
  %v188 = vld [vmem:[%s8 + $0xd8] sm:$0xff]
  %v189 = vld [vmem:[%s8 + $0xe0] sm:$0xff]
  %v190 = vld [vmem:[%s8 + $0xe8] sm:$0xff]
  %v191 = vld [vmem:[%s8 + $0xf0] sm:$0xff]
  %v192 = vld [vmem:[%s8 + $0xf8] sm:$0xff]
  %v193 = vld [vmem:[%s8 + $0x100] sm:$0xff]
  %v194 = vld [vmem:[%s8 + $0x108] sm:$0xff]
  %v195 = vld [vmem:[%s8 + $0x110] sm:$0xff]
  %v196 = vld [vmem:[%s8 + $0x118] sm:$0xff]
  %v197 = vld [vmem:[%s8 + $0x120] sm:$0xff]
  %v198 = vld [vmem:[%s8 + $0x128] sm:$0xff]
  %v199 = vld [vmem:[%s8 + $0x130] sm:$0xff]
  %v200 = vld [vmem:[%s8 + $0x138] sm:$0xff]
  %v201 = vld [vmem:[%s8 + $0x140] sm:$0xff]
  %v202 = vld [vmem:[%s8 + $0x148] sm:$0xff]
  %v203 = vld [vmem:[%s8 + $0x150] sm:$0xff]
  %v204 = vld [vmem:[%s8 + $0x158] sm:$0xff]
  %v205 = vld [vmem:[%s8 + $0x160] sm:$0xff]
  %v206 = vld [vmem:[%s8 + $0x168] sm:$0xff]
  %v207 = vld [vmem:[%s8 + $0x170] sm:$0xff]
  %v208 = vld [vmem:[%s8 + $0x178] sm:$0xff]
  %v209 = vld [vmem:[%s8 + $0x180] sm:$0xff]
  %v210 = vld [vmem:[%s8 + $0x188] sm:$0xff]
  %v211 = vld [vmem:[%s8 + $0x190] sm:$0xff]
  %v212 = vld [vmem:[%s8 + $0x198] sm:$0xff]
  %v213 = vld [vmem:[%s8 + $0x1a0] sm:$0xff]
  %v214 = vld [vmem:[%s8 + $0x1a8] sm:$0xff]
  %v215 = vld [vmem:[%s8 + $0x1b0] sm:$0xff]
  %v216 = vld [vmem:[%s8 + $0x1b8] sm:$0xff]
  %v217 = vld [vmem:[%s8 + $0x1c0] sm:$0xff]
  %v218 = vld [vmem:[%s8 + $0x1c8] sm:$0xff]
  %v219 = vld [vmem:[%s8 + $0x1d0] sm:$0xff]
  %v220 = vld [vmem:[%s8 + $0x1d8] sm:$0xff]
  %v221 = vld [vmem:[%s8 + $0x1e0] sm:$0xff]
  %v222 = vld [vmem:[%s8 + $0x1e8] sm:$0xff]
  %v223 = vld [vmem:[%s8 + $0x1f0] sm:$0xff]
  %v224 = vld [vmem:[%s8 + $0x1f8] sm:$0xff]
  %v225 = vld [vmem:[%s8 + $0x200] sm:$0xff]
  %v226 = vld [vmem:[%s8 + $0x208] sm:$0xff]
  %v227 = vld [vmem:[%s8 + $0x210] sm:$0xff]
  %v228 = vld [vmem:[%s8 + $0x218] sm:$0xff]
  %v229 = vld [vmem:[%s8 + $0x220] sm:$0xff]
  %v230 = vld [vmem:[%s8 + $0x228] sm:$0xff]
  %v231 = vld [vmem:[%s8 + $0x230] sm:$0xff]
  %v232 = vld [vmem:[%s8 + $0x238] sm:$0xff]
  %v233 = vld [vmem:[%s8 + $0x240] sm:$0xff]
  %v234 = vld [vmem:[%s8 + $0x248] sm:$0xff]
  %v235 = vld [vmem:[%s8 + $0x250] sm:$0xff]
  %v236 = vld [vmem:[%s8 + $0x258] sm:$0xff]
  %v237 = vld [vmem:[%s8 + $0x260] sm:$0xff]
  %v238 = vld [vmem:[%s8 + $0x268] sm:$0xff]
  %v239 = vld [vmem:[%s8 + $0x270] sm:$0xff]
  %v240 = vld [vmem:[%s8 + $0x278] sm:$0xff]
  %v241 = vld [vmem:[%s8 + $0x280] sm:$0xff]
  %v242 = vld [vmem:[%s8 + $0x288] sm:$0xff]
  %v243 = vld [vmem:[%s8 + $0x290] sm:$0xff]
  %v244 = vld [vmem:[%s8 + $0x298] sm:$0xff]
  %v245 = vld [vmem:[%s8 + $0x2a0] sm:$0xff]
  %v246 = vld [vmem:[%s8 + $0x2a8] sm:$0xff]
  %v247 = vld [vmem:[%s8 + $0x2b0] sm:$0xff]
  %v248 = vld [vmem:[%s8 + $0x2b8] sm:$0xff]
  %v249 = vld [vmem:[%s8 + $0x2c0] sm:$0xff]
  %v250 = vld [vmem:[%s8 + $0x2c8] sm:$0xff]
  %v251 = vld [vmem:[%s8 + $0x2d0] sm:$0xff]
  %v252 = vld [vmem:[%s8 + $0x2d8] sm:$0xff]
  %v253 = vld [vmem:[%s8 + $0x2e0] sm:$0xff]
  %v254 = vld [vmem:[%s8 + $0x2e8] sm:$0xff]
  %v255 = vld [vmem:[%s8 + $0x2f0] sm:$0xff]
  %v256 = vld [vmem:[%s8 + $0x2f8] sm:$0xff]
  %v257 = vld [vmem:[%s8 + $0x300] sm:$0xff]
  %v258 = vld [vmem:[%s8 + $0x308] sm:$0xff]
  %v259 = vld [vmem:[%s8 + $0x310] sm:$0xff]
  %v260 = vld [vmem:[%s8 + $0x318] sm:$0xff]
  %v261 = vld [vmem:[%s8 + $0x320] sm:$0xff]
  %v262 = vld [vmem:[%s8 + $0x328] sm:$0xff]
  %v263 = vld [vmem:[%s8 + $0x330] sm:$0xff]
  %v264 = vld [vmem:[%s8 + $0x338] sm:$0xff]
  %v265 = vld [vmem:[%s8 + $0x340] sm:$0xff]
  %v266 = vld [vmem:[%s8 + $0x348] sm:$0xff]
  %v267 = vld [vmem:[%s8 + $0x350] sm:$0xff]
  %v268 = vld [vmem:[%s8 + $0x358] sm:$0xff]
  %v269 = vld [vmem:[%s8 + $0x360] sm:$0xff]
  %v270 = vld [vmem:[%s8 + $0x368] sm:$0xff]
  %v271 = vld [vmem:[%s8 + $0x370] sm:$0xff]
  %v272 = vld [vmem:[%s8 + $0x378] sm:$0xff]
  %v273 = vld [vmem:[%s8 + $0x380] sm:$0xff]
  %v274 = vld [vmem:[%s8 + $0x388] sm:$0xff]
  %v275 = vld [vmem:[%s8 + $0x390] sm:$0xff]
  %v276 = vld [vmem:[%s8 + $0x398] sm:$0xff]
  %v277 = vld [vmem:[%s8 + $0x3a0] sm:$0xff]
  %v278 = vld [vmem:[%s8 + $0x3a8] sm:$0xff]
  %v279 = vld [vmem:[%s8 + $0x3b0] sm:$0xff]
  %v280 = vld [vmem:[%s8 + $0x3b8] sm:$0xff]
  %v281 = vld [vmem:[%s8 + $0x3c0] sm:$0xff]
  %v282 = vld [vmem:[%s8 + $0x3c8] sm:$0xff]
  %v283 = vld [vmem:[%s8 + $0x3d0] sm:$0xff]
  %v284 = vld [vmem:[%s8 + $0x3d8] sm:$0xff]
  %v285 = vld [vmem:[%s8 + $0x3e0] sm:$0xff]
  %v286 = vld [vmem:[%s8 + $0x3e8] sm:$0xff]
  %v287 = vld [vmem:[%s8 + $0x3f0] sm:$0xff]
  %v288 = vld [vmem:[%s8 + $0x3f8] sm:$0xff]
  %v289 = vld [vmem:[%s8 + $0x400] sm:$0xff]
  %v290 = vld [vmem:[%s8 + $0x408] sm:$0xff]
  %v291 = vld [vmem:[%s8 + $0x410] sm:$0xff]
  %v292 = vld [vmem:[%s8 + $0x418] sm:$0xff]
  %v293 = vld [vmem:[%s8 + $0x420] sm:$0xff]
  %v294 = vld [vmem:[%s8 + $0x428] sm:$0xff]
  %v295 = vld [vmem:[%s8 + $0x430] sm:$0xff]
  %v296 = vld [vmem:[%s8 + $0x438] sm:$0xff]
  %v297 = vld [vmem:[%s8 + $0x440] sm:$0xff]
  %v298 = vld [vmem:[%s8 + $0x448] sm:$0xff]
  %v299 = vld [vmem:[%s8 + $0x450] sm:$0xff]
  %v300 = vld [vmem:[%s8 + $0x458] sm:$0xff]
  %v301 = vld [vmem:[%s8 + $0x460] sm:$0xff]
  %v302 = vld [vmem:[%s8 + $0x468] sm:$0xff]
  %v303 = vld [vmem:[%s8 + $0x470] sm:$0xff]
  %v304 = vld [vmem:[%s8 + $0x478] sm:$0xff]
  %v305 = vld [vmem:[%s8 + $0x480] sm:$0xff]
  %v306 = vld [vmem:[%s8 + $0x488] sm:$0xff]
  %v307 = vld [vmem:[%s8 + $0x490] sm:$0xff]
  %v308 = vld [vmem:[%s8 + $0x498] sm:$0xff]
  %v309 = vld [vmem:[%s8 + $0x4a0] sm:$0xff]
  %v310 = vld [vmem:[%s8 + $0x4a8] sm:$0xff]
  %v311 = vld [vmem:[%s8 + $0x4b0] sm:$0xff]
  %v312 = vld [vmem:[%s8 + $0x4b8] sm:$0xff]
  %v313 = vld [vmem:[%s8 + $0x4c0] sm:$0xff]
  %v314 = vld [vmem:[%s8 + $0x4c8] sm:$0xff]
  %v315 = vld [vmem:[%s8 + $0x4d0] sm:$0xff]
  %v316 = vld [vmem:[%s8 + $0x4d8] sm:$0xff]
  %v317 = vld [vmem:[%s8 + $0x4e0] sm:$0xff]
  %v318 = vld [vmem:[%s8 + $0x4e8] sm:$0xff]
  %v319 = vld [vmem:[%s8 + $0x4f0] sm:$0xff]
  %v320 = vld [vmem:[%s8 + $0x4f8] sm:$0xff]
  %v321 = vld [vmem:[%s8 + $0x500] sm:$0xff]
  %v322 = vld [vmem:[%s8 + $0x508] sm:$0xff]
  %v323 = vld [vmem:[%s8 + $0x510] sm:$0xff]
  %v324 = vld [vmem:[%s8 + $0x518] sm:$0xff]
  %v325 = vld [vmem:[%s8 + $0x520] sm:$0xff]
  %v326 = vld [vmem:[%s8 + $0x528] sm:$0xff]
  %v327 = vld [vmem:[%s8 + $0x530] sm:$0xff]
  %v328 = vld [vmem:[%s8 + $0x538] sm:$0xff]
  %v329 = vld [vmem:[%s8 + $0x540] sm:$0xff]
  %v330 = vld [vmem:[%s8 + $0x548] sm:$0xff]
  %v331 = vld [vmem:[%s8 + $0x550] sm:$0xff]
  %v332 = vld [vmem:[%s8 + $0x558] sm:$0xff]
  %v333 = vld [vmem:[%s8 + $0x560] sm:$0xff]
  %v334 = vld [vmem:[%s8 + $0x568] sm:$0xff]
  %v335 = vld [vmem:[%s8 + $0x570] sm:$0xff]
  %v336 = vld [vmem:[%s8 + $0x578] sm:$0xff]
  %v337 = vld [vmem:[%s8 + $0x580] sm:$0xff]
  %v338 = vld [vmem:[%s8 + $0x588] sm:$0xff]
  %v339 = vld [vmem:[%s8 + $0x590] sm:$0xff]
  %v340 = vld [vmem:[%s8 + $0x598] sm:$0xff]
  %v341 = vld [vmem:[%s8 + $0x5a0] sm:$0xff]
  %v342 = vld [vmem:[%s8 + $0x5a8] sm:$0xff]
  %v343 = vld [vmem:[%s8 + $0x5b0] sm:$0xff]
  %v344 = vld [vmem:[%s8 + $0x5b8] sm:$0xff]
  %v345 = vld [vmem:[%s8 + $0x5c0] sm:$0xff]
  %v346 = vld [vmem:[%s8 + $0x5c8] sm:$0xff]
  %v347 = vld [vmem:[%s8 + $0x5d0] sm:$0xff]
  %v348 = vld [vmem:[%s8 + $0x5d8] sm:$0xff]
  %v349 = vld [vmem:[%s8 + $0x5e0] sm:$0xff]
  %v350 = vld [vmem:[%s8 + $0x5e8] sm:$0xff]
  %v351 = vld [vmem:[%s8 + $0x5f0] sm:$0xff]
  %v352 = vld [vmem:[%s8 + $0x5f8] sm:$0xff]
  %v353 = vld [vmem:[%s8 + $0x600] sm:$0xff]
  %v354 = vld [vmem:[%s8 + $0x608] sm:$0xff]
  %v355 = vld [vmem:[%s8 + $0x610] sm:$0xff]
  %v356 = vld [vmem:[%s8 + $0x618] sm:$0xff]
  %v357 = vld [vmem:[%s8 + $0x620] sm:$0xff]
  %v358 = vld [vmem:[%s8 + $0x628] sm:$0xff]
  %v359 = vld [vmem:[%s8 + $0x630] sm:$0xff]
  %v360 = vld [vmem:[%s8 + $0x638] sm:$0xff]
  %v361 = vld [vmem:[%s8 + $0x640] sm:$0xff]
  %v362 = vld [vmem:[%s8 + $0x648] sm:$0xff]
  %v363 = vld [vmem:[%s8 + $0x650] sm:$0xff]
  %v364 = vld [vmem:[%s8 + $0x658] sm:$0xff]
  %v365 = vld [vmem:[%s8 + $0x660] sm:$0xff]
  %v366 = vld [vmem:[%s8 + $0x668] sm:$0xff]
  %v367 = vld [vmem:[%s8 + $0x670] sm:$0xff]
  %v368 = vld [vmem:[%s8 + $0x678] sm:$0xff]
  %v369 = vld [vmem:[%s8 + $0x680] sm:$0xff]
  %v370 = vld [vmem:[%s8 + $0x688] sm:$0xff]
  %v371 = vld [vmem:[%s8 + $0x690] sm:$0xff]
  %v372 = vld [vmem:[%s8 + $0x698] sm:$0xff]
  %v373 = vld [vmem:[%s8 + $0x6a0] sm:$0xff]
  %v374 = vld [vmem:[%s8 + $0x6a8] sm:$0xff]
  %v375 = vld [vmem:[%s8 + $0x6b0] sm:$0xff]
  %v376 = vld [vmem:[%s8 + $0x6b8] sm:$0xff]
  %v377 = vld [vmem:[%s8 + $0x6c0] sm:$0xff]
  %v378 = vld [vmem:[%s8 + $0x6c8] sm:$0xff]
  %v379 = vld [vmem:[%s8 + $0x6d0] sm:$0xff]
  %v380 = vld [vmem:[%s8 + $0x6d8] sm:$0xff]
  %v381 = vld [vmem:[%s8 + $0x6e0] sm:$0xff]
  %v382 = vld [vmem:[%s8 + $0x6e8] sm:$0xff]
  %v383 = vld [vmem:[%s8 + $0x6f0] sm:$0xff]
  %v384 = vld [vmem:[%s8 + $0x6f8] sm:$0xff]
  %v385 = vld [vmem:[%s8 + $0x700] sm:$0xff]
  %v386 = vld [vmem:[%s8 + $0x708] sm:$0xff]
  %v387 = vld [vmem:[%s8 + $0x710] sm:$0xff]
  %v388 = vld [vmem:[%s8 + $0x718] sm:$0xff]
  %v389 = vld [vmem:[%s8 + $0x720] sm:$0xff]
  %v390 = vld [vmem:[%s8 + $0x728] sm:$0xff]
  %v391 = vld [vmem:[%s8 + $0x730] sm:$0xff]
  %v392 = vld [vmem:[%s8 + $0x738] sm:$0xff]
  %v393 = vld [vmem:[%s8 + $0x740] sm:$0xff]
  %v394 = vld [vmem:[%s8 + $0x748] sm:$0xff]
  %v395 = vld [vmem:[%s8 + $0x750] sm:$0xff]
  %v396 = vld [vmem:[%s8 + $0x758] sm:$0xff]
  %v397 = vld [vmem:[%s8 + $0x760] sm:$0xff]
  %v398 = vld [vmem:[%s8 + $0x768] sm:$0xff]
  %v399 = vld [vmem:[%s8 + $0x770] sm:$0xff]
  %v400 = vld [vmem:[%s8 + $0x778] sm:$0xff]
  %v401 = vld [vmem:[%s8 + $0x780] sm:$0xff]
  %v402 = vld [vmem:[%s8 + $0x788] sm:$0xff]
  %v403 = vld [vmem:[%s8 + $0x790] sm:$0xff]
  %v404 = vld [vmem:[%s8 + $0x798] sm:$0xff]
  %v405 = vld [vmem:[%s8 + $0x7a0] sm:$0xff]
  %v406 = vld [vmem:[%s8 + $0x7a8] sm:$0xff]
  %v407 = vld [vmem:[%s8 + $0x7b0] sm:$0xff]
  %v408 = vld [vmem:[%s8 + $0x7b8] sm:$0xff]
  %v409 = vld [vmem:[%s8 + $0x7c0] sm:$0xff]
  %v410 = vld [vmem:[%s8 + $0x7c8] sm:$0xff]
  %v411 = vld [vmem:[%s8 + $0x7d0] sm:$0xff]
  %v412 = vld [vmem:[%s8 + $0x7d8] sm:$0xff]
  %v413 = vld [vmem:[%s8 + $0x7e0] sm:$0xff]
  %v414 = vld [vmem:[%s8 + $0x7e8] sm:$0xff]
  %v415 = vld [vmem:[%s8 + $0x7f0] sm:$0xff]
  %v416 = vld [vmem:[%s8 + $0x7f8] sm:$0xff]
  %v417 = vld [vmem:[%s8 + $0x800] sm:$0xff]
  %v418 = vld [vmem:[%s8 + $0x808] sm:$0xff]
  %v419 = vld [vmem:[%s8 + $0x810] sm:$0xff]
  %v420 = vld [vmem:[%s8 + $0x818] sm:$0xff]
  %v421 = vld [vmem:[%s8 + $0x820] sm:$0xff]
  %v422 = vld [vmem:[%s8 + $0x828] sm:$0xff]
  %v423 = vld [vmem:[%s8 + $0x830] sm:$0xff]
  %v424 = vld [vmem:[%s8 + $0x838] sm:$0xff]
  %v425 = vld [vmem:[%s8 + $0x840] sm:$0xff]
  %v426 = vld [vmem:[%s8 + $0x848] sm:$0xff]
  %v427 = vld [vmem:[%s8 + $0x850] sm:$0xff]
  %v428 = vld [vmem:[%s8 + $0x858] sm:$0xff]
  %v429 = vld [vmem:[%s8 + $0x860] sm:$0xff]
  %v430 = vld [vmem:[%s8 + $0x868] sm:$0xff]
  %v431 = vld [vmem:[%s8 + $0x870] sm:$0xff]
  %v432 = vld [vmem:[%s8 + $0x878] sm:$0xff]
  %v433 = vld [vmem:[%s8 + $0x880] sm:$0xff]
  %v434 = vld [vmem:[%s8 + $0x888] sm:$0xff]
  %v435 = vld [vmem:[%s8 + $0x890] sm:$0xff]
  %v436 = vld [vmem:[%s8 + $0x898] sm:$0xff]
  %v437 = vld [vmem:[%s8 + $0x8a0] sm:$0xff]
  %v438 = vld [vmem:[%s8 + $0x8a8] sm:$0xff]
  %v439 = vld [vmem:[%s8 + $0x8b0] sm:$0xff]
  %v440 = vld [vmem:[%s8 + $0x8b8] sm:$0xff]
  %v441 = vld [vmem:[%s8 + $0x8c0] sm:$0xff]
  %v442 = vld [vmem:[%s8 + $0x8c8] sm:$0xff]
  %v443 = vld [vmem:[%s8 + $0x8d0] sm:$0xff]
  %v444 = vld [vmem:[%s8 + $0x8d8] sm:$0xff]
  %v445 = vld [vmem:[%s8 + $0x8e0] sm:$0xff]
  %v446 = vld [vmem:[%s8 + $0x8e8] sm:$0xff]
  %v447 = vld [vmem:[%s8 + $0x8f0] sm:$0xff]
  %v448 = vld [vmem:[%s8 + $0x8f8] sm:$0xff]
  %v449 = vld [vmem:[%s8 + $0x900] sm:$0xff]
  %v450 = vld [vmem:[%s8 + $0x908] sm:$0xff]
  %v451 = vld [vmem:[%s8 + $0x910] sm:$0xff]
  %v452 = vld [vmem:[%s8 + $0x918] sm:$0xff]
  %v453 = vld [vmem:[%s8 + $0x920] sm:$0xff]
  %v454 = vld [vmem:[%s8 + $0x928] sm:$0xff]
  %v455 = vld [vmem:[%s8 + $0x930] sm:$0xff]
  %v456 = vld [vmem:[%s8 + $0x938] sm:$0xff]
  %v457 = vld [vmem:[%s8 + $0x940] sm:$0xff]
  %v458 = vld [vmem:[%s8 + $0x948] sm:$0xff]
  %v459 = vld [vmem:[%s8 + $0x950] sm:$0xff]
  %v460 = vld [vmem:[%s8 + $0x958] sm:$0xff]
  %v461 = vld [vmem:[%s8 + $0x960] sm:$0xff]
  %v462 = vld [vmem:[%s8 + $0x968] sm:$0xff]
  %v463 = vld [vmem:[%s8 + $0x970] sm:$0xff]
  %v464 = vld [vmem:[%s8 + $0x978] sm:$0xff]
  %v465 = vld [vmem:[%s8 + $0x980] sm:$0xff]
  %v466 = vld [vmem:[%s8 + $0x988] sm:$0xff]
  %v467 = vld [vmem:[%s8 + $0x990] sm:$0xff]
  %v468 = vld [vmem:[%s8 + $0x998] sm:$0xff]
  %v469 = vld [vmem:[%s8 + $0x9a0] sm:$0xff]
  %v470 = vld [vmem:[%s8 + $0x9a8] sm:$0xff]
  %v471 = vld [vmem:[%s8 + $0x9b0] sm:$0xff]
  %v472 = vld [vmem:[%s8 + $0x9b8] sm:$0xff]
  %v473 = vld [vmem:[%s8 + $0x9c0] sm:$0xff]
  %v474 = vld [vmem:[%s8 + $0x9c8] sm:$0xff]
  %v475 = vld [vmem:[%s8 + $0x9d0] sm:$0xff]
  %v476 = vld [vmem:[%s8 + $0x9d8] sm:$0xff]
  %v477 = vld [vmem:[%s8 + $0x9e0] sm:$0xff]
  %v478 = vld [vmem:[%s8 + $0x9e8] sm:$0xff]
  %v479 = vld [vmem:[%s8 + $0x9f0] sm:$0xff]
  %v480 = vld [vmem:[%s8 + $0x9f8] sm:$0xff]
  %v481 = vld [vmem:[%s8 + $0xa00] sm:$0xff]
  %v482 = vld [vmem:[%s8 + $0xa08] sm:$0xff]
  %v483 = vld [vmem:[%s8 + $0xa10] sm:$0xff]
  %v484 = vld [vmem:[%s8 + $0xa18] sm:$0xff]
  %v485 = vld [vmem:[%s8 + $0xa20] sm:$0xff]
  %v486 = vld [vmem:[%s8 + $0xa28] sm:$0xff]
  %v487 = vld [vmem:[%s8 + $0xa30] sm:$0xff]
  %v488 = vld [vmem:[%s8 + $0xa38] sm:$0xff]
  %v489 = vld [vmem:[%s8 + $0xa40] sm:$0xff]
  %v490 = vld [vmem:[%s8 + $0xa48] sm:$0xff]
  %v491 = vld [vmem:[%s8 + $0xa50] sm:$0xff]
  %v492 = vld [vmem:[%s8 + $0xa58] sm:$0xff]
  %v493 = vld [vmem:[%s8 + $0xa60] sm:$0xff]
  %v494 = vld [vmem:[%s8 + $0xa68] sm:$0xff]
  %v495 = vld [vmem:[%s8 + $0xa70] sm:$0xff]
  %v496 = vld [vmem:[%s8 + $0xa78] sm:$0xff]
  %v497 = vld [vmem:[%s8 + $0xa80] sm:$0xff]
  %v498 = vld [vmem:[%s8 + $0xa88] sm:$0xff]
  %v499 = vld [vmem:[%s8 + $0xa90] sm:$0xff]
  %v500 = vld [vmem:[%s8 + $0xa98] sm:$0xff]
  %v501 = vld [vmem:[%s8 + $0xaa0] sm:$0xff]
  %v502 = vld [vmem:[%s8 + $0xaa8] sm:$0xff]
  %v503 = vld [vmem:[%s8 + $0xab0] sm:$0xff]
  %v504 = vld [vmem:[%s8 + $0xab8] sm:$0xff]
  %v505 = vld [vmem:[%s8 + $0xac0] sm:$0xff]
  %v506 = vld [vmem:[%s8 + $0xac8] sm:$0xff]
  %v507 = vld [vmem:[%s8 + $0xad0] sm:$0xff]
  %v508 = vld [vmem:[%s8 + $0xad8] sm:$0xff]
  %v509 = vld [vmem:[%s8 + $0xae0] sm:$0xff]
  %v510 = vld [vmem:[%s8 + $0xae8] sm:$0xff]
  %v511 = vld [vmem:[%s8 + $0xaf0] sm:$0xff]
  %v512 = vld [vmem:[%s8 + $0xaf8] sm:$0xff]
  %v513 = vld [vmem:[%s8 + $0xb00] sm:$0xff]
  %v514 = vld [vmem:[%s8 + $0xb08] sm:$0xff]
  %v515 = vld [vmem:[%s8 + $0xb10] sm:$0xff]
  %v516 = vld [vmem:[%s8 + $0xb18] sm:$0xff]
  %v517 = vld [vmem:[%s8 + $0xb20] sm:$0xff]
  %v518 = vld [vmem:[%s8 + $0xb28] sm:$0xff]
  %v519 = vld [vmem:[%s8 + $0xb30] sm:$0xff]
  %v520 = vld [vmem:[%s8 + $0xb38] sm:$0xff]
  %v521 = vld [vmem:[%s8 + $0xb40] sm:$0xff]
  %v522 = vld [vmem:[%s8 + $0xb48] sm:$0xff]
  %v523 = vld [vmem:[%s8 + $0xb50] sm:$0xff]
  %v524 = vld [vmem:[%s8 + $0xb58] sm:$0xff]
  %v525 = vld [vmem:[%s8 + $0xb60] sm:$0xff]
  %v526 = vld [vmem:[%s8 + $0xb68] sm:$0xff]
  %v527 = vld [vmem:[%s8 + $0xb70] sm:$0xff]
  %v528 = vld [vmem:[%s8 + $0xb78] sm:$0xff]
  %v529 = vld [vmem:[%s8 + $0xb80] sm:$0xff]
  %v530 = vld [vmem:[%s8 + $0xb88] sm:$0xff]
  %v531 = vld [vmem:[%s8 + $0xb90] sm:$0xff]
  %v532 = vld [vmem:[%s8 + $0xb98] sm:$0xff]
  %v533 = vld [vmem:[%s8 + $0xba0] sm:$0xff]
  %v534 = vld [vmem:[%s8 + $0xba8] sm:$0xff]
  %v535 = vld [vmem:[%s8 + $0xbb0] sm:$0xff]
  %v536 = vld [vmem:[%s8 + $0xbb8] sm:$0xff]
  %v537 = vld [vmem:[%s8 + $0xbc0] sm:$0xff]
  %v538 = vld [vmem:[%s8 + $0xbc8] sm:$0xff]
  %v539 = vld [vmem:[%s8 + $0xbd0] sm:$0xff]
  %v540 = vld [vmem:[%s8 + $0xbd8] sm:$0xff]
  %v541 = vld [vmem:[%s8 + $0xbe0] sm:$0xff]
  %v542 = vld [vmem:[%s8 + $0xbe8] sm:$0xff]
  %v543 = vld [vmem:[%s8 + $0xbf0] sm:$0xff]
  %v544 = vld [vmem:[%s8 + $0xbf8] sm:$0xff]
  %v545 = vld [vmem:[%s8 + $0xc00] sm:$0xff]
  %v546 = vld [vmem:[%s8 + $0xc08] sm:$0xff]
  %v547 = vld [vmem:[%s8 + $0xc10] sm:$0xff]
  %v548 = vld [vmem:[%s8 + $0xc18] sm:$0xff]
  %v549 = vld [vmem:[%s8 + $0xc20] sm:$0xff]
  %v550 = vld [vmem:[%s8 + $0xc28] sm:$0xff]
  %v551 = vld [vmem:[%s8 + $0xc30] sm:$0xff]
  %v552 = vld [vmem:[%s8 + $0xc38] sm:$0xff]
  %v553 = vld [vmem:[%s9] sm:$0xf]
  %v555 = vperm.slane %v553, 0
  %v556 = vperm.slane %v553, 1
  %v557 = vperm.slane %v553, 2
  %v558 = vperm.slane %v553, 3
  %vm563 = vcmask 130048
  %v565 = vsel %vm563, %v160, 0
  %567 = vmatpush.msra.mxu0 %v221
  %568 = vmatpush.msra.mxu0 %v217
  %569 = vmatpush.msra.mxu0 %v213
  %570 = vmatpush.msra.mxu0 %v209
  %571 = vmatpush.msra.mxu0 %v205
  %572 = vmatpush.msra.mxu0 %v201
  %573 = vmatpush.msra.mxu0 %v197
  %574 = vmatpush.msra.mxu0 %v193
  %575 = vmatpush.msra.mxu0 %v189
  %576 = vmatpush.msra.mxu0 %v185
  %577 = vmatpush.msra.mxu0 %v181
  %578 = vmatpush.msra.mxu0 %v177
  %579 = vmatpush.msra.mxu0 %v173
  %580 = vmatpush.msra.mxu0 %v169
  %581 = vmatpush.msra.mxu0 %v165
  %582 = vmatpush.msra.mxu0 %v161
  %583 = vmatmul.f32.gmra.mxu0 %v154
  %v584 = vpop.f32.mrf.mxu0
  %v585 = vadd.f32 %v555, %v584
  %586 = vdwg.mxu0
  %587 = vmatpush.msra.mxu0 %v285
  %588 = vmatpush.msra.mxu0 %v281
  %589 = vmatpush.msra.mxu0 %v277
  %590 = vmatpush.msra.mxu0 %v273
  %591 = vmatpush.msra.mxu0 %v269
  %592 = vmatpush.msra.mxu0 %v265
  %593 = vmatpush.msra.mxu0 %v261
  %594 = vmatpush.msra.mxu0 %v257
  %595 = vmatpush.msra.mxu0 %v253
  %596 = vmatpush.msra.mxu0 %v249
  %597 = vmatpush.msra.mxu0 %v245
  %598 = vmatpush.msra.mxu0 %v241
  %599 = vmatpush.msra.mxu0 %v237
  %600 = vmatpush.msra.mxu0 %v233
  %601 = vmatpush.msra.mxu0 %v229
  %602 = vmatpush.msra.mxu0 %v225
  %603 = vmatmul.f32.gmra.mxu0 %v155
  %v604 = vpop.f32.mrf.mxu0
  %v605 = vadd.f32 %v585, %v604
  %606 = vdwg.mxu0
  %607 = vmatpush.msra.mxu0 %v349
  %608 = vmatpush.msra.mxu0 %v345
  %609 = vmatpush.msra.mxu0 %v341
  %610 = vmatpush.msra.mxu0 %v337
  %611 = vmatpush.msra.mxu0 %v333
  %612 = vmatpush.msra.mxu0 %v329
  %613 = vmatpush.msra.mxu0 %v325
  %614 = vmatpush.msra.mxu0 %v321
  %615 = vmatpush.msra.mxu0 %v317
  %616 = vmatpush.msra.mxu0 %v313
  %617 = vmatpush.msra.mxu0 %v309
  %618 = vmatpush.msra.mxu0 %v305
  %619 = vmatpush.msra.mxu0 %v301
  %620 = vmatpush.msra.mxu0 %v297
  %621 = vmatpush.msra.mxu0 %v293
  %622 = vmatpush.msra.mxu0 %v289
  %623 = vmatmul.f32.gmra.mxu0 %v156
  %v624 = vpop.f32.mrf.mxu0
  %v625 = vadd.f32 %v605, %v624
  %626 = vdwg.mxu0
  %627 = vmatpush.msra.mxu0 %v413
  %628 = vmatpush.msra.mxu0 %v409
  %629 = vmatpush.msra.mxu0 %v405
  %630 = vmatpush.msra.mxu0 %v401
  %631 = vmatpush.msra.mxu0 %v397
  %632 = vmatpush.msra.mxu0 %v393
  %633 = vmatpush.msra.mxu0 %v389
  %634 = vmatpush.msra.mxu0 %v385
  %635 = vmatpush.msra.mxu0 %v381
  %636 = vmatpush.msra.mxu0 %v377
  %637 = vmatpush.msra.mxu0 %v373
  %638 = vmatpush.msra.mxu0 %v369
  %639 = vmatpush.msra.mxu0 %v365
  %640 = vmatpush.msra.mxu0 %v361
  %641 = vmatpush.msra.mxu0 %v357
  %642 = vmatpush.msra.mxu0 %v353
  %643 = vmatmul.f32.gmra.mxu0 %v157
  %v644 = vpop.f32.mrf.mxu0
  %v645 = vadd.f32 %v625, %v644
  %646 = vdwg.mxu0
  %647 = vmatpush.msra.mxu0 %v477
  %648 = vmatpush.msra.mxu0 %v473
  %649 = vmatpush.msra.mxu0 %v469
  %650 = vmatpush.msra.mxu0 %v465
  %651 = vmatpush.msra.mxu0 %v461
  %652 = vmatpush.msra.mxu0 %v457
  %653 = vmatpush.msra.mxu0 %v453
  %654 = vmatpush.msra.mxu0 %v449
  %655 = vmatpush.msra.mxu0 %v445
  %656 = vmatpush.msra.mxu0 %v441
  %657 = vmatpush.msra.mxu0 %v437
  %658 = vmatpush.msra.mxu0 %v433
  %659 = vmatpush.msra.mxu0 %v429
  %660 = vmatpush.msra.mxu0 %v425
  %661 = vmatpush.msra.mxu0 %v421
  %662 = vmatpush.msra.mxu0 %v417
  %663 = vmatmul.f32.gmra.mxu0 %v158
  %v664 = vpop.f32.mrf.mxu0
  %v665 = vadd.f32 %v645, %v664
  %666 = vdwg.mxu0
  %667 = vmatpush.msra.mxu0 %v541
  %668 = vmatpush.msra.mxu0 %v537
  %669 = vmatpush.msra.mxu0 %v533
  %670 = vmatpush.msra.mxu0 %v529
  %671 = vmatpush.msra.mxu0 %v525
  %672 = vmatpush.msra.mxu0 %v521
  %673 = vmatpush.msra.mxu0 %v517
  %674 = vmatpush.msra.mxu0 %v513
  %675 = vmatpush.msra.mxu0 %v509
  %676 = vmatpush.msra.mxu0 %v505
  %677 = vmatpush.msra.mxu0 %v501
  %678 = vmatpush.msra.mxu0 %v497
  %679 = vmatpush.msra.mxu0 %v493
  %680 = vmatpush.msra.mxu0 %v489
  %681 = vmatpush.msra.mxu0 %v485
  %682 = vmatpush.msra.mxu0 %v481
  %683 = vmatmul.f32.gmra.mxu0 %v159
  %v684 = vpop.f32.mrf.mxu0
  %v685 = vadd.f32 %v665, %v684
  %686 = vdwg.mxu0
  %687 = vmatpush.msra.mxu0 0.0
  %688 = vmatpush.msra.mxu0 0.0
  %689 = vmatpush.msra.mxu0 0.0
  %690 = vmatpush.msra.mxu0 0.0
  %691 = vmatpush.msra.mxu0 0.0
  %692 = vmatpush.msra.mxu0 0.0
  %693 = vmatpush.msra.mxu0 0.0
  %694 = vmatpush.msra.mxu0 0.0
  %695 = vmatpush.msra.mxu0 0.0
  %696 = vmatpush.msra.mxu0 0.0
  %697 = vmatpush.msra.mxu0 0.0
  %698 = vmatpush.msra.mxu0 0.0
  %699 = vmatpush.msra.mxu0 0.0
  %700 = vmatpush.msra.mxu0 0.0
  %701 = vmatpush.msra.mxu0 %v549
  %702 = vmatpush.msra.mxu0 %v545
  %703 = vmatmul.f32.gmra.mxu0 %v565
  %v704 = vpop.f32.mrf.mxu0
  %v705 = vadd.f32 %v685, %v704
  %706 = vdwg.mxu0
  %707 = vmatpush.msra.mxu0 %v222
  %708 = vmatpush.msra.mxu0 %v218
  %709 = vmatpush.msra.mxu0 %v214
  %710 = vmatpush.msra.mxu0 %v210
  %711 = vmatpush.msra.mxu0 %v206
  %712 = vmatpush.msra.mxu0 %v202
  %713 = vmatpush.msra.mxu0 %v198
  %714 = vmatpush.msra.mxu0 %v194
  %715 = vmatpush.msra.mxu0 %v190
  %716 = vmatpush.msra.mxu0 %v186
  %717 = vmatpush.msra.mxu0 %v182
  %718 = vmatpush.msra.mxu0 %v178
  %719 = vmatpush.msra.mxu0 %v174
  %720 = vmatpush.msra.mxu0 %v170
  %721 = vmatpush.msra.mxu0 %v166
  %722 = vmatpush.msra.mxu0 %v162
  %723 = vmatmul.f32.gmra.mxu0 %v154
  %v724 = vpop.f32.mrf.mxu0
  %v725 = vadd.f32 %v556, %v724
  %726 = vdwg.mxu0
  %727 = vmatpush.msra.mxu0 %v286
  %728 = vmatpush.msra.mxu0 %v282
  %729 = vmatpush.msra.mxu0 %v278
  %730 = vmatpush.msra.mxu0 %v274
  %731 = vmatpush.msra.mxu0 %v270
  %732 = vmatpush.msra.mxu0 %v266
  %733 = vmatpush.msra.mxu0 %v262
  %734 = vmatpush.msra.mxu0 %v258
  %735 = vmatpush.msra.mxu0 %v254
  %736 = vmatpush.msra.mxu0 %v250
  %737 = vmatpush.msra.mxu0 %v246
  %738 = vmatpush.msra.mxu0 %v242
  %739 = vmatpush.msra.mxu0 %v238
  %740 = vmatpush.msra.mxu0 %v234
  %741 = vmatpush.msra.mxu0 %v230
  %742 = vmatpush.msra.mxu0 %v226
  %743 = vmatmul.f32.gmra.mxu0 %v155
  %v744 = vpop.f32.mrf.mxu0
  %v745 = vadd.f32 %v725, %v744
  %746 = vdwg.mxu0
  %747 = vmatpush.msra.mxu0 %v350
  %748 = vmatpush.msra.mxu0 %v346
  %749 = vmatpush.msra.mxu0 %v342
  %750 = vmatpush.msra.mxu0 %v338
  %751 = vmatpush.msra.mxu0 %v334
  %752 = vmatpush.msra.mxu0 %v330
  %753 = vmatpush.msra.mxu0 %v326
  %754 = vmatpush.msra.mxu0 %v322
  %755 = vmatpush.msra.mxu0 %v318
  %756 = vmatpush.msra.mxu0 %v314
  %757 = vmatpush.msra.mxu0 %v310
  %758 = vmatpush.msra.mxu0 %v306
  %759 = vmatpush.msra.mxu0 %v302
  %760 = vmatpush.msra.mxu0 %v298
  %761 = vmatpush.msra.mxu0 %v294
  %762 = vmatpush.msra.mxu0 %v290
  %763 = vmatmul.f32.gmra.mxu0 %v156
  %v764 = vpop.f32.mrf.mxu0
  %v765 = vadd.f32 %v745, %v764
  %766 = vdwg.mxu0
  %767 = vmatpush.msra.mxu0 %v414
  %768 = vmatpush.msra.mxu0 %v410
  %769 = vmatpush.msra.mxu0 %v406
  %770 = vmatpush.msra.mxu0 %v402
  %771 = vmatpush.msra.mxu0 %v398
  %772 = vmatpush.msra.mxu0 %v394
  %773 = vmatpush.msra.mxu0 %v390
  %774 = vmatpush.msra.mxu0 %v386
  %775 = vmatpush.msra.mxu0 %v382
  %776 = vmatpush.msra.mxu0 %v378
  %777 = vmatpush.msra.mxu0 %v374
  %778 = vmatpush.msra.mxu0 %v370
  %779 = vmatpush.msra.mxu0 %v366
  %780 = vmatpush.msra.mxu0 %v362
  %781 = vmatpush.msra.mxu0 %v358
  %782 = vmatpush.msra.mxu0 %v354
  %783 = vmatmul.f32.gmra.mxu0 %v157
  %v784 = vpop.f32.mrf.mxu0
  %v785 = vadd.f32 %v765, %v784
  %786 = vdwg.mxu0
  %787 = vmatpush.msra.mxu0 %v478
  %788 = vmatpush.msra.mxu0 %v474
  %789 = vmatpush.msra.mxu0 %v470
  %790 = vmatpush.msra.mxu0 %v466
  %791 = vmatpush.msra.mxu0 %v462
  %792 = vmatpush.msra.mxu0 %v458
  %793 = vmatpush.msra.mxu0 %v454
  %794 = vmatpush.msra.mxu0 %v450
  %795 = vmatpush.msra.mxu0 %v446
  %796 = vmatpush.msra.mxu0 %v442
  %797 = vmatpush.msra.mxu0 %v438
  %798 = vmatpush.msra.mxu0 %v434
  %799 = vmatpush.msra.mxu0 %v430
  %800 = vmatpush.msra.mxu0 %v426
  %801 = vmatpush.msra.mxu0 %v422
  %802 = vmatpush.msra.mxu0 %v418
  %803 = vmatmul.f32.gmra.mxu0 %v158
  %v804 = vpop.f32.mrf.mxu0
  %v805 = vadd.f32 %v785, %v804
  %806 = vdwg.mxu0
  %807 = vmatpush.msra.mxu0 %v542
  %808 = vmatpush.msra.mxu0 %v538
  %809 = vmatpush.msra.mxu0 %v534
  %810 = vmatpush.msra.mxu0 %v530
  %811 = vmatpush.msra.mxu0 %v526
  %812 = vmatpush.msra.mxu0 %v522
  %813 = vmatpush.msra.mxu0 %v518
  %814 = vmatpush.msra.mxu0 %v514
  %815 = vmatpush.msra.mxu0 %v510
  %816 = vmatpush.msra.mxu0 %v506
  %817 = vmatpush.msra.mxu0 %v502
  %818 = vmatpush.msra.mxu0 %v498
  %819 = vmatpush.msra.mxu0 %v494
  %820 = vmatpush.msra.mxu0 %v490
  %821 = vmatpush.msra.mxu0 %v486
  %822 = vmatpush.msra.mxu0 %v482
  %823 = vmatmul.f32.gmra.mxu0 %v159
  %v824 = vpop.f32.mrf.mxu0
  %v825 = vadd.f32 %v805, %v824
  %826 = vdwg.mxu0
  %827 = vmatpush.msra.mxu0 0.0
  %828 = vmatpush.msra.mxu0 0.0
  %829 = vmatpush.msra.mxu0 0.0
  %830 = vmatpush.msra.mxu0 0.0
  %831 = vmatpush.msra.mxu0 0.0
  %832 = vmatpush.msra.mxu0 0.0
  %833 = vmatpush.msra.mxu0 0.0
  %834 = vmatpush.msra.mxu0 0.0
  %835 = vmatpush.msra.mxu0 0.0
  %836 = vmatpush.msra.mxu0 0.0
  %837 = vmatpush.msra.mxu0 0.0
  %838 = vmatpush.msra.mxu0 0.0
  %839 = vmatpush.msra.mxu0 0.0
  %840 = vmatpush.msra.mxu0 0.0
  %841 = vmatpush.msra.mxu0 %v550
  %842 = vmatpush.msra.mxu0 %v546
  %843 = vmatmul.f32.gmra.mxu0 %v565
  %v844 = vpop.f32.mrf.mxu0
  %v845 = vadd.f32 %v825, %v844
  %846 = vdwg.mxu0
  %847 = vmatpush.msra.mxu0 %v223
  %848 = vmatpush.msra.mxu0 %v219
  %849 = vmatpush.msra.mxu0 %v215
  %850 = vmatpush.msra.mxu0 %v211
  %851 = vmatpush.msra.mxu0 %v207
  %852 = vmatpush.msra.mxu0 %v203
  %853 = vmatpush.msra.mxu0 %v199
  %854 = vmatpush.msra.mxu0 %v195
  %855 = vmatpush.msra.mxu0 %v191
  %856 = vmatpush.msra.mxu0 %v187
  %857 = vmatpush.msra.mxu0 %v183
  %858 = vmatpush.msra.mxu0 %v179
  %859 = vmatpush.msra.mxu0 %v175
  %860 = vmatpush.msra.mxu0 %v171
  %861 = vmatpush.msra.mxu0 %v167
  %862 = vmatpush.msra.mxu0 %v163
  %863 = vmatmul.f32.gmra.mxu0 %v154
  %v864 = vpop.f32.mrf.mxu0
  %v865 = vadd.f32 %v557, %v864
  %866 = vdwg.mxu0
  %867 = vmatpush.msra.mxu0 %v287
  %868 = vmatpush.msra.mxu0 %v283
  %869 = vmatpush.msra.mxu0 %v279
  %870 = vmatpush.msra.mxu0 %v275
  %871 = vmatpush.msra.mxu0 %v271
  %872 = vmatpush.msra.mxu0 %v267
  %873 = vmatpush.msra.mxu0 %v263
  %874 = vmatpush.msra.mxu0 %v259
  %875 = vmatpush.msra.mxu0 %v255
  %876 = vmatpush.msra.mxu0 %v251
  %877 = vmatpush.msra.mxu0 %v247
  %878 = vmatpush.msra.mxu0 %v243
  %879 = vmatpush.msra.mxu0 %v239
  %880 = vmatpush.msra.mxu0 %v235
  %881 = vmatpush.msra.mxu0 %v231
  %882 = vmatpush.msra.mxu0 %v227
  %883 = vmatmul.f32.gmra.mxu0 %v155
  %v884 = vpop.f32.mrf.mxu0
  %v885 = vadd.f32 %v865, %v884
  %886 = vdwg.mxu0
  %887 = vmatpush.msra.mxu0 %v351
  %888 = vmatpush.msra.mxu0 %v347
  %889 = vmatpush.msra.mxu0 %v343
  %890 = vmatpush.msra.mxu0 %v339
  %891 = vmatpush.msra.mxu0 %v335
  %892 = vmatpush.msra.mxu0 %v331
  %893 = vmatpush.msra.mxu0 %v327
  %894 = vmatpush.msra.mxu0 %v323
  %895 = vmatpush.msra.mxu0 %v319
  %896 = vmatpush.msra.mxu0 %v315
  %897 = vmatpush.msra.mxu0 %v311
  %898 = vmatpush.msra.mxu0 %v307
  %899 = vmatpush.msra.mxu0 %v303
  %900 = vmatpush.msra.mxu0 %v299
  %901 = vmatpush.msra.mxu0 %v295
  %902 = vmatpush.msra.mxu0 %v291
  %903 = vmatmul.f32.gmra.mxu0 %v156
  %v904 = vpop.f32.mrf.mxu0
  %v905 = vadd.f32 %v885, %v904
  %906 = vdwg.mxu0
  %907 = vmatpush.msra.mxu0 %v415
  %908 = vmatpush.msra.mxu0 %v411
  %909 = vmatpush.msra.mxu0 %v407
  %910 = vmatpush.msra.mxu0 %v403
  %911 = vmatpush.msra.mxu0 %v399
  %912 = vmatpush.msra.mxu0 %v395
  %913 = vmatpush.msra.mxu0 %v391
  %914 = vmatpush.msra.mxu0 %v387
  %915 = vmatpush.msra.mxu0 %v383
  %916 = vmatpush.msra.mxu0 %v379
  %917 = vmatpush.msra.mxu0 %v375
  %918 = vmatpush.msra.mxu0 %v371
  %919 = vmatpush.msra.mxu0 %v367
  %920 = vmatpush.msra.mxu0 %v363
  %921 = vmatpush.msra.mxu0 %v359
  %922 = vmatpush.msra.mxu0 %v355
  %923 = vmatmul.f32.gmra.mxu0 %v157
  %v924 = vpop.f32.mrf.mxu0
  %v925 = vadd.f32 %v905, %v924
  %926 = vdwg.mxu0
  %927 = vmatpush.msra.mxu0 %v479
  %928 = vmatpush.msra.mxu0 %v475
  %929 = vmatpush.msra.mxu0 %v471
  %930 = vmatpush.msra.mxu0 %v467
  %931 = vmatpush.msra.mxu0 %v463
  %932 = vmatpush.msra.mxu0 %v459
  %933 = vmatpush.msra.mxu0 %v455
  %934 = vmatpush.msra.mxu0 %v451
  %935 = vmatpush.msra.mxu0 %v447
  %936 = vmatpush.msra.mxu0 %v443
  %937 = vmatpush.msra.mxu0 %v439
  %938 = vmatpush.msra.mxu0 %v435
  %939 = vmatpush.msra.mxu0 %v431
  %940 = vmatpush.msra.mxu0 %v427
  %941 = vmatpush.msra.mxu0 %v423
  %942 = vmatpush.msra.mxu0 %v419
  %943 = vmatmul.f32.gmra.mxu0 %v158
  %v944 = vpop.f32.mrf.mxu0
  %v945 = vadd.f32 %v925, %v944
  %946 = vdwg.mxu0
  %947 = vmatpush.msra.mxu0 %v543
  %948 = vmatpush.msra.mxu0 %v539
  %949 = vmatpush.msra.mxu0 %v535
  %950 = vmatpush.msra.mxu0 %v531
  %951 = vmatpush.msra.mxu0 %v527
  %952 = vmatpush.msra.mxu0 %v523
  %953 = vmatpush.msra.mxu0 %v519
  %954 = vmatpush.msra.mxu0 %v515
  %955 = vmatpush.msra.mxu0 %v511
  %956 = vmatpush.msra.mxu0 %v507
  %957 = vmatpush.msra.mxu0 %v503
  %958 = vmatpush.msra.mxu0 %v499
  %959 = vmatpush.msra.mxu0 %v495
  %960 = vmatpush.msra.mxu0 %v491
  %961 = vmatpush.msra.mxu0 %v487
  %962 = vmatpush.msra.mxu0 %v483
  %963 = vmatmul.f32.gmra.mxu0 %v159
  %v964 = vpop.f32.mrf.mxu0
  %v965 = vadd.f32 %v945, %v964
  %966 = vdwg.mxu0
  %967 = vmatpush.msra.mxu0 0.0
  %968 = vmatpush.msra.mxu0 0.0
  %969 = vmatpush.msra.mxu0 0.0
  %970 = vmatpush.msra.mxu0 0.0
  %971 = vmatpush.msra.mxu0 0.0
  %972 = vmatpush.msra.mxu0 0.0
  %973 = vmatpush.msra.mxu0 0.0
  %974 = vmatpush.msra.mxu0 0.0
  %975 = vmatpush.msra.mxu0 0.0
  %976 = vmatpush.msra.mxu0 0.0
  %977 = vmatpush.msra.mxu0 0.0
  %978 = vmatpush.msra.mxu0 0.0
  %979 = vmatpush.msra.mxu0 0.0
  %980 = vmatpush.msra.mxu0 0.0
  %981 = vmatpush.msra.mxu0 %v551
  %982 = vmatpush.msra.mxu0 %v547
  %983 = vmatmul.f32.gmra.mxu0 %v565
  %v984 = vpop.f32.mrf.mxu0
  %v985 = vadd.f32 %v965, %v984
  %986 = vdwg.mxu0
  %987 = vmatpush.msra.mxu0 %v224
  %988 = vmatpush.msra.mxu0 %v220
  %989 = vmatpush.msra.mxu0 %v216
  %990 = vmatpush.msra.mxu0 %v212
  %991 = vmatpush.msra.mxu0 %v208
  %992 = vmatpush.msra.mxu0 %v204
  %993 = vmatpush.msra.mxu0 %v200
  %994 = vmatpush.msra.mxu0 %v196
  %995 = vmatpush.msra.mxu0 %v192
  %996 = vmatpush.msra.mxu0 %v188
  %997 = vmatpush.msra.mxu0 %v184
  %998 = vmatpush.msra.mxu0 %v180
  %999 = vmatpush.msra.mxu0 %v176
  %1000 = vmatpush.msra.mxu0 %v172
  %1001 = vmatpush.msra.mxu0 %v168
  %1002 = vmatpush.msra.mxu0 %v164
  %1003 = vmatmul.f32.gmra.mxu0 %v154
  %v1004 = vpop.f32.mrf.mxu0
  %v1005 = vadd.f32 %v558, %v1004
  %1006 = vdwg.mxu0
  %1007 = vmatpush.msra.mxu0 %v288
  %1008 = vmatpush.msra.mxu0 %v284
  %1009 = vmatpush.msra.mxu0 %v280
  %1010 = vmatpush.msra.mxu0 %v276
  %1011 = vmatpush.msra.mxu0 %v272
  %1012 = vmatpush.msra.mxu0 %v268
  %1013 = vmatpush.msra.mxu0 %v264
  %1014 = vmatpush.msra.mxu0 %v260
  %1015 = vmatpush.msra.mxu0 %v256
  %1016 = vmatpush.msra.mxu0 %v252
  %1017 = vmatpush.msra.mxu0 %v248
  %1018 = vmatpush.msra.mxu0 %v244
  %1019 = vmatpush.msra.mxu0 %v240
  %1020 = vmatpush.msra.mxu0 %v236
  %1021 = vmatpush.msra.mxu0 %v232
  %1022 = vmatpush.msra.mxu0 %v228
  %1023 = vmatmul.f32.gmra.mxu0 %v155
  %v1024 = vpop.f32.mrf.mxu0
  %v1025 = vadd.f32 %v1005, %v1024
  %1026 = vdwg.mxu0
  %1027 = vmatpush.msra.mxu0 %v352
  %1028 = vmatpush.msra.mxu0 %v348
  %1029 = vmatpush.msra.mxu0 %v344
  %1030 = vmatpush.msra.mxu0 %v340
  %1031 = vmatpush.msra.mxu0 %v336
  %1032 = vmatpush.msra.mxu0 %v332
  %1033 = vmatpush.msra.mxu0 %v328
  %1034 = vmatpush.msra.mxu0 %v324
  %1035 = vmatpush.msra.mxu0 %v320
  %1036 = vmatpush.msra.mxu0 %v316
  %1037 = vmatpush.msra.mxu0 %v312
  %1038 = vmatpush.msra.mxu0 %v308
  %1039 = vmatpush.msra.mxu0 %v304
  %1040 = vmatpush.msra.mxu0 %v300
  %1041 = vmatpush.msra.mxu0 %v296
  %1042 = vmatpush.msra.mxu0 %v292
  %1043 = vmatmul.f32.gmra.mxu0 %v156
  %v1044 = vpop.f32.mrf.mxu0
  %v1045 = vadd.f32 %v1025, %v1044
  %1046 = vdwg.mxu0
  %1047 = vmatpush.msra.mxu0 %v416
  %1048 = vmatpush.msra.mxu0 %v412
  %1049 = vmatpush.msra.mxu0 %v408
  %1050 = vmatpush.msra.mxu0 %v404
  %1051 = vmatpush.msra.mxu0 %v400
  %1052 = vmatpush.msra.mxu0 %v396
  %1053 = vmatpush.msra.mxu0 %v392
  %1054 = vmatpush.msra.mxu0 %v388
  %1055 = vmatpush.msra.mxu0 %v384
  %1056 = vmatpush.msra.mxu0 %v380
  %1057 = vmatpush.msra.mxu0 %v376
  %1058 = vmatpush.msra.mxu0 %v372
  %1059 = vmatpush.msra.mxu0 %v368
  %1060 = vmatpush.msra.mxu0 %v364
  %1061 = vmatpush.msra.mxu0 %v360
  %1062 = vmatpush.msra.mxu0 %v356
  %1063 = vmatmul.f32.gmra.mxu0 %v157
  %v1064 = vpop.f32.mrf.mxu0
  %v1065 = vadd.f32 %v1045, %v1064
  %1066 = vdwg.mxu0
  %1067 = vmatpush.msra.mxu0 %v480
  %1068 = vmatpush.msra.mxu0 %v476
  %1069 = vmatpush.msra.mxu0 %v472
  %1070 = vmatpush.msra.mxu0 %v468
  %1071 = vmatpush.msra.mxu0 %v464
  %1072 = vmatpush.msra.mxu0 %v460
  %1073 = vmatpush.msra.mxu0 %v456
  %1074 = vmatpush.msra.mxu0 %v452
  %1075 = vmatpush.msra.mxu0 %v448
  %1076 = vmatpush.msra.mxu0 %v444
  %1077 = vmatpush.msra.mxu0 %v440
  %1078 = vmatpush.msra.mxu0 %v436
  %1079 = vmatpush.msra.mxu0 %v432
  %1080 = vmatpush.msra.mxu0 %v428
  %1081 = vmatpush.msra.mxu0 %v424
  %1082 = vmatpush.msra.mxu0 %v420
  %1083 = vmatmul.f32.gmra.mxu0 %v158
  %v1084 = vpop.f32.mrf.mxu0
  %v1085 = vadd.f32 %v1065, %v1084
  %1086 = vdwg.mxu0
  %1087 = vmatpush.msra.mxu0 %v544
  %1088 = vmatpush.msra.mxu0 %v540
  %1089 = vmatpush.msra.mxu0 %v536
  %1090 = vmatpush.msra.mxu0 %v532
  %1091 = vmatpush.msra.mxu0 %v528
  %1092 = vmatpush.msra.mxu0 %v524
  %1093 = vmatpush.msra.mxu0 %v520
  %1094 = vmatpush.msra.mxu0 %v516
  %1095 = vmatpush.msra.mxu0 %v512
  %1096 = vmatpush.msra.mxu0 %v508
  %1097 = vmatpush.msra.mxu0 %v504
  %1098 = vmatpush.msra.mxu0 %v500
  %1099 = vmatpush.msra.mxu0 %v496
  %1100 = vmatpush.msra.mxu0 %v492
  %1101 = vmatpush.msra.mxu0 %v488
  %1102 = vmatpush.msra.mxu0 %v484
  %1103 = vmatmul.f32.gmra.mxu0 %v159
  %v1104 = vpop.f32.mrf.mxu0
  %v1105 = vadd.f32 %v1085, %v1104
  %1106 = vdwg.mxu0
  %1107 = vmatpush.msra.mxu0 0.0
  %1108 = vmatpush.msra.mxu0 0.0
  %1109 = vmatpush.msra.mxu0 0.0
  %1110 = vmatpush.msra.mxu0 0.0
  %1111 = vmatpush.msra.mxu0 0.0
  %1112 = vmatpush.msra.mxu0 0.0
  %1113 = vmatpush.msra.mxu0 0.0
  %1114 = vmatpush.msra.mxu0 0.0
  %1115 = vmatpush.msra.mxu0 0.0
  %1116 = vmatpush.msra.mxu0 0.0
  %1117 = vmatpush.msra.mxu0 0.0
  %1118 = vmatpush.msra.mxu0 0.0
  %1119 = vmatpush.msra.mxu0 0.0
  %1120 = vmatpush.msra.mxu0 0.0
  %1121 = vmatpush.msra.mxu0 %v552
  %1122 = vmatpush.msra.mxu0 %v548
  %1123 = vmatmul.f32.gmra.mxu0 %v565
  %v1124 = vpop.f32.mrf.mxu0
  %v1125 = vadd.f32 %v1105, %v1124
  %1126 = vdwg.mxu0
  %v1127 = vmax.f32 %v705, 0.0
  %v1128 = vmax.f32 %v845, 0.0
  %v1129 = vmax.f32 %v985, 0.0
  %v1130 = vmax.f32 %v1125, 0.0
  %v1131 = vld [vmem:[%s10] sm:$0xff]
  %v1132 = vld [vmem:[%s10 + $0x8] sm:$0xff]
  %v1133 = vld [vmem:[%s10 + $0x10] sm:$0xff]
  %v1134 = vld [vmem:[%s10 + $0x18] sm:$0xff]
  %v1135 = vld [vmem:[%s10 + $0x20] sm:$0xff]
  %v1136 = vld [vmem:[%s10 + $0x28] sm:$0xff]
  %v1137 = vld [vmem:[%s10 + $0x30] sm:$0xff]
  %v1138 = vld [vmem:[%s10 + $0x38] sm:$0xff]
  %v1139 = vld [vmem:[%s10 + $0x40] sm:$0xff]
  %v1140 = vld [vmem:[%s10 + $0x48] sm:$0xff]
  %v1141 = vld [vmem:[%s10 + $0x50] sm:$0xff]
  %v1142 = vld [vmem:[%s10 + $0x58] sm:$0xff]
  %v1143 = vld [vmem:[%s10 + $0x60] sm:$0xff]
  %v1144 = vld [vmem:[%s10 + $0x68] sm:$0xff]
  %v1145 = vld [vmem:[%s10 + $0x70] sm:$0xff]
  %v1146 = vld [vmem:[%s10 + $0x78] sm:$0xff]
  %v1147 = vld [vmem:[%s10 + $0x80] sm:$0xff]
  %v1148 = vld [vmem:[%s10 + $0x88] sm:$0xff]
  %v1149 = vld [vmem:[%s10 + $0x90] sm:$0xff]
  %v1150 = vld [vmem:[%s10 + $0x98] sm:$0xff]
  %v1151 = vld [vmem:[%s10 + $0xa0] sm:$0xff]
  %v1152 = vld [vmem:[%s10 + $0xa8] sm:$0xff]
  %v1153 = vld [vmem:[%s10 + $0xb0] sm:$0xff]
  %v1154 = vld [vmem:[%s10 + $0xb8] sm:$0xff]
  %v1155 = vld [vmem:[%s10 + $0xc0] sm:$0xff]
  %v1156 = vld [vmem:[%s10 + $0xc8] sm:$0xff]
  %v1157 = vld [vmem:[%s10 + $0xd0] sm:$0xff]
  %v1158 = vld [vmem:[%s10 + $0xd8] sm:$0xff]
  %v1159 = vld [vmem:[%s10 + $0xe0] sm:$0xff]
  %v1160 = vld [vmem:[%s10 + $0xe8] sm:$0xff]
  %v1161 = vld [vmem:[%s10 + $0xf0] sm:$0xff]
  %v1162 = vld [vmem:[%s10 + $0xf8] sm:$0xff]
  %v1163 = vld [vmem:[%s10 + $0x100] sm:$0xff]
  %v1164 = vld [vmem:[%s10 + $0x108] sm:$0xff]
  %v1165 = vld [vmem:[%s10 + $0x110] sm:$0xff]
  %v1166 = vld [vmem:[%s10 + $0x118] sm:$0xff]
  %v1167 = vld [vmem:[%s10 + $0x120] sm:$0xff]
  %v1168 = vld [vmem:[%s10 + $0x128] sm:$0xff]
  %v1169 = vld [vmem:[%s10 + $0x130] sm:$0xff]
  %v1170 = vld [vmem:[%s10 + $0x138] sm:$0xff]
  %v1171 = vld [vmem:[%s10 + $0x140] sm:$0xff]
  %v1172 = vld [vmem:[%s10 + $0x148] sm:$0xff]
  %v1173 = vld [vmem:[%s10 + $0x150] sm:$0xff]
  %v1174 = vld [vmem:[%s10 + $0x158] sm:$0xff]
  %v1175 = vld [vmem:[%s10 + $0x160] sm:$0xff]
  %v1176 = vld [vmem:[%s10 + $0x168] sm:$0xff]
  %v1177 = vld [vmem:[%s10 + $0x170] sm:$0xff]
  %v1178 = vld [vmem:[%s10 + $0x178] sm:$0xff]
  %v1179 = vld [vmem:[%s10 + $0x180] sm:$0xff]
  %v1180 = vld [vmem:[%s10 + $0x188] sm:$0xff]
  %v1181 = vld [vmem:[%s11] sm:$0x1]
  %v1183 = vperm.slane %v1181, 0
  %v1186 = vsel %vm563, %v1130, 0
  %1188 = vmatpush.msra.mxu0 %v1146
  %1189 = vmatpush.msra.mxu0 %v1145
  %1190 = vmatpush.msra.mxu0 %v1144
  %1191 = vmatpush.msra.mxu0 %v1143
  %1192 = vmatpush.msra.mxu0 %v1142
  %1193 = vmatpush.msra.mxu0 %v1141
  %1194 = vmatpush.msra.mxu0 %v1140
  %1195 = vmatpush.msra.mxu0 %v1139
  %1196 = vmatpush.msra.mxu0 %v1138
  %1197 = vmatpush.msra.mxu0 %v1137
  %1198 = vmatpush.msra.mxu0 %v1136
  %1199 = vmatpush.msra.mxu0 %v1135
  %1200 = vmatpush.msra.mxu0 %v1134
  %1201 = vmatpush.msra.mxu0 %v1133
  %1202 = vmatpush.msra.mxu0 %v1132
  %1203 = vmatpush.msra.mxu0 %v1131
  %1204 = vmatmul.f32.gmra.mxu0 %v1127
  %v1205 = vpop.f32.mrf.mxu0
  %v1206 = vadd.f32 %v1183, %v1205
  %1207 = vdwg.mxu0
  %1208 = vmatpush.msra.mxu0 %v1162
  %1209 = vmatpush.msra.mxu0 %v1161
  %1210 = vmatpush.msra.mxu0 %v1160
  %1211 = vmatpush.msra.mxu0 %v1159
  %1212 = vmatpush.msra.mxu0 %v1158
  %1213 = vmatpush.msra.mxu0 %v1157
  %1214 = vmatpush.msra.mxu0 %v1156
  %1215 = vmatpush.msra.mxu0 %v1155
  %1216 = vmatpush.msra.mxu0 %v1154
  %1217 = vmatpush.msra.mxu0 %v1153
  %1218 = vmatpush.msra.mxu0 %v1152
  %1219 = vmatpush.msra.mxu0 %v1151
  %1220 = vmatpush.msra.mxu0 %v1150
  %1221 = vmatpush.msra.mxu0 %v1149
  %1222 = vmatpush.msra.mxu0 %v1148
  %1223 = vmatpush.msra.mxu0 %v1147
  %1224 = vmatmul.f32.gmra.mxu0 %v1128
  %v1225 = vpop.f32.mrf.mxu0
  %v1226 = vadd.f32 %v1206, %v1225
  %1227 = vdwg.mxu0
  %1228 = vmatpush.msra.mxu0 %v1178
  %1229 = vmatpush.msra.mxu0 %v1177
  %1230 = vmatpush.msra.mxu0 %v1176
  %1231 = vmatpush.msra.mxu0 %v1175
  %1232 = vmatpush.msra.mxu0 %v1174
  %1233 = vmatpush.msra.mxu0 %v1173
  %1234 = vmatpush.msra.mxu0 %v1172
  %1235 = vmatpush.msra.mxu0 %v1171
  %1236 = vmatpush.msra.mxu0 %v1170
  %1237 = vmatpush.msra.mxu0 %v1169
  %1238 = vmatpush.msra.mxu0 %v1168
  %1239 = vmatpush.msra.mxu0 %v1167
  %1240 = vmatpush.msra.mxu0 %v1166
  %1241 = vmatpush.msra.mxu0 %v1165
  %1242 = vmatpush.msra.mxu0 %v1164
  %1243 = vmatpush.msra.mxu0 %v1163
  %1244 = vmatmul.f32.gmra.mxu0 %v1129
  %v1245 = vpop.f32.mrf.mxu0
  %v1246 = vadd.f32 %v1226, %v1245
  %1247 = vdwg.mxu0
  %1248 = vmatpush.msra.mxu0 0.0
  %1249 = vmatpush.msra.mxu0 0.0
  %1250 = vmatpush.msra.mxu0 0.0
  %1251 = vmatpush.msra.mxu0 0.0
  %1252 = vmatpush.msra.mxu0 0.0
  %1253 = vmatpush.msra.mxu0 0.0
  %1254 = vmatpush.msra.mxu0 0.0
  %1255 = vmatpush.msra.mxu0 0.0
  %1256 = vmatpush.msra.mxu0 0.0
  %1257 = vmatpush.msra.mxu0 0.0
  %1258 = vmatpush.msra.mxu0 0.0
  %1259 = vmatpush.msra.mxu0 0.0
  %1260 = vmatpush.msra.mxu0 0.0
  %1261 = vmatpush.msra.mxu0 0.0
  %1262 = vmatpush.msra.mxu0 %v1180
  %1263 = vmatpush.msra.mxu0 %v1179
  %1264 = vmatmul.f32.gmra.mxu0 %v1186
  %v1265 = vpop.f32.mrf.mxu0
  %v1266 = vadd.f32 %v1246, %v1265
  %1267 = vdwg.mxu0
  %v1268 = vsub.f32 0.0, %v1266
  %v1269 = vmul.f32 %v1268, 1.442695
  %v1270 = vpow.pop %v1269
  %v1271 = vadd.f32 %v1270, 1.0
  %v1272 = vrcp.pop %v1271
  %v1273 = vmul.f32 %v1271, %v1272
  %v1274 = vsub.f32 1.0, %v1273
  %v1275 = vmul.f32 %v1272, %v1274
  %v1276 = vadd.f32 %v1272, %v1275
  %vm1277 = vweird.f32 %v1271
  %vm1278 = vweird.f32 %v1272
  %vm1279 = vmor %vm1277, %vm1278
  %v1280 = vsel %vm1279, %v1272, %v1276
  %v1281 = vand.u32 2147483647, %v1271
  %vm1282 = vcmp.eq.f32.partialorder %v1281, 8.507059e+37
  %v1283 = vand.u32 %v1271, 2147483648
  %v1284 = vor.u32 1.1754944e-38, %v1283
  %v1285 = vsel %vm1282, %v1284, %v1280
  %v1286 = vld [vmem:[%s2] sm:$0x1]
  %v1287 = vld [vmem:[%s3] sm:$0xff]
  %v1288 = vmul.f32 %v153, 6.2831855
  %1290 = vset.pattern.permute.xlu0 0
  %1291 = vperm.xlu0 %1290, %v1288
  %v1292 = vpop.permute.xlu0 %1291
  %v1295 = vperm.slane %v1286, 0
  %v1297 = vmul.f32 %v1292, %v1295
  %v1298 = vmul.f32 %v1285, 3.1415927
  %1300 = vset.pattern.permute.xlu0 0
  %1301 = vperm.xlu0 %1300, %v1298
  %v1302 = vpop.permute.xlu0 %1301
  %v1304 = vadd.f32 %v1297, %v1302
  %v1305 = vand.u32 2147483647, %v1304
  %vm1306 = vcmp.le.f32.partialorder %v1305, 0.7853982
  %vm1307 = vcmp.lt.s32.totalorder %v1304, 0
  %v1308 = vand.u32 %v1304, 2139095040
  %v1309 = vshrl.u32 %v1308, 23
  %v1310 = vsub.s32 %v1309, 127
  %v1311 = vand.u32 2147483647, %v1304
  %v1312 = vand.u32 %v1311, 8388607
  %v1313 = vor.u32 %v1312, 8388608
  %v1314 = vsub.s32 0, %v1313
  %v1315 = vadd.s32 %v1310, 1
  %vm1316 = vcmp.gt.s32.totalorder %v1315, 0
  %v1317 = vsel %vm1316, %v1315, 0
  %v1318 = vshrl.u32 %v1317, 5
  %v1319 = vand.u32 %v1317, 31
  %v1320 = vsub.s32 32, %v1319
  %v1321 = vshrl.u32 683565275, %v1320
  %v1322 = vshll.u32 683565275, %v1319
  %v1323 = vshrl.u32 2475754826, %v1320
  %v1324 = vor.u32 %v1322, %v1323
  %v1325 = vshll.u32 2475754826, %v1319
  %v1326 = vshrl.u32 2131351028, %v1320
  %v1327 = vor.u32 %v1325, %v1326
  %v1328 = vshll.u32 2131351028, %v1319
  %v1329 = vshrl.u32 2102212464, %v1320
  %v1330 = vor.u32 %v1328, %v1329
  %v1331 = vshll.u32 2102212464, %v1319
  %v1332 = vshrl.u32 920167782, %v1320
  %v1333 = vor.u32 %v1331, %v1332
  %v1334 = vshll.u32 920167782, %v1319
  %v1335 = vshrl.u32 1326507024, %v1320
  %v1336 = vor.u32 %v1334, %v1335
  %vm1337 = vcmp.lt.s32.totalorder %v1318, 1
  %vm1338 = vcmp.lt.s32.totalorder %v1318, 2
  %vm1339 = vcmp.lt.s32.totalorder %v1318, 3
  %vm1340 = vcmp.lt.s32.totalorder %v1318, 4
  %v1341 = vsel %vm1337, %v1321, %v1324
  %v1342 = vsel %vm1340, %v1330, 2102212464
  %v1343 = vsel %vm1339, %v1327, %v1342
  %v1344 = vsel %vm1338, %v1341, %v1343
  %v1345 = vsel %vm1337, %v1324, %v1327
  %v1346 = vsel %vm1340, %v1333, 920167782
  %v1347 = vsel %vm1339, %v1330, %v1346
  %v1348 = vsel %vm1338, %v1345, %v1347
  %v1349 = vsel %vm1337, %v1327, %v1330
  %v1350 = vsel %vm1340, %v1336, 1326507024
  %v1351 = vsel %vm1339, %v1333, %v1350
  %v1352 = vsel %vm1338, %v1349, %v1351
  %v1353 = vshll.u32 %v1313, 8
  %v1354 = vand.u32 %v1353, 65535
  %v1355 = vshrl.u32 %v1353, 16
  %v1356 = vand.u32 %v1352, 65535
  %v1357 = vshrl.u32 %v1352, 16
  %v1358 = vmul.u32 %v1354, %v1356
  %v1359 = vmul.u32 %v1354, %v1357
  %v1360 = vmul.u32 %v1355, %v1356
  %v1361 = vmul.u32 %v1355, %v1357
  %v1362 = vshll.u32 %v1359, 16
  %v1363 = vshrl.u32 %v1359, 16
  %v1364 = vshll.u32 %v1360, 16
  %v1365 = vshrl.u32 %v1360, 16
  %vm1366 = vc.u32 %v1358, %v1362
  %v1367 = vsel %vm1366, 1, 0
  %v1368 = vadd.s32 %v1358, %v1362
  %v1369 = vadd.s32 %v1361, %v1367
  %vm1370 = vc.u32 %v1368, %v1364
  %v1371 = vsel %vm1370, 1, 0
  %v1372 = vadd.s32 %v1368, %v1364
  %v1373 = vadd.s32 %v1369, %v1371
  %v1374 = vadd.s32 %v1373, %v1363
  %v1375 = vadd.s32 %v1374, %v1365
  %v1376 = vand.u32 %v1353, 65535
  %v1377 = vshrl.u32 %v1353, 16
  %v1378 = vand.u32 %v1348, 65535
  %v1379 = vshrl.u32 %v1348, 16
  %v1380 = vmul.u32 %v1376, %v1378
  %v1381 = vmul.u32 %v1376, %v1379
  %v1382 = vmul.u32 %v1377, %v1378
  %v1383 = vmul.u32 %v1377, %v1379
  %v1384 = vshll.u32 %v1381, 16
  %v1385 = vshrl.u32 %v1381, 16
  %v1386 = vshll.u32 %v1382, 16
  %v1387 = vshrl.u32 %v1382, 16
  %vm1388 = vc.u32 %v1380, %v1384
  %v1389 = vsel %vm1388, 1, 0
  %v1390 = vadd.s32 %v1380, %v1384
  %v1391 = vadd.s32 %v1383, %v1389
  %vm1392 = vc.u32 %v1390, %v1386
  %v1393 = vsel %vm1392, 1, 0
  %v1394 = vadd.s32 %v1390, %v1386
  %v1395 = vadd.s32 %v1391, %v1393
  %v1396 = vadd.s32 %v1395, %v1385
  %v1397 = vadd.s32 %v1396, %v1387
  %v1398 = vmul.u32 %v1353, %v1344
  %v1399 = vadd.s32 %v1375, %v1394
  %vm1400 = vc.u32 %v1375, %v1394
  %v1401 = vadd.s32 %v1397, 1
  %v1402 = vsel %vm1400, %v1401, %v1397
  %v1403 = vadd.s32 %v1398, %v1402
  %v1404 = vadd.s32 %v1403, 536870912
  %v1405 = vshrl.u32 %v1404, 30
  %v1406 = vshll.u32 %v1405, 30
  %v1407 = vsub.s32 %v1403, %v1406
  %vm1408 = vcmp.lt.s32.totalorder %v1407, 0
  %v1409 = vsub.s32 0, %v1407
  %v1410 = vsel %vm1408, %v1409, %v1407
  %v1411 = vclz %v1410
  %v1412 = vsub.s32 %v1411, 2
  %vm1413 = vcmp.gt.s32.totalorder 0, %v1412
  %v1414 = vsel %vm1413, 0, %v1412
  %v1415 = vsub.s32 32, %v1414
  %v1416 = vshll.u32 %v1407, %v1414
  %v1417 = vshrl.u32 %v1399, %v1415
  %v1418 = vor.u32 %v1416, %v1417
  %v1419 = vsub.s32 4294967266, %v1414
  %v1420 = vadd.s32 %v1419, 127
  %v1421 = vshll.u32 %v1420, 23
  %v1422 = vor.u32 4788187, %v1421
  %v1423 = vand.u32 2147483647, %v1422
  %v1425 = vcvt.s32.f32 %v1418
  %v1426 = vmul.f32 %v1425, %v1423
  %v1427 = vxor.u32 %v1426, 2147483648
  %v1428 = vsel %vm1307, %v1427, %v1426
  %v1429 = vsub.s32 4, %v1405
  %v1430 = vsel %vm1307, %v1429, %v1405
  %v1431 = vsel %vm1306, %v1304, %v1428
  %v1432 = vsel %vm1306, 0, %v1430
  %v1433 = vmul.f32 %v1431, %v1431
  %v1434 = vmul.f32 %v1433, -0.001358992
  %v1435 = vadd.f32 %v1434, 0.041655596
  %v1436 = vmul.f32 %v1433, %v1435
  %v1437 = vadd.f32 %v1436, -0.4999988
  %v1438 = vmul.f32 %v1433, %v1437
  %v1439 = vadd.f32 1.0, %v1438
  %v1440 = vmul.f32 %v1431, %v1431
  %v1441 = vmul.f32 %v1440, -0.00019511016
  %v1442 = vadd.f32 %v1441, 0.008332121
  %v1443 = vmul.f32 %v1440, %v1442
  %v1444 = vadd.f32 %v1443, -0.16666654
  %v1445 = vmul.f32 %v1440, %v1444
  %v1446 = vadd.f32 %v1445, 1.0
  %v1447 = vmul.f32 %v1446, %v1431
  %vm1448 = vweird.f32 %v1304
  %v1449 = vadd.s32 %v1432, 3
  %v1450 = vand.u32 %v1449, 3
  %vm1451 = vcmp.lt.s32.totalorder %v1450, 2
  %vm1452 = vcmp.eq.s32.totalorder %v1450, 0
  %v1453 = vxor.u32 %v1447, 2147483648
  %v1454 = vsel %vm1452, %v1439, %v1453
  %vm1455 = vcmp.eq.s32.totalorder %v1450, 2
  %v1456 = vxor.u32 %v1439, 2147483648
  %v1457 = vsel %vm1455, %v1456, %v1447
  %v1458 = vsel %vm1451, %v1454, %v1457
  %v1459 = vsel %vm1448, nan, %v1458
  %v1460 = vadd.f32 %v1287, %v1459
  %1461 = vset.pattern.permute.xlu0 1
  %1462 = vperm.xlu0 %1461, %v1288
  %v1463 = vpop.permute.xlu0 %1462
  %v1465 = vmul.f32 %v1463, %v1295
  %1466 = vset.pattern.permute.xlu0 1
  %1467 = vperm.xlu0 %1466, %v1298
  %v1468 = vpop.permute.xlu0 %1467
  %v1470 = vadd.f32 %v1465, %v1468
  %v1471 = vand.u32 2147483647, %v1470
  %vm1472 = vcmp.le.f32.partialorder %v1471, 0.7853982
  %vm1473 = vcmp.lt.s32.totalorder %v1470, 0
  %v1474 = vand.u32 %v1470, 2139095040
  %v1475 = vshrl.u32 %v1474, 23
  %v1476 = vsub.s32 %v1475, 127
  %v1477 = vand.u32 2147483647, %v1470
  %v1478 = vand.u32 %v1477, 8388607
  %v1479 = vor.u32 %v1478, 8388608
  %v1480 = vsub.s32 0, %v1479
  %v1481 = vadd.s32 %v1476, 1
  %vm1482 = vcmp.gt.s32.totalorder %v1481, 0
  %v1483 = vsel %vm1482, %v1481, 0
  %v1484 = vshrl.u32 %v1483, 5
  %v1485 = vand.u32 %v1483, 31
  %v1486 = vsub.s32 32, %v1485
  %v1487 = vshrl.u32 683565275, %v1486
  %v1488 = vshll.u32 683565275, %v1485
  %v1489 = vshrl.u32 2475754826, %v1486
  %v1490 = vor.u32 %v1488, %v1489
  %v1491 = vshll.u32 2475754826, %v1485
  %v1492 = vshrl.u32 2131351028, %v1486
  %v1493 = vor.u32 %v1491, %v1492
  %v1494 = vshll.u32 2131351028, %v1485
  %v1495 = vshrl.u32 2102212464, %v1486
  %v1496 = vor.u32 %v1494, %v1495
  %v1497 = vshll.u32 2102212464, %v1485
  %v1498 = vshrl.u32 920167782, %v1486
  %v1499 = vor.u32 %v1497, %v1498
  %v1500 = vshll.u32 920167782, %v1485
  %v1501 = vshrl.u32 1326507024, %v1486
  %v1502 = vor.u32 %v1500, %v1501
  %vm1503 = vcmp.lt.s32.totalorder %v1484, 1
  %vm1504 = vcmp.lt.s32.totalorder %v1484, 2
  %vm1505 = vcmp.lt.s32.totalorder %v1484, 3
  %vm1506 = vcmp.lt.s32.totalorder %v1484, 4
  %v1507 = vsel %vm1503, %v1487, %v1490
  %v1508 = vsel %vm1506, %v1496, 2102212464
  %v1509 = vsel %vm1505, %v1493, %v1508
  %v1510 = vsel %vm1504, %v1507, %v1509
  %v1511 = vsel %vm1503, %v1490, %v1493
  %v1512 = vsel %vm1506, %v1499, 920167782
  %v1513 = vsel %vm1505, %v1496, %v1512
  %v1514 = vsel %vm1504, %v1511, %v1513
  %v1515 = vsel %vm1503, %v1493, %v1496
  %v1516 = vsel %vm1506, %v1502, 1326507024
  %v1517 = vsel %vm1505, %v1499, %v1516
  %v1518 = vsel %vm1504, %v1515, %v1517
  %v1519 = vshll.u32 %v1479, 8
  %v1520 = vand.u32 %v1519, 65535
  %v1521 = vshrl.u32 %v1519, 16
  %v1522 = vand.u32 %v1518, 65535
  %v1523 = vshrl.u32 %v1518, 16
  %v1524 = vmul.u32 %v1520, %v1522
  %v1525 = vmul.u32 %v1520, %v1523
  %v1526 = vmul.u32 %v1521, %v1522
  %v1527 = vmul.u32 %v1521, %v1523
  %v1528 = vshll.u32 %v1525, 16
  %v1529 = vshrl.u32 %v1525, 16
  %v1530 = vshll.u32 %v1526, 16
  %v1531 = vshrl.u32 %v1526, 16
  %vm1532 = vc.u32 %v1524, %v1528
  %v1533 = vsel %vm1532, 1, 0
  %v1534 = vadd.s32 %v1524, %v1528
  %v1535 = vadd.s32 %v1527, %v1533
  %vm1536 = vc.u32 %v1534, %v1530
  %v1537 = vsel %vm1536, 1, 0
  %v1538 = vadd.s32 %v1534, %v1530
  %v1539 = vadd.s32 %v1535, %v1537
  %v1540 = vadd.s32 %v1539, %v1529
  %v1541 = vadd.s32 %v1540, %v1531
  %v1542 = vand.u32 %v1519, 65535
  %v1543 = vshrl.u32 %v1519, 16
  %v1544 = vand.u32 %v1514, 65535
  %v1545 = vshrl.u32 %v1514, 16
  %v1546 = vmul.u32 %v1542, %v1544
  %v1547 = vmul.u32 %v1542, %v1545
  %v1548 = vmul.u32 %v1543, %v1544
  %v1549 = vmul.u32 %v1543, %v1545
  %v1550 = vshll.u32 %v1547, 16
  %v1551 = vshrl.u32 %v1547, 16
  %v1552 = vshll.u32 %v1548, 16
  %v1553 = vshrl.u32 %v1548, 16
  %vm1554 = vc.u32 %v1546, %v1550
  %v1555 = vsel %vm1554, 1, 0
  %v1556 = vadd.s32 %v1546, %v1550
  %v1557 = vadd.s32 %v1549, %v1555
  %vm1558 = vc.u32 %v1556, %v1552
  %v1559 = vsel %vm1558, 1, 0
  %v1560 = vadd.s32 %v1556, %v1552
  %v1561 = vadd.s32 %v1557, %v1559
  %v1562 = vadd.s32 %v1561, %v1551
  %v1563 = vadd.s32 %v1562, %v1553
  %v1564 = vmul.u32 %v1519, %v1510
  %v1565 = vadd.s32 %v1541, %v1560
  %vm1566 = vc.u32 %v1541, %v1560
  %v1567 = vadd.s32 %v1563, 1
  %v1568 = vsel %vm1566, %v1567, %v1563
  %v1569 = vadd.s32 %v1564, %v1568
  %v1570 = vadd.s32 %v1569, 536870912
  %v1571 = vshrl.u32 %v1570, 30
  %v1572 = vshll.u32 %v1571, 30
  %v1573 = vsub.s32 %v1569, %v1572
  %vm1574 = vcmp.lt.s32.totalorder %v1573, 0
  %v1575 = vsub.s32 0, %v1573
  %v1576 = vsel %vm1574, %v1575, %v1573
  %v1577 = vclz %v1576
  %v1578 = vsub.s32 %v1577, 2
  %vm1579 = vcmp.gt.s32.totalorder 0, %v1578
  %v1580 = vsel %vm1579, 0, %v1578
  %v1581 = vsub.s32 32, %v1580
  %v1582 = vshll.u32 %v1573, %v1580
  %v1583 = vshrl.u32 %v1565, %v1581
  %v1584 = vor.u32 %v1582, %v1583
  %v1585 = vsub.s32 4294967266, %v1580
  %v1586 = vadd.s32 %v1585, 127
  %v1587 = vshll.u32 %v1586, 23
  %v1588 = vor.u32 4788187, %v1587
  %v1589 = vand.u32 2147483647, %v1588
  %v1591 = vcvt.s32.f32 %v1584
  %v1592 = vmul.f32 %v1591, %v1589
  %v1593 = vxor.u32 %v1592, 2147483648
  %v1594 = vsel %vm1473, %v1593, %v1592
  %v1595 = vsub.s32 4, %v1571
  %v1596 = vsel %vm1473, %v1595, %v1571
  %v1597 = vsel %vm1472, %v1470, %v1594
  %v1598 = vsel %vm1472, 0, %v1596
  %v1599 = vmul.f32 %v1597, %v1597
  %v1600 = vmul.f32 %v1599, -0.001358992
  %v1601 = vadd.f32 %v1600, 0.041655596
  %v1602 = vmul.f32 %v1599, %v1601
  %v1603 = vadd.f32 %v1602, -0.4999988
  %v1604 = vmul.f32 %v1599, %v1603
  %v1605 = vadd.f32 1.0, %v1604
  %v1606 = vmul.f32 %v1597, %v1597
  %v1607 = vmul.f32 %v1606, -0.00019511016
  %v1608 = vadd.f32 %v1607, 0.008332121
  %v1609 = vmul.f32 %v1606, %v1608
  %v1610 = vadd.f32 %v1609, -0.16666654
  %v1611 = vmul.f32 %v1606, %v1610
  %v1612 = vadd.f32 %v1611, 1.0
  %v1613 = vmul.f32 %v1612, %v1597
  %vm1614 = vweird.f32 %v1470
  %v1615 = vadd.s32 %v1598, 3
  %v1616 = vand.u32 %v1615, 3
  %vm1617 = vcmp.lt.s32.totalorder %v1616, 2
  %vm1618 = vcmp.eq.s32.totalorder %v1616, 0
  %v1619 = vxor.u32 %v1613, 2147483648
  %v1620 = vsel %vm1618, %v1605, %v1619
  %vm1621 = vcmp.eq.s32.totalorder %v1616, 2
  %v1622 = vxor.u32 %v1605, 2147483648
  %v1623 = vsel %vm1621, %v1622, %v1613
  %v1624 = vsel %vm1617, %v1620, %v1623
  %v1625 = vsel %vm1614, nan, %v1624
  %v1626 = vadd.f32 %v1460, %v1625
  %1627 = vset.pattern.permute.xlu0 2
  %1628 = vperm.xlu0 %1627, %v1288
  %v1629 = vpop.permute.xlu0 %1628
  %v1631 = vmul.f32 %v1629, %v1295
  %1632 = vset.pattern.permute.xlu0 2
  %1633 = vperm.xlu0 %1632, %v1298
  %v1634 = vpop.permute.xlu0 %1633
  %v1636 = vadd.f32 %v1631, %v1634
  %v1637 = vand.u32 2147483647, %v1636
  %vm1638 = vcmp.le.f32.partialorder %v1637, 0.7853982
  %vm1639 = vcmp.lt.s32.totalorder %v1636, 0
  %v1640 = vand.u32 %v1636, 2139095040
  %v1641 = vshrl.u32 %v1640, 23
  %v1642 = vsub.s32 %v1641, 127
  %v1643 = vand.u32 2147483647, %v1636
  %v1644 = vand.u32 %v1643, 8388607
  %v1645 = vor.u32 %v1644, 8388608
  %v1646 = vsub.s32 0, %v1645
  %v1647 = vadd.s32 %v1642, 1
  %vm1648 = vcmp.gt.s32.totalorder %v1647, 0
  %v1649 = vsel %vm1648, %v1647, 0
  %v1650 = vshrl.u32 %v1649, 5
  %v1651 = vand.u32 %v1649, 31
  %v1652 = vsub.s32 32, %v1651
  %v1653 = vshrl.u32 683565275, %v1652
  %v1654 = vshll.u32 683565275, %v1651
  %v1655 = vshrl.u32 2475754826, %v1652
  %v1656 = vor.u32 %v1654, %v1655
  %v1657 = vshll.u32 2475754826, %v1651
  %v1658 = vshrl.u32 2131351028, %v1652
  %v1659 = vor.u32 %v1657, %v1658
  %v1660 = vshll.u32 2131351028, %v1651
  %v1661 = vshrl.u32 2102212464, %v1652
  %v1662 = vor.u32 %v1660, %v1661
  %v1663 = vshll.u32 2102212464, %v1651
  %v1664 = vshrl.u32 920167782, %v1652
  %v1665 = vor.u32 %v1663, %v1664
  %v1666 = vshll.u32 920167782, %v1651
  %v1667 = vshrl.u32 1326507024, %v1652
  %v1668 = vor.u32 %v1666, %v1667
  %vm1669 = vcmp.lt.s32.totalorder %v1650, 1
  %vm1670 = vcmp.lt.s32.totalorder %v1650, 2
  %vm1671 = vcmp.lt.s32.totalorder %v1650, 3
  %vm1672 = vcmp.lt.s32.totalorder %v1650, 4
  %v1673 = vsel %vm1669, %v1653, %v1656
  %v1674 = vsel %vm1672, %v1662, 2102212464
  %v1675 = vsel %vm1671, %v1659, %v1674
  %v1676 = vsel %vm1670, %v1673, %v1675
  %v1677 = vsel %vm1669, %v1656, %v1659
  %v1678 = vsel %vm1672, %v1665, 920167782
  %v1679 = vsel %vm1671, %v1662, %v1678
  %v1680 = vsel %vm1670, %v1677, %v1679
  %v1681 = vsel %vm1669, %v1659, %v1662
  %v1682 = vsel %vm1672, %v1668, 1326507024
  %v1683 = vsel %vm1671, %v1665, %v1682
  %v1684 = vsel %vm1670, %v1681, %v1683
  %v1685 = vshll.u32 %v1645, 8
  %v1686 = vand.u32 %v1685, 65535
  %v1687 = vshrl.u32 %v1685, 16
  %v1688 = vand.u32 %v1684, 65535
  %v1689 = vshrl.u32 %v1684, 16
  %v1690 = vmul.u32 %v1686, %v1688
  %v1691 = vmul.u32 %v1686, %v1689
  %v1692 = vmul.u32 %v1687, %v1688
  %v1693 = vmul.u32 %v1687, %v1689
  %v1694 = vshll.u32 %v1691, 16
  %v1695 = vshrl.u32 %v1691, 16
  %v1696 = vshll.u32 %v1692, 16
  %v1697 = vshrl.u32 %v1692, 16
  %vm1698 = vc.u32 %v1690, %v1694
  %v1699 = vsel %vm1698, 1, 0
  %v1700 = vadd.s32 %v1690, %v1694
  %v1701 = vadd.s32 %v1693, %v1699
  %vm1702 = vc.u32 %v1700, %v1696
  %v1703 = vsel %vm1702, 1, 0
  %v1704 = vadd.s32 %v1700, %v1696
  %v1705 = vadd.s32 %v1701, %v1703
  %v1706 = vadd.s32 %v1705, %v1695
  %v1707 = vadd.s32 %v1706, %v1697
  %v1708 = vand.u32 %v1685, 65535
  %v1709 = vshrl.u32 %v1685, 16
  %v1710 = vand.u32 %v1680, 65535
  %v1711 = vshrl.u32 %v1680, 16
  %v1712 = vmul.u32 %v1708, %v1710
  %v1713 = vmul.u32 %v1708, %v1711
  %v1714 = vmul.u32 %v1709, %v1710
  %v1715 = vmul.u32 %v1709, %v1711
  %v1716 = vshll.u32 %v1713, 16
  %v1717 = vshrl.u32 %v1713, 16
  %v1718 = vshll.u32 %v1714, 16
  %v1719 = vshrl.u32 %v1714, 16
  %vm1720 = vc.u32 %v1712, %v1716
  %v1721 = vsel %vm1720, 1, 0
  %v1722 = vadd.s32 %v1712, %v1716
  %v1723 = vadd.s32 %v1715, %v1721
  %vm1724 = vc.u32 %v1722, %v1718
  %v1725 = vsel %vm1724, 1, 0
  %v1726 = vadd.s32 %v1722, %v1718
  %v1727 = vadd.s32 %v1723, %v1725
  %v1728 = vadd.s32 %v1727, %v1717
  %v1729 = vadd.s32 %v1728, %v1719
  %v1730 = vmul.u32 %v1685, %v1676
  %v1731 = vadd.s32 %v1707, %v1726
  %vm1732 = vc.u32 %v1707, %v1726
  %v1733 = vadd.s32 %v1729, 1
  %v1734 = vsel %vm1732, %v1733, %v1729
  %v1735 = vadd.s32 %v1730, %v1734
  %v1736 = vadd.s32 %v1735, 536870912
  %v1737 = vshrl.u32 %v1736, 30
  %v1738 = vshll.u32 %v1737, 30
  %v1739 = vsub.s32 %v1735, %v1738
  %vm1740 = vcmp.lt.s32.totalorder %v1739, 0
  %v1741 = vsub.s32 0, %v1739
  %v1742 = vsel %vm1740, %v1741, %v1739
  %v1743 = vclz %v1742
  %v1744 = vsub.s32 %v1743, 2
  %vm1745 = vcmp.gt.s32.totalorder 0, %v1744
  %v1746 = vsel %vm1745, 0, %v1744
  %v1747 = vsub.s32 32, %v1746
  %v1748 = vshll.u32 %v1739, %v1746
  %v1749 = vshrl.u32 %v1731, %v1747
  %v1750 = vor.u32 %v1748, %v1749
  %v1751 = vsub.s32 4294967266, %v1746
  %v1752 = vadd.s32 %v1751, 127
  %v1753 = vshll.u32 %v1752, 23
  %v1754 = vor.u32 4788187, %v1753
  %v1755 = vand.u32 2147483647, %v1754
  %v1757 = vcvt.s32.f32 %v1750
  %v1758 = vmul.f32 %v1757, %v1755
  %v1759 = vxor.u32 %v1758, 2147483648
  %v1760 = vsel %vm1639, %v1759, %v1758
  %v1761 = vsub.s32 4, %v1737
  %v1762 = vsel %vm1639, %v1761, %v1737
  %v1763 = vsel %vm1638, %v1636, %v1760
  %v1764 = vsel %vm1638, 0, %v1762
  %v1765 = vmul.f32 %v1763, %v1763
  %v1766 = vmul.f32 %v1765, -0.001358992
  %v1767 = vadd.f32 %v1766, 0.041655596
  %v1768 = vmul.f32 %v1765, %v1767
  %v1769 = vadd.f32 %v1768, -0.4999988
  %v1770 = vmul.f32 %v1765, %v1769
  %v1771 = vadd.f32 1.0, %v1770
  %v1772 = vmul.f32 %v1763, %v1763
  %v1773 = vmul.f32 %v1772, -0.00019511016
  %v1774 = vadd.f32 %v1773, 0.008332121
  %v1775 = vmul.f32 %v1772, %v1774
  %v1776 = vadd.f32 %v1775, -0.16666654
  %v1777 = vmul.f32 %v1772, %v1776
  %v1778 = vadd.f32 %v1777, 1.0
  %v1779 = vmul.f32 %v1778, %v1763
  %vm1780 = vweird.f32 %v1636
  %v1781 = vadd.s32 %v1764, 3
  %v1782 = vand.u32 %v1781, 3
  %vm1783 = vcmp.lt.s32.totalorder %v1782, 2
  %vm1784 = vcmp.eq.s32.totalorder %v1782, 0
  %v1785 = vxor.u32 %v1779, 2147483648
  %v1786 = vsel %vm1784, %v1771, %v1785
  %vm1787 = vcmp.eq.s32.totalorder %v1782, 2
  %v1788 = vxor.u32 %v1771, 2147483648
  %v1789 = vsel %vm1787, %v1788, %v1779
  %v1790 = vsel %vm1783, %v1786, %v1789
  %v1791 = vsel %vm1780, nan, %v1790
  %v1792 = vadd.f32 %v1626, %v1791
  %1793 = vset.pattern.permute.xlu0 3
  %1794 = vperm.xlu0 %1793, %v1288
  %v1795 = vpop.permute.xlu0 %1794
  %v1797 = vmul.f32 %v1795, %v1295
  %1798 = vset.pattern.permute.xlu0 3
  %1799 = vperm.xlu0 %1798, %v1298
  %v1800 = vpop.permute.xlu0 %1799
  %v1802 = vadd.f32 %v1797, %v1800
  %v1803 = vand.u32 2147483647, %v1802
  %vm1804 = vcmp.le.f32.partialorder %v1803, 0.7853982
  %vm1805 = vcmp.lt.s32.totalorder %v1802, 0
  %v1806 = vand.u32 %v1802, 2139095040
  %v1807 = vshrl.u32 %v1806, 23
  %v1808 = vsub.s32 %v1807, 127
  %v1809 = vand.u32 2147483647, %v1802
  %v1810 = vand.u32 %v1809, 8388607
  %v1811 = vor.u32 %v1810, 8388608
  %v1812 = vsub.s32 0, %v1811
  %v1813 = vadd.s32 %v1808, 1
  %vm1814 = vcmp.gt.s32.totalorder %v1813, 0
  %v1815 = vsel %vm1814, %v1813, 0
  %v1816 = vshrl.u32 %v1815, 5
  %v1817 = vand.u32 %v1815, 31
  %v1818 = vsub.s32 32, %v1817
  %v1819 = vshrl.u32 683565275, %v1818
  %v1820 = vshll.u32 683565275, %v1817
  %v1821 = vshrl.u32 2475754826, %v1818
  %v1822 = vor.u32 %v1820, %v1821
  %v1823 = vshll.u32 2475754826, %v1817
  %v1824 = vshrl.u32 2131351028, %v1818
  %v1825 = vor.u32 %v1823, %v1824
  %v1826 = vshll.u32 2131351028, %v1817
  %v1827 = vshrl.u32 2102212464, %v1818
  %v1828 = vor.u32 %v1826, %v1827
  %v1829 = vshll.u32 2102212464, %v1817
  %v1830 = vshrl.u32 920167782, %v1818
  %v1831 = vor.u32 %v1829, %v1830
  %v1832 = vshll.u32 920167782, %v1817
  %v1833 = vshrl.u32 1326507024, %v1818
  %v1834 = vor.u32 %v1832, %v1833
  %vm1835 = vcmp.lt.s32.totalorder %v1816, 1
  %vm1836 = vcmp.lt.s32.totalorder %v1816, 2
  %vm1837 = vcmp.lt.s32.totalorder %v1816, 3
  %vm1838 = vcmp.lt.s32.totalorder %v1816, 4
  %v1839 = vsel %vm1835, %v1819, %v1822
  %v1840 = vsel %vm1838, %v1828, 2102212464
  %v1841 = vsel %vm1837, %v1825, %v1840
  %v1842 = vsel %vm1836, %v1839, %v1841
  %v1843 = vsel %vm1835, %v1822, %v1825
  %v1844 = vsel %vm1838, %v1831, 920167782
  %v1845 = vsel %vm1837, %v1828, %v1844
  %v1846 = vsel %vm1836, %v1843, %v1845
  %v1847 = vsel %vm1835, %v1825, %v1828
  %v1848 = vsel %vm1838, %v1834, 1326507024
  %v1849 = vsel %vm1837, %v1831, %v1848
  %v1850 = vsel %vm1836, %v1847, %v1849
  %v1851 = vshll.u32 %v1811, 8
  %v1852 = vand.u32 %v1851, 65535
  %v1853 = vshrl.u32 %v1851, 16
  %v1854 = vand.u32 %v1850, 65535
  %v1855 = vshrl.u32 %v1850, 16
  %v1856 = vmul.u32 %v1852, %v1854
  %v1857 = vmul.u32 %v1852, %v1855
  %v1858 = vmul.u32 %v1853, %v1854
  %v1859 = vmul.u32 %v1853, %v1855
  %v1860 = vshll.u32 %v1857, 16
  %v1861 = vshrl.u32 %v1857, 16
  %v1862 = vshll.u32 %v1858, 16
  %v1863 = vshrl.u32 %v1858, 16
  %vm1864 = vc.u32 %v1856, %v1860
  %v1865 = vsel %vm1864, 1, 0
  %v1866 = vadd.s32 %v1856, %v1860
  %v1867 = vadd.s32 %v1859, %v1865
  %vm1868 = vc.u32 %v1866, %v1862
  %v1869 = vsel %vm1868, 1, 0
  %v1870 = vadd.s32 %v1866, %v1862
  %v1871 = vadd.s32 %v1867, %v1869
  %v1872 = vadd.s32 %v1871, %v1861
  %v1873 = vadd.s32 %v1872, %v1863
  %v1874 = vand.u32 %v1851, 65535
  %v1875 = vshrl.u32 %v1851, 16
  %v1876 = vand.u32 %v1846, 65535
  %v1877 = vshrl.u32 %v1846, 16
  %v1878 = vmul.u32 %v1874, %v1876
  %v1879 = vmul.u32 %v1874, %v1877
  %v1880 = vmul.u32 %v1875, %v1876
  %v1881 = vmul.u32 %v1875, %v1877
  %v1882 = vshll.u32 %v1879, 16
  %v1883 = vshrl.u32 %v1879, 16
  %v1884 = vshll.u32 %v1880, 16
  %v1885 = vshrl.u32 %v1880, 16
  %vm1886 = vc.u32 %v1878, %v1882
  %v1887 = vsel %vm1886, 1, 0
  %v1888 = vadd.s32 %v1878, %v1882
  %v1889 = vadd.s32 %v1881, %v1887
  %vm1890 = vc.u32 %v1888, %v1884
  %v1891 = vsel %vm1890, 1, 0
  %v1892 = vadd.s32 %v1888, %v1884
  %v1893 = vadd.s32 %v1889, %v1891
  %v1894 = vadd.s32 %v1893, %v1883
  %v1895 = vadd.s32 %v1894, %v1885
  %v1896 = vmul.u32 %v1851, %v1842
  %v1897 = vadd.s32 %v1873, %v1892
  %vm1898 = vc.u32 %v1873, %v1892
  %v1899 = vadd.s32 %v1895, 1
  %v1900 = vsel %vm1898, %v1899, %v1895
  %v1901 = vadd.s32 %v1896, %v1900
  %v1902 = vadd.s32 %v1901, 536870912
  %v1903 = vshrl.u32 %v1902, 30
  %v1904 = vshll.u32 %v1903, 30
  %v1905 = vsub.s32 %v1901, %v1904
  %vm1906 = vcmp.lt.s32.totalorder %v1905, 0
  %v1907 = vsub.s32 0, %v1905
  %v1908 = vsel %vm1906, %v1907, %v1905
  %v1909 = vclz %v1908
  %v1910 = vsub.s32 %v1909, 2
  %vm1911 = vcmp.gt.s32.totalorder 0, %v1910
  %v1912 = vsel %vm1911, 0, %v1910
  %v1913 = vsub.s32 32, %v1912
  %v1914 = vshll.u32 %v1905, %v1912
  %v1915 = vshrl.u32 %v1897, %v1913
  %v1916 = vor.u32 %v1914, %v1915
  %v1917 = vsub.s32 4294967266, %v1912
  %v1918 = vadd.s32 %v1917, 127
  %v1919 = vshll.u32 %v1918, 23
  %v1920 = vor.u32 4788187, %v1919
  %v1921 = vand.u32 2147483647, %v1920
  %v1923 = vcvt.s32.f32 %v1916
  %v1924 = vmul.f32 %v1923, %v1921
  %v1925 = vxor.u32 %v1924, 2147483648
  %v1926 = vsel %vm1805, %v1925, %v1924
  %v1927 = vsub.s32 4, %v1903
  %v1928 = vsel %vm1805, %v1927, %v1903
  %v1929 = vsel %vm1804, %v1802, %v1926
  %v1930 = vsel %vm1804, 0, %v1928
  %v1931 = vmul.f32 %v1929, %v1929
  %v1932 = vmul.f32 %v1931, -0.001358992
  %v1933 = vadd.f32 %v1932, 0.041655596
  %v1934 = vmul.f32 %v1931, %v1933
  %v1935 = vadd.f32 %v1934, -0.4999988
  %v1936 = vmul.f32 %v1931, %v1935
  %v1937 = vadd.f32 1.0, %v1936
  %v1938 = vmul.f32 %v1929, %v1929
  %v1939 = vmul.f32 %v1938, -0.00019511016
  %v1940 = vadd.f32 %v1939, 0.008332121
  %v1941 = vmul.f32 %v1938, %v1940
  %v1942 = vadd.f32 %v1941, -0.16666654
  %v1943 = vmul.f32 %v1938, %v1942
  %v1944 = vadd.f32 %v1943, 1.0
  %v1945 = vmul.f32 %v1944, %v1929
  %vm1946 = vweird.f32 %v1802
  %v1947 = vadd.s32 %v1930, 3
  %v1948 = vand.u32 %v1947, 3
  %vm1949 = vcmp.lt.s32.totalorder %v1948, 2
  %vm1950 = vcmp.eq.s32.totalorder %v1948, 0
  %v1951 = vxor.u32 %v1945, 2147483648
  %v1952 = vsel %vm1950, %v1937, %v1951
  %vm1953 = vcmp.eq.s32.totalorder %v1948, 2
  %v1954 = vxor.u32 %v1937, 2147483648
  %v1955 = vsel %vm1953, %v1954, %v1945
  %v1956 = vsel %vm1949, %v1952, %v1955
  %v1957 = vsel %vm1946, nan, %v1956
  %v1958 = vadd.f32 %v1792, %v1957
  %1959 = vset.pattern.permute.xlu0 4
  %1960 = vperm.xlu0 %1959, %v1288
  %v1961 = vpop.permute.xlu0 %1960
  %v1963 = vmul.f32 %v1961, %v1295
  %1964 = vset.pattern.permute.xlu0 4
  %1965 = vperm.xlu0 %1964, %v1298
  %v1966 = vpop.permute.xlu0 %1965
  %v1968 = vadd.f32 %v1963, %v1966
  %v1969 = vand.u32 2147483647, %v1968
  %vm1970 = vcmp.le.f32.partialorder %v1969, 0.7853982
  %vm1971 = vcmp.lt.s32.totalorder %v1968, 0
  %v1972 = vand.u32 %v1968, 2139095040
  %v1973 = vshrl.u32 %v1972, 23
  %v1974 = vsub.s32 %v1973, 127
  %v1975 = vand.u32 2147483647, %v1968
  %v1976 = vand.u32 %v1975, 8388607
  %v1977 = vor.u32 %v1976, 8388608
  %v1978 = vsub.s32 0, %v1977
  %v1979 = vadd.s32 %v1974, 1
  %vm1980 = vcmp.gt.s32.totalorder %v1979, 0
  %v1981 = vsel %vm1980, %v1979, 0
  %v1982 = vshrl.u32 %v1981, 5
  %v1983 = vand.u32 %v1981, 31
  %v1984 = vsub.s32 32, %v1983
  %v1985 = vshrl.u32 683565275, %v1984
  %v1986 = vshll.u32 683565275, %v1983
  %v1987 = vshrl.u32 2475754826, %v1984
  %v1988 = vor.u32 %v1986, %v1987
  %v1989 = vshll.u32 2475754826, %v1983
  %v1990 = vshrl.u32 2131351028, %v1984
  %v1991 = vor.u32 %v1989, %v1990
  %v1992 = vshll.u32 2131351028, %v1983
  %v1993 = vshrl.u32 2102212464, %v1984
  %v1994 = vor.u32 %v1992, %v1993
  %v1995 = vshll.u32 2102212464, %v1983
  %v1996 = vshrl.u32 920167782, %v1984
  %v1997 = vor.u32 %v1995, %v1996
  %v1998 = vshll.u32 920167782, %v1983
  %v1999 = vshrl.u32 1326507024, %v1984
  %v2000 = vor.u32 %v1998, %v1999
  %vm2001 = vcmp.lt.s32.totalorder %v1982, 1
  %vm2002 = vcmp.lt.s32.totalorder %v1982, 2
  %vm2003 = vcmp.lt.s32.totalorder %v1982, 3
  %vm2004 = vcmp.lt.s32.totalorder %v1982, 4
  %v2005 = vsel %vm2001, %v1985, %v1988
  %v2006 = vsel %vm2004, %v1994, 2102212464
  %v2007 = vsel %vm2003, %v1991, %v2006
  %v2008 = vsel %vm2002, %v2005, %v2007
  %v2009 = vsel %vm2001, %v1988, %v1991
  %v2010 = vsel %vm2004, %v1997, 920167782
  %v2011 = vsel %vm2003, %v1994, %v2010
  %v2012 = vsel %vm2002, %v2009, %v2011
  %v2013 = vsel %vm2001, %v1991, %v1994
  %v2014 = vsel %vm2004, %v2000, 1326507024
  %v2015 = vsel %vm2003, %v1997, %v2014
  %v2016 = vsel %vm2002, %v2013, %v2015
  %v2017 = vshll.u32 %v1977, 8
  %v2018 = vand.u32 %v2017, 65535
  %v2019 = vshrl.u32 %v2017, 16
  %v2020 = vand.u32 %v2016, 65535
  %v2021 = vshrl.u32 %v2016, 16
  %v2022 = vmul.u32 %v2018, %v2020
  %v2023 = vmul.u32 %v2018, %v2021
  %v2024 = vmul.u32 %v2019, %v2020
  %v2025 = vmul.u32 %v2019, %v2021
  %v2026 = vshll.u32 %v2023, 16
  %v2027 = vshrl.u32 %v2023, 16
  %v2028 = vshll.u32 %v2024, 16
  %v2029 = vshrl.u32 %v2024, 16
  %vm2030 = vc.u32 %v2022, %v2026
  %v2031 = vsel %vm2030, 1, 0
  %v2032 = vadd.s32 %v2022, %v2026
  %v2033 = vadd.s32 %v2025, %v2031
  %vm2034 = vc.u32 %v2032, %v2028
  %v2035 = vsel %vm2034, 1, 0
  %v2036 = vadd.s32 %v2032, %v2028
  %v2037 = vadd.s32 %v2033, %v2035
  %v2038 = vadd.s32 %v2037, %v2027
  %v2039 = vadd.s32 %v2038, %v2029
  %v2040 = vand.u32 %v2017, 65535
  %v2041 = vshrl.u32 %v2017, 16
  %v2042 = vand.u32 %v2012, 65535
  %v2043 = vshrl.u32 %v2012, 16
  %v2044 = vmul.u32 %v2040, %v2042
  %v2045 = vmul.u32 %v2040, %v2043
  %v2046 = vmul.u32 %v2041, %v2042
  %v2047 = vmul.u32 %v2041, %v2043
  %v2048 = vshll.u32 %v2045, 16
  %v2049 = vshrl.u32 %v2045, 16
  %v2050 = vshll.u32 %v2046, 16
  %v2051 = vshrl.u32 %v2046, 16
  %vm2052 = vc.u32 %v2044, %v2048
  %v2053 = vsel %vm2052, 1, 0
  %v2054 = vadd.s32 %v2044, %v2048
  %v2055 = vadd.s32 %v2047, %v2053
  %vm2056 = vc.u32 %v2054, %v2050
  %v2057 = vsel %vm2056, 1, 0
  %v2058 = vadd.s32 %v2054, %v2050
  %v2059 = vadd.s32 %v2055, %v2057
  %v2060 = vadd.s32 %v2059, %v2049
  %v2061 = vadd.s32 %v2060, %v2051
  %v2062 = vmul.u32 %v2017, %v2008
  %v2063 = vadd.s32 %v2039, %v2058
  %vm2064 = vc.u32 %v2039, %v2058
  %v2065 = vadd.s32 %v2061, 1
  %v2066 = vsel %vm2064, %v2065, %v2061
  %v2067 = vadd.s32 %v2062, %v2066
  %v2068 = vadd.s32 %v2067, 536870912
  %v2069 = vshrl.u32 %v2068, 30
  %v2070 = vshll.u32 %v2069, 30
  %v2071 = vsub.s32 %v2067, %v2070
  %vm2072 = vcmp.lt.s32.totalorder %v2071, 0
  %v2073 = vsub.s32 0, %v2071
  %v2074 = vsel %vm2072, %v2073, %v2071
  %v2075 = vclz %v2074
  %v2076 = vsub.s32 %v2075, 2
  %vm2077 = vcmp.gt.s32.totalorder 0, %v2076
  %v2078 = vsel %vm2077, 0, %v2076
  %v2079 = vsub.s32 32, %v2078
  %v2080 = vshll.u32 %v2071, %v2078
  %v2081 = vshrl.u32 %v2063, %v2079
  %v2082 = vor.u32 %v2080, %v2081
  %v2083 = vsub.s32 4294967266, %v2078
  %v2084 = vadd.s32 %v2083, 127
  %v2085 = vshll.u32 %v2084, 23
  %v2086 = vor.u32 4788187, %v2085
  %v2087 = vand.u32 2147483647, %v2086
  %v2089 = vcvt.s32.f32 %v2082
  %v2090 = vmul.f32 %v2089, %v2087
  %v2091 = vxor.u32 %v2090, 2147483648
  %v2092 = vsel %vm1971, %v2091, %v2090
  %v2093 = vsub.s32 4, %v2069
  %v2094 = vsel %vm1971, %v2093, %v2069
  %v2095 = vsel %vm1970, %v1968, %v2092
  %v2096 = vsel %vm1970, 0, %v2094
  %v2097 = vmul.f32 %v2095, %v2095
  %v2098 = vmul.f32 %v2097, -0.001358992
  %v2099 = vadd.f32 %v2098, 0.041655596
  %v2100 = vmul.f32 %v2097, %v2099
  %v2101 = vadd.f32 %v2100, -0.4999988
  %v2102 = vmul.f32 %v2097, %v2101
  %v2103 = vadd.f32 1.0, %v2102
  %v2104 = vmul.f32 %v2095, %v2095
  %v2105 = vmul.f32 %v2104, -0.00019511016
  %v2106 = vadd.f32 %v2105, 0.008332121
  %v2107 = vmul.f32 %v2104, %v2106
  %v2108 = vadd.f32 %v2107, -0.16666654
  %v2109 = vmul.f32 %v2104, %v2108
  %v2110 = vadd.f32 %v2109, 1.0
  %v2111 = vmul.f32 %v2110, %v2095
  %vm2112 = vweird.f32 %v1968
  %v2113 = vadd.s32 %v2096, 3
  %v2114 = vand.u32 %v2113, 3
  %vm2115 = vcmp.lt.s32.totalorder %v2114, 2
  %vm2116 = vcmp.eq.s32.totalorder %v2114, 0
  %v2117 = vxor.u32 %v2111, 2147483648
  %v2118 = vsel %vm2116, %v2103, %v2117
  %vm2119 = vcmp.eq.s32.totalorder %v2114, 2
  %v2120 = vxor.u32 %v2103, 2147483648
  %v2121 = vsel %vm2119, %v2120, %v2111
  %v2122 = vsel %vm2115, %v2118, %v2121
  %v2123 = vsel %vm2112, nan, %v2122
  %v2124 = vadd.f32 %v1958, %v2123
  %2125 = vset.pattern.permute.xlu0 5
  %2126 = vperm.xlu0 %2125, %v1288
  %v2127 = vpop.permute.xlu0 %2126
  %v2129 = vmul.f32 %v2127, %v1295
  %2130 = vset.pattern.permute.xlu0 5
  %2131 = vperm.xlu0 %2130, %v1298
  %v2132 = vpop.permute.xlu0 %2131
  %v2134 = vadd.f32 %v2129, %v2132
  %v2135 = vand.u32 2147483647, %v2134
  %vm2136 = vcmp.le.f32.partialorder %v2135, 0.7853982
  %vm2137 = vcmp.lt.s32.totalorder %v2134, 0
  %v2138 = vand.u32 %v2134, 2139095040
  %v2139 = vshrl.u32 %v2138, 23
  %v2140 = vsub.s32 %v2139, 127
  %v2141 = vand.u32 2147483647, %v2134
  %v2142 = vand.u32 %v2141, 8388607
  %v2143 = vor.u32 %v2142, 8388608
  %v2144 = vsub.s32 0, %v2143
  %v2145 = vadd.s32 %v2140, 1
  %vm2146 = vcmp.gt.s32.totalorder %v2145, 0
  %v2147 = vsel %vm2146, %v2145, 0
  %v2148 = vshrl.u32 %v2147, 5
  %v2149 = vand.u32 %v2147, 31
  %v2150 = vsub.s32 32, %v2149
  %v2151 = vshrl.u32 683565275, %v2150
  %v2152 = vshll.u32 683565275, %v2149
  %v2153 = vshrl.u32 2475754826, %v2150
  %v2154 = vor.u32 %v2152, %v2153
  %v2155 = vshll.u32 2475754826, %v2149
  %v2156 = vshrl.u32 2131351028, %v2150
  %v2157 = vor.u32 %v2155, %v2156
  %v2158 = vshll.u32 2131351028, %v2149
  %v2159 = vshrl.u32 2102212464, %v2150
  %v2160 = vor.u32 %v2158, %v2159
  %v2161 = vshll.u32 2102212464, %v2149
  %v2162 = vshrl.u32 920167782, %v2150
  %v2163 = vor.u32 %v2161, %v2162
  %v2164 = vshll.u32 920167782, %v2149
  %v2165 = vshrl.u32 1326507024, %v2150
  %v2166 = vor.u32 %v2164, %v2165
  %vm2167 = vcmp.lt.s32.totalorder %v2148, 1
  %vm2168 = vcmp.lt.s32.totalorder %v2148, 2
  %vm2169 = vcmp.lt.s32.totalorder %v2148, 3
  %vm2170 = vcmp.lt.s32.totalorder %v2148, 4
  %v2171 = vsel %vm2167, %v2151, %v2154
  %v2172 = vsel %vm2170, %v2160, 2102212464
  %v2173 = vsel %vm2169, %v2157, %v2172
  %v2174 = vsel %vm2168, %v2171, %v2173
  %v2175 = vsel %vm2167, %v2154, %v2157
  %v2176 = vsel %vm2170, %v2163, 920167782
  %v2177 = vsel %vm2169, %v2160, %v2176
  %v2178 = vsel %vm2168, %v2175, %v2177
  %v2179 = vsel %vm2167, %v2157, %v2160
  %v2180 = vsel %vm2170, %v2166, 1326507024
  %v2181 = vsel %vm2169, %v2163, %v2180
  %v2182 = vsel %vm2168, %v2179, %v2181
  %v2183 = vshll.u32 %v2143, 8
  %v2184 = vand.u32 %v2183, 65535
  %v2185 = vshrl.u32 %v2183, 16
  %v2186 = vand.u32 %v2182, 65535
  %v2187 = vshrl.u32 %v2182, 16
  %v2188 = vmul.u32 %v2184, %v2186
  %v2189 = vmul.u32 %v2184, %v2187
  %v2190 = vmul.u32 %v2185, %v2186
  %v2191 = vmul.u32 %v2185, %v2187
  %v2192 = vshll.u32 %v2189, 16
  %v2193 = vshrl.u32 %v2189, 16
  %v2194 = vshll.u32 %v2190, 16
  %v2195 = vshrl.u32 %v2190, 16
  %vm2196 = vc.u32 %v2188, %v2192
  %v2197 = vsel %vm2196, 1, 0
  %v2198 = vadd.s32 %v2188, %v2192
  %v2199 = vadd.s32 %v2191, %v2197
  %vm2200 = vc.u32 %v2198, %v2194
  %v2201 = vsel %vm2200, 1, 0
  %v2202 = vadd.s32 %v2198, %v2194
  %v2203 = vadd.s32 %v2199, %v2201
  %v2204 = vadd.s32 %v2203, %v2193
  %v2205 = vadd.s32 %v2204, %v2195
  %v2206 = vand.u32 %v2183, 65535
  %v2207 = vshrl.u32 %v2183, 16
  %v2208 = vand.u32 %v2178, 65535
  %v2209 = vshrl.u32 %v2178, 16
  %v2210 = vmul.u32 %v2206, %v2208
  %v2211 = vmul.u32 %v2206, %v2209
  %v2212 = vmul.u32 %v2207, %v2208
  %v2213 = vmul.u32 %v2207, %v2209
  %v2214 = vshll.u32 %v2211, 16
  %v2215 = vshrl.u32 %v2211, 16
  %v2216 = vshll.u32 %v2212, 16
  %v2217 = vshrl.u32 %v2212, 16
  %vm2218 = vc.u32 %v2210, %v2214
  %v2219 = vsel %vm2218, 1, 0
  %v2220 = vadd.s32 %v2210, %v2214
  %v2221 = vadd.s32 %v2213, %v2219
  %vm2222 = vc.u32 %v2220, %v2216
  %v2223 = vsel %vm2222, 1, 0
  %v2224 = vadd.s32 %v2220, %v2216
  %v2225 = vadd.s32 %v2221, %v2223
  %v2226 = vadd.s32 %v2225, %v2215
  %v2227 = vadd.s32 %v2226, %v2217
  %v2228 = vmul.u32 %v2183, %v2174
  %v2229 = vadd.s32 %v2205, %v2224
  %vm2230 = vc.u32 %v2205, %v2224
  %v2231 = vadd.s32 %v2227, 1
  %v2232 = vsel %vm2230, %v2231, %v2227
  %v2233 = vadd.s32 %v2228, %v2232
  %v2234 = vadd.s32 %v2233, 536870912
  %v2235 = vshrl.u32 %v2234, 30
  %v2236 = vshll.u32 %v2235, 30
  %v2237 = vsub.s32 %v2233, %v2236
  %vm2238 = vcmp.lt.s32.totalorder %v2237, 0
  %v2239 = vsub.s32 0, %v2237
  %v2240 = vsel %vm2238, %v2239, %v2237
  %v2241 = vclz %v2240
  %v2242 = vsub.s32 %v2241, 2
  %vm2243 = vcmp.gt.s32.totalorder 0, %v2242
  %v2244 = vsel %vm2243, 0, %v2242
  %v2245 = vsub.s32 32, %v2244
  %v2246 = vshll.u32 %v2237, %v2244
  %v2247 = vshrl.u32 %v2229, %v2245
  %v2248 = vor.u32 %v2246, %v2247
  %v2249 = vsub.s32 4294967266, %v2244
  %v2250 = vadd.s32 %v2249, 127
  %v2251 = vshll.u32 %v2250, 23
  %v2252 = vor.u32 4788187, %v2251
  %v2253 = vand.u32 2147483647, %v2252
  %v2255 = vcvt.s32.f32 %v2248
  %v2256 = vmul.f32 %v2255, %v2253
  %v2257 = vxor.u32 %v2256, 2147483648
  %v2258 = vsel %vm2137, %v2257, %v2256
  %v2259 = vsub.s32 4, %v2235
  %v2260 = vsel %vm2137, %v2259, %v2235
  %v2261 = vsel %vm2136, %v2134, %v2258
  %v2262 = vsel %vm2136, 0, %v2260
  %v2263 = vmul.f32 %v2261, %v2261
  %v2264 = vmul.f32 %v2263, -0.001358992
  %v2265 = vadd.f32 %v2264, 0.041655596
  %v2266 = vmul.f32 %v2263, %v2265
  %v2267 = vadd.f32 %v2266, -0.4999988
  %v2268 = vmul.f32 %v2263, %v2267
  %v2269 = vadd.f32 1.0, %v2268
  %v2270 = vmul.f32 %v2261, %v2261
  %v2271 = vmul.f32 %v2270, -0.00019511016
  %v2272 = vadd.f32 %v2271, 0.008332121
  %v2273 = vmul.f32 %v2270, %v2272
  %v2274 = vadd.f32 %v2273, -0.16666654
  %v2275 = vmul.f32 %v2270, %v2274
  %v2276 = vadd.f32 %v2275, 1.0
  %v2277 = vmul.f32 %v2276, %v2261
  %vm2278 = vweird.f32 %v2134
  %v2279 = vadd.s32 %v2262, 3
  %v2280 = vand.u32 %v2279, 3
  %vm2281 = vcmp.lt.s32.totalorder %v2280, 2
  %vm2282 = vcmp.eq.s32.totalorder %v2280, 0
  %v2283 = vxor.u32 %v2277, 2147483648
  %v2284 = vsel %vm2282, %v2269, %v2283
  %vm2285 = vcmp.eq.s32.totalorder %v2280, 2
  %v2286 = vxor.u32 %v2269, 2147483648
  %v2287 = vsel %vm2285, %v2286, %v2277
  %v2288 = vsel %vm2281, %v2284, %v2287
  %v2289 = vsel %vm2278, nan, %v2288
  %v2290 = vadd.f32 %v2124, %v2289
  %2291 = vset.pattern.permute.xlu0 6
  %2292 = vperm.xlu0 %2291, %v1288
  %v2293 = vpop.permute.xlu0 %2292
  %v2295 = vmul.f32 %v2293, %v1295
  %2296 = vset.pattern.permute.xlu0 6
  %2297 = vperm.xlu0 %2296, %v1298
  %v2298 = vpop.permute.xlu0 %2297
  %v2300 = vadd.f32 %v2295, %v2298
  %v2301 = vand.u32 2147483647, %v2300
  %vm2302 = vcmp.le.f32.partialorder %v2301, 0.7853982
  %vm2303 = vcmp.lt.s32.totalorder %v2300, 0
  %v2304 = vand.u32 %v2300, 2139095040
  %v2305 = vshrl.u32 %v2304, 23
  %v2306 = vsub.s32 %v2305, 127
  %v2307 = vand.u32 2147483647, %v2300
  %v2308 = vand.u32 %v2307, 8388607
  %v2309 = vor.u32 %v2308, 8388608
  %v2310 = vsub.s32 0, %v2309
  %v2311 = vadd.s32 %v2306, 1
  %vm2312 = vcmp.gt.s32.totalorder %v2311, 0
  %v2313 = vsel %vm2312, %v2311, 0
  %v2314 = vshrl.u32 %v2313, 5
  %v2315 = vand.u32 %v2313, 31
  %v2316 = vsub.s32 32, %v2315
  %v2317 = vshrl.u32 683565275, %v2316
  %v2318 = vshll.u32 683565275, %v2315
  %v2319 = vshrl.u32 2475754826, %v2316
  %v2320 = vor.u32 %v2318, %v2319
  %v2321 = vshll.u32 2475754826, %v2315
  %v2322 = vshrl.u32 2131351028, %v2316
  %v2323 = vor.u32 %v2321, %v2322
  %v2324 = vshll.u32 2131351028, %v2315
  %v2325 = vshrl.u32 2102212464, %v2316
  %v2326 = vor.u32 %v2324, %v2325
  %v2327 = vshll.u32 2102212464, %v2315
  %v2328 = vshrl.u32 920167782, %v2316
  %v2329 = vor.u32 %v2327, %v2328
  %v2330 = vshll.u32 920167782, %v2315
  %v2331 = vshrl.u32 1326507024, %v2316
  %v2332 = vor.u32 %v2330, %v2331
  %vm2333 = vcmp.lt.s32.totalorder %v2314, 1
  %vm2334 = vcmp.lt.s32.totalorder %v2314, 2
  %vm2335 = vcmp.lt.s32.totalorder %v2314, 3
  %vm2336 = vcmp.lt.s32.totalorder %v2314, 4
  %v2337 = vsel %vm2333, %v2317, %v2320
  %v2338 = vsel %vm2336, %v2326, 2102212464
  %v2339 = vsel %vm2335, %v2323, %v2338
  %v2340 = vsel %vm2334, %v2337, %v2339
  %v2341 = vsel %vm2333, %v2320, %v2323
  %v2342 = vsel %vm2336, %v2329, 920167782
  %v2343 = vsel %vm2335, %v2326, %v2342
  %v2344 = vsel %vm2334, %v2341, %v2343
  %v2345 = vsel %vm2333, %v2323, %v2326
  %v2346 = vsel %vm2336, %v2332, 1326507024
  %v2347 = vsel %vm2335, %v2329, %v2346
  %v2348 = vsel %vm2334, %v2345, %v2347
  %v2349 = vshll.u32 %v2309, 8
  %v2350 = vand.u32 %v2349, 65535
  %v2351 = vshrl.u32 %v2349, 16
  %v2352 = vand.u32 %v2348, 65535
  %v2353 = vshrl.u32 %v2348, 16
  %v2354 = vmul.u32 %v2350, %v2352
  %v2355 = vmul.u32 %v2350, %v2353
  %v2356 = vmul.u32 %v2351, %v2352
  %v2357 = vmul.u32 %v2351, %v2353
  %v2358 = vshll.u32 %v2355, 16
  %v2359 = vshrl.u32 %v2355, 16
  %v2360 = vshll.u32 %v2356, 16
  %v2361 = vshrl.u32 %v2356, 16
  %vm2362 = vc.u32 %v2354, %v2358
  %v2363 = vsel %vm2362, 1, 0
  %v2364 = vadd.s32 %v2354, %v2358
  %v2365 = vadd.s32 %v2357, %v2363
  %vm2366 = vc.u32 %v2364, %v2360
  %v2367 = vsel %vm2366, 1, 0
  %v2368 = vadd.s32 %v2364, %v2360
  %v2369 = vadd.s32 %v2365, %v2367
  %v2370 = vadd.s32 %v2369, %v2359
  %v2371 = vadd.s32 %v2370, %v2361
  %v2372 = vand.u32 %v2349, 65535
  %v2373 = vshrl.u32 %v2349, 16
  %v2374 = vand.u32 %v2344, 65535
  %v2375 = vshrl.u32 %v2344, 16
  %v2376 = vmul.u32 %v2372, %v2374
  %v2377 = vmul.u32 %v2372, %v2375
  %v2378 = vmul.u32 %v2373, %v2374
  %v2379 = vmul.u32 %v2373, %v2375
  %v2380 = vshll.u32 %v2377, 16
  %v2381 = vshrl.u32 %v2377, 16
  %v2382 = vshll.u32 %v2378, 16
  %v2383 = vshrl.u32 %v2378, 16
  %vm2384 = vc.u32 %v2376, %v2380
  %v2385 = vsel %vm2384, 1, 0
  %v2386 = vadd.s32 %v2376, %v2380
  %v2387 = vadd.s32 %v2379, %v2385
  %vm2388 = vc.u32 %v2386, %v2382
  %v2389 = vsel %vm2388, 1, 0
  %v2390 = vadd.s32 %v2386, %v2382
  %v2391 = vadd.s32 %v2387, %v2389
  %v2392 = vadd.s32 %v2391, %v2381
  %v2393 = vadd.s32 %v2392, %v2383
  %v2394 = vmul.u32 %v2349, %v2340
  %v2395 = vadd.s32 %v2371, %v2390
  %vm2396 = vc.u32 %v2371, %v2390
  %v2397 = vadd.s32 %v2393, 1
  %v2398 = vsel %vm2396, %v2397, %v2393
  %v2399 = vadd.s32 %v2394, %v2398
  %v2400 = vadd.s32 %v2399, 536870912
  %v2401 = vshrl.u32 %v2400, 30
  %v2402 = vshll.u32 %v2401, 30
  %v2403 = vsub.s32 %v2399, %v2402
  %vm2404 = vcmp.lt.s32.totalorder %v2403, 0
  %v2405 = vsub.s32 0, %v2403
  %v2406 = vsel %vm2404, %v2405, %v2403
  %v2407 = vclz %v2406
  %v2408 = vsub.s32 %v2407, 2
  %vm2409 = vcmp.gt.s32.totalorder 0, %v2408
  %v2410 = vsel %vm2409, 0, %v2408
  %v2411 = vsub.s32 32, %v2410
  %v2412 = vshll.u32 %v2403, %v2410
  %v2413 = vshrl.u32 %v2395, %v2411
  %v2414 = vor.u32 %v2412, %v2413
  %v2415 = vsub.s32 4294967266, %v2410
  %v2416 = vadd.s32 %v2415, 127
  %v2417 = vshll.u32 %v2416, 23
  %v2418 = vor.u32 4788187, %v2417
  %v2419 = vand.u32 2147483647, %v2418
  %v2421 = vcvt.s32.f32 %v2414
  %v2422 = vmul.f32 %v2421, %v2419
  %v2423 = vxor.u32 %v2422, 2147483648
  %v2424 = vsel %vm2303, %v2423, %v2422
  %v2425 = vsub.s32 4, %v2401
  %v2426 = vsel %vm2303, %v2425, %v2401
  %v2427 = vsel %vm2302, %v2300, %v2424
  %v2428 = vsel %vm2302, 0, %v2426
  %v2429 = vmul.f32 %v2427, %v2427
  %v2430 = vmul.f32 %v2429, -0.001358992
  %v2431 = vadd.f32 %v2430, 0.041655596
  %v2432 = vmul.f32 %v2429, %v2431
  %v2433 = vadd.f32 %v2432, -0.4999988
  %v2434 = vmul.f32 %v2429, %v2433
  %v2435 = vadd.f32 1.0, %v2434
  %v2436 = vmul.f32 %v2427, %v2427
  %v2437 = vmul.f32 %v2436, -0.00019511016
  %v2438 = vadd.f32 %v2437, 0.008332121
  %v2439 = vmul.f32 %v2436, %v2438
  %v2440 = vadd.f32 %v2439, -0.16666654
  %v2441 = vmul.f32 %v2436, %v2440
  %v2442 = vadd.f32 %v2441, 1.0
  %v2443 = vmul.f32 %v2442, %v2427
  %vm2444 = vweird.f32 %v2300
  %v2445 = vadd.s32 %v2428, 3
  %v2446 = vand.u32 %v2445, 3
  %vm2447 = vcmp.lt.s32.totalorder %v2446, 2
  %vm2448 = vcmp.eq.s32.totalorder %v2446, 0
  %v2449 = vxor.u32 %v2443, 2147483648
  %v2450 = vsel %vm2448, %v2435, %v2449
  %vm2451 = vcmp.eq.s32.totalorder %v2446, 2
  %v2452 = vxor.u32 %v2435, 2147483648
  %v2453 = vsel %vm2451, %v2452, %v2443
  %v2454 = vsel %vm2447, %v2450, %v2453
  %v2455 = vsel %vm2444, nan, %v2454
  %v2456 = vadd.f32 %v2290, %v2455
  %2457 = vset.pattern.permute.xlu0 7
  %2458 = vperm.xlu0 %2457, %v1288
  %v2459 = vpop.permute.xlu0 %2458
  %v2461 = vmul.f32 %v2459, %v1295
  %2462 = vset.pattern.permute.xlu0 7
  %2463 = vperm.xlu0 %2462, %v1298
  %v2464 = vpop.permute.xlu0 %2463
  %v2466 = vadd.f32 %v2461, %v2464
  %v2467 = vand.u32 2147483647, %v2466
  %vm2468 = vcmp.le.f32.partialorder %v2467, 0.7853982
  %vm2469 = vcmp.lt.s32.totalorder %v2466, 0
  %v2470 = vand.u32 %v2466, 2139095040
  %v2471 = vshrl.u32 %v2470, 23
  %v2472 = vsub.s32 %v2471, 127
  %v2473 = vand.u32 2147483647, %v2466
  %v2474 = vand.u32 %v2473, 8388607
  %v2475 = vor.u32 %v2474, 8388608
  %v2476 = vsub.s32 0, %v2475
  %v2477 = vadd.s32 %v2472, 1
  %vm2478 = vcmp.gt.s32.totalorder %v2477, 0
  %v2479 = vsel %vm2478, %v2477, 0
  %v2480 = vshrl.u32 %v2479, 5
  %v2481 = vand.u32 %v2479, 31
  %v2482 = vsub.s32 32, %v2481
  %v2483 = vshrl.u32 683565275, %v2482
  %v2484 = vshll.u32 683565275, %v2481
  %v2485 = vshrl.u32 2475754826, %v2482
  %v2486 = vor.u32 %v2484, %v2485
  %v2487 = vshll.u32 2475754826, %v2481
  %v2488 = vshrl.u32 2131351028, %v2482
  %v2489 = vor.u32 %v2487, %v2488
  %v2490 = vshll.u32 2131351028, %v2481
  %v2491 = vshrl.u32 2102212464, %v2482
  %v2492 = vor.u32 %v2490, %v2491
  %v2493 = vshll.u32 2102212464, %v2481
  %v2494 = vshrl.u32 920167782, %v2482
  %v2495 = vor.u32 %v2493, %v2494
  %v2496 = vshll.u32 920167782, %v2481
  %v2497 = vshrl.u32 1326507024, %v2482
  %v2498 = vor.u32 %v2496, %v2497
  %vm2499 = vcmp.lt.s32.totalorder %v2480, 1
  %vm2500 = vcmp.lt.s32.totalorder %v2480, 2
  %vm2501 = vcmp.lt.s32.totalorder %v2480, 3
  %vm2502 = vcmp.lt.s32.totalorder %v2480, 4
  %v2503 = vsel %vm2499, %v2483, %v2486
  %v2504 = vsel %vm2502, %v2492, 2102212464
  %v2505 = vsel %vm2501, %v2489, %v2504
  %v2506 = vsel %vm2500, %v2503, %v2505
  %v2507 = vsel %vm2499, %v2486, %v2489
  %v2508 = vsel %vm2502, %v2495, 920167782
  %v2509 = vsel %vm2501, %v2492, %v2508
  %v2510 = vsel %vm2500, %v2507, %v2509
  %v2511 = vsel %vm2499, %v2489, %v2492
  %v2512 = vsel %vm2502, %v2498, 1326507024
  %v2513 = vsel %vm2501, %v2495, %v2512
  %v2514 = vsel %vm2500, %v2511, %v2513
  %v2515 = vshll.u32 %v2475, 8
  %v2516 = vand.u32 %v2515, 65535
  %v2517 = vshrl.u32 %v2515, 16
  %v2518 = vand.u32 %v2514, 65535
  %v2519 = vshrl.u32 %v2514, 16
  %v2520 = vmul.u32 %v2516, %v2518
  %v2521 = vmul.u32 %v2516, %v2519
  %v2522 = vmul.u32 %v2517, %v2518
  %v2523 = vmul.u32 %v2517, %v2519
  %v2524 = vshll.u32 %v2521, 16
  %v2525 = vshrl.u32 %v2521, 16
  %v2526 = vshll.u32 %v2522, 16
  %v2527 = vshrl.u32 %v2522, 16
  %vm2528 = vc.u32 %v2520, %v2524
  %v2529 = vsel %vm2528, 1, 0
  %v2530 = vadd.s32 %v2520, %v2524
  %v2531 = vadd.s32 %v2523, %v2529
  %vm2532 = vc.u32 %v2530, %v2526
  %v2533 = vsel %vm2532, 1, 0
  %v2534 = vadd.s32 %v2530, %v2526
  %v2535 = vadd.s32 %v2531, %v2533
  %v2536 = vadd.s32 %v2535, %v2525
  %v2537 = vadd.s32 %v2536, %v2527
  %v2538 = vand.u32 %v2515, 65535
  %v2539 = vshrl.u32 %v2515, 16
  %v2540 = vand.u32 %v2510, 65535
  %v2541 = vshrl.u32 %v2510, 16
  %v2542 = vmul.u32 %v2538, %v2540
  %v2543 = vmul.u32 %v2538, %v2541
  %v2544 = vmul.u32 %v2539, %v2540
  %v2545 = vmul.u32 %v2539, %v2541
  %v2546 = vshll.u32 %v2543, 16
  %v2547 = vshrl.u32 %v2543, 16
  %v2548 = vshll.u32 %v2544, 16
  %v2549 = vshrl.u32 %v2544, 16
  %vm2550 = vc.u32 %v2542, %v2546
  %v2551 = vsel %vm2550, 1, 0
  %v2552 = vadd.s32 %v2542, %v2546
  %v2553 = vadd.s32 %v2545, %v2551
  %vm2554 = vc.u32 %v2552, %v2548
  %v2555 = vsel %vm2554, 1, 0
  %v2556 = vadd.s32 %v2552, %v2548
  %v2557 = vadd.s32 %v2553, %v2555
  %v2558 = vadd.s32 %v2557, %v2547
  %v2559 = vadd.s32 %v2558, %v2549
  %v2560 = vmul.u32 %v2515, %v2506
  %v2561 = vadd.s32 %v2537, %v2556
  %vm2562 = vc.u32 %v2537, %v2556
  %v2563 = vadd.s32 %v2559, 1
  %v2564 = vsel %vm2562, %v2563, %v2559
  %v2565 = vadd.s32 %v2560, %v2564
  %v2566 = vadd.s32 %v2565, 536870912
  %v2567 = vshrl.u32 %v2566, 30
  %v2568 = vshll.u32 %v2567, 30
  %v2569 = vsub.s32 %v2565, %v2568
  %vm2570 = vcmp.lt.s32.totalorder %v2569, 0
  %v2571 = vsub.s32 0, %v2569
  %v2572 = vsel %vm2570, %v2571, %v2569
  %v2573 = vclz %v2572
  %v2574 = vsub.s32 %v2573, 2
  %vm2575 = vcmp.gt.s32.totalorder 0, %v2574
  %v2576 = vsel %vm2575, 0, %v2574
  %v2577 = vsub.s32 32, %v2576
  %v2578 = vshll.u32 %v2569, %v2576
  %v2579 = vshrl.u32 %v2561, %v2577
  %v2580 = vor.u32 %v2578, %v2579
  %v2581 = vsub.s32 4294967266, %v2576
  %v2582 = vadd.s32 %v2581, 127
  %v2583 = vshll.u32 %v2582, 23
  %v2584 = vor.u32 4788187, %v2583
  %v2585 = vand.u32 2147483647, %v2584
  %v2587 = vcvt.s32.f32 %v2580
  %v2588 = vmul.f32 %v2587, %v2585
  %v2589 = vxor.u32 %v2588, 2147483648
  %v2590 = vsel %vm2469, %v2589, %v2588
  %v2591 = vsub.s32 4, %v2567
  %v2592 = vsel %vm2469, %v2591, %v2567
  %v2593 = vsel %vm2468, %v2466, %v2590
  %v2594 = vsel %vm2468, 0, %v2592
  %v2595 = vmul.f32 %v2593, %v2593
  %v2596 = vmul.f32 %v2595, -0.001358992
  %v2597 = vadd.f32 %v2596, 0.041655596
  %v2598 = vmul.f32 %v2595, %v2597
  %v2599 = vadd.f32 %v2598, -0.4999988
  %v2600 = vmul.f32 %v2595, %v2599
  %v2601 = vadd.f32 1.0, %v2600
  %v2602 = vmul.f32 %v2593, %v2593
  %v2603 = vmul.f32 %v2602, -0.00019511016
  %v2604 = vadd.f32 %v2603, 0.008332121
  %v2605 = vmul.f32 %v2602, %v2604
  %v2606 = vadd.f32 %v2605, -0.16666654
  %v2607 = vmul.f32 %v2602, %v2606
  %v2608 = vadd.f32 %v2607, 1.0
  %v2609 = vmul.f32 %v2608, %v2593
  %vm2610 = vweird.f32 %v2466
  %v2611 = vadd.s32 %v2594, 3
  %v2612 = vand.u32 %v2611, 3
  %vm2613 = vcmp.lt.s32.totalorder %v2612, 2
  %vm2614 = vcmp.eq.s32.totalorder %v2612, 0
  %v2615 = vxor.u32 %v2609, 2147483648
  %v2616 = vsel %vm2614, %v2601, %v2615
  %vm2617 = vcmp.eq.s32.totalorder %v2612, 2
  %v2618 = vxor.u32 %v2601, 2147483648
  %v2619 = vsel %vm2617, %v2618, %v2609
  %v2620 = vsel %vm2613, %v2616, %v2619
  %v2621 = vsel %vm2610, nan, %v2620
  %v2622 = vadd.f32 %v2456, %v2621
  %2623 = vset.pattern.permute.xlu0 8
  %2624 = vperm.xlu0 %2623, %v1288
  %v2625 = vpop.permute.xlu0 %2624
  %v2627 = vmul.f32 %v2625, %v1295
  %2628 = vset.pattern.permute.xlu0 8
  %2629 = vperm.xlu0 %2628, %v1298
  %v2630 = vpop.permute.xlu0 %2629
  %v2632 = vadd.f32 %v2627, %v2630
  %v2633 = vand.u32 2147483647, %v2632
  %vm2634 = vcmp.le.f32.partialorder %v2633, 0.7853982
  %vm2635 = vcmp.lt.s32.totalorder %v2632, 0
  %v2636 = vand.u32 %v2632, 2139095040
  %v2637 = vshrl.u32 %v2636, 23
  %v2638 = vsub.s32 %v2637, 127
  %v2639 = vand.u32 2147483647, %v2632
  %v2640 = vand.u32 %v2639, 8388607
  %v2641 = vor.u32 %v2640, 8388608
  %v2642 = vsub.s32 0, %v2641
  %v2643 = vadd.s32 %v2638, 1
  %vm2644 = vcmp.gt.s32.totalorder %v2643, 0
  %v2645 = vsel %vm2644, %v2643, 0
  %v2646 = vshrl.u32 %v2645, 5
  %v2647 = vand.u32 %v2645, 31
  %v2648 = vsub.s32 32, %v2647
  %v2649 = vshrl.u32 683565275, %v2648
  %v2650 = vshll.u32 683565275, %v2647
  %v2651 = vshrl.u32 2475754826, %v2648
  %v2652 = vor.u32 %v2650, %v2651
  %v2653 = vshll.u32 2475754826, %v2647
  %v2654 = vshrl.u32 2131351028, %v2648
  %v2655 = vor.u32 %v2653, %v2654
  %v2656 = vshll.u32 2131351028, %v2647
  %v2657 = vshrl.u32 2102212464, %v2648
  %v2658 = vor.u32 %v2656, %v2657
  %v2659 = vshll.u32 2102212464, %v2647
  %v2660 = vshrl.u32 920167782, %v2648
  %v2661 = vor.u32 %v2659, %v2660
  %v2662 = vshll.u32 920167782, %v2647
  %v2663 = vshrl.u32 1326507024, %v2648
  %v2664 = vor.u32 %v2662, %v2663
  %vm2665 = vcmp.lt.s32.totalorder %v2646, 1
  %vm2666 = vcmp.lt.s32.totalorder %v2646, 2
  %vm2667 = vcmp.lt.s32.totalorder %v2646, 3
  %vm2668 = vcmp.lt.s32.totalorder %v2646, 4
  %v2669 = vsel %vm2665, %v2649, %v2652
  %v2670 = vsel %vm2668, %v2658, 2102212464
  %v2671 = vsel %vm2667, %v2655, %v2670
  %v2672 = vsel %vm2666, %v2669, %v2671
  %v2673 = vsel %vm2665, %v2652, %v2655
  %v2674 = vsel %vm2668, %v2661, 920167782
  %v2675 = vsel %vm2667, %v2658, %v2674
  %v2676 = vsel %vm2666, %v2673, %v2675
  %v2677 = vsel %vm2665, %v2655, %v2658
  %v2678 = vsel %vm2668, %v2664, 1326507024
  %v2679 = vsel %vm2667, %v2661, %v2678
  %v2680 = vsel %vm2666, %v2677, %v2679
  %v2681 = vshll.u32 %v2641, 8
  %v2682 = vand.u32 %v2681, 65535
  %v2683 = vshrl.u32 %v2681, 16
  %v2684 = vand.u32 %v2680, 65535
  %v2685 = vshrl.u32 %v2680, 16
  %v2686 = vmul.u32 %v2682, %v2684
  %v2687 = vmul.u32 %v2682, %v2685
  %v2688 = vmul.u32 %v2683, %v2684
  %v2689 = vmul.u32 %v2683, %v2685
  %v2690 = vshll.u32 %v2687, 16
  %v2691 = vshrl.u32 %v2687, 16
  %v2692 = vshll.u32 %v2688, 16
  %v2693 = vshrl.u32 %v2688, 16
  %vm2694 = vc.u32 %v2686, %v2690
  %v2695 = vsel %vm2694, 1, 0
  %v2696 = vadd.s32 %v2686, %v2690
  %v2697 = vadd.s32 %v2689, %v2695
  %vm2698 = vc.u32 %v2696, %v2692
  %v2699 = vsel %vm2698, 1, 0
  %v2700 = vadd.s32 %v2696, %v2692
  %v2701 = vadd.s32 %v2697, %v2699
  %v2702 = vadd.s32 %v2701, %v2691
  %v2703 = vadd.s32 %v2702, %v2693
  %v2704 = vand.u32 %v2681, 65535
  %v2705 = vshrl.u32 %v2681, 16
  %v2706 = vand.u32 %v2676, 65535
  %v2707 = vshrl.u32 %v2676, 16
  %v2708 = vmul.u32 %v2704, %v2706
  %v2709 = vmul.u32 %v2704, %v2707
  %v2710 = vmul.u32 %v2705, %v2706
  %v2711 = vmul.u32 %v2705, %v2707
  %v2712 = vshll.u32 %v2709, 16
  %v2713 = vshrl.u32 %v2709, 16
  %v2714 = vshll.u32 %v2710, 16
  %v2715 = vshrl.u32 %v2710, 16
  %vm2716 = vc.u32 %v2708, %v2712
  %v2717 = vsel %vm2716, 1, 0
  %v2718 = vadd.s32 %v2708, %v2712
  %v2719 = vadd.s32 %v2711, %v2717
  %vm2720 = vc.u32 %v2718, %v2714
  %v2721 = vsel %vm2720, 1, 0
  %v2722 = vadd.s32 %v2718, %v2714
  %v2723 = vadd.s32 %v2719, %v2721
  %v2724 = vadd.s32 %v2723, %v2713
  %v2725 = vadd.s32 %v2724, %v2715
  %v2726 = vmul.u32 %v2681, %v2672
  %v2727 = vadd.s32 %v2703, %v2722
  %vm2728 = vc.u32 %v2703, %v2722
  %v2729 = vadd.s32 %v2725, 1
  %v2730 = vsel %vm2728, %v2729, %v2725
  %v2731 = vadd.s32 %v2726, %v2730
  %v2732 = vadd.s32 %v2731, 536870912
  %v2733 = vshrl.u32 %v2732, 30
  %v2734 = vshll.u32 %v2733, 30
  %v2735 = vsub.s32 %v2731, %v2734
  %vm2736 = vcmp.lt.s32.totalorder %v2735, 0
  %v2737 = vsub.s32 0, %v2735
  %v2738 = vsel %vm2736, %v2737, %v2735
  %v2739 = vclz %v2738
  %v2740 = vsub.s32 %v2739, 2
  %vm2741 = vcmp.gt.s32.totalorder 0, %v2740
  %v2742 = vsel %vm2741, 0, %v2740
  %v2743 = vsub.s32 32, %v2742
  %v2744 = vshll.u32 %v2735, %v2742
  %v2745 = vshrl.u32 %v2727, %v2743
  %v2746 = vor.u32 %v2744, %v2745
  %v2747 = vsub.s32 4294967266, %v2742
  %v2748 = vadd.s32 %v2747, 127
  %v2749 = vshll.u32 %v2748, 23
  %v2750 = vor.u32 4788187, %v2749
  %v2751 = vand.u32 2147483647, %v2750
  %v2753 = vcvt.s32.f32 %v2746
  %v2754 = vmul.f32 %v2753, %v2751
  %v2755 = vxor.u32 %v2754, 2147483648
  %v2756 = vsel %vm2635, %v2755, %v2754
  %v2757 = vsub.s32 4, %v2733
  %v2758 = vsel %vm2635, %v2757, %v2733
  %v2759 = vsel %vm2634, %v2632, %v2756
  %v2760 = vsel %vm2634, 0, %v2758
  %v2761 = vmul.f32 %v2759, %v2759
  %v2762 = vmul.f32 %v2761, -0.001358992
  %v2763 = vadd.f32 %v2762, 0.041655596
  %v2764 = vmul.f32 %v2761, %v2763
  %v2765 = vadd.f32 %v2764, -0.4999988
  %v2766 = vmul.f32 %v2761, %v2765
  %v2767 = vadd.f32 1.0, %v2766
  %v2768 = vmul.f32 %v2759, %v2759
  %v2769 = vmul.f32 %v2768, -0.00019511016
  %v2770 = vadd.f32 %v2769, 0.008332121
  %v2771 = vmul.f32 %v2768, %v2770
  %v2772 = vadd.f32 %v2771, -0.16666654
  %v2773 = vmul.f32 %v2768, %v2772
  %v2774 = vadd.f32 %v2773, 1.0
  %v2775 = vmul.f32 %v2774, %v2759
  %vm2776 = vweird.f32 %v2632
  %v2777 = vadd.s32 %v2760, 3
  %v2778 = vand.u32 %v2777, 3
  %vm2779 = vcmp.lt.s32.totalorder %v2778, 2
  %vm2780 = vcmp.eq.s32.totalorder %v2778, 0
  %v2781 = vxor.u32 %v2775, 2147483648
  %v2782 = vsel %vm2780, %v2767, %v2781
  %vm2783 = vcmp.eq.s32.totalorder %v2778, 2
  %v2784 = vxor.u32 %v2767, 2147483648
  %v2785 = vsel %vm2783, %v2784, %v2775
  %v2786 = vsel %vm2779, %v2782, %v2785
  %v2787 = vsel %vm2776, nan, %v2786
  %v2788 = vadd.f32 %v2622, %v2787
  %2789 = vset.pattern.permute.xlu0 9
  %2790 = vperm.xlu0 %2789, %v1288
  %v2791 = vpop.permute.xlu0 %2790
  %v2793 = vmul.f32 %v2791, %v1295
  %2794 = vset.pattern.permute.xlu0 9
  %2795 = vperm.xlu0 %2794, %v1298
  %v2796 = vpop.permute.xlu0 %2795
  %v2798 = vadd.f32 %v2793, %v2796
  %v2799 = vand.u32 2147483647, %v2798
  %vm2800 = vcmp.le.f32.partialorder %v2799, 0.7853982
  %vm2801 = vcmp.lt.s32.totalorder %v2798, 0
  %v2802 = vand.u32 %v2798, 2139095040
  %v2803 = vshrl.u32 %v2802, 23
  %v2804 = vsub.s32 %v2803, 127
  %v2805 = vand.u32 2147483647, %v2798
  %v2806 = vand.u32 %v2805, 8388607
  %v2807 = vor.u32 %v2806, 8388608
  %v2808 = vsub.s32 0, %v2807
  %v2809 = vadd.s32 %v2804, 1
  %vm2810 = vcmp.gt.s32.totalorder %v2809, 0
  %v2811 = vsel %vm2810, %v2809, 0
  %v2812 = vshrl.u32 %v2811, 5
  %v2813 = vand.u32 %v2811, 31
  %v2814 = vsub.s32 32, %v2813
  %v2815 = vshrl.u32 683565275, %v2814
  %v2816 = vshll.u32 683565275, %v2813
  %v2817 = vshrl.u32 2475754826, %v2814
  %v2818 = vor.u32 %v2816, %v2817
  %v2819 = vshll.u32 2475754826, %v2813
  %v2820 = vshrl.u32 2131351028, %v2814
  %v2821 = vor.u32 %v2819, %v2820
  %v2822 = vshll.u32 2131351028, %v2813
  %v2823 = vshrl.u32 2102212464, %v2814
  %v2824 = vor.u32 %v2822, %v2823
  %v2825 = vshll.u32 2102212464, %v2813
  %v2826 = vshrl.u32 920167782, %v2814
  %v2827 = vor.u32 %v2825, %v2826
  %v2828 = vshll.u32 920167782, %v2813
  %v2829 = vshrl.u32 1326507024, %v2814
  %v2830 = vor.u32 %v2828, %v2829
  %vm2831 = vcmp.lt.s32.totalorder %v2812, 1
  %vm2832 = vcmp.lt.s32.totalorder %v2812, 2
  %vm2833 = vcmp.lt.s32.totalorder %v2812, 3
  %vm2834 = vcmp.lt.s32.totalorder %v2812, 4
  %v2835 = vsel %vm2831, %v2815, %v2818
  %v2836 = vsel %vm2834, %v2824, 2102212464
  %v2837 = vsel %vm2833, %v2821, %v2836
  %v2838 = vsel %vm2832, %v2835, %v2837
  %v2839 = vsel %vm2831, %v2818, %v2821
  %v2840 = vsel %vm2834, %v2827, 920167782
  %v2841 = vsel %vm2833, %v2824, %v2840
  %v2842 = vsel %vm2832, %v2839, %v2841
  %v2843 = vsel %vm2831, %v2821, %v2824
  %v2844 = vsel %vm2834, %v2830, 1326507024
  %v2845 = vsel %vm2833, %v2827, %v2844
  %v2846 = vsel %vm2832, %v2843, %v2845
  %v2847 = vshll.u32 %v2807, 8
  %v2848 = vand.u32 %v2847, 65535
  %v2849 = vshrl.u32 %v2847, 16
  %v2850 = vand.u32 %v2846, 65535
  %v2851 = vshrl.u32 %v2846, 16
  %v2852 = vmul.u32 %v2848, %v2850
  %v2853 = vmul.u32 %v2848, %v2851
  %v2854 = vmul.u32 %v2849, %v2850
  %v2855 = vmul.u32 %v2849, %v2851
  %v2856 = vshll.u32 %v2853, 16
  %v2857 = vshrl.u32 %v2853, 16
  %v2858 = vshll.u32 %v2854, 16
  %v2859 = vshrl.u32 %v2854, 16
  %vm2860 = vc.u32 %v2852, %v2856
  %v2861 = vsel %vm2860, 1, 0
  %v2862 = vadd.s32 %v2852, %v2856
  %v2863 = vadd.s32 %v2855, %v2861
  %vm2864 = vc.u32 %v2862, %v2858
  %v2865 = vsel %vm2864, 1, 0
  %v2866 = vadd.s32 %v2862, %v2858
  %v2867 = vadd.s32 %v2863, %v2865
  %v2868 = vadd.s32 %v2867, %v2857
  %v2869 = vadd.s32 %v2868, %v2859
  %v2870 = vand.u32 %v2847, 65535
  %v2871 = vshrl.u32 %v2847, 16
  %v2872 = vand.u32 %v2842, 65535
  %v2873 = vshrl.u32 %v2842, 16
  %v2874 = vmul.u32 %v2870, %v2872
  %v2875 = vmul.u32 %v2870, %v2873
  %v2876 = vmul.u32 %v2871, %v2872
  %v2877 = vmul.u32 %v2871, %v2873
  %v2878 = vshll.u32 %v2875, 16
  %v2879 = vshrl.u32 %v2875, 16
  %v2880 = vshll.u32 %v2876, 16
  %v2881 = vshrl.u32 %v2876, 16
  %vm2882 = vc.u32 %v2874, %v2878
  %v2883 = vsel %vm2882, 1, 0
  %v2884 = vadd.s32 %v2874, %v2878
  %v2885 = vadd.s32 %v2877, %v2883
  %vm2886 = vc.u32 %v2884, %v2880
  %v2887 = vsel %vm2886, 1, 0
  %v2888 = vadd.s32 %v2884, %v2880
  %v2889 = vadd.s32 %v2885, %v2887
  %v2890 = vadd.s32 %v2889, %v2879
  %v2891 = vadd.s32 %v2890, %v2881
  %v2892 = vmul.u32 %v2847, %v2838
  %v2893 = vadd.s32 %v2869, %v2888
  %vm2894 = vc.u32 %v2869, %v2888
  %v2895 = vadd.s32 %v2891, 1
  %v2896 = vsel %vm2894, %v2895, %v2891
  %v2897 = vadd.s32 %v2892, %v2896
  %v2898 = vadd.s32 %v2897, 536870912
  %v2899 = vshrl.u32 %v2898, 30
  %v2900 = vshll.u32 %v2899, 30
  %v2901 = vsub.s32 %v2897, %v2900
  %vm2902 = vcmp.lt.s32.totalorder %v2901, 0
  %v2903 = vsub.s32 0, %v2901
  %v2904 = vsel %vm2902, %v2903, %v2901
  %v2905 = vclz %v2904
  %v2906 = vsub.s32 %v2905, 2
  %vm2907 = vcmp.gt.s32.totalorder 0, %v2906
  %v2908 = vsel %vm2907, 0, %v2906
  %v2909 = vsub.s32 32, %v2908
  %v2910 = vshll.u32 %v2901, %v2908
  %v2911 = vshrl.u32 %v2893, %v2909
  %v2912 = vor.u32 %v2910, %v2911
  %v2913 = vsub.s32 4294967266, %v2908
  %v2914 = vadd.s32 %v2913, 127
  %v2915 = vshll.u32 %v2914, 23
  %v2916 = vor.u32 4788187, %v2915
  %v2917 = vand.u32 2147483647, %v2916
  %v2919 = vcvt.s32.f32 %v2912
  %v2920 = vmul.f32 %v2919, %v2917
  %v2921 = vxor.u32 %v2920, 2147483648
  %v2922 = vsel %vm2801, %v2921, %v2920
  %v2923 = vsub.s32 4, %v2899
  %v2924 = vsel %vm2801, %v2923, %v2899
  %v2925 = vsel %vm2800, %v2798, %v2922
  %v2926 = vsel %vm2800, 0, %v2924
  %v2927 = vmul.f32 %v2925, %v2925
  %v2928 = vmul.f32 %v2927, -0.001358992
  %v2929 = vadd.f32 %v2928, 0.041655596
  %v2930 = vmul.f32 %v2927, %v2929
  %v2931 = vadd.f32 %v2930, -0.4999988
  %v2932 = vmul.f32 %v2927, %v2931
  %v2933 = vadd.f32 1.0, %v2932
  %v2934 = vmul.f32 %v2925, %v2925
  %v2935 = vmul.f32 %v2934, -0.00019511016
  %v2936 = vadd.f32 %v2935, 0.008332121
  %v2937 = vmul.f32 %v2934, %v2936
  %v2938 = vadd.f32 %v2937, -0.16666654
  %v2939 = vmul.f32 %v2934, %v2938
  %v2940 = vadd.f32 %v2939, 1.0
  %v2941 = vmul.f32 %v2940, %v2925
  %vm2942 = vweird.f32 %v2798
  %v2943 = vadd.s32 %v2926, 3
  %v2944 = vand.u32 %v2943, 3
  %vm2945 = vcmp.lt.s32.totalorder %v2944, 2
  %vm2946 = vcmp.eq.s32.totalorder %v2944, 0
  %v2947 = vxor.u32 %v2941, 2147483648
  %v2948 = vsel %vm2946, %v2933, %v2947
  %vm2949 = vcmp.eq.s32.totalorder %v2944, 2
  %v2950 = vxor.u32 %v2933, 2147483648
  %v2951 = vsel %vm2949, %v2950, %v2941
  %v2952 = vsel %vm2945, %v2948, %v2951
  %v2953 = vsel %vm2942, nan, %v2952
  %v2954 = vadd.f32 %v2788, %v2953
  %2955 = vset.pattern.permute.xlu0 10
  %2956 = vperm.xlu0 %2955, %v1288
  %v2957 = vpop.permute.xlu0 %2956
  %v2959 = vmul.f32 %v2957, %v1295
  %2960 = vset.pattern.permute.xlu0 10
  %2961 = vperm.xlu0 %2960, %v1298
  %v2962 = vpop.permute.xlu0 %2961
  %v2964 = vadd.f32 %v2959, %v2962
  %v2965 = vand.u32 2147483647, %v2964
  %vm2966 = vcmp.le.f32.partialorder %v2965, 0.7853982
  %vm2967 = vcmp.lt.s32.totalorder %v2964, 0
  %v2968 = vand.u32 %v2964, 2139095040
  %v2969 = vshrl.u32 %v2968, 23
  %v2970 = vsub.s32 %v2969, 127
  %v2971 = vand.u32 2147483647, %v2964
  %v2972 = vand.u32 %v2971, 8388607
  %v2973 = vor.u32 %v2972, 8388608
  %v2974 = vsub.s32 0, %v2973
  %v2975 = vadd.s32 %v2970, 1
  %vm2976 = vcmp.gt.s32.totalorder %v2975, 0
  %v2977 = vsel %vm2976, %v2975, 0
  %v2978 = vshrl.u32 %v2977, 5
  %v2979 = vand.u32 %v2977, 31
  %v2980 = vsub.s32 32, %v2979
  %v2981 = vshrl.u32 683565275, %v2980
  %v2982 = vshll.u32 683565275, %v2979
  %v2983 = vshrl.u32 2475754826, %v2980
  %v2984 = vor.u32 %v2982, %v2983
  %v2985 = vshll.u32 2475754826, %v2979
  %v2986 = vshrl.u32 2131351028, %v2980
  %v2987 = vor.u32 %v2985, %v2986
  %v2988 = vshll.u32 2131351028, %v2979
  %v2989 = vshrl.u32 2102212464, %v2980
  %v2990 = vor.u32 %v2988, %v2989
  %v2991 = vshll.u32 2102212464, %v2979
  %v2992 = vshrl.u32 920167782, %v2980
  %v2993 = vor.u32 %v2991, %v2992
  %v2994 = vshll.u32 920167782, %v2979
  %v2995 = vshrl.u32 1326507024, %v2980
  %v2996 = vor.u32 %v2994, %v2995
  %vm2997 = vcmp.lt.s32.totalorder %v2978, 1
  %vm2998 = vcmp.lt.s32.totalorder %v2978, 2
  %vm2999 = vcmp.lt.s32.totalorder %v2978, 3
  %vm3000 = vcmp.lt.s32.totalorder %v2978, 4
  %v3001 = vsel %vm2997, %v2981, %v2984
  %v3002 = vsel %vm3000, %v2990, 2102212464
  %v3003 = vsel %vm2999, %v2987, %v3002
  %v3004 = vsel %vm2998, %v3001, %v3003
  %v3005 = vsel %vm2997, %v2984, %v2987
  %v3006 = vsel %vm3000, %v2993, 920167782
  %v3007 = vsel %vm2999, %v2990, %v3006
  %v3008 = vsel %vm2998, %v3005, %v3007
  %v3009 = vsel %vm2997, %v2987, %v2990
  %v3010 = vsel %vm3000, %v2996, 1326507024
  %v3011 = vsel %vm2999, %v2993, %v3010
  %v3012 = vsel %vm2998, %v3009, %v3011
  %v3013 = vshll.u32 %v2973, 8
  %v3014 = vand.u32 %v3013, 65535
  %v3015 = vshrl.u32 %v3013, 16
  %v3016 = vand.u32 %v3012, 65535
  %v3017 = vshrl.u32 %v3012, 16
  %v3018 = vmul.u32 %v3014, %v3016
  %v3019 = vmul.u32 %v3014, %v3017
  %v3020 = vmul.u32 %v3015, %v3016
  %v3021 = vmul.u32 %v3015, %v3017
  %v3022 = vshll.u32 %v3019, 16
  %v3023 = vshrl.u32 %v3019, 16
  %v3024 = vshll.u32 %v3020, 16
  %v3025 = vshrl.u32 %v3020, 16
  %vm3026 = vc.u32 %v3018, %v3022
  %v3027 = vsel %vm3026, 1, 0
  %v3028 = vadd.s32 %v3018, %v3022
  %v3029 = vadd.s32 %v3021, %v3027
  %vm3030 = vc.u32 %v3028, %v3024
  %v3031 = vsel %vm3030, 1, 0
  %v3032 = vadd.s32 %v3028, %v3024
  %v3033 = vadd.s32 %v3029, %v3031
  %v3034 = vadd.s32 %v3033, %v3023
  %v3035 = vadd.s32 %v3034, %v3025
  %v3036 = vand.u32 %v3013, 65535
  %v3037 = vshrl.u32 %v3013, 16
  %v3038 = vand.u32 %v3008, 65535
  %v3039 = vshrl.u32 %v3008, 16
  %v3040 = vmul.u32 %v3036, %v3038
  %v3041 = vmul.u32 %v3036, %v3039
  %v3042 = vmul.u32 %v3037, %v3038
  %v3043 = vmul.u32 %v3037, %v3039
  %v3044 = vshll.u32 %v3041, 16
  %v3045 = vshrl.u32 %v3041, 16
  %v3046 = vshll.u32 %v3042, 16
  %v3047 = vshrl.u32 %v3042, 16
  %vm3048 = vc.u32 %v3040, %v3044
  %v3049 = vsel %vm3048, 1, 0
  %v3050 = vadd.s32 %v3040, %v3044
  %v3051 = vadd.s32 %v3043, %v3049
  %vm3052 = vc.u32 %v3050, %v3046
  %v3053 = vsel %vm3052, 1, 0
  %v3054 = vadd.s32 %v3050, %v3046
  %v3055 = vadd.s32 %v3051, %v3053
  %v3056 = vadd.s32 %v3055, %v3045
  %v3057 = vadd.s32 %v3056, %v3047
  %v3058 = vmul.u32 %v3013, %v3004
  %v3059 = vadd.s32 %v3035, %v3054
  %vm3060 = vc.u32 %v3035, %v3054
  %v3061 = vadd.s32 %v3057, 1
  %v3062 = vsel %vm3060, %v3061, %v3057
  %v3063 = vadd.s32 %v3058, %v3062
  %v3064 = vadd.s32 %v3063, 536870912
  %v3065 = vshrl.u32 %v3064, 30
  %v3066 = vshll.u32 %v3065, 30
  %v3067 = vsub.s32 %v3063, %v3066
  %vm3068 = vcmp.lt.s32.totalorder %v3067, 0
  %v3069 = vsub.s32 0, %v3067
  %v3070 = vsel %vm3068, %v3069, %v3067
  %v3071 = vclz %v3070
  %v3072 = vsub.s32 %v3071, 2
  %vm3073 = vcmp.gt.s32.totalorder 0, %v3072
  %v3074 = vsel %vm3073, 0, %v3072
  %v3075 = vsub.s32 32, %v3074
  %v3076 = vshll.u32 %v3067, %v3074
  %v3077 = vshrl.u32 %v3059, %v3075
  %v3078 = vor.u32 %v3076, %v3077
  %v3079 = vsub.s32 4294967266, %v3074
  %v3080 = vadd.s32 %v3079, 127
  %v3081 = vshll.u32 %v3080, 23
  %v3082 = vor.u32 4788187, %v3081
  %v3083 = vand.u32 2147483647, %v3082
  %v3085 = vcvt.s32.f32 %v3078
  %v3086 = vmul.f32 %v3085, %v3083
  %v3087 = vxor.u32 %v3086, 2147483648
  %v3088 = vsel %vm2967, %v3087, %v3086
  %v3089 = vsub.s32 4, %v3065
  %v3090 = vsel %vm2967, %v3089, %v3065
  %v3091 = vsel %vm2966, %v2964, %v3088
  %v3092 = vsel %vm2966, 0, %v3090
  %v3093 = vmul.f32 %v3091, %v3091
  %v3094 = vmul.f32 %v3093, -0.001358992
  %v3095 = vadd.f32 %v3094, 0.041655596
  %v3096 = vmul.f32 %v3093, %v3095
  %v3097 = vadd.f32 %v3096, -0.4999988
  %v3098 = vmul.f32 %v3093, %v3097
  %v3099 = vadd.f32 1.0, %v3098
  %v3100 = vmul.f32 %v3091, %v3091
  %v3101 = vmul.f32 %v3100, -0.00019511016
  %v3102 = vadd.f32 %v3101, 0.008332121
  %v3103 = vmul.f32 %v3100, %v3102
  %v3104 = vadd.f32 %v3103, -0.16666654
  %v3105 = vmul.f32 %v3100, %v3104
  %v3106 = vadd.f32 %v3105, 1.0
  %v3107 = vmul.f32 %v3106, %v3091
  %vm3108 = vweird.f32 %v2964
  %v3109 = vadd.s32 %v3092, 3
  %v3110 = vand.u32 %v3109, 3
  %vm3111 = vcmp.lt.s32.totalorder %v3110, 2
  %vm3112 = vcmp.eq.s32.totalorder %v3110, 0
  %v3113 = vxor.u32 %v3107, 2147483648
  %v3114 = vsel %vm3112, %v3099, %v3113
  %vm3115 = vcmp.eq.s32.totalorder %v3110, 2
  %v3116 = vxor.u32 %v3099, 2147483648
  %v3117 = vsel %vm3115, %v3116, %v3107
  %v3118 = vsel %vm3111, %v3114, %v3117
  %v3119 = vsel %vm3108, nan, %v3118
  %v3120 = vadd.f32 %v2954, %v3119
  %3121 = vset.pattern.permute.xlu0 11
  %3122 = vperm.xlu0 %3121, %v1288
  %v3123 = vpop.permute.xlu0 %3122
  %v3125 = vmul.f32 %v3123, %v1295
  %3126 = vset.pattern.permute.xlu0 11
  %3127 = vperm.xlu0 %3126, %v1298
  %v3128 = vpop.permute.xlu0 %3127
  %v3130 = vadd.f32 %v3125, %v3128
  %v3131 = vand.u32 2147483647, %v3130
  %vm3132 = vcmp.le.f32.partialorder %v3131, 0.7853982
  %vm3133 = vcmp.lt.s32.totalorder %v3130, 0
  %v3134 = vand.u32 %v3130, 2139095040
  %v3135 = vshrl.u32 %v3134, 23
  %v3136 = vsub.s32 %v3135, 127
  %v3137 = vand.u32 2147483647, %v3130
  %v3138 = vand.u32 %v3137, 8388607
  %v3139 = vor.u32 %v3138, 8388608
  %v3140 = vsub.s32 0, %v3139
  %v3141 = vadd.s32 %v3136, 1
  %vm3142 = vcmp.gt.s32.totalorder %v3141, 0
  %v3143 = vsel %vm3142, %v3141, 0
  %v3144 = vshrl.u32 %v3143, 5
  %v3145 = vand.u32 %v3143, 31
  %v3146 = vsub.s32 32, %v3145
  %v3147 = vshrl.u32 683565275, %v3146
  %v3148 = vshll.u32 683565275, %v3145
  %v3149 = vshrl.u32 2475754826, %v3146
  %v3150 = vor.u32 %v3148, %v3149
  %v3151 = vshll.u32 2475754826, %v3145
  %v3152 = vshrl.u32 2131351028, %v3146
  %v3153 = vor.u32 %v3151, %v3152
  %v3154 = vshll.u32 2131351028, %v3145
  %v3155 = vshrl.u32 2102212464, %v3146
  %v3156 = vor.u32 %v3154, %v3155
  %v3157 = vshll.u32 2102212464, %v3145
  %v3158 = vshrl.u32 920167782, %v3146
  %v3159 = vor.u32 %v3157, %v3158
  %v3160 = vshll.u32 920167782, %v3145
  %v3161 = vshrl.u32 1326507024, %v3146
  %v3162 = vor.u32 %v3160, %v3161
  %vm3163 = vcmp.lt.s32.totalorder %v3144, 1
  %vm3164 = vcmp.lt.s32.totalorder %v3144, 2
  %vm3165 = vcmp.lt.s32.totalorder %v3144, 3
  %vm3166 = vcmp.lt.s32.totalorder %v3144, 4
  %v3167 = vsel %vm3163, %v3147, %v3150
  %v3168 = vsel %vm3166, %v3156, 2102212464
  %v3169 = vsel %vm3165, %v3153, %v3168
  %v3170 = vsel %vm3164, %v3167, %v3169
  %v3171 = vsel %vm3163, %v3150, %v3153
  %v3172 = vsel %vm3166, %v3159, 920167782
  %v3173 = vsel %vm3165, %v3156, %v3172
  %v3174 = vsel %vm3164, %v3171, %v3173
  %v3175 = vsel %vm3163, %v3153, %v3156
  %v3176 = vsel %vm3166, %v3162, 1326507024
  %v3177 = vsel %vm3165, %v3159, %v3176
  %v3178 = vsel %vm3164, %v3175, %v3177
  %v3179 = vshll.u32 %v3139, 8
  %v3180 = vand.u32 %v3179, 65535
  %v3181 = vshrl.u32 %v3179, 16
  %v3182 = vand.u32 %v3178, 65535
  %v3183 = vshrl.u32 %v3178, 16
  %v3184 = vmul.u32 %v3180, %v3182
  %v3185 = vmul.u32 %v3180, %v3183
  %v3186 = vmul.u32 %v3181, %v3182
  %v3187 = vmul.u32 %v3181, %v3183
  %v3188 = vshll.u32 %v3185, 16
  %v3189 = vshrl.u32 %v3185, 16
  %v3190 = vshll.u32 %v3186, 16
  %v3191 = vshrl.u32 %v3186, 16
  %vm3192 = vc.u32 %v3184, %v3188
  %v3193 = vsel %vm3192, 1, 0
  %v3194 = vadd.s32 %v3184, %v3188
  %v3195 = vadd.s32 %v3187, %v3193
  %vm3196 = vc.u32 %v3194, %v3190
  %v3197 = vsel %vm3196, 1, 0
  %v3198 = vadd.s32 %v3194, %v3190
  %v3199 = vadd.s32 %v3195, %v3197
  %v3200 = vadd.s32 %v3199, %v3189
  %v3201 = vadd.s32 %v3200, %v3191
  %v3202 = vand.u32 %v3179, 65535
  %v3203 = vshrl.u32 %v3179, 16
  %v3204 = vand.u32 %v3174, 65535
  %v3205 = vshrl.u32 %v3174, 16
  %v3206 = vmul.u32 %v3202, %v3204
  %v3207 = vmul.u32 %v3202, %v3205
  %v3208 = vmul.u32 %v3203, %v3204
  %v3209 = vmul.u32 %v3203, %v3205
  %v3210 = vshll.u32 %v3207, 16
  %v3211 = vshrl.u32 %v3207, 16
  %v3212 = vshll.u32 %v3208, 16
  %v3213 = vshrl.u32 %v3208, 16
  %vm3214 = vc.u32 %v3206, %v3210
  %v3215 = vsel %vm3214, 1, 0
  %v3216 = vadd.s32 %v3206, %v3210
  %v3217 = vadd.s32 %v3209, %v3215
  %vm3218 = vc.u32 %v3216, %v3212
  %v3219 = vsel %vm3218, 1, 0
  %v3220 = vadd.s32 %v3216, %v3212
  %v3221 = vadd.s32 %v3217, %v3219
  %v3222 = vadd.s32 %v3221, %v3211
  %v3223 = vadd.s32 %v3222, %v3213
  %v3224 = vmul.u32 %v3179, %v3170
  %v3225 = vadd.s32 %v3201, %v3220
  %vm3226 = vc.u32 %v3201, %v3220
  %v3227 = vadd.s32 %v3223, 1
  %v3228 = vsel %vm3226, %v3227, %v3223
  %v3229 = vadd.s32 %v3224, %v3228
  %v3230 = vadd.s32 %v3229, 536870912
  %v3231 = vshrl.u32 %v3230, 30
  %v3232 = vshll.u32 %v3231, 30
  %v3233 = vsub.s32 %v3229, %v3232
  %vm3234 = vcmp.lt.s32.totalorder %v3233, 0
  %v3235 = vsub.s32 0, %v3233
  %v3236 = vsel %vm3234, %v3235, %v3233
  %v3237 = vclz %v3236
  %v3238 = vsub.s32 %v3237, 2
  %vm3239 = vcmp.gt.s32.totalorder 0, %v3238
  %v3240 = vsel %vm3239, 0, %v3238
  %v3241 = vsub.s32 32, %v3240
  %v3242 = vshll.u32 %v3233, %v3240
  %v3243 = vshrl.u32 %v3225, %v3241
  %v3244 = vor.u32 %v3242, %v3243
  %v3245 = vsub.s32 4294967266, %v3240
  %v3246 = vadd.s32 %v3245, 127
  %v3247 = vshll.u32 %v3246, 23
  %v3248 = vor.u32 4788187, %v3247
  %v3249 = vand.u32 2147483647, %v3248
  %v3251 = vcvt.s32.f32 %v3244
  %v3252 = vmul.f32 %v3251, %v3249
  %v3253 = vxor.u32 %v3252, 2147483648
  %v3254 = vsel %vm3133, %v3253, %v3252
  %v3255 = vsub.s32 4, %v3231
  %v3256 = vsel %vm3133, %v3255, %v3231
  %v3257 = vsel %vm3132, %v3130, %v3254
  %v3258 = vsel %vm3132, 0, %v3256
  %v3259 = vmul.f32 %v3257, %v3257
  %v3260 = vmul.f32 %v3259, -0.001358992
  %v3261 = vadd.f32 %v3260, 0.041655596
  %v3262 = vmul.f32 %v3259, %v3261
  %v3263 = vadd.f32 %v3262, -0.4999988
  %v3264 = vmul.f32 %v3259, %v3263
  %v3265 = vadd.f32 1.0, %v3264
  %v3266 = vmul.f32 %v3257, %v3257
  %v3267 = vmul.f32 %v3266, -0.00019511016
  %v3268 = vadd.f32 %v3267, 0.008332121
  %v3269 = vmul.f32 %v3266, %v3268
  %v3270 = vadd.f32 %v3269, -0.16666654
  %v3271 = vmul.f32 %v3266, %v3270
  %v3272 = vadd.f32 %v3271, 1.0
  %v3273 = vmul.f32 %v3272, %v3257
  %vm3274 = vweird.f32 %v3130
  %v3275 = vadd.s32 %v3258, 3
  %v3276 = vand.u32 %v3275, 3
  %vm3277 = vcmp.lt.s32.totalorder %v3276, 2
  %vm3278 = vcmp.eq.s32.totalorder %v3276, 0
  %v3279 = vxor.u32 %v3273, 2147483648
  %v3280 = vsel %vm3278, %v3265, %v3279
  %vm3281 = vcmp.eq.s32.totalorder %v3276, 2
  %v3282 = vxor.u32 %v3265, 2147483648
  %v3283 = vsel %vm3281, %v3282, %v3273
  %v3284 = vsel %vm3277, %v3280, %v3283
  %v3285 = vsel %vm3274, nan, %v3284
  %v3286 = vadd.f32 %v3120, %v3285
  %3287 = vset.pattern.permute.xlu0 12
  %3288 = vperm.xlu0 %3287, %v1288
  %v3289 = vpop.permute.xlu0 %3288
  %v3291 = vmul.f32 %v3289, %v1295
  %3292 = vset.pattern.permute.xlu0 12
  %3293 = vperm.xlu0 %3292, %v1298
  %v3294 = vpop.permute.xlu0 %3293
  %v3296 = vadd.f32 %v3291, %v3294
  %v3297 = vand.u32 2147483647, %v3296
  %vm3298 = vcmp.le.f32.partialorder %v3297, 0.7853982
  %vm3299 = vcmp.lt.s32.totalorder %v3296, 0
  %v3300 = vand.u32 %v3296, 2139095040
  %v3301 = vshrl.u32 %v3300, 23
  %v3302 = vsub.s32 %v3301, 127
  %v3303 = vand.u32 2147483647, %v3296
  %v3304 = vand.u32 %v3303, 8388607
  %v3305 = vor.u32 %v3304, 8388608
  %v3306 = vsub.s32 0, %v3305
  %v3307 = vadd.s32 %v3302, 1
  %vm3308 = vcmp.gt.s32.totalorder %v3307, 0
  %v3309 = vsel %vm3308, %v3307, 0
  %v3310 = vshrl.u32 %v3309, 5
  %v3311 = vand.u32 %v3309, 31
  %v3312 = vsub.s32 32, %v3311
  %v3313 = vshrl.u32 683565275, %v3312
  %v3314 = vshll.u32 683565275, %v3311
  %v3315 = vshrl.u32 2475754826, %v3312
  %v3316 = vor.u32 %v3314, %v3315
  %v3317 = vshll.u32 2475754826, %v3311
  %v3318 = vshrl.u32 2131351028, %v3312
  %v3319 = vor.u32 %v3317, %v3318
  %v3320 = vshll.u32 2131351028, %v3311
  %v3321 = vshrl.u32 2102212464, %v3312
  %v3322 = vor.u32 %v3320, %v3321
  %v3323 = vshll.u32 2102212464, %v3311
  %v3324 = vshrl.u32 920167782, %v3312
  %v3325 = vor.u32 %v3323, %v3324
  %v3326 = vshll.u32 920167782, %v3311
  %v3327 = vshrl.u32 1326507024, %v3312
  %v3328 = vor.u32 %v3326, %v3327
  %vm3329 = vcmp.lt.s32.totalorder %v3310, 1
  %vm3330 = vcmp.lt.s32.totalorder %v3310, 2
  %vm3331 = vcmp.lt.s32.totalorder %v3310, 3
  %vm3332 = vcmp.lt.s32.totalorder %v3310, 4
  %v3333 = vsel %vm3329, %v3313, %v3316
  %v3334 = vsel %vm3332, %v3322, 2102212464
  %v3335 = vsel %vm3331, %v3319, %v3334
  %v3336 = vsel %vm3330, %v3333, %v3335
  %v3337 = vsel %vm3329, %v3316, %v3319
  %v3338 = vsel %vm3332, %v3325, 920167782
  %v3339 = vsel %vm3331, %v3322, %v3338
  %v3340 = vsel %vm3330, %v3337, %v3339
  %v3341 = vsel %vm3329, %v3319, %v3322
  %v3342 = vsel %vm3332, %v3328, 1326507024
  %v3343 = vsel %vm3331, %v3325, %v3342
  %v3344 = vsel %vm3330, %v3341, %v3343
  %v3345 = vshll.u32 %v3305, 8
  %v3346 = vand.u32 %v3345, 65535
  %v3347 = vshrl.u32 %v3345, 16
  %v3348 = vand.u32 %v3344, 65535
  %v3349 = vshrl.u32 %v3344, 16
  %v3350 = vmul.u32 %v3346, %v3348
  %v3351 = vmul.u32 %v3346, %v3349
  %v3352 = vmul.u32 %v3347, %v3348
  %v3353 = vmul.u32 %v3347, %v3349
  %v3354 = vshll.u32 %v3351, 16
  %v3355 = vshrl.u32 %v3351, 16
  %v3356 = vshll.u32 %v3352, 16
  %v3357 = vshrl.u32 %v3352, 16
  %vm3358 = vc.u32 %v3350, %v3354
  %v3359 = vsel %vm3358, 1, 0
  %v3360 = vadd.s32 %v3350, %v3354
  %v3361 = vadd.s32 %v3353, %v3359
  %vm3362 = vc.u32 %v3360, %v3356
  %v3363 = vsel %vm3362, 1, 0
  %v3364 = vadd.s32 %v3360, %v3356
  %v3365 = vadd.s32 %v3361, %v3363
  %v3366 = vadd.s32 %v3365, %v3355
  %v3367 = vadd.s32 %v3366, %v3357
  %v3368 = vand.u32 %v3345, 65535
  %v3369 = vshrl.u32 %v3345, 16
  %v3370 = vand.u32 %v3340, 65535
  %v3371 = vshrl.u32 %v3340, 16
  %v3372 = vmul.u32 %v3368, %v3370
  %v3373 = vmul.u32 %v3368, %v3371
  %v3374 = vmul.u32 %v3369, %v3370
  %v3375 = vmul.u32 %v3369, %v3371
  %v3376 = vshll.u32 %v3373, 16
  %v3377 = vshrl.u32 %v3373, 16
  %v3378 = vshll.u32 %v3374, 16
  %v3379 = vshrl.u32 %v3374, 16
  %vm3380 = vc.u32 %v3372, %v3376
  %v3381 = vsel %vm3380, 1, 0
  %v3382 = vadd.s32 %v3372, %v3376
  %v3383 = vadd.s32 %v3375, %v3381
  %vm3384 = vc.u32 %v3382, %v3378
  %v3385 = vsel %vm3384, 1, 0
  %v3386 = vadd.s32 %v3382, %v3378
  %v3387 = vadd.s32 %v3383, %v3385
  %v3388 = vadd.s32 %v3387, %v3377
  %v3389 = vadd.s32 %v3388, %v3379
  %v3390 = vmul.u32 %v3345, %v3336
  %v3391 = vadd.s32 %v3367, %v3386
  %vm3392 = vc.u32 %v3367, %v3386
  %v3393 = vadd.s32 %v3389, 1
  %v3394 = vsel %vm3392, %v3393, %v3389
  %v3395 = vadd.s32 %v3390, %v3394
  %v3396 = vadd.s32 %v3395, 536870912
  %v3397 = vshrl.u32 %v3396, 30
  %v3398 = vshll.u32 %v3397, 30
  %v3399 = vsub.s32 %v3395, %v3398
  %vm3400 = vcmp.lt.s32.totalorder %v3399, 0
  %v3401 = vsub.s32 0, %v3399
  %v3402 = vsel %vm3400, %v3401, %v3399
  %v3403 = vclz %v3402
  %v3404 = vsub.s32 %v3403, 2
  %vm3405 = vcmp.gt.s32.totalorder 0, %v3404
  %v3406 = vsel %vm3405, 0, %v3404
  %v3407 = vsub.s32 32, %v3406
  %v3408 = vshll.u32 %v3399, %v3406
  %v3409 = vshrl.u32 %v3391, %v3407
  %v3410 = vor.u32 %v3408, %v3409
  %v3411 = vsub.s32 4294967266, %v3406
  %v3412 = vadd.s32 %v3411, 127
  %v3413 = vshll.u32 %v3412, 23
  %v3414 = vor.u32 4788187, %v3413
  %v3415 = vand.u32 2147483647, %v3414
  %v3417 = vcvt.s32.f32 %v3410
  %v3418 = vmul.f32 %v3417, %v3415
  %v3419 = vxor.u32 %v3418, 2147483648
  %v3420 = vsel %vm3299, %v3419, %v3418
  %v3421 = vsub.s32 4, %v3397
  %v3422 = vsel %vm3299, %v3421, %v3397
  %v3423 = vsel %vm3298, %v3296, %v3420
  %v3424 = vsel %vm3298, 0, %v3422
  %v3425 = vmul.f32 %v3423, %v3423
  %v3426 = vmul.f32 %v3425, -0.001358992
  %v3427 = vadd.f32 %v3426, 0.041655596
  %v3428 = vmul.f32 %v3425, %v3427
  %v3429 = vadd.f32 %v3428, -0.4999988
  %v3430 = vmul.f32 %v3425, %v3429
  %v3431 = vadd.f32 1.0, %v3430
  %v3432 = vmul.f32 %v3423, %v3423
  %v3433 = vmul.f32 %v3432, -0.00019511016
  %v3434 = vadd.f32 %v3433, 0.008332121
  %v3435 = vmul.f32 %v3432, %v3434
  %v3436 = vadd.f32 %v3435, -0.16666654
  %v3437 = vmul.f32 %v3432, %v3436
  %v3438 = vadd.f32 %v3437, 1.0
  %v3439 = vmul.f32 %v3438, %v3423
  %vm3440 = vweird.f32 %v3296
  %v3441 = vadd.s32 %v3424, 3
  %v3442 = vand.u32 %v3441, 3
  %vm3443 = vcmp.lt.s32.totalorder %v3442, 2
  %vm3444 = vcmp.eq.s32.totalorder %v3442, 0
  %v3445 = vxor.u32 %v3439, 2147483648
  %v3446 = vsel %vm3444, %v3431, %v3445
  %vm3447 = vcmp.eq.s32.totalorder %v3442, 2
  %v3448 = vxor.u32 %v3431, 2147483648
  %v3449 = vsel %vm3447, %v3448, %v3439
  %v3450 = vsel %vm3443, %v3446, %v3449
  %v3451 = vsel %vm3440, nan, %v3450
  %v3452 = vadd.f32 %v3286, %v3451
  %3453 = vset.pattern.permute.xlu0 13
  %3454 = vperm.xlu0 %3453, %v1288
  %v3455 = vpop.permute.xlu0 %3454
  %v3457 = vmul.f32 %v3455, %v1295
  %3458 = vset.pattern.permute.xlu0 13
  %3459 = vperm.xlu0 %3458, %v1298
  %v3460 = vpop.permute.xlu0 %3459
  %v3462 = vadd.f32 %v3457, %v3460
  %v3463 = vand.u32 2147483647, %v3462
  %vm3464 = vcmp.le.f32.partialorder %v3463, 0.7853982
  %vm3465 = vcmp.lt.s32.totalorder %v3462, 0
  %v3466 = vand.u32 %v3462, 2139095040
  %v3467 = vshrl.u32 %v3466, 23
  %v3468 = vsub.s32 %v3467, 127
  %v3469 = vand.u32 2147483647, %v3462
  %v3470 = vand.u32 %v3469, 8388607
  %v3471 = vor.u32 %v3470, 8388608
  %v3472 = vsub.s32 0, %v3471
  %v3473 = vadd.s32 %v3468, 1
  %vm3474 = vcmp.gt.s32.totalorder %v3473, 0
  %v3475 = vsel %vm3474, %v3473, 0
  %v3476 = vshrl.u32 %v3475, 5
  %v3477 = vand.u32 %v3475, 31
  %v3478 = vsub.s32 32, %v3477
  %v3479 = vshrl.u32 683565275, %v3478
  %v3480 = vshll.u32 683565275, %v3477
  %v3481 = vshrl.u32 2475754826, %v3478
  %v3482 = vor.u32 %v3480, %v3481
  %v3483 = vshll.u32 2475754826, %v3477
  %v3484 = vshrl.u32 2131351028, %v3478
  %v3485 = vor.u32 %v3483, %v3484
  %v3486 = vshll.u32 2131351028, %v3477
  %v3487 = vshrl.u32 2102212464, %v3478
  %v3488 = vor.u32 %v3486, %v3487
  %v3489 = vshll.u32 2102212464, %v3477
  %v3490 = vshrl.u32 920167782, %v3478
  %v3491 = vor.u32 %v3489, %v3490
  %v3492 = vshll.u32 920167782, %v3477
  %v3493 = vshrl.u32 1326507024, %v3478
  %v3494 = vor.u32 %v3492, %v3493
  %vm3495 = vcmp.lt.s32.totalorder %v3476, 1
  %vm3496 = vcmp.lt.s32.totalorder %v3476, 2
  %vm3497 = vcmp.lt.s32.totalorder %v3476, 3
  %vm3498 = vcmp.lt.s32.totalorder %v3476, 4
  %v3499 = vsel %vm3495, %v3479, %v3482
  %v3500 = vsel %vm3498, %v3488, 2102212464
  %v3501 = vsel %vm3497, %v3485, %v3500
  %v3502 = vsel %vm3496, %v3499, %v3501
  %v3503 = vsel %vm3495, %v3482, %v3485
  %v3504 = vsel %vm3498, %v3491, 920167782
  %v3505 = vsel %vm3497, %v3488, %v3504
  %v3506 = vsel %vm3496, %v3503, %v3505
  %v3507 = vsel %vm3495, %v3485, %v3488
  %v3508 = vsel %vm3498, %v3494, 1326507024
  %v3509 = vsel %vm3497, %v3491, %v3508
  %v3510 = vsel %vm3496, %v3507, %v3509
  %v3511 = vshll.u32 %v3471, 8
  %v3512 = vand.u32 %v3511, 65535
  %v3513 = vshrl.u32 %v3511, 16
  %v3514 = vand.u32 %v3510, 65535
  %v3515 = vshrl.u32 %v3510, 16
  %v3516 = vmul.u32 %v3512, %v3514
  %v3517 = vmul.u32 %v3512, %v3515
  %v3518 = vmul.u32 %v3513, %v3514
  %v3519 = vmul.u32 %v3513, %v3515
  %v3520 = vshll.u32 %v3517, 16
  %v3521 = vshrl.u32 %v3517, 16
  %v3522 = vshll.u32 %v3518, 16
  %v3523 = vshrl.u32 %v3518, 16
  %vm3524 = vc.u32 %v3516, %v3520
  %v3525 = vsel %vm3524, 1, 0
  %v3526 = vadd.s32 %v3516, %v3520
  %v3527 = vadd.s32 %v3519, %v3525
  %vm3528 = vc.u32 %v3526, %v3522
  %v3529 = vsel %vm3528, 1, 0
  %v3530 = vadd.s32 %v3526, %v3522
  %v3531 = vadd.s32 %v3527, %v3529
  %v3532 = vadd.s32 %v3531, %v3521
  %v3533 = vadd.s32 %v3532, %v3523
  %v3534 = vand.u32 %v3511, 65535
  %v3535 = vshrl.u32 %v3511, 16
  %v3536 = vand.u32 %v3506, 65535
  %v3537 = vshrl.u32 %v3506, 16
  %v3538 = vmul.u32 %v3534, %v3536
  %v3539 = vmul.u32 %v3534, %v3537
  %v3540 = vmul.u32 %v3535, %v3536
  %v3541 = vmul.u32 %v3535, %v3537
  %v3542 = vshll.u32 %v3539, 16
  %v3543 = vshrl.u32 %v3539, 16
  %v3544 = vshll.u32 %v3540, 16
  %v3545 = vshrl.u32 %v3540, 16
  %vm3546 = vc.u32 %v3538, %v3542
  %v3547 = vsel %vm3546, 1, 0
  %v3548 = vadd.s32 %v3538, %v3542
  %v3549 = vadd.s32 %v3541, %v3547
  %vm3550 = vc.u32 %v3548, %v3544
  %v3551 = vsel %vm3550, 1, 0
  %v3552 = vadd.s32 %v3548, %v3544
  %v3553 = vadd.s32 %v3549, %v3551
  %v3554 = vadd.s32 %v3553, %v3543
  %v3555 = vadd.s32 %v3554, %v3545
  %v3556 = vmul.u32 %v3511, %v3502
  %v3557 = vadd.s32 %v3533, %v3552
  %vm3558 = vc.u32 %v3533, %v3552
  %v3559 = vadd.s32 %v3555, 1
  %v3560 = vsel %vm3558, %v3559, %v3555
  %v3561 = vadd.s32 %v3556, %v3560
  %v3562 = vadd.s32 %v3561, 536870912
  %v3563 = vshrl.u32 %v3562, 30
  %v3564 = vshll.u32 %v3563, 30
  %v3565 = vsub.s32 %v3561, %v3564
  %vm3566 = vcmp.lt.s32.totalorder %v3565, 0
  %v3567 = vsub.s32 0, %v3565
  %v3568 = vsel %vm3566, %v3567, %v3565
  %v3569 = vclz %v3568
  %v3570 = vsub.s32 %v3569, 2
  %vm3571 = vcmp.gt.s32.totalorder 0, %v3570
  %v3572 = vsel %vm3571, 0, %v3570
  %v3573 = vsub.s32 32, %v3572
  %v3574 = vshll.u32 %v3565, %v3572
  %v3575 = vshrl.u32 %v3557, %v3573
  %v3576 = vor.u32 %v3574, %v3575
  %v3577 = vsub.s32 4294967266, %v3572
  %v3578 = vadd.s32 %v3577, 127
  %v3579 = vshll.u32 %v3578, 23
  %v3580 = vor.u32 4788187, %v3579
  %v3581 = vand.u32 2147483647, %v3580
  %v3583 = vcvt.s32.f32 %v3576
  %v3584 = vmul.f32 %v3583, %v3581
  %v3585 = vxor.u32 %v3584, 2147483648
  %v3586 = vsel %vm3465, %v3585, %v3584
  %v3587 = vsub.s32 4, %v3563
  %v3588 = vsel %vm3465, %v3587, %v3563
  %v3589 = vsel %vm3464, %v3462, %v3586
  %v3590 = vsel %vm3464, 0, %v3588
  %v3591 = vmul.f32 %v3589, %v3589
  %v3592 = vmul.f32 %v3591, -0.001358992
  %v3593 = vadd.f32 %v3592, 0.041655596
  %v3594 = vmul.f32 %v3591, %v3593
  %v3595 = vadd.f32 %v3594, -0.4999988
  %v3596 = vmul.f32 %v3591, %v3595
  %v3597 = vadd.f32 1.0, %v3596
  %v3598 = vmul.f32 %v3589, %v3589
  %v3599 = vmul.f32 %v3598, -0.00019511016
  %v3600 = vadd.f32 %v3599, 0.008332121
  %v3601 = vmul.f32 %v3598, %v3600
  %v3602 = vadd.f32 %v3601, -0.16666654
  %v3603 = vmul.f32 %v3598, %v3602
  %v3604 = vadd.f32 %v3603, 1.0
  %v3605 = vmul.f32 %v3604, %v3589
  %vm3606 = vweird.f32 %v3462
  %v3607 = vadd.s32 %v3590, 3
  %v3608 = vand.u32 %v3607, 3
  %vm3609 = vcmp.lt.s32.totalorder %v3608, 2
  %vm3610 = vcmp.eq.s32.totalorder %v3608, 0
  %v3611 = vxor.u32 %v3605, 2147483648
  %v3612 = vsel %vm3610, %v3597, %v3611
  %vm3613 = vcmp.eq.s32.totalorder %v3608, 2
  %v3614 = vxor.u32 %v3597, 2147483648
  %v3615 = vsel %vm3613, %v3614, %v3605
  %v3616 = vsel %vm3609, %v3612, %v3615
  %v3617 = vsel %vm3606, nan, %v3616
  %v3618 = vadd.f32 %v3452, %v3617
  %3619 = vset.pattern.permute.xlu0 14
  %3620 = vperm.xlu0 %3619, %v1288
  %v3621 = vpop.permute.xlu0 %3620
  %v3623 = vmul.f32 %v3621, %v1295
  %3624 = vset.pattern.permute.xlu0 14
  %3625 = vperm.xlu0 %3624, %v1298
  %v3626 = vpop.permute.xlu0 %3625
  %v3628 = vadd.f32 %v3623, %v3626
  %v3629 = vand.u32 2147483647, %v3628
  %vm3630 = vcmp.le.f32.partialorder %v3629, 0.7853982
  %vm3631 = vcmp.lt.s32.totalorder %v3628, 0
  %v3632 = vand.u32 %v3628, 2139095040
  %v3633 = vshrl.u32 %v3632, 23
  %v3634 = vsub.s32 %v3633, 127
  %v3635 = vand.u32 2147483647, %v3628
  %v3636 = vand.u32 %v3635, 8388607
  %v3637 = vor.u32 %v3636, 8388608
  %v3638 = vsub.s32 0, %v3637
  %v3639 = vadd.s32 %v3634, 1
  %vm3640 = vcmp.gt.s32.totalorder %v3639, 0
  %v3641 = vsel %vm3640, %v3639, 0
  %v3642 = vshrl.u32 %v3641, 5
  %v3643 = vand.u32 %v3641, 31
  %v3644 = vsub.s32 32, %v3643
  %v3645 = vshrl.u32 683565275, %v3644
  %v3646 = vshll.u32 683565275, %v3643
  %v3647 = vshrl.u32 2475754826, %v3644
  %v3648 = vor.u32 %v3646, %v3647
  %v3649 = vshll.u32 2475754826, %v3643
  %v3650 = vshrl.u32 2131351028, %v3644
  %v3651 = vor.u32 %v3649, %v3650
  %v3652 = vshll.u32 2131351028, %v3643
  %v3653 = vshrl.u32 2102212464, %v3644
  %v3654 = vor.u32 %v3652, %v3653
  %v3655 = vshll.u32 2102212464, %v3643
  %v3656 = vshrl.u32 920167782, %v3644
  %v3657 = vor.u32 %v3655, %v3656
  %v3658 = vshll.u32 920167782, %v3643
  %v3659 = vshrl.u32 1326507024, %v3644
  %v3660 = vor.u32 %v3658, %v3659
  %vm3661 = vcmp.lt.s32.totalorder %v3642, 1
  %vm3662 = vcmp.lt.s32.totalorder %v3642, 2
  %vm3663 = vcmp.lt.s32.totalorder %v3642, 3
  %vm3664 = vcmp.lt.s32.totalorder %v3642, 4
  %v3665 = vsel %vm3661, %v3645, %v3648
  %v3666 = vsel %vm3664, %v3654, 2102212464
  %v3667 = vsel %vm3663, %v3651, %v3666
  %v3668 = vsel %vm3662, %v3665, %v3667
  %v3669 = vsel %vm3661, %v3648, %v3651
  %v3670 = vsel %vm3664, %v3657, 920167782
  %v3671 = vsel %vm3663, %v3654, %v3670
  %v3672 = vsel %vm3662, %v3669, %v3671
  %v3673 = vsel %vm3661, %v3651, %v3654
  %v3674 = vsel %vm3664, %v3660, 1326507024
  %v3675 = vsel %vm3663, %v3657, %v3674
  %v3676 = vsel %vm3662, %v3673, %v3675
  %v3677 = vshll.u32 %v3637, 8
  %v3678 = vand.u32 %v3677, 65535
  %v3679 = vshrl.u32 %v3677, 16
  %v3680 = vand.u32 %v3676, 65535
  %v3681 = vshrl.u32 %v3676, 16
  %v3682 = vmul.u32 %v3678, %v3680
  %v3683 = vmul.u32 %v3678, %v3681
  %v3684 = vmul.u32 %v3679, %v3680
  %v3685 = vmul.u32 %v3679, %v3681
  %v3686 = vshll.u32 %v3683, 16
  %v3687 = vshrl.u32 %v3683, 16
  %v3688 = vshll.u32 %v3684, 16
  %v3689 = vshrl.u32 %v3684, 16
  %vm3690 = vc.u32 %v3682, %v3686
  %v3691 = vsel %vm3690, 1, 0
  %v3692 = vadd.s32 %v3682, %v3686
  %v3693 = vadd.s32 %v3685, %v3691
  %vm3694 = vc.u32 %v3692, %v3688
  %v3695 = vsel %vm3694, 1, 0
  %v3696 = vadd.s32 %v3692, %v3688
  %v3697 = vadd.s32 %v3693, %v3695
  %v3698 = vadd.s32 %v3697, %v3687
  %v3699 = vadd.s32 %v3698, %v3689
  %v3700 = vand.u32 %v3677, 65535
  %v3701 = vshrl.u32 %v3677, 16
  %v3702 = vand.u32 %v3672, 65535
  %v3703 = vshrl.u32 %v3672, 16
  %v3704 = vmul.u32 %v3700, %v3702
  %v3705 = vmul.u32 %v3700, %v3703
  %v3706 = vmul.u32 %v3701, %v3702
  %v3707 = vmul.u32 %v3701, %v3703
  %v3708 = vshll.u32 %v3705, 16
  %v3709 = vshrl.u32 %v3705, 16
  %v3710 = vshll.u32 %v3706, 16
  %v3711 = vshrl.u32 %v3706, 16
  %vm3712 = vc.u32 %v3704, %v3708
  %v3713 = vsel %vm3712, 1, 0
  %v3714 = vadd.s32 %v3704, %v3708
  %v3715 = vadd.s32 %v3707, %v3713
  %vm3716 = vc.u32 %v3714, %v3710
  %v3717 = vsel %vm3716, 1, 0
  %v3718 = vadd.s32 %v3714, %v3710
  %v3719 = vadd.s32 %v3715, %v3717
  %v3720 = vadd.s32 %v3719, %v3709
  %v3721 = vadd.s32 %v3720, %v3711
  %v3722 = vmul.u32 %v3677, %v3668
  %v3723 = vadd.s32 %v3699, %v3718
  %vm3724 = vc.u32 %v3699, %v3718
  %v3725 = vadd.s32 %v3721, 1
  %v3726 = vsel %vm3724, %v3725, %v3721
  %v3727 = vadd.s32 %v3722, %v3726
  %v3728 = vadd.s32 %v3727, 536870912
  %v3729 = vshrl.u32 %v3728, 30
  %v3730 = vshll.u32 %v3729, 30
  %v3731 = vsub.s32 %v3727, %v3730
  %vm3732 = vcmp.lt.s32.totalorder %v3731, 0
  %v3733 = vsub.s32 0, %v3731
  %v3734 = vsel %vm3732, %v3733, %v3731
  %v3735 = vclz %v3734
  %v3736 = vsub.s32 %v3735, 2
  %vm3737 = vcmp.gt.s32.totalorder 0, %v3736
  %v3738 = vsel %vm3737, 0, %v3736
  %v3739 = vsub.s32 32, %v3738
  %v3740 = vshll.u32 %v3731, %v3738
  %v3741 = vshrl.u32 %v3723, %v3739
  %v3742 = vor.u32 %v3740, %v3741
  %v3743 = vsub.s32 4294967266, %v3738
  %v3744 = vadd.s32 %v3743, 127
  %v3745 = vshll.u32 %v3744, 23
  %v3746 = vor.u32 4788187, %v3745
  %v3747 = vand.u32 2147483647, %v3746
  %v3749 = vcvt.s32.f32 %v3742
  %v3750 = vmul.f32 %v3749, %v3747
  %v3751 = vxor.u32 %v3750, 2147483648
  %v3752 = vsel %vm3631, %v3751, %v3750
  %v3753 = vsub.s32 4, %v3729
  %v3754 = vsel %vm3631, %v3753, %v3729
  %v3755 = vsel %vm3630, %v3628, %v3752
  %v3756 = vsel %vm3630, 0, %v3754
  %v3757 = vmul.f32 %v3755, %v3755
  %v3758 = vmul.f32 %v3757, -0.001358992
  %v3759 = vadd.f32 %v3758, 0.041655596
  %v3760 = vmul.f32 %v3757, %v3759
  %v3761 = vadd.f32 %v3760, -0.4999988
  %v3762 = vmul.f32 %v3757, %v3761
  %v3763 = vadd.f32 1.0, %v3762
  %v3764 = vmul.f32 %v3755, %v3755
  %v3765 = vmul.f32 %v3764, -0.00019511016
  %v3766 = vadd.f32 %v3765, 0.008332121
  %v3767 = vmul.f32 %v3764, %v3766
  %v3768 = vadd.f32 %v3767, -0.16666654
  %v3769 = vmul.f32 %v3764, %v3768
  %v3770 = vadd.f32 %v3769, 1.0
  %v3771 = vmul.f32 %v3770, %v3755
  %vm3772 = vweird.f32 %v3628
  %v3773 = vadd.s32 %v3756, 3
  %v3774 = vand.u32 %v3773, 3
  %vm3775 = vcmp.lt.s32.totalorder %v3774, 2
  %vm3776 = vcmp.eq.s32.totalorder %v3774, 0
  %v3777 = vxor.u32 %v3771, 2147483648
  %v3778 = vsel %vm3776, %v3763, %v3777
  %vm3779 = vcmp.eq.s32.totalorder %v3774, 2
  %v3780 = vxor.u32 %v3763, 2147483648
  %v3781 = vsel %vm3779, %v3780, %v3771
  %v3782 = vsel %vm3775, %v3778, %v3781
  %v3783 = vsel %vm3772, nan, %v3782
  %v3784 = vadd.f32 %v3618, %v3783
  %3785 = vset.pattern.permute.xlu0 15
  %3786 = vperm.xlu0 %3785, %v1288
  %v3787 = vpop.permute.xlu0 %3786
  %v3789 = vmul.f32 %v3787, %v1295
  %3790 = vset.pattern.permute.xlu0 15
  %3791 = vperm.xlu0 %3790, %v1298
  %v3792 = vpop.permute.xlu0 %3791
  %v3794 = vadd.f32 %v3789, %v3792
  %v3795 = vand.u32 2147483647, %v3794
  %vm3796 = vcmp.le.f32.partialorder %v3795, 0.7853982
  %vm3797 = vcmp.lt.s32.totalorder %v3794, 0
  %v3798 = vand.u32 %v3794, 2139095040
  %v3799 = vshrl.u32 %v3798, 23
  %v3800 = vsub.s32 %v3799, 127
  %v3801 = vand.u32 2147483647, %v3794
  %v3802 = vand.u32 %v3801, 8388607
  %v3803 = vor.u32 %v3802, 8388608
  %v3804 = vsub.s32 0, %v3803
  %v3805 = vadd.s32 %v3800, 1
  %vm3806 = vcmp.gt.s32.totalorder %v3805, 0
  %v3807 = vsel %vm3806, %v3805, 0
  %v3808 = vshrl.u32 %v3807, 5
  %v3809 = vand.u32 %v3807, 31
  %v3810 = vsub.s32 32, %v3809
  %v3811 = vshrl.u32 683565275, %v3810
  %v3812 = vshll.u32 683565275, %v3809
  %v3813 = vshrl.u32 2475754826, %v3810
  %v3814 = vor.u32 %v3812, %v3813
  %v3815 = vshll.u32 2475754826, %v3809
  %v3816 = vshrl.u32 2131351028, %v3810
  %v3817 = vor.u32 %v3815, %v3816
  %v3818 = vshll.u32 2131351028, %v3809
  %v3819 = vshrl.u32 2102212464, %v3810
  %v3820 = vor.u32 %v3818, %v3819
  %v3821 = vshll.u32 2102212464, %v3809
  %v3822 = vshrl.u32 920167782, %v3810
  %v3823 = vor.u32 %v3821, %v3822
  %v3824 = vshll.u32 920167782, %v3809
  %v3825 = vshrl.u32 1326507024, %v3810
  %v3826 = vor.u32 %v3824, %v3825
  %vm3827 = vcmp.lt.s32.totalorder %v3808, 1
  %vm3828 = vcmp.lt.s32.totalorder %v3808, 2
  %vm3829 = vcmp.lt.s32.totalorder %v3808, 3
  %vm3830 = vcmp.lt.s32.totalorder %v3808, 4
  %v3831 = vsel %vm3827, %v3811, %v3814
  %v3832 = vsel %vm3830, %v3820, 2102212464
  %v3833 = vsel %vm3829, %v3817, %v3832
  %v3834 = vsel %vm3828, %v3831, %v3833
  %v3835 = vsel %vm3827, %v3814, %v3817
  %v3836 = vsel %vm3830, %v3823, 920167782
  %v3837 = vsel %vm3829, %v3820, %v3836
  %v3838 = vsel %vm3828, %v3835, %v3837
  %v3839 = vsel %vm3827, %v3817, %v3820
  %v3840 = vsel %vm3830, %v3826, 1326507024
  %v3841 = vsel %vm3829, %v3823, %v3840
  %v3842 = vsel %vm3828, %v3839, %v3841
  %v3843 = vshll.u32 %v3803, 8
  %v3844 = vand.u32 %v3843, 65535
  %v3845 = vshrl.u32 %v3843, 16
  %v3846 = vand.u32 %v3842, 65535
  %v3847 = vshrl.u32 %v3842, 16
  %v3848 = vmul.u32 %v3844, %v3846
  %v3849 = vmul.u32 %v3844, %v3847
  %v3850 = vmul.u32 %v3845, %v3846
  %v3851 = vmul.u32 %v3845, %v3847
  %v3852 = vshll.u32 %v3849, 16
  %v3853 = vshrl.u32 %v3849, 16
  %v3854 = vshll.u32 %v3850, 16
  %v3855 = vshrl.u32 %v3850, 16
  %vm3856 = vc.u32 %v3848, %v3852
  %v3857 = vsel %vm3856, 1, 0
  %v3858 = vadd.s32 %v3848, %v3852
  %v3859 = vadd.s32 %v3851, %v3857
  %vm3860 = vc.u32 %v3858, %v3854
  %v3861 = vsel %vm3860, 1, 0
  %v3862 = vadd.s32 %v3858, %v3854
  %v3863 = vadd.s32 %v3859, %v3861
  %v3864 = vadd.s32 %v3863, %v3853
  %v3865 = vadd.s32 %v3864, %v3855
  %v3866 = vand.u32 %v3843, 65535
  %v3867 = vshrl.u32 %v3843, 16
  %v3868 = vand.u32 %v3838, 65535
  %v3869 = vshrl.u32 %v3838, 16
  %v3870 = vmul.u32 %v3866, %v3868
  %v3871 = vmul.u32 %v3866, %v3869
  %v3872 = vmul.u32 %v3867, %v3868
  %v3873 = vmul.u32 %v3867, %v3869
  %v3874 = vshll.u32 %v3871, 16
  %v3875 = vshrl.u32 %v3871, 16
  %v3876 = vshll.u32 %v3872, 16
  %v3877 = vshrl.u32 %v3872, 16
  %vm3878 = vc.u32 %v3870, %v3874
  %v3879 = vsel %vm3878, 1, 0
  %v3880 = vadd.s32 %v3870, %v3874
  %v3881 = vadd.s32 %v3873, %v3879
  %vm3882 = vc.u32 %v3880, %v3876
  %v3883 = vsel %vm3882, 1, 0
  %v3884 = vadd.s32 %v3880, %v3876
  %v3885 = vadd.s32 %v3881, %v3883
  %v3886 = vadd.s32 %v3885, %v3875
  %v3887 = vadd.s32 %v3886, %v3877
  %v3888 = vmul.u32 %v3843, %v3834
  %v3889 = vadd.s32 %v3865, %v3884
  %vm3890 = vc.u32 %v3865, %v3884
  %v3891 = vadd.s32 %v3887, 1
  %v3892 = vsel %vm3890, %v3891, %v3887
  %v3893 = vadd.s32 %v3888, %v3892
  %v3894 = vadd.s32 %v3893, 536870912
  %v3895 = vshrl.u32 %v3894, 30
  %v3896 = vshll.u32 %v3895, 30
  %v3897 = vsub.s32 %v3893, %v3896
  %vm3898 = vcmp.lt.s32.totalorder %v3897, 0
  %v3899 = vsub.s32 0, %v3897
  %v3900 = vsel %vm3898, %v3899, %v3897
  %v3901 = vclz %v3900
  %v3902 = vsub.s32 %v3901, 2
  %vm3903 = vcmp.gt.s32.totalorder 0, %v3902
  %v3904 = vsel %vm3903, 0, %v3902
  %v3905 = vsub.s32 32, %v3904
  %v3906 = vshll.u32 %v3897, %v3904
  %v3907 = vshrl.u32 %v3889, %v3905
  %v3908 = vor.u32 %v3906, %v3907
  %v3909 = vsub.s32 4294967266, %v3904
  %v3910 = vadd.s32 %v3909, 127
  %v3911 = vshll.u32 %v3910, 23
  %v3912 = vor.u32 4788187, %v3911
  %v3913 = vand.u32 2147483647, %v3912
  %v3915 = vcvt.s32.f32 %v3908
  %v3916 = vmul.f32 %v3915, %v3913
  %v3917 = vxor.u32 %v3916, 2147483648
  %v3918 = vsel %vm3797, %v3917, %v3916
  %v3919 = vsub.s32 4, %v3895
  %v3920 = vsel %vm3797, %v3919, %v3895
  %v3921 = vsel %vm3796, %v3794, %v3918
  %v3922 = vsel %vm3796, 0, %v3920
  %v3923 = vmul.f32 %v3921, %v3921
  %v3924 = vmul.f32 %v3923, -0.001358992
  %v3925 = vadd.f32 %v3924, 0.041655596
  %v3926 = vmul.f32 %v3923, %v3925
  %v3927 = vadd.f32 %v3926, -0.4999988
  %v3928 = vmul.f32 %v3923, %v3927
  %v3929 = vadd.f32 1.0, %v3928
  %v3930 = vmul.f32 %v3921, %v3921
  %v3931 = vmul.f32 %v3930, -0.00019511016
  %v3932 = vadd.f32 %v3931, 0.008332121
  %v3933 = vmul.f32 %v3930, %v3932
  %v3934 = vadd.f32 %v3933, -0.16666654
  %v3935 = vmul.f32 %v3930, %v3934
  %v3936 = vadd.f32 %v3935, 1.0
  %v3937 = vmul.f32 %v3936, %v3921
  %vm3938 = vweird.f32 %v3794
  %v3939 = vadd.s32 %v3922, 3
  %v3940 = vand.u32 %v3939, 3
  %vm3941 = vcmp.lt.s32.totalorder %v3940, 2
  %vm3942 = vcmp.eq.s32.totalorder %v3940, 0
  %v3943 = vxor.u32 %v3937, 2147483648
  %v3944 = vsel %vm3942, %v3929, %v3943
  %vm3945 = vcmp.eq.s32.totalorder %v3940, 2
  %v3946 = vxor.u32 %v3929, 2147483648
  %v3947 = vsel %vm3945, %v3946, %v3937
  %v3948 = vsel %vm3941, %v3944, %v3947
  %v3949 = vsel %vm3938, nan, %v3948
  %v3950 = vadd.f32 %v3784, %v3949
  %3951 = vset.pattern.permute.xlu0 16
  %3952 = vperm.xlu0 %3951, %v1288
  %v3953 = vpop.permute.xlu0 %3952
  %v3955 = vmul.f32 %v3953, %v1295
  %3956 = vset.pattern.permute.xlu0 16
  %3957 = vperm.xlu0 %3956, %v1298
  %v3958 = vpop.permute.xlu0 %3957
  %v3960 = vadd.f32 %v3955, %v3958
  %v3961 = vand.u32 2147483647, %v3960
  %vm3962 = vcmp.le.f32.partialorder %v3961, 0.7853982
  %vm3963 = vcmp.lt.s32.totalorder %v3960, 0
  %v3964 = vand.u32 %v3960, 2139095040
  %v3965 = vshrl.u32 %v3964, 23
  %v3966 = vsub.s32 %v3965, 127
  %v3967 = vand.u32 2147483647, %v3960
  %v3968 = vand.u32 %v3967, 8388607
  %v3969 = vor.u32 %v3968, 8388608
  %v3970 = vsub.s32 0, %v3969
  %v3971 = vadd.s32 %v3966, 1
  %vm3972 = vcmp.gt.s32.totalorder %v3971, 0
  %v3973 = vsel %vm3972, %v3971, 0
  %v3974 = vshrl.u32 %v3973, 5
  %v3975 = vand.u32 %v3973, 31
  %v3976 = vsub.s32 32, %v3975
  %v3977 = vshrl.u32 683565275, %v3976
  %v3978 = vshll.u32 683565275, %v3975
  %v3979 = vshrl.u32 2475754826, %v3976
  %v3980 = vor.u32 %v3978, %v3979
  %v3981 = vshll.u32 2475754826, %v3975
  %v3982 = vshrl.u32 2131351028, %v3976
  %v3983 = vor.u32 %v3981, %v3982
  %v3984 = vshll.u32 2131351028, %v3975
  %v3985 = vshrl.u32 2102212464, %v3976
  %v3986 = vor.u32 %v3984, %v3985
  %v3987 = vshll.u32 2102212464, %v3975
  %v3988 = vshrl.u32 920167782, %v3976
  %v3989 = vor.u32 %v3987, %v3988
  %v3990 = vshll.u32 920167782, %v3975
  %v3991 = vshrl.u32 1326507024, %v3976
  %v3992 = vor.u32 %v3990, %v3991
  %vm3993 = vcmp.lt.s32.totalorder %v3974, 1
  %vm3994 = vcmp.lt.s32.totalorder %v3974, 2
  %vm3995 = vcmp.lt.s32.totalorder %v3974, 3
  %vm3996 = vcmp.lt.s32.totalorder %v3974, 4
  %v3997 = vsel %vm3993, %v3977, %v3980
  %v3998 = vsel %vm3996, %v3986, 2102212464
  %v3999 = vsel %vm3995, %v3983, %v3998
  %v4000 = vsel %vm3994, %v3997, %v3999
  %v4001 = vsel %vm3993, %v3980, %v3983
  %v4002 = vsel %vm3996, %v3989, 920167782
  %v4003 = vsel %vm3995, %v3986, %v4002
  %v4004 = vsel %vm3994, %v4001, %v4003
  %v4005 = vsel %vm3993, %v3983, %v3986
  %v4006 = vsel %vm3996, %v3992, 1326507024
  %v4007 = vsel %vm3995, %v3989, %v4006
  %v4008 = vsel %vm3994, %v4005, %v4007
  %v4009 = vshll.u32 %v3969, 8
  %v4010 = vand.u32 %v4009, 65535
  %v4011 = vshrl.u32 %v4009, 16
  %v4012 = vand.u32 %v4008, 65535
  %v4013 = vshrl.u32 %v4008, 16
  %v4014 = vmul.u32 %v4010, %v4012
  %v4015 = vmul.u32 %v4010, %v4013
  %v4016 = vmul.u32 %v4011, %v4012
  %v4017 = vmul.u32 %v4011, %v4013
  %v4018 = vshll.u32 %v4015, 16
  %v4019 = vshrl.u32 %v4015, 16
  %v4020 = vshll.u32 %v4016, 16
  %v4021 = vshrl.u32 %v4016, 16
  %vm4022 = vc.u32 %v4014, %v4018
  %v4023 = vsel %vm4022, 1, 0
  %v4024 = vadd.s32 %v4014, %v4018
  %v4025 = vadd.s32 %v4017, %v4023
  %vm4026 = vc.u32 %v4024, %v4020
  %v4027 = vsel %vm4026, 1, 0
  %v4028 = vadd.s32 %v4024, %v4020
  %v4029 = vadd.s32 %v4025, %v4027
  %v4030 = vadd.s32 %v4029, %v4019
  %v4031 = vadd.s32 %v4030, %v4021
  %v4032 = vand.u32 %v4009, 65535
  %v4033 = vshrl.u32 %v4009, 16
  %v4034 = vand.u32 %v4004, 65535
  %v4035 = vshrl.u32 %v4004, 16
  %v4036 = vmul.u32 %v4032, %v4034
  %v4037 = vmul.u32 %v4032, %v4035
  %v4038 = vmul.u32 %v4033, %v4034
  %v4039 = vmul.u32 %v4033, %v4035
  %v4040 = vshll.u32 %v4037, 16
  %v4041 = vshrl.u32 %v4037, 16
  %v4042 = vshll.u32 %v4038, 16
  %v4043 = vshrl.u32 %v4038, 16
  %vm4044 = vc.u32 %v4036, %v4040
  %v4045 = vsel %vm4044, 1, 0
  %v4046 = vadd.s32 %v4036, %v4040
  %v4047 = vadd.s32 %v4039, %v4045
  %vm4048 = vc.u32 %v4046, %v4042
  %v4049 = vsel %vm4048, 1, 0
  %v4050 = vadd.s32 %v4046, %v4042
  %v4051 = vadd.s32 %v4047, %v4049
  %v4052 = vadd.s32 %v4051, %v4041
  %v4053 = vadd.s32 %v4052, %v4043
  %v4054 = vmul.u32 %v4009, %v4000
  %v4055 = vadd.s32 %v4031, %v4050
  %vm4056 = vc.u32 %v4031, %v4050
  %v4057 = vadd.s32 %v4053, 1
  %v4058 = vsel %vm4056, %v4057, %v4053
  %v4059 = vadd.s32 %v4054, %v4058
  %v4060 = vadd.s32 %v4059, 536870912
  %v4061 = vshrl.u32 %v4060, 30
  %v4062 = vshll.u32 %v4061, 30
  %v4063 = vsub.s32 %v4059, %v4062
  %vm4064 = vcmp.lt.s32.totalorder %v4063, 0
  %v4065 = vsub.s32 0, %v4063
  %v4066 = vsel %vm4064, %v4065, %v4063
  %v4067 = vclz %v4066
  %v4068 = vsub.s32 %v4067, 2
  %vm4069 = vcmp.gt.s32.totalorder 0, %v4068
  %v4070 = vsel %vm4069, 0, %v4068
  %v4071 = vsub.s32 32, %v4070
  %v4072 = vshll.u32 %v4063, %v4070
  %v4073 = vshrl.u32 %v4055, %v4071
  %v4074 = vor.u32 %v4072, %v4073
  %v4075 = vsub.s32 4294967266, %v4070
  %v4076 = vadd.s32 %v4075, 127
  %v4077 = vshll.u32 %v4076, 23
  %v4078 = vor.u32 4788187, %v4077
  %v4079 = vand.u32 2147483647, %v4078
  %v4081 = vcvt.s32.f32 %v4074
  %v4082 = vmul.f32 %v4081, %v4079
  %v4083 = vxor.u32 %v4082, 2147483648
  %v4084 = vsel %vm3963, %v4083, %v4082
  %v4085 = vsub.s32 4, %v4061
  %v4086 = vsel %vm3963, %v4085, %v4061
  %v4087 = vsel %vm3962, %v3960, %v4084
  %v4088 = vsel %vm3962, 0, %v4086
  %v4089 = vmul.f32 %v4087, %v4087
  %v4090 = vmul.f32 %v4089, -0.001358992
  %v4091 = vadd.f32 %v4090, 0.041655596
  %v4092 = vmul.f32 %v4089, %v4091
  %v4093 = vadd.f32 %v4092, -0.4999988
  %v4094 = vmul.f32 %v4089, %v4093
  %v4095 = vadd.f32 1.0, %v4094
  %v4096 = vmul.f32 %v4087, %v4087
  %v4097 = vmul.f32 %v4096, -0.00019511016
  %v4098 = vadd.f32 %v4097, 0.008332121
  %v4099 = vmul.f32 %v4096, %v4098
  %v4100 = vadd.f32 %v4099, -0.16666654
  %v4101 = vmul.f32 %v4096, %v4100
  %v4102 = vadd.f32 %v4101, 1.0
  %v4103 = vmul.f32 %v4102, %v4087
  %vm4104 = vweird.f32 %v3960
  %v4105 = vadd.s32 %v4088, 3
  %v4106 = vand.u32 %v4105, 3
  %vm4107 = vcmp.lt.s32.totalorder %v4106, 2
  %vm4108 = vcmp.eq.s32.totalorder %v4106, 0
  %v4109 = vxor.u32 %v4103, 2147483648
  %v4110 = vsel %vm4108, %v4095, %v4109
  %vm4111 = vcmp.eq.s32.totalorder %v4106, 2
  %v4112 = vxor.u32 %v4095, 2147483648
  %v4113 = vsel %vm4111, %v4112, %v4103
  %v4114 = vsel %vm4107, %v4110, %v4113
  %v4115 = vsel %vm4104, nan, %v4114
  %v4116 = vadd.f32 %v3950, %v4115
  %4117 = vset.pattern.permute.xlu0 17
  %4118 = vperm.xlu0 %4117, %v1288
  %v4119 = vpop.permute.xlu0 %4118
  %v4121 = vmul.f32 %v4119, %v1295
  %4122 = vset.pattern.permute.xlu0 17
  %4123 = vperm.xlu0 %4122, %v1298
  %v4124 = vpop.permute.xlu0 %4123
  %v4126 = vadd.f32 %v4121, %v4124
  %v4127 = vand.u32 2147483647, %v4126
  %vm4128 = vcmp.le.f32.partialorder %v4127, 0.7853982
  %vm4129 = vcmp.lt.s32.totalorder %v4126, 0
  %v4130 = vand.u32 %v4126, 2139095040
  %v4131 = vshrl.u32 %v4130, 23
  %v4132 = vsub.s32 %v4131, 127
  %v4133 = vand.u32 2147483647, %v4126
  %v4134 = vand.u32 %v4133, 8388607
  %v4135 = vor.u32 %v4134, 8388608
  %v4136 = vsub.s32 0, %v4135
  %v4137 = vadd.s32 %v4132, 1
  %vm4138 = vcmp.gt.s32.totalorder %v4137, 0
  %v4139 = vsel %vm4138, %v4137, 0
  %v4140 = vshrl.u32 %v4139, 5
  %v4141 = vand.u32 %v4139, 31
  %v4142 = vsub.s32 32, %v4141
  %v4143 = vshrl.u32 683565275, %v4142
  %v4144 = vshll.u32 683565275, %v4141
  %v4145 = vshrl.u32 2475754826, %v4142
  %v4146 = vor.u32 %v4144, %v4145
  %v4147 = vshll.u32 2475754826, %v4141
  %v4148 = vshrl.u32 2131351028, %v4142
  %v4149 = vor.u32 %v4147, %v4148
  %v4150 = vshll.u32 2131351028, %v4141
  %v4151 = vshrl.u32 2102212464, %v4142
  %v4152 = vor.u32 %v4150, %v4151
  %v4153 = vshll.u32 2102212464, %v4141
  %v4154 = vshrl.u32 920167782, %v4142
  %v4155 = vor.u32 %v4153, %v4154
  %v4156 = vshll.u32 920167782, %v4141
  %v4157 = vshrl.u32 1326507024, %v4142
  %v4158 = vor.u32 %v4156, %v4157
  %vm4159 = vcmp.lt.s32.totalorder %v4140, 1
  %vm4160 = vcmp.lt.s32.totalorder %v4140, 2
  %vm4161 = vcmp.lt.s32.totalorder %v4140, 3
  %vm4162 = vcmp.lt.s32.totalorder %v4140, 4
  %v4163 = vsel %vm4159, %v4143, %v4146
  %v4164 = vsel %vm4162, %v4152, 2102212464
  %v4165 = vsel %vm4161, %v4149, %v4164
  %v4166 = vsel %vm4160, %v4163, %v4165
  %v4167 = vsel %vm4159, %v4146, %v4149
  %v4168 = vsel %vm4162, %v4155, 920167782
  %v4169 = vsel %vm4161, %v4152, %v4168
  %v4170 = vsel %vm4160, %v4167, %v4169
  %v4171 = vsel %vm4159, %v4149, %v4152
  %v4172 = vsel %vm4162, %v4158, 1326507024
  %v4173 = vsel %vm4161, %v4155, %v4172
  %v4174 = vsel %vm4160, %v4171, %v4173
  %v4175 = vshll.u32 %v4135, 8
  %v4176 = vand.u32 %v4175, 65535
  %v4177 = vshrl.u32 %v4175, 16
  %v4178 = vand.u32 %v4174, 65535
  %v4179 = vshrl.u32 %v4174, 16
  %v4180 = vmul.u32 %v4176, %v4178
  %v4181 = vmul.u32 %v4176, %v4179
  %v4182 = vmul.u32 %v4177, %v4178
  %v4183 = vmul.u32 %v4177, %v4179
  %v4184 = vshll.u32 %v4181, 16
  %v4185 = vshrl.u32 %v4181, 16
  %v4186 = vshll.u32 %v4182, 16
  %v4187 = vshrl.u32 %v4182, 16
  %vm4188 = vc.u32 %v4180, %v4184
  %v4189 = vsel %vm4188, 1, 0
  %v4190 = vadd.s32 %v4180, %v4184
  %v4191 = vadd.s32 %v4183, %v4189
  %vm4192 = vc.u32 %v4190, %v4186
  %v4193 = vsel %vm4192, 1, 0
  %v4194 = vadd.s32 %v4190, %v4186
  %v4195 = vadd.s32 %v4191, %v4193
  %v4196 = vadd.s32 %v4195, %v4185
  %v4197 = vadd.s32 %v4196, %v4187
  %v4198 = vand.u32 %v4175, 65535
  %v4199 = vshrl.u32 %v4175, 16
  %v4200 = vand.u32 %v4170, 65535
  %v4201 = vshrl.u32 %v4170, 16
  %v4202 = vmul.u32 %v4198, %v4200
  %v4203 = vmul.u32 %v4198, %v4201
  %v4204 = vmul.u32 %v4199, %v4200
  %v4205 = vmul.u32 %v4199, %v4201
  %v4206 = vshll.u32 %v4203, 16
  %v4207 = vshrl.u32 %v4203, 16
  %v4208 = vshll.u32 %v4204, 16
  %v4209 = vshrl.u32 %v4204, 16
  %vm4210 = vc.u32 %v4202, %v4206
  %v4211 = vsel %vm4210, 1, 0
  %v4212 = vadd.s32 %v4202, %v4206
  %v4213 = vadd.s32 %v4205, %v4211
  %vm4214 = vc.u32 %v4212, %v4208
  %v4215 = vsel %vm4214, 1, 0
  %v4216 = vadd.s32 %v4212, %v4208
  %v4217 = vadd.s32 %v4213, %v4215
  %v4218 = vadd.s32 %v4217, %v4207
  %v4219 = vadd.s32 %v4218, %v4209
  %v4220 = vmul.u32 %v4175, %v4166
  %v4221 = vadd.s32 %v4197, %v4216
  %vm4222 = vc.u32 %v4197, %v4216
  %v4223 = vadd.s32 %v4219, 1
  %v4224 = vsel %vm4222, %v4223, %v4219
  %v4225 = vadd.s32 %v4220, %v4224
  %v4226 = vadd.s32 %v4225, 536870912
  %v4227 = vshrl.u32 %v4226, 30
  %v4228 = vshll.u32 %v4227, 30
  %v4229 = vsub.s32 %v4225, %v4228
  %vm4230 = vcmp.lt.s32.totalorder %v4229, 0
  %v4231 = vsub.s32 0, %v4229
  %v4232 = vsel %vm4230, %v4231, %v4229
  %v4233 = vclz %v4232
  %v4234 = vsub.s32 %v4233, 2
  %vm4235 = vcmp.gt.s32.totalorder 0, %v4234
  %v4236 = vsel %vm4235, 0, %v4234
  %v4237 = vsub.s32 32, %v4236
  %v4238 = vshll.u32 %v4229, %v4236
  %v4239 = vshrl.u32 %v4221, %v4237
  %v4240 = vor.u32 %v4238, %v4239
  %v4241 = vsub.s32 4294967266, %v4236
  %v4242 = vadd.s32 %v4241, 127
  %v4243 = vshll.u32 %v4242, 23
  %v4244 = vor.u32 4788187, %v4243
  %v4245 = vand.u32 2147483647, %v4244
  %v4247 = vcvt.s32.f32 %v4240
  %v4248 = vmul.f32 %v4247, %v4245
  %v4249 = vxor.u32 %v4248, 2147483648
  %v4250 = vsel %vm4129, %v4249, %v4248
  %v4251 = vsub.s32 4, %v4227
  %v4252 = vsel %vm4129, %v4251, %v4227
  %v4253 = vsel %vm4128, %v4126, %v4250
  %v4254 = vsel %vm4128, 0, %v4252
  %v4255 = vmul.f32 %v4253, %v4253
  %v4256 = vmul.f32 %v4255, -0.001358992
  %v4257 = vadd.f32 %v4256, 0.041655596
  %v4258 = vmul.f32 %v4255, %v4257
  %v4259 = vadd.f32 %v4258, -0.4999988
  %v4260 = vmul.f32 %v4255, %v4259
  %v4261 = vadd.f32 1.0, %v4260
  %v4262 = vmul.f32 %v4253, %v4253
  %v4263 = vmul.f32 %v4262, -0.00019511016
  %v4264 = vadd.f32 %v4263, 0.008332121
  %v4265 = vmul.f32 %v4262, %v4264
  %v4266 = vadd.f32 %v4265, -0.16666654
  %v4267 = vmul.f32 %v4262, %v4266
  %v4268 = vadd.f32 %v4267, 1.0
  %v4269 = vmul.f32 %v4268, %v4253
  %vm4270 = vweird.f32 %v4126
  %v4271 = vadd.s32 %v4254, 3
  %v4272 = vand.u32 %v4271, 3
  %vm4273 = vcmp.lt.s32.totalorder %v4272, 2
  %vm4274 = vcmp.eq.s32.totalorder %v4272, 0
  %v4275 = vxor.u32 %v4269, 2147483648
  %v4276 = vsel %vm4274, %v4261, %v4275
  %vm4277 = vcmp.eq.s32.totalorder %v4272, 2
  %v4278 = vxor.u32 %v4261, 2147483648
  %v4279 = vsel %vm4277, %v4278, %v4269
  %v4280 = vsel %vm4273, %v4276, %v4279
  %v4281 = vsel %vm4270, nan, %v4280
  %v4282 = vadd.f32 %v4116, %v4281
  %4283 = vset.pattern.permute.xlu0 18
  %4284 = vperm.xlu0 %4283, %v1288
  %v4285 = vpop.permute.xlu0 %4284
  %v4287 = vmul.f32 %v4285, %v1295
  %4288 = vset.pattern.permute.xlu0 18
  %4289 = vperm.xlu0 %4288, %v1298
  %v4290 = vpop.permute.xlu0 %4289
  %v4292 = vadd.f32 %v4287, %v4290
  %v4293 = vand.u32 2147483647, %v4292
  %vm4294 = vcmp.le.f32.partialorder %v4293, 0.7853982
  %vm4295 = vcmp.lt.s32.totalorder %v4292, 0
  %v4296 = vand.u32 %v4292, 2139095040
  %v4297 = vshrl.u32 %v4296, 23
  %v4298 = vsub.s32 %v4297, 127
  %v4299 = vand.u32 2147483647, %v4292
  %v4300 = vand.u32 %v4299, 8388607
  %v4301 = vor.u32 %v4300, 8388608
  %v4302 = vsub.s32 0, %v4301
  %v4303 = vadd.s32 %v4298, 1
  %vm4304 = vcmp.gt.s32.totalorder %v4303, 0
  %v4305 = vsel %vm4304, %v4303, 0
  %v4306 = vshrl.u32 %v4305, 5
  %v4307 = vand.u32 %v4305, 31
  %v4308 = vsub.s32 32, %v4307
  %v4309 = vshrl.u32 683565275, %v4308
  %v4310 = vshll.u32 683565275, %v4307
  %v4311 = vshrl.u32 2475754826, %v4308
  %v4312 = vor.u32 %v4310, %v4311
  %v4313 = vshll.u32 2475754826, %v4307
  %v4314 = vshrl.u32 2131351028, %v4308
  %v4315 = vor.u32 %v4313, %v4314
  %v4316 = vshll.u32 2131351028, %v4307
  %v4317 = vshrl.u32 2102212464, %v4308
  %v4318 = vor.u32 %v4316, %v4317
  %v4319 = vshll.u32 2102212464, %v4307
  %v4320 = vshrl.u32 920167782, %v4308
  %v4321 = vor.u32 %v4319, %v4320
  %v4322 = vshll.u32 920167782, %v4307
  %v4323 = vshrl.u32 1326507024, %v4308
  %v4324 = vor.u32 %v4322, %v4323
  %vm4325 = vcmp.lt.s32.totalorder %v4306, 1
  %vm4326 = vcmp.lt.s32.totalorder %v4306, 2
  %vm4327 = vcmp.lt.s32.totalorder %v4306, 3
  %vm4328 = vcmp.lt.s32.totalorder %v4306, 4
  %v4329 = vsel %vm4325, %v4309, %v4312
  %v4330 = vsel %vm4328, %v4318, 2102212464
  %v4331 = vsel %vm4327, %v4315, %v4330
  %v4332 = vsel %vm4326, %v4329, %v4331
  %v4333 = vsel %vm4325, %v4312, %v4315
  %v4334 = vsel %vm4328, %v4321, 920167782
  %v4335 = vsel %vm4327, %v4318, %v4334
  %v4336 = vsel %vm4326, %v4333, %v4335
  %v4337 = vsel %vm4325, %v4315, %v4318
  %v4338 = vsel %vm4328, %v4324, 1326507024
  %v4339 = vsel %vm4327, %v4321, %v4338
  %v4340 = vsel %vm4326, %v4337, %v4339
  %v4341 = vshll.u32 %v4301, 8
  %v4342 = vand.u32 %v4341, 65535
  %v4343 = vshrl.u32 %v4341, 16
  %v4344 = vand.u32 %v4340, 65535
  %v4345 = vshrl.u32 %v4340, 16
  %v4346 = vmul.u32 %v4342, %v4344
  %v4347 = vmul.u32 %v4342, %v4345
  %v4348 = vmul.u32 %v4343, %v4344
  %v4349 = vmul.u32 %v4343, %v4345
  %v4350 = vshll.u32 %v4347, 16
  %v4351 = vshrl.u32 %v4347, 16
  %v4352 = vshll.u32 %v4348, 16
  %v4353 = vshrl.u32 %v4348, 16
  %vm4354 = vc.u32 %v4346, %v4350
  %v4355 = vsel %vm4354, 1, 0
  %v4356 = vadd.s32 %v4346, %v4350
  %v4357 = vadd.s32 %v4349, %v4355
  %vm4358 = vc.u32 %v4356, %v4352
  %v4359 = vsel %vm4358, 1, 0
  %v4360 = vadd.s32 %v4356, %v4352
  %v4361 = vadd.s32 %v4357, %v4359
  %v4362 = vadd.s32 %v4361, %v4351
  %v4363 = vadd.s32 %v4362, %v4353
  %v4364 = vand.u32 %v4341, 65535
  %v4365 = vshrl.u32 %v4341, 16
  %v4366 = vand.u32 %v4336, 65535
  %v4367 = vshrl.u32 %v4336, 16
  %v4368 = vmul.u32 %v4364, %v4366
  %v4369 = vmul.u32 %v4364, %v4367
  %v4370 = vmul.u32 %v4365, %v4366
  %v4371 = vmul.u32 %v4365, %v4367
  %v4372 = vshll.u32 %v4369, 16
  %v4373 = vshrl.u32 %v4369, 16
  %v4374 = vshll.u32 %v4370, 16
  %v4375 = vshrl.u32 %v4370, 16
  %vm4376 = vc.u32 %v4368, %v4372
  %v4377 = vsel %vm4376, 1, 0
  %v4378 = vadd.s32 %v4368, %v4372
  %v4379 = vadd.s32 %v4371, %v4377
  %vm4380 = vc.u32 %v4378, %v4374
  %v4381 = vsel %vm4380, 1, 0
  %v4382 = vadd.s32 %v4378, %v4374
  %v4383 = vadd.s32 %v4379, %v4381
  %v4384 = vadd.s32 %v4383, %v4373
  %v4385 = vadd.s32 %v4384, %v4375
  %v4386 = vmul.u32 %v4341, %v4332
  %v4387 = vadd.s32 %v4363, %v4382
  %vm4388 = vc.u32 %v4363, %v4382
  %v4389 = vadd.s32 %v4385, 1
  %v4390 = vsel %vm4388, %v4389, %v4385
  %v4391 = vadd.s32 %v4386, %v4390
  %v4392 = vadd.s32 %v4391, 536870912
  %v4393 = vshrl.u32 %v4392, 30
  %v4394 = vshll.u32 %v4393, 30
  %v4395 = vsub.s32 %v4391, %v4394
  %vm4396 = vcmp.lt.s32.totalorder %v4395, 0
  %v4397 = vsub.s32 0, %v4395
  %v4398 = vsel %vm4396, %v4397, %v4395
  %v4399 = vclz %v4398
  %v4400 = vsub.s32 %v4399, 2
  %vm4401 = vcmp.gt.s32.totalorder 0, %v4400
  %v4402 = vsel %vm4401, 0, %v4400
  %v4403 = vsub.s32 32, %v4402
  %v4404 = vshll.u32 %v4395, %v4402
  %v4405 = vshrl.u32 %v4387, %v4403
  %v4406 = vor.u32 %v4404, %v4405
  %v4407 = vsub.s32 4294967266, %v4402
  %v4408 = vadd.s32 %v4407, 127
  %v4409 = vshll.u32 %v4408, 23
  %v4410 = vor.u32 4788187, %v4409
  %v4411 = vand.u32 2147483647, %v4410
  %v4413 = vcvt.s32.f32 %v4406
  %v4414 = vmul.f32 %v4413, %v4411
  %v4415 = vxor.u32 %v4414, 2147483648
  %v4416 = vsel %vm4295, %v4415, %v4414
  %v4417 = vsub.s32 4, %v4393
  %v4418 = vsel %vm4295, %v4417, %v4393
  %v4419 = vsel %vm4294, %v4292, %v4416
  %v4420 = vsel %vm4294, 0, %v4418
  %v4421 = vmul.f32 %v4419, %v4419
  %v4422 = vmul.f32 %v4421, -0.001358992
  %v4423 = vadd.f32 %v4422, 0.041655596
  %v4424 = vmul.f32 %v4421, %v4423
  %v4425 = vadd.f32 %v4424, -0.4999988
  %v4426 = vmul.f32 %v4421, %v4425
  %v4427 = vadd.f32 1.0, %v4426
  %v4428 = vmul.f32 %v4419, %v4419
  %v4429 = vmul.f32 %v4428, -0.00019511016
  %v4430 = vadd.f32 %v4429, 0.008332121
  %v4431 = vmul.f32 %v4428, %v4430
  %v4432 = vadd.f32 %v4431, -0.16666654
  %v4433 = vmul.f32 %v4428, %v4432
  %v4434 = vadd.f32 %v4433, 1.0
  %v4435 = vmul.f32 %v4434, %v4419
  %vm4436 = vweird.f32 %v4292
  %v4437 = vadd.s32 %v4420, 3
  %v4438 = vand.u32 %v4437, 3
  %vm4439 = vcmp.lt.s32.totalorder %v4438, 2
  %vm4440 = vcmp.eq.s32.totalorder %v4438, 0
  %v4441 = vxor.u32 %v4435, 2147483648
  %v4442 = vsel %vm4440, %v4427, %v4441
  %vm4443 = vcmp.eq.s32.totalorder %v4438, 2
  %v4444 = vxor.u32 %v4427, 2147483648
  %v4445 = vsel %vm4443, %v4444, %v4435
  %v4446 = vsel %vm4439, %v4442, %v4445
  %v4447 = vsel %vm4436, nan, %v4446
  %v4448 = vadd.f32 %v4282, %v4447
  %4449 = vset.pattern.permute.xlu0 19
  %4450 = vperm.xlu0 %4449, %v1288
  %v4451 = vpop.permute.xlu0 %4450
  %v4453 = vmul.f32 %v4451, %v1295
  %4454 = vset.pattern.permute.xlu0 19
  %4455 = vperm.xlu0 %4454, %v1298
  %v4456 = vpop.permute.xlu0 %4455
  %v4458 = vadd.f32 %v4453, %v4456
  %v4459 = vand.u32 2147483647, %v4458
  %vm4460 = vcmp.le.f32.partialorder %v4459, 0.7853982
  %vm4461 = vcmp.lt.s32.totalorder %v4458, 0
  %v4462 = vand.u32 %v4458, 2139095040
  %v4463 = vshrl.u32 %v4462, 23
  %v4464 = vsub.s32 %v4463, 127
  %v4465 = vand.u32 2147483647, %v4458
  %v4466 = vand.u32 %v4465, 8388607
  %v4467 = vor.u32 %v4466, 8388608
  %v4468 = vsub.s32 0, %v4467
  %v4469 = vadd.s32 %v4464, 1
  %vm4470 = vcmp.gt.s32.totalorder %v4469, 0
  %v4471 = vsel %vm4470, %v4469, 0
  %v4472 = vshrl.u32 %v4471, 5
  %v4473 = vand.u32 %v4471, 31
  %v4474 = vsub.s32 32, %v4473
  %v4475 = vshrl.u32 683565275, %v4474
  %v4476 = vshll.u32 683565275, %v4473
  %v4477 = vshrl.u32 2475754826, %v4474
  %v4478 = vor.u32 %v4476, %v4477
  %v4479 = vshll.u32 2475754826, %v4473
  %v4480 = vshrl.u32 2131351028, %v4474
  %v4481 = vor.u32 %v4479, %v4480
  %v4482 = vshll.u32 2131351028, %v4473
  %v4483 = vshrl.u32 2102212464, %v4474
  %v4484 = vor.u32 %v4482, %v4483
  %v4485 = vshll.u32 2102212464, %v4473
  %v4486 = vshrl.u32 920167782, %v4474
  %v4487 = vor.u32 %v4485, %v4486
  %v4488 = vshll.u32 920167782, %v4473
  %v4489 = vshrl.u32 1326507024, %v4474
  %v4490 = vor.u32 %v4488, %v4489
  %vm4491 = vcmp.lt.s32.totalorder %v4472, 1
  %vm4492 = vcmp.lt.s32.totalorder %v4472, 2
  %vm4493 = vcmp.lt.s32.totalorder %v4472, 3
  %vm4494 = vcmp.lt.s32.totalorder %v4472, 4
  %v4495 = vsel %vm4491, %v4475, %v4478
  %v4496 = vsel %vm4494, %v4484, 2102212464
  %v4497 = vsel %vm4493, %v4481, %v4496
  %v4498 = vsel %vm4492, %v4495, %v4497
  %v4499 = vsel %vm4491, %v4478, %v4481
  %v4500 = vsel %vm4494, %v4487, 920167782
  %v4501 = vsel %vm4493, %v4484, %v4500
  %v4502 = vsel %vm4492, %v4499, %v4501
  %v4503 = vsel %vm4491, %v4481, %v4484
  %v4504 = vsel %vm4494, %v4490, 1326507024
  %v4505 = vsel %vm4493, %v4487, %v4504
  %v4506 = vsel %vm4492, %v4503, %v4505
  %v4507 = vshll.u32 %v4467, 8
  %v4508 = vand.u32 %v4507, 65535
  %v4509 = vshrl.u32 %v4507, 16
  %v4510 = vand.u32 %v4506, 65535
  %v4511 = vshrl.u32 %v4506, 16
  %v4512 = vmul.u32 %v4508, %v4510
  %v4513 = vmul.u32 %v4508, %v4511
  %v4514 = vmul.u32 %v4509, %v4510
  %v4515 = vmul.u32 %v4509, %v4511
  %v4516 = vshll.u32 %v4513, 16
  %v4517 = vshrl.u32 %v4513, 16
  %v4518 = vshll.u32 %v4514, 16
  %v4519 = vshrl.u32 %v4514, 16
  %vm4520 = vc.u32 %v4512, %v4516
  %v4521 = vsel %vm4520, 1, 0
  %v4522 = vadd.s32 %v4512, %v4516
  %v4523 = vadd.s32 %v4515, %v4521
  %vm4524 = vc.u32 %v4522, %v4518
  %v4525 = vsel %vm4524, 1, 0
  %v4526 = vadd.s32 %v4522, %v4518
  %v4527 = vadd.s32 %v4523, %v4525
  %v4528 = vadd.s32 %v4527, %v4517
  %v4529 = vadd.s32 %v4528, %v4519
  %v4530 = vand.u32 %v4507, 65535
  %v4531 = vshrl.u32 %v4507, 16
  %v4532 = vand.u32 %v4502, 65535
  %v4533 = vshrl.u32 %v4502, 16
  %v4534 = vmul.u32 %v4530, %v4532
  %v4535 = vmul.u32 %v4530, %v4533
  %v4536 = vmul.u32 %v4531, %v4532
  %v4537 = vmul.u32 %v4531, %v4533
  %v4538 = vshll.u32 %v4535, 16
  %v4539 = vshrl.u32 %v4535, 16
  %v4540 = vshll.u32 %v4536, 16
  %v4541 = vshrl.u32 %v4536, 16
  %vm4542 = vc.u32 %v4534, %v4538
  %v4543 = vsel %vm4542, 1, 0
  %v4544 = vadd.s32 %v4534, %v4538
  %v4545 = vadd.s32 %v4537, %v4543
  %vm4546 = vc.u32 %v4544, %v4540
  %v4547 = vsel %vm4546, 1, 0
  %v4548 = vadd.s32 %v4544, %v4540
  %v4549 = vadd.s32 %v4545, %v4547
  %v4550 = vadd.s32 %v4549, %v4539
  %v4551 = vadd.s32 %v4550, %v4541
  %v4552 = vmul.u32 %v4507, %v4498
  %v4553 = vadd.s32 %v4529, %v4548
  %vm4554 = vc.u32 %v4529, %v4548
  %v4555 = vadd.s32 %v4551, 1
  %v4556 = vsel %vm4554, %v4555, %v4551
  %v4557 = vadd.s32 %v4552, %v4556
  %v4558 = vadd.s32 %v4557, 536870912
  %v4559 = vshrl.u32 %v4558, 30
  %v4560 = vshll.u32 %v4559, 30
  %v4561 = vsub.s32 %v4557, %v4560
  %vm4562 = vcmp.lt.s32.totalorder %v4561, 0
  %v4563 = vsub.s32 0, %v4561
  %v4564 = vsel %vm4562, %v4563, %v4561
  %v4565 = vclz %v4564
  %v4566 = vsub.s32 %v4565, 2
  %vm4567 = vcmp.gt.s32.totalorder 0, %v4566
  %v4568 = vsel %vm4567, 0, %v4566
  %v4569 = vsub.s32 32, %v4568
  %v4570 = vshll.u32 %v4561, %v4568
  %v4571 = vshrl.u32 %v4553, %v4569
  %v4572 = vor.u32 %v4570, %v4571
  %v4573 = vsub.s32 4294967266, %v4568
  %v4574 = vadd.s32 %v4573, 127
  %v4575 = vshll.u32 %v4574, 23
  %v4576 = vor.u32 4788187, %v4575
  %v4577 = vand.u32 2147483647, %v4576
  %v4579 = vcvt.s32.f32 %v4572
  %v4580 = vmul.f32 %v4579, %v4577
  %v4581 = vxor.u32 %v4580, 2147483648
  %v4582 = vsel %vm4461, %v4581, %v4580
  %v4583 = vsub.s32 4, %v4559
  %v4584 = vsel %vm4461, %v4583, %v4559
  %v4585 = vsel %vm4460, %v4458, %v4582
  %v4586 = vsel %vm4460, 0, %v4584
  %v4587 = vmul.f32 %v4585, %v4585
  %v4588 = vmul.f32 %v4587, -0.001358992
  %v4589 = vadd.f32 %v4588, 0.041655596
  %v4590 = vmul.f32 %v4587, %v4589
  %v4591 = vadd.f32 %v4590, -0.4999988
  %v4592 = vmul.f32 %v4587, %v4591
  %v4593 = vadd.f32 1.0, %v4592
  %v4594 = vmul.f32 %v4585, %v4585
  %v4595 = vmul.f32 %v4594, -0.00019511016
  %v4596 = vadd.f32 %v4595, 0.008332121
  %v4597 = vmul.f32 %v4594, %v4596
  %v4598 = vadd.f32 %v4597, -0.16666654
  %v4599 = vmul.f32 %v4594, %v4598
  %v4600 = vadd.f32 %v4599, 1.0
  %v4601 = vmul.f32 %v4600, %v4585
  %vm4602 = vweird.f32 %v4458
  %v4603 = vadd.s32 %v4586, 3
  %v4604 = vand.u32 %v4603, 3
  %vm4605 = vcmp.lt.s32.totalorder %v4604, 2
  %vm4606 = vcmp.eq.s32.totalorder %v4604, 0
  %v4607 = vxor.u32 %v4601, 2147483648
  %v4608 = vsel %vm4606, %v4593, %v4607
  %vm4609 = vcmp.eq.s32.totalorder %v4604, 2
  %v4610 = vxor.u32 %v4593, 2147483648
  %v4611 = vsel %vm4609, %v4610, %v4601
  %v4612 = vsel %vm4605, %v4608, %v4611
  %v4613 = vsel %vm4602, nan, %v4612
  %v4614 = vadd.f32 %v4448, %v4613
  %4615 = vset.pattern.permute.xlu0 20
  %4616 = vperm.xlu0 %4615, %v1288
  %v4617 = vpop.permute.xlu0 %4616
  %v4619 = vmul.f32 %v4617, %v1295
  %4620 = vset.pattern.permute.xlu0 20
  %4621 = vperm.xlu0 %4620, %v1298
  %v4622 = vpop.permute.xlu0 %4621
  %v4624 = vadd.f32 %v4619, %v4622
  %v4625 = vand.u32 2147483647, %v4624
  %vm4626 = vcmp.le.f32.partialorder %v4625, 0.7853982
  %vm4627 = vcmp.lt.s32.totalorder %v4624, 0
  %v4628 = vand.u32 %v4624, 2139095040
  %v4629 = vshrl.u32 %v4628, 23
  %v4630 = vsub.s32 %v4629, 127
  %v4631 = vand.u32 2147483647, %v4624
  %v4632 = vand.u32 %v4631, 8388607
  %v4633 = vor.u32 %v4632, 8388608
  %v4634 = vsub.s32 0, %v4633
  %v4635 = vadd.s32 %v4630, 1
  %vm4636 = vcmp.gt.s32.totalorder %v4635, 0
  %v4637 = vsel %vm4636, %v4635, 0
  %v4638 = vshrl.u32 %v4637, 5
  %v4639 = vand.u32 %v4637, 31
  %v4640 = vsub.s32 32, %v4639
  %v4641 = vshrl.u32 683565275, %v4640
  %v4642 = vshll.u32 683565275, %v4639
  %v4643 = vshrl.u32 2475754826, %v4640
  %v4644 = vor.u32 %v4642, %v4643
  %v4645 = vshll.u32 2475754826, %v4639
  %v4646 = vshrl.u32 2131351028, %v4640
  %v4647 = vor.u32 %v4645, %v4646
  %v4648 = vshll.u32 2131351028, %v4639
  %v4649 = vshrl.u32 2102212464, %v4640
  %v4650 = vor.u32 %v4648, %v4649
  %v4651 = vshll.u32 2102212464, %v4639
  %v4652 = vshrl.u32 920167782, %v4640
  %v4653 = vor.u32 %v4651, %v4652
  %v4654 = vshll.u32 920167782, %v4639
  %v4655 = vshrl.u32 1326507024, %v4640
  %v4656 = vor.u32 %v4654, %v4655
  %vm4657 = vcmp.lt.s32.totalorder %v4638, 1
  %vm4658 = vcmp.lt.s32.totalorder %v4638, 2
  %vm4659 = vcmp.lt.s32.totalorder %v4638, 3
  %vm4660 = vcmp.lt.s32.totalorder %v4638, 4
  %v4661 = vsel %vm4657, %v4641, %v4644
  %v4662 = vsel %vm4660, %v4650, 2102212464
  %v4663 = vsel %vm4659, %v4647, %v4662
  %v4664 = vsel %vm4658, %v4661, %v4663
  %v4665 = vsel %vm4657, %v4644, %v4647
  %v4666 = vsel %vm4660, %v4653, 920167782
  %v4667 = vsel %vm4659, %v4650, %v4666
  %v4668 = vsel %vm4658, %v4665, %v4667
  %v4669 = vsel %vm4657, %v4647, %v4650
  %v4670 = vsel %vm4660, %v4656, 1326507024
  %v4671 = vsel %vm4659, %v4653, %v4670
  %v4672 = vsel %vm4658, %v4669, %v4671
  %v4673 = vshll.u32 %v4633, 8
  %v4674 = vand.u32 %v4673, 65535
  %v4675 = vshrl.u32 %v4673, 16
  %v4676 = vand.u32 %v4672, 65535
  %v4677 = vshrl.u32 %v4672, 16
  %v4678 = vmul.u32 %v4674, %v4676
  %v4679 = vmul.u32 %v4674, %v4677
  %v4680 = vmul.u32 %v4675, %v4676
  %v4681 = vmul.u32 %v4675, %v4677
  %v4682 = vshll.u32 %v4679, 16
  %v4683 = vshrl.u32 %v4679, 16
  %v4684 = vshll.u32 %v4680, 16
  %v4685 = vshrl.u32 %v4680, 16
  %vm4686 = vc.u32 %v4678, %v4682
  %v4687 = vsel %vm4686, 1, 0
  %v4688 = vadd.s32 %v4678, %v4682
  %v4689 = vadd.s32 %v4681, %v4687
  %vm4690 = vc.u32 %v4688, %v4684
  %v4691 = vsel %vm4690, 1, 0
  %v4692 = vadd.s32 %v4688, %v4684
  %v4693 = vadd.s32 %v4689, %v4691
  %v4694 = vadd.s32 %v4693, %v4683
  %v4695 = vadd.s32 %v4694, %v4685
  %v4696 = vand.u32 %v4673, 65535
  %v4697 = vshrl.u32 %v4673, 16
  %v4698 = vand.u32 %v4668, 65535
  %v4699 = vshrl.u32 %v4668, 16
  %v4700 = vmul.u32 %v4696, %v4698
  %v4701 = vmul.u32 %v4696, %v4699
  %v4702 = vmul.u32 %v4697, %v4698
  %v4703 = vmul.u32 %v4697, %v4699
  %v4704 = vshll.u32 %v4701, 16
  %v4705 = vshrl.u32 %v4701, 16
  %v4706 = vshll.u32 %v4702, 16
  %v4707 = vshrl.u32 %v4702, 16
  %vm4708 = vc.u32 %v4700, %v4704
  %v4709 = vsel %vm4708, 1, 0
  %v4710 = vadd.s32 %v4700, %v4704
  %v4711 = vadd.s32 %v4703, %v4709
  %vm4712 = vc.u32 %v4710, %v4706
  %v4713 = vsel %vm4712, 1, 0
  %v4714 = vadd.s32 %v4710, %v4706
  %v4715 = vadd.s32 %v4711, %v4713
  %v4716 = vadd.s32 %v4715, %v4705
  %v4717 = vadd.s32 %v4716, %v4707
  %v4718 = vmul.u32 %v4673, %v4664
  %v4719 = vadd.s32 %v4695, %v4714
  %vm4720 = vc.u32 %v4695, %v4714
  %v4721 = vadd.s32 %v4717, 1
  %v4722 = vsel %vm4720, %v4721, %v4717
  %v4723 = vadd.s32 %v4718, %v4722
  %v4724 = vadd.s32 %v4723, 536870912
  %v4725 = vshrl.u32 %v4724, 30
  %v4726 = vshll.u32 %v4725, 30
  %v4727 = vsub.s32 %v4723, %v4726
  %vm4728 = vcmp.lt.s32.totalorder %v4727, 0
  %v4729 = vsub.s32 0, %v4727
  %v4730 = vsel %vm4728, %v4729, %v4727
  %v4731 = vclz %v4730
  %v4732 = vsub.s32 %v4731, 2
  %vm4733 = vcmp.gt.s32.totalorder 0, %v4732
  %v4734 = vsel %vm4733, 0, %v4732
  %v4735 = vsub.s32 32, %v4734
  %v4736 = vshll.u32 %v4727, %v4734
  %v4737 = vshrl.u32 %v4719, %v4735
  %v4738 = vor.u32 %v4736, %v4737
  %v4739 = vsub.s32 4294967266, %v4734
  %v4740 = vadd.s32 %v4739, 127
  %v4741 = vshll.u32 %v4740, 23
  %v4742 = vor.u32 4788187, %v4741
  %v4743 = vand.u32 2147483647, %v4742
  %v4745 = vcvt.s32.f32 %v4738
  %v4746 = vmul.f32 %v4745, %v4743
  %v4747 = vxor.u32 %v4746, 2147483648
  %v4748 = vsel %vm4627, %v4747, %v4746
  %v4749 = vsub.s32 4, %v4725
  %v4750 = vsel %vm4627, %v4749, %v4725
  %v4751 = vsel %vm4626, %v4624, %v4748
  %v4752 = vsel %vm4626, 0, %v4750
  %v4753 = vmul.f32 %v4751, %v4751
  %v4754 = vmul.f32 %v4753, -0.001358992
  %v4755 = vadd.f32 %v4754, 0.041655596
  %v4756 = vmul.f32 %v4753, %v4755
  %v4757 = vadd.f32 %v4756, -0.4999988
  %v4758 = vmul.f32 %v4753, %v4757
  %v4759 = vadd.f32 1.0, %v4758
  %v4760 = vmul.f32 %v4751, %v4751
  %v4761 = vmul.f32 %v4760, -0.00019511016
  %v4762 = vadd.f32 %v4761, 0.008332121
  %v4763 = vmul.f32 %v4760, %v4762
  %v4764 = vadd.f32 %v4763, -0.16666654
  %v4765 = vmul.f32 %v4760, %v4764
  %v4766 = vadd.f32 %v4765, 1.0
  %v4767 = vmul.f32 %v4766, %v4751
  %vm4768 = vweird.f32 %v4624
  %v4769 = vadd.s32 %v4752, 3
  %v4770 = vand.u32 %v4769, 3
  %vm4771 = vcmp.lt.s32.totalorder %v4770, 2
  %vm4772 = vcmp.eq.s32.totalorder %v4770, 0
  %v4773 = vxor.u32 %v4767, 2147483648
  %v4774 = vsel %vm4772, %v4759, %v4773
  %vm4775 = vcmp.eq.s32.totalorder %v4770, 2
  %v4776 = vxor.u32 %v4759, 2147483648
  %v4777 = vsel %vm4775, %v4776, %v4767
  %v4778 = vsel %vm4771, %v4774, %v4777
  %v4779 = vsel %vm4768, nan, %v4778
  %v4780 = vadd.f32 %v4614, %v4779
  %4781 = vset.pattern.permute.xlu0 21
  %4782 = vperm.xlu0 %4781, %v1288
  %v4783 = vpop.permute.xlu0 %4782
  %v4785 = vmul.f32 %v4783, %v1295
  %4786 = vset.pattern.permute.xlu0 21
  %4787 = vperm.xlu0 %4786, %v1298
  %v4788 = vpop.permute.xlu0 %4787
  %v4790 = vadd.f32 %v4785, %v4788
  %v4791 = vand.u32 2147483647, %v4790
  %vm4792 = vcmp.le.f32.partialorder %v4791, 0.7853982
  %vm4793 = vcmp.lt.s32.totalorder %v4790, 0
  %v4794 = vand.u32 %v4790, 2139095040
  %v4795 = vshrl.u32 %v4794, 23
  %v4796 = vsub.s32 %v4795, 127
  %v4797 = vand.u32 2147483647, %v4790
  %v4798 = vand.u32 %v4797, 8388607
  %v4799 = vor.u32 %v4798, 8388608
  %v4800 = vsub.s32 0, %v4799
  %v4801 = vadd.s32 %v4796, 1
  %vm4802 = vcmp.gt.s32.totalorder %v4801, 0
  %v4803 = vsel %vm4802, %v4801, 0
  %v4804 = vshrl.u32 %v4803, 5
  %v4805 = vand.u32 %v4803, 31
  %v4806 = vsub.s32 32, %v4805
  %v4807 = vshrl.u32 683565275, %v4806
  %v4808 = vshll.u32 683565275, %v4805
  %v4809 = vshrl.u32 2475754826, %v4806
  %v4810 = vor.u32 %v4808, %v4809
  %v4811 = vshll.u32 2475754826, %v4805
  %v4812 = vshrl.u32 2131351028, %v4806
  %v4813 = vor.u32 %v4811, %v4812
  %v4814 = vshll.u32 2131351028, %v4805
  %v4815 = vshrl.u32 2102212464, %v4806
  %v4816 = vor.u32 %v4814, %v4815
  %v4817 = vshll.u32 2102212464, %v4805
  %v4818 = vshrl.u32 920167782, %v4806
  %v4819 = vor.u32 %v4817, %v4818
  %v4820 = vshll.u32 920167782, %v4805
  %v4821 = vshrl.u32 1326507024, %v4806
  %v4822 = vor.u32 %v4820, %v4821
  %vm4823 = vcmp.lt.s32.totalorder %v4804, 1
  %vm4824 = vcmp.lt.s32.totalorder %v4804, 2
  %vm4825 = vcmp.lt.s32.totalorder %v4804, 3
  %vm4826 = vcmp.lt.s32.totalorder %v4804, 4
  %v4827 = vsel %vm4823, %v4807, %v4810
  %v4828 = vsel %vm4826, %v4816, 2102212464
  %v4829 = vsel %vm4825, %v4813, %v4828
  %v4830 = vsel %vm4824, %v4827, %v4829
  %v4831 = vsel %vm4823, %v4810, %v4813
  %v4832 = vsel %vm4826, %v4819, 920167782
  %v4833 = vsel %vm4825, %v4816, %v4832
  %v4834 = vsel %vm4824, %v4831, %v4833
  %v4835 = vsel %vm4823, %v4813, %v4816
  %v4836 = vsel %vm4826, %v4822, 1326507024
  %v4837 = vsel %vm4825, %v4819, %v4836
  %v4838 = vsel %vm4824, %v4835, %v4837
  %v4839 = vshll.u32 %v4799, 8
  %v4840 = vand.u32 %v4839, 65535
  %v4841 = vshrl.u32 %v4839, 16
  %v4842 = vand.u32 %v4838, 65535
  %v4843 = vshrl.u32 %v4838, 16
  %v4844 = vmul.u32 %v4840, %v4842
  %v4845 = vmul.u32 %v4840, %v4843
  %v4846 = vmul.u32 %v4841, %v4842
  %v4847 = vmul.u32 %v4841, %v4843
  %v4848 = vshll.u32 %v4845, 16
  %v4849 = vshrl.u32 %v4845, 16
  %v4850 = vshll.u32 %v4846, 16
  %v4851 = vshrl.u32 %v4846, 16
  %vm4852 = vc.u32 %v4844, %v4848
  %v4853 = vsel %vm4852, 1, 0
  %v4854 = vadd.s32 %v4844, %v4848
  %v4855 = vadd.s32 %v4847, %v4853
  %vm4856 = vc.u32 %v4854, %v4850
  %v4857 = vsel %vm4856, 1, 0
  %v4858 = vadd.s32 %v4854, %v4850
  %v4859 = vadd.s32 %v4855, %v4857
  %v4860 = vadd.s32 %v4859, %v4849
  %v4861 = vadd.s32 %v4860, %v4851
  %v4862 = vand.u32 %v4839, 65535
  %v4863 = vshrl.u32 %v4839, 16
  %v4864 = vand.u32 %v4834, 65535
  %v4865 = vshrl.u32 %v4834, 16
  %v4866 = vmul.u32 %v4862, %v4864
  %v4867 = vmul.u32 %v4862, %v4865
  %v4868 = vmul.u32 %v4863, %v4864
  %v4869 = vmul.u32 %v4863, %v4865
  %v4870 = vshll.u32 %v4867, 16
  %v4871 = vshrl.u32 %v4867, 16
  %v4872 = vshll.u32 %v4868, 16
  %v4873 = vshrl.u32 %v4868, 16
  %vm4874 = vc.u32 %v4866, %v4870
  %v4875 = vsel %vm4874, 1, 0
  %v4876 = vadd.s32 %v4866, %v4870
  %v4877 = vadd.s32 %v4869, %v4875
  %vm4878 = vc.u32 %v4876, %v4872
  %v4879 = vsel %vm4878, 1, 0
  %v4880 = vadd.s32 %v4876, %v4872
  %v4881 = vadd.s32 %v4877, %v4879
  %v4882 = vadd.s32 %v4881, %v4871
  %v4883 = vadd.s32 %v4882, %v4873
  %v4884 = vmul.u32 %v4839, %v4830
  %v4885 = vadd.s32 %v4861, %v4880
  %vm4886 = vc.u32 %v4861, %v4880
  %v4887 = vadd.s32 %v4883, 1
  %v4888 = vsel %vm4886, %v4887, %v4883
  %v4889 = vadd.s32 %v4884, %v4888
  %v4890 = vadd.s32 %v4889, 536870912
  %v4891 = vshrl.u32 %v4890, 30
  %v4892 = vshll.u32 %v4891, 30
  %v4893 = vsub.s32 %v4889, %v4892
  %vm4894 = vcmp.lt.s32.totalorder %v4893, 0
  %v4895 = vsub.s32 0, %v4893
  %v4896 = vsel %vm4894, %v4895, %v4893
  %v4897 = vclz %v4896
  %v4898 = vsub.s32 %v4897, 2
  %vm4899 = vcmp.gt.s32.totalorder 0, %v4898
  %v4900 = vsel %vm4899, 0, %v4898
  %v4901 = vsub.s32 32, %v4900
  %v4902 = vshll.u32 %v4893, %v4900
  %v4903 = vshrl.u32 %v4885, %v4901
  %v4904 = vor.u32 %v4902, %v4903
  %v4905 = vsub.s32 4294967266, %v4900
  %v4906 = vadd.s32 %v4905, 127
  %v4907 = vshll.u32 %v4906, 23
  %v4908 = vor.u32 4788187, %v4907
  %v4909 = vand.u32 2147483647, %v4908
  %v4911 = vcvt.s32.f32 %v4904
  %v4912 = vmul.f32 %v4911, %v4909
  %v4913 = vxor.u32 %v4912, 2147483648
  %v4914 = vsel %vm4793, %v4913, %v4912
  %v4915 = vsub.s32 4, %v4891
  %v4916 = vsel %vm4793, %v4915, %v4891
  %v4917 = vsel %vm4792, %v4790, %v4914
  %v4918 = vsel %vm4792, 0, %v4916
  %v4919 = vmul.f32 %v4917, %v4917
  %v4920 = vmul.f32 %v4919, -0.001358992
  %v4921 = vadd.f32 %v4920, 0.041655596
  %v4922 = vmul.f32 %v4919, %v4921
  %v4923 = vadd.f32 %v4922, -0.4999988
  %v4924 = vmul.f32 %v4919, %v4923
  %v4925 = vadd.f32 1.0, %v4924
  %v4926 = vmul.f32 %v4917, %v4917
  %v4927 = vmul.f32 %v4926, -0.00019511016
  %v4928 = vadd.f32 %v4927, 0.008332121
  %v4929 = vmul.f32 %v4926, %v4928
  %v4930 = vadd.f32 %v4929, -0.16666654
  %v4931 = vmul.f32 %v4926, %v4930
  %v4932 = vadd.f32 %v4931, 1.0
  %v4933 = vmul.f32 %v4932, %v4917
  %vm4934 = vweird.f32 %v4790
  %v4935 = vadd.s32 %v4918, 3
  %v4936 = vand.u32 %v4935, 3
  %vm4937 = vcmp.lt.s32.totalorder %v4936, 2
  %vm4938 = vcmp.eq.s32.totalorder %v4936, 0
  %v4939 = vxor.u32 %v4933, 2147483648
  %v4940 = vsel %vm4938, %v4925, %v4939
  %vm4941 = vcmp.eq.s32.totalorder %v4936, 2
  %v4942 = vxor.u32 %v4925, 2147483648
  %v4943 = vsel %vm4941, %v4942, %v4933
  %v4944 = vsel %vm4937, %v4940, %v4943
  %v4945 = vsel %vm4934, nan, %v4944
  %v4946 = vadd.f32 %v4780, %v4945
  %4947 = vset.pattern.permute.xlu0 22
  %4948 = vperm.xlu0 %4947, %v1288
  %v4949 = vpop.permute.xlu0 %4948
  %v4951 = vmul.f32 %v4949, %v1295
  %4952 = vset.pattern.permute.xlu0 22
  %4953 = vperm.xlu0 %4952, %v1298
  %v4954 = vpop.permute.xlu0 %4953
  %v4956 = vadd.f32 %v4951, %v4954
  %v4957 = vand.u32 2147483647, %v4956
  %vm4958 = vcmp.le.f32.partialorder %v4957, 0.7853982
  %vm4959 = vcmp.lt.s32.totalorder %v4956, 0
  %v4960 = vand.u32 %v4956, 2139095040
  %v4961 = vshrl.u32 %v4960, 23
  %v4962 = vsub.s32 %v4961, 127
  %v4963 = vand.u32 2147483647, %v4956
  %v4964 = vand.u32 %v4963, 8388607
  %v4965 = vor.u32 %v4964, 8388608
  %v4966 = vsub.s32 0, %v4965
  %v4967 = vadd.s32 %v4962, 1
  %vm4968 = vcmp.gt.s32.totalorder %v4967, 0
  %v4969 = vsel %vm4968, %v4967, 0
  %v4970 = vshrl.u32 %v4969, 5
  %v4971 = vand.u32 %v4969, 31
  %v4972 = vsub.s32 32, %v4971
  %v4973 = vshrl.u32 683565275, %v4972
  %v4974 = vshll.u32 683565275, %v4971
  %v4975 = vshrl.u32 2475754826, %v4972
  %v4976 = vor.u32 %v4974, %v4975
  %v4977 = vshll.u32 2475754826, %v4971
  %v4978 = vshrl.u32 2131351028, %v4972
  %v4979 = vor.u32 %v4977, %v4978
  %v4980 = vshll.u32 2131351028, %v4971
  %v4981 = vshrl.u32 2102212464, %v4972
  %v4982 = vor.u32 %v4980, %v4981
  %v4983 = vshll.u32 2102212464, %v4971
  %v4984 = vshrl.u32 920167782, %v4972
  %v4985 = vor.u32 %v4983, %v4984
  %v4986 = vshll.u32 920167782, %v4971
  %v4987 = vshrl.u32 1326507024, %v4972
  %v4988 = vor.u32 %v4986, %v4987
  %vm4989 = vcmp.lt.s32.totalorder %v4970, 1
  %vm4990 = vcmp.lt.s32.totalorder %v4970, 2
  %vm4991 = vcmp.lt.s32.totalorder %v4970, 3
  %vm4992 = vcmp.lt.s32.totalorder %v4970, 4
  %v4993 = vsel %vm4989, %v4973, %v4976
  %v4994 = vsel %vm4992, %v4982, 2102212464
  %v4995 = vsel %vm4991, %v4979, %v4994
  %v4996 = vsel %vm4990, %v4993, %v4995
  %v4997 = vsel %vm4989, %v4976, %v4979
  %v4998 = vsel %vm4992, %v4985, 920167782
  %v4999 = vsel %vm4991, %v4982, %v4998
  %v5000 = vsel %vm4990, %v4997, %v4999
  %v5001 = vsel %vm4989, %v4979, %v4982
  %v5002 = vsel %vm4992, %v4988, 1326507024
  %v5003 = vsel %vm4991, %v4985, %v5002
  %v5004 = vsel %vm4990, %v5001, %v5003
  %v5005 = vshll.u32 %v4965, 8
  %v5006 = vand.u32 %v5005, 65535
  %v5007 = vshrl.u32 %v5005, 16
  %v5008 = vand.u32 %v5004, 65535
  %v5009 = vshrl.u32 %v5004, 16
  %v5010 = vmul.u32 %v5006, %v5008
  %v5011 = vmul.u32 %v5006, %v5009
  %v5012 = vmul.u32 %v5007, %v5008
  %v5013 = vmul.u32 %v5007, %v5009
  %v5014 = vshll.u32 %v5011, 16
  %v5015 = vshrl.u32 %v5011, 16
  %v5016 = vshll.u32 %v5012, 16
  %v5017 = vshrl.u32 %v5012, 16
  %vm5018 = vc.u32 %v5010, %v5014
  %v5019 = vsel %vm5018, 1, 0
  %v5020 = vadd.s32 %v5010, %v5014
  %v5021 = vadd.s32 %v5013, %v5019
  %vm5022 = vc.u32 %v5020, %v5016
  %v5023 = vsel %vm5022, 1, 0
  %v5024 = vadd.s32 %v5020, %v5016
  %v5025 = vadd.s32 %v5021, %v5023
  %v5026 = vadd.s32 %v5025, %v5015
  %v5027 = vadd.s32 %v5026, %v5017
  %v5028 = vand.u32 %v5005, 65535
  %v5029 = vshrl.u32 %v5005, 16
  %v5030 = vand.u32 %v5000, 65535
  %v5031 = vshrl.u32 %v5000, 16
  %v5032 = vmul.u32 %v5028, %v5030
  %v5033 = vmul.u32 %v5028, %v5031
  %v5034 = vmul.u32 %v5029, %v5030
  %v5035 = vmul.u32 %v5029, %v5031
  %v5036 = vshll.u32 %v5033, 16
  %v5037 = vshrl.u32 %v5033, 16
  %v5038 = vshll.u32 %v5034, 16
  %v5039 = vshrl.u32 %v5034, 16
  %vm5040 = vc.u32 %v5032, %v5036
  %v5041 = vsel %vm5040, 1, 0
  %v5042 = vadd.s32 %v5032, %v5036
  %v5043 = vadd.s32 %v5035, %v5041
  %vm5044 = vc.u32 %v5042, %v5038
  %v5045 = vsel %vm5044, 1, 0
  %v5046 = vadd.s32 %v5042, %v5038
  %v5047 = vadd.s32 %v5043, %v5045
  %v5048 = vadd.s32 %v5047, %v5037
  %v5049 = vadd.s32 %v5048, %v5039
  %v5050 = vmul.u32 %v5005, %v4996
  %v5051 = vadd.s32 %v5027, %v5046
  %vm5052 = vc.u32 %v5027, %v5046
  %v5053 = vadd.s32 %v5049, 1
  %v5054 = vsel %vm5052, %v5053, %v5049
  %v5055 = vadd.s32 %v5050, %v5054
  %v5056 = vadd.s32 %v5055, 536870912
  %v5057 = vshrl.u32 %v5056, 30
  %v5058 = vshll.u32 %v5057, 30
  %v5059 = vsub.s32 %v5055, %v5058
  %vm5060 = vcmp.lt.s32.totalorder %v5059, 0
  %v5061 = vsub.s32 0, %v5059
  %v5062 = vsel %vm5060, %v5061, %v5059
  %v5063 = vclz %v5062
  %v5064 = vsub.s32 %v5063, 2
  %vm5065 = vcmp.gt.s32.totalorder 0, %v5064
  %v5066 = vsel %vm5065, 0, %v5064
  %v5067 = vsub.s32 32, %v5066
  %v5068 = vshll.u32 %v5059, %v5066
  %v5069 = vshrl.u32 %v5051, %v5067
  %v5070 = vor.u32 %v5068, %v5069
  %v5071 = vsub.s32 4294967266, %v5066
  %v5072 = vadd.s32 %v5071, 127
  %v5073 = vshll.u32 %v5072, 23
  %v5074 = vor.u32 4788187, %v5073
  %v5075 = vand.u32 2147483647, %v5074
  %v5077 = vcvt.s32.f32 %v5070
  %v5078 = vmul.f32 %v5077, %v5075
  %v5079 = vxor.u32 %v5078, 2147483648
  %v5080 = vsel %vm4959, %v5079, %v5078
  %v5081 = vsub.s32 4, %v5057
  %v5082 = vsel %vm4959, %v5081, %v5057
  %v5083 = vsel %vm4958, %v4956, %v5080
  %v5084 = vsel %vm4958, 0, %v5082
  %v5085 = vmul.f32 %v5083, %v5083
  %v5086 = vmul.f32 %v5085, -0.001358992
  %v5087 = vadd.f32 %v5086, 0.041655596
  %v5088 = vmul.f32 %v5085, %v5087
  %v5089 = vadd.f32 %v5088, -0.4999988
  %v5090 = vmul.f32 %v5085, %v5089
  %v5091 = vadd.f32 1.0, %v5090
  %v5092 = vmul.f32 %v5083, %v5083
  %v5093 = vmul.f32 %v5092, -0.00019511016
  %v5094 = vadd.f32 %v5093, 0.008332121
  %v5095 = vmul.f32 %v5092, %v5094
  %v5096 = vadd.f32 %v5095, -0.16666654
  %v5097 = vmul.f32 %v5092, %v5096
  %v5098 = vadd.f32 %v5097, 1.0
  %v5099 = vmul.f32 %v5098, %v5083
  %vm5100 = vweird.f32 %v4956
  %v5101 = vadd.s32 %v5084, 3
  %v5102 = vand.u32 %v5101, 3
  %vm5103 = vcmp.lt.s32.totalorder %v5102, 2
  %vm5104 = vcmp.eq.s32.totalorder %v5102, 0
  %v5105 = vxor.u32 %v5099, 2147483648
  %v5106 = vsel %vm5104, %v5091, %v5105
  %vm5107 = vcmp.eq.s32.totalorder %v5102, 2
  %v5108 = vxor.u32 %v5091, 2147483648
  %v5109 = vsel %vm5107, %v5108, %v5099
  %v5110 = vsel %vm5103, %v5106, %v5109
  %v5111 = vsel %vm5100, nan, %v5110
  %v5112 = vadd.f32 %v4946, %v5111
  %5113 = vset.pattern.permute.xlu0 23
  %5114 = vperm.xlu0 %5113, %v1288
  %v5115 = vpop.permute.xlu0 %5114
  %v5117 = vmul.f32 %v5115, %v1295
  %5118 = vset.pattern.permute.xlu0 23
  %5119 = vperm.xlu0 %5118, %v1298
  %v5120 = vpop.permute.xlu0 %5119
  %v5122 = vadd.f32 %v5117, %v5120
  %v5123 = vand.u32 2147483647, %v5122
  %vm5124 = vcmp.le.f32.partialorder %v5123, 0.7853982
  %vm5125 = vcmp.lt.s32.totalorder %v5122, 0
  %v5126 = vand.u32 %v5122, 2139095040
  %v5127 = vshrl.u32 %v5126, 23
  %v5128 = vsub.s32 %v5127, 127
  %v5129 = vand.u32 2147483647, %v5122
  %v5130 = vand.u32 %v5129, 8388607
  %v5131 = vor.u32 %v5130, 8388608
  %v5132 = vsub.s32 0, %v5131
  %v5133 = vadd.s32 %v5128, 1
  %vm5134 = vcmp.gt.s32.totalorder %v5133, 0
  %v5135 = vsel %vm5134, %v5133, 0
  %v5136 = vshrl.u32 %v5135, 5
  %v5137 = vand.u32 %v5135, 31
  %v5138 = vsub.s32 32, %v5137
  %v5139 = vshrl.u32 683565275, %v5138
  %v5140 = vshll.u32 683565275, %v5137
  %v5141 = vshrl.u32 2475754826, %v5138
  %v5142 = vor.u32 %v5140, %v5141
  %v5143 = vshll.u32 2475754826, %v5137
  %v5144 = vshrl.u32 2131351028, %v5138
  %v5145 = vor.u32 %v5143, %v5144
  %v5146 = vshll.u32 2131351028, %v5137
  %v5147 = vshrl.u32 2102212464, %v5138
  %v5148 = vor.u32 %v5146, %v5147
  %v5149 = vshll.u32 2102212464, %v5137
  %v5150 = vshrl.u32 920167782, %v5138
  %v5151 = vor.u32 %v5149, %v5150
  %v5152 = vshll.u32 920167782, %v5137
  %v5153 = vshrl.u32 1326507024, %v5138
  %v5154 = vor.u32 %v5152, %v5153
  %vm5155 = vcmp.lt.s32.totalorder %v5136, 1
  %vm5156 = vcmp.lt.s32.totalorder %v5136, 2
  %vm5157 = vcmp.lt.s32.totalorder %v5136, 3
  %vm5158 = vcmp.lt.s32.totalorder %v5136, 4
  %v5159 = vsel %vm5155, %v5139, %v5142
  %v5160 = vsel %vm5158, %v5148, 2102212464
  %v5161 = vsel %vm5157, %v5145, %v5160
  %v5162 = vsel %vm5156, %v5159, %v5161
  %v5163 = vsel %vm5155, %v5142, %v5145
  %v5164 = vsel %vm5158, %v5151, 920167782
  %v5165 = vsel %vm5157, %v5148, %v5164
  %v5166 = vsel %vm5156, %v5163, %v5165
  %v5167 = vsel %vm5155, %v5145, %v5148
  %v5168 = vsel %vm5158, %v5154, 1326507024
  %v5169 = vsel %vm5157, %v5151, %v5168
  %v5170 = vsel %vm5156, %v5167, %v5169
  %v5171 = vshll.u32 %v5131, 8
  %v5172 = vand.u32 %v5171, 65535
  %v5173 = vshrl.u32 %v5171, 16
  %v5174 = vand.u32 %v5170, 65535
  %v5175 = vshrl.u32 %v5170, 16
  %v5176 = vmul.u32 %v5172, %v5174
  %v5177 = vmul.u32 %v5172, %v5175
  %v5178 = vmul.u32 %v5173, %v5174
  %v5179 = vmul.u32 %v5173, %v5175
  %v5180 = vshll.u32 %v5177, 16
  %v5181 = vshrl.u32 %v5177, 16
  %v5182 = vshll.u32 %v5178, 16
  %v5183 = vshrl.u32 %v5178, 16
  %vm5184 = vc.u32 %v5176, %v5180
  %v5185 = vsel %vm5184, 1, 0
  %v5186 = vadd.s32 %v5176, %v5180
  %v5187 = vadd.s32 %v5179, %v5185
  %vm5188 = vc.u32 %v5186, %v5182
  %v5189 = vsel %vm5188, 1, 0
  %v5190 = vadd.s32 %v5186, %v5182
  %v5191 = vadd.s32 %v5187, %v5189
  %v5192 = vadd.s32 %v5191, %v5181
  %v5193 = vadd.s32 %v5192, %v5183
  %v5194 = vand.u32 %v5171, 65535
  %v5195 = vshrl.u32 %v5171, 16
  %v5196 = vand.u32 %v5166, 65535
  %v5197 = vshrl.u32 %v5166, 16
  %v5198 = vmul.u32 %v5194, %v5196
  %v5199 = vmul.u32 %v5194, %v5197
  %v5200 = vmul.u32 %v5195, %v5196
  %v5201 = vmul.u32 %v5195, %v5197
  %v5202 = vshll.u32 %v5199, 16
  %v5203 = vshrl.u32 %v5199, 16
  %v5204 = vshll.u32 %v5200, 16
  %v5205 = vshrl.u32 %v5200, 16
  %vm5206 = vc.u32 %v5198, %v5202
  %v5207 = vsel %vm5206, 1, 0
  %v5208 = vadd.s32 %v5198, %v5202
  %v5209 = vadd.s32 %v5201, %v5207
  %vm5210 = vc.u32 %v5208, %v5204
  %v5211 = vsel %vm5210, 1, 0
  %v5212 = vadd.s32 %v5208, %v5204
  %v5213 = vadd.s32 %v5209, %v5211
  %v5214 = vadd.s32 %v5213, %v5203
  %v5215 = vadd.s32 %v5214, %v5205
  %v5216 = vmul.u32 %v5171, %v5162
  %v5217 = vadd.s32 %v5193, %v5212
  %vm5218 = vc.u32 %v5193, %v5212
  %v5219 = vadd.s32 %v5215, 1
  %v5220 = vsel %vm5218, %v5219, %v5215
  %v5221 = vadd.s32 %v5216, %v5220
  %v5222 = vadd.s32 %v5221, 536870912
  %v5223 = vshrl.u32 %v5222, 30
  %v5224 = vshll.u32 %v5223, 30
  %v5225 = vsub.s32 %v5221, %v5224
  %vm5226 = vcmp.lt.s32.totalorder %v5225, 0
  %v5227 = vsub.s32 0, %v5225
  %v5228 = vsel %vm5226, %v5227, %v5225
  %v5229 = vclz %v5228
  %v5230 = vsub.s32 %v5229, 2
  %vm5231 = vcmp.gt.s32.totalorder 0, %v5230
  %v5232 = vsel %vm5231, 0, %v5230
  %v5233 = vsub.s32 32, %v5232
  %v5234 = vshll.u32 %v5225, %v5232
  %v5235 = vshrl.u32 %v5217, %v5233
  %v5236 = vor.u32 %v5234, %v5235
  %v5237 = vsub.s32 4294967266, %v5232
  %v5238 = vadd.s32 %v5237, 127
  %v5239 = vshll.u32 %v5238, 23
  %v5240 = vor.u32 4788187, %v5239
  %v5241 = vand.u32 2147483647, %v5240
  %v5243 = vcvt.s32.f32 %v5236
  %v5244 = vmul.f32 %v5243, %v5241
  %v5245 = vxor.u32 %v5244, 2147483648
  %v5246 = vsel %vm5125, %v5245, %v5244
  %v5247 = vsub.s32 4, %v5223
  %v5248 = vsel %vm5125, %v5247, %v5223
  %v5249 = vsel %vm5124, %v5122, %v5246
  %v5250 = vsel %vm5124, 0, %v5248
  %v5251 = vmul.f32 %v5249, %v5249
  %v5252 = vmul.f32 %v5251, -0.001358992
  %v5253 = vadd.f32 %v5252, 0.041655596
  %v5254 = vmul.f32 %v5251, %v5253
  %v5255 = vadd.f32 %v5254, -0.4999988
  %v5256 = vmul.f32 %v5251, %v5255
  %v5257 = vadd.f32 1.0, %v5256
  %v5258 = vmul.f32 %v5249, %v5249
  %v5259 = vmul.f32 %v5258, -0.00019511016
  %v5260 = vadd.f32 %v5259, 0.008332121
  %v5261 = vmul.f32 %v5258, %v5260
  %v5262 = vadd.f32 %v5261, -0.16666654
  %v5263 = vmul.f32 %v5258, %v5262
  %v5264 = vadd.f32 %v5263, 1.0
  %v5265 = vmul.f32 %v5264, %v5249
  %vm5266 = vweird.f32 %v5122
  %v5267 = vadd.s32 %v5250, 3
  %v5268 = vand.u32 %v5267, 3
  %vm5269 = vcmp.lt.s32.totalorder %v5268, 2
  %vm5270 = vcmp.eq.s32.totalorder %v5268, 0
  %v5271 = vxor.u32 %v5265, 2147483648
  %v5272 = vsel %vm5270, %v5257, %v5271
  %vm5273 = vcmp.eq.s32.totalorder %v5268, 2
  %v5274 = vxor.u32 %v5257, 2147483648
  %v5275 = vsel %vm5273, %v5274, %v5265
  %v5276 = vsel %vm5269, %v5272, %v5275
  %v5277 = vsel %vm5266, nan, %v5276
  %v5278 = vadd.f32 %v5112, %v5277
  %5279 = vset.pattern.permute.xlu0 24
  %5280 = vperm.xlu0 %5279, %v1288
  %v5281 = vpop.permute.xlu0 %5280
  %v5283 = vmul.f32 %v5281, %v1295
  %5284 = vset.pattern.permute.xlu0 24
  %5285 = vperm.xlu0 %5284, %v1298
  %v5286 = vpop.permute.xlu0 %5285
  %v5288 = vadd.f32 %v5283, %v5286
  %v5289 = vand.u32 2147483647, %v5288
  %vm5290 = vcmp.le.f32.partialorder %v5289, 0.7853982
  %vm5291 = vcmp.lt.s32.totalorder %v5288, 0
  %v5292 = vand.u32 %v5288, 2139095040
  %v5293 = vshrl.u32 %v5292, 23
  %v5294 = vsub.s32 %v5293, 127
  %v5295 = vand.u32 2147483647, %v5288
  %v5296 = vand.u32 %v5295, 8388607
  %v5297 = vor.u32 %v5296, 8388608
  %v5298 = vsub.s32 0, %v5297
  %v5299 = vadd.s32 %v5294, 1
  %vm5300 = vcmp.gt.s32.totalorder %v5299, 0
  %v5301 = vsel %vm5300, %v5299, 0
  %v5302 = vshrl.u32 %v5301, 5
  %v5303 = vand.u32 %v5301, 31
  %v5304 = vsub.s32 32, %v5303
  %v5305 = vshrl.u32 683565275, %v5304
  %v5306 = vshll.u32 683565275, %v5303
  %v5307 = vshrl.u32 2475754826, %v5304
  %v5308 = vor.u32 %v5306, %v5307
  %v5309 = vshll.u32 2475754826, %v5303
  %v5310 = vshrl.u32 2131351028, %v5304
  %v5311 = vor.u32 %v5309, %v5310
  %v5312 = vshll.u32 2131351028, %v5303
  %v5313 = vshrl.u32 2102212464, %v5304
  %v5314 = vor.u32 %v5312, %v5313
  %v5315 = vshll.u32 2102212464, %v5303
  %v5316 = vshrl.u32 920167782, %v5304
  %v5317 = vor.u32 %v5315, %v5316
  %v5318 = vshll.u32 920167782, %v5303
  %v5319 = vshrl.u32 1326507024, %v5304
  %v5320 = vor.u32 %v5318, %v5319
  %vm5321 = vcmp.lt.s32.totalorder %v5302, 1
  %vm5322 = vcmp.lt.s32.totalorder %v5302, 2
  %vm5323 = vcmp.lt.s32.totalorder %v5302, 3
  %vm5324 = vcmp.lt.s32.totalorder %v5302, 4
  %v5325 = vsel %vm5321, %v5305, %v5308
  %v5326 = vsel %vm5324, %v5314, 2102212464
  %v5327 = vsel %vm5323, %v5311, %v5326
  %v5328 = vsel %vm5322, %v5325, %v5327
  %v5329 = vsel %vm5321, %v5308, %v5311
  %v5330 = vsel %vm5324, %v5317, 920167782
  %v5331 = vsel %vm5323, %v5314, %v5330
  %v5332 = vsel %vm5322, %v5329, %v5331
  %v5333 = vsel %vm5321, %v5311, %v5314
  %v5334 = vsel %vm5324, %v5320, 1326507024
  %v5335 = vsel %vm5323, %v5317, %v5334
  %v5336 = vsel %vm5322, %v5333, %v5335
  %v5337 = vshll.u32 %v5297, 8
  %v5338 = vand.u32 %v5337, 65535
  %v5339 = vshrl.u32 %v5337, 16
  %v5340 = vand.u32 %v5336, 65535
  %v5341 = vshrl.u32 %v5336, 16
  %v5342 = vmul.u32 %v5338, %v5340
  %v5343 = vmul.u32 %v5338, %v5341
  %v5344 = vmul.u32 %v5339, %v5340
  %v5345 = vmul.u32 %v5339, %v5341
  %v5346 = vshll.u32 %v5343, 16
  %v5347 = vshrl.u32 %v5343, 16
  %v5348 = vshll.u32 %v5344, 16
  %v5349 = vshrl.u32 %v5344, 16
  %vm5350 = vc.u32 %v5342, %v5346
  %v5351 = vsel %vm5350, 1, 0
  %v5352 = vadd.s32 %v5342, %v5346
  %v5353 = vadd.s32 %v5345, %v5351
  %vm5354 = vc.u32 %v5352, %v5348
  %v5355 = vsel %vm5354, 1, 0
  %v5356 = vadd.s32 %v5352, %v5348
  %v5357 = vadd.s32 %v5353, %v5355
  %v5358 = vadd.s32 %v5357, %v5347
  %v5359 = vadd.s32 %v5358, %v5349
  %v5360 = vand.u32 %v5337, 65535
  %v5361 = vshrl.u32 %v5337, 16
  %v5362 = vand.u32 %v5332, 65535
  %v5363 = vshrl.u32 %v5332, 16
  %v5364 = vmul.u32 %v5360, %v5362
  %v5365 = vmul.u32 %v5360, %v5363
  %v5366 = vmul.u32 %v5361, %v5362
  %v5367 = vmul.u32 %v5361, %v5363
  %v5368 = vshll.u32 %v5365, 16
  %v5369 = vshrl.u32 %v5365, 16
  %v5370 = vshll.u32 %v5366, 16
  %v5371 = vshrl.u32 %v5366, 16
  %vm5372 = vc.u32 %v5364, %v5368
  %v5373 = vsel %vm5372, 1, 0
  %v5374 = vadd.s32 %v5364, %v5368
  %v5375 = vadd.s32 %v5367, %v5373
  %vm5376 = vc.u32 %v5374, %v5370
  %v5377 = vsel %vm5376, 1, 0
  %v5378 = vadd.s32 %v5374, %v5370
  %v5379 = vadd.s32 %v5375, %v5377
  %v5380 = vadd.s32 %v5379, %v5369
  %v5381 = vadd.s32 %v5380, %v5371
  %v5382 = vmul.u32 %v5337, %v5328
  %v5383 = vadd.s32 %v5359, %v5378
  %vm5384 = vc.u32 %v5359, %v5378
  %v5385 = vadd.s32 %v5381, 1
  %v5386 = vsel %vm5384, %v5385, %v5381
  %v5387 = vadd.s32 %v5382, %v5386
  %v5388 = vadd.s32 %v5387, 536870912
  %v5389 = vshrl.u32 %v5388, 30
  %v5390 = vshll.u32 %v5389, 30
  %v5391 = vsub.s32 %v5387, %v5390
  %vm5392 = vcmp.lt.s32.totalorder %v5391, 0
  %v5393 = vsub.s32 0, %v5391
  %v5394 = vsel %vm5392, %v5393, %v5391
  %v5395 = vclz %v5394
  %v5396 = vsub.s32 %v5395, 2
  %vm5397 = vcmp.gt.s32.totalorder 0, %v5396
  %v5398 = vsel %vm5397, 0, %v5396
  %v5399 = vsub.s32 32, %v5398
  %v5400 = vshll.u32 %v5391, %v5398
  %v5401 = vshrl.u32 %v5383, %v5399
  %v5402 = vor.u32 %v5400, %v5401
  %v5403 = vsub.s32 4294967266, %v5398
  %v5404 = vadd.s32 %v5403, 127
  %v5405 = vshll.u32 %v5404, 23
  %v5406 = vor.u32 4788187, %v5405
  %v5407 = vand.u32 2147483647, %v5406
  %v5409 = vcvt.s32.f32 %v5402
  %v5410 = vmul.f32 %v5409, %v5407
  %v5411 = vxor.u32 %v5410, 2147483648
  %v5412 = vsel %vm5291, %v5411, %v5410
  %v5413 = vsub.s32 4, %v5389
  %v5414 = vsel %vm5291, %v5413, %v5389
  %v5415 = vsel %vm5290, %v5288, %v5412
  %v5416 = vsel %vm5290, 0, %v5414
  %v5417 = vmul.f32 %v5415, %v5415
  %v5418 = vmul.f32 %v5417, -0.001358992
  %v5419 = vadd.f32 %v5418, 0.041655596
  %v5420 = vmul.f32 %v5417, %v5419
  %v5421 = vadd.f32 %v5420, -0.4999988
  %v5422 = vmul.f32 %v5417, %v5421
  %v5423 = vadd.f32 1.0, %v5422
  %v5424 = vmul.f32 %v5415, %v5415
  %v5425 = vmul.f32 %v5424, -0.00019511016
  %v5426 = vadd.f32 %v5425, 0.008332121
  %v5427 = vmul.f32 %v5424, %v5426
  %v5428 = vadd.f32 %v5427, -0.16666654
  %v5429 = vmul.f32 %v5424, %v5428
  %v5430 = vadd.f32 %v5429, 1.0
  %v5431 = vmul.f32 %v5430, %v5415
  %vm5432 = vweird.f32 %v5288
  %v5433 = vadd.s32 %v5416, 3
  %v5434 = vand.u32 %v5433, 3
  %vm5435 = vcmp.lt.s32.totalorder %v5434, 2
  %vm5436 = vcmp.eq.s32.totalorder %v5434, 0
  %v5437 = vxor.u32 %v5431, 2147483648
  %v5438 = vsel %vm5436, %v5423, %v5437
  %vm5439 = vcmp.eq.s32.totalorder %v5434, 2
  %v5440 = vxor.u32 %v5423, 2147483648
  %v5441 = vsel %vm5439, %v5440, %v5431
  %v5442 = vsel %vm5435, %v5438, %v5441
  %v5443 = vsel %vm5432, nan, %v5442
  %v5444 = vadd.f32 %v5278, %v5443
  %5445 = vset.pattern.permute.xlu0 25
  %5446 = vperm.xlu0 %5445, %v1288
  %v5447 = vpop.permute.xlu0 %5446
  %v5449 = vmul.f32 %v5447, %v1295
  %5450 = vset.pattern.permute.xlu0 25
  %5451 = vperm.xlu0 %5450, %v1298
  %v5452 = vpop.permute.xlu0 %5451
  %v5454 = vadd.f32 %v5449, %v5452
  %v5455 = vand.u32 2147483647, %v5454
  %vm5456 = vcmp.le.f32.partialorder %v5455, 0.7853982
  %vm5457 = vcmp.lt.s32.totalorder %v5454, 0
  %v5458 = vand.u32 %v5454, 2139095040
  %v5459 = vshrl.u32 %v5458, 23
  %v5460 = vsub.s32 %v5459, 127
  %v5461 = vand.u32 2147483647, %v5454
  %v5462 = vand.u32 %v5461, 8388607
  %v5463 = vor.u32 %v5462, 8388608
  %v5464 = vsub.s32 0, %v5463
  %v5465 = vadd.s32 %v5460, 1
  %vm5466 = vcmp.gt.s32.totalorder %v5465, 0
  %v5467 = vsel %vm5466, %v5465, 0
  %v5468 = vshrl.u32 %v5467, 5
  %v5469 = vand.u32 %v5467, 31
  %v5470 = vsub.s32 32, %v5469
  %v5471 = vshrl.u32 683565275, %v5470
  %v5472 = vshll.u32 683565275, %v5469
  %v5473 = vshrl.u32 2475754826, %v5470
  %v5474 = vor.u32 %v5472, %v5473
  %v5475 = vshll.u32 2475754826, %v5469
  %v5476 = vshrl.u32 2131351028, %v5470
  %v5477 = vor.u32 %v5475, %v5476
  %v5478 = vshll.u32 2131351028, %v5469
  %v5479 = vshrl.u32 2102212464, %v5470
  %v5480 = vor.u32 %v5478, %v5479
  %v5481 = vshll.u32 2102212464, %v5469
  %v5482 = vshrl.u32 920167782, %v5470
  %v5483 = vor.u32 %v5481, %v5482
  %v5484 = vshll.u32 920167782, %v5469
  %v5485 = vshrl.u32 1326507024, %v5470
  %v5486 = vor.u32 %v5484, %v5485
  %vm5487 = vcmp.lt.s32.totalorder %v5468, 1
  %vm5488 = vcmp.lt.s32.totalorder %v5468, 2
  %vm5489 = vcmp.lt.s32.totalorder %v5468, 3
  %vm5490 = vcmp.lt.s32.totalorder %v5468, 4
  %v5491 = vsel %vm5487, %v5471, %v5474
  %v5492 = vsel %vm5490, %v5480, 2102212464
  %v5493 = vsel %vm5489, %v5477, %v5492
  %v5494 = vsel %vm5488, %v5491, %v5493
  %v5495 = vsel %vm5487, %v5474, %v5477
  %v5496 = vsel %vm5490, %v5483, 920167782
  %v5497 = vsel %vm5489, %v5480, %v5496
  %v5498 = vsel %vm5488, %v5495, %v5497
  %v5499 = vsel %vm5487, %v5477, %v5480
  %v5500 = vsel %vm5490, %v5486, 1326507024
  %v5501 = vsel %vm5489, %v5483, %v5500
  %v5502 = vsel %vm5488, %v5499, %v5501
  %v5503 = vshll.u32 %v5463, 8
  %v5504 = vand.u32 %v5503, 65535
  %v5505 = vshrl.u32 %v5503, 16
  %v5506 = vand.u32 %v5502, 65535
  %v5507 = vshrl.u32 %v5502, 16
  %v5508 = vmul.u32 %v5504, %v5506
  %v5509 = vmul.u32 %v5504, %v5507
  %v5510 = vmul.u32 %v5505, %v5506
  %v5511 = vmul.u32 %v5505, %v5507
  %v5512 = vshll.u32 %v5509, 16
  %v5513 = vshrl.u32 %v5509, 16
  %v5514 = vshll.u32 %v5510, 16
  %v5515 = vshrl.u32 %v5510, 16
  %vm5516 = vc.u32 %v5508, %v5512
  %v5517 = vsel %vm5516, 1, 0
  %v5518 = vadd.s32 %v5508, %v5512
  %v5519 = vadd.s32 %v5511, %v5517
  %vm5520 = vc.u32 %v5518, %v5514
  %v5521 = vsel %vm5520, 1, 0
  %v5522 = vadd.s32 %v5518, %v5514
  %v5523 = vadd.s32 %v5519, %v5521
  %v5524 = vadd.s32 %v5523, %v5513
  %v5525 = vadd.s32 %v5524, %v5515
  %v5526 = vand.u32 %v5503, 65535
  %v5527 = vshrl.u32 %v5503, 16
  %v5528 = vand.u32 %v5498, 65535
  %v5529 = vshrl.u32 %v5498, 16
  %v5530 = vmul.u32 %v5526, %v5528
  %v5531 = vmul.u32 %v5526, %v5529
  %v5532 = vmul.u32 %v5527, %v5528
  %v5533 = vmul.u32 %v5527, %v5529
  %v5534 = vshll.u32 %v5531, 16
  %v5535 = vshrl.u32 %v5531, 16
  %v5536 = vshll.u32 %v5532, 16
  %v5537 = vshrl.u32 %v5532, 16
  %vm5538 = vc.u32 %v5530, %v5534
  %v5539 = vsel %vm5538, 1, 0
  %v5540 = vadd.s32 %v5530, %v5534
  %v5541 = vadd.s32 %v5533, %v5539
  %vm5542 = vc.u32 %v5540, %v5536
  %v5543 = vsel %vm5542, 1, 0
  %v5544 = vadd.s32 %v5540, %v5536
  %v5545 = vadd.s32 %v5541, %v5543
  %v5546 = vadd.s32 %v5545, %v5535
  %v5547 = vadd.s32 %v5546, %v5537
  %v5548 = vmul.u32 %v5503, %v5494
  %v5549 = vadd.s32 %v5525, %v5544
  %vm5550 = vc.u32 %v5525, %v5544
  %v5551 = vadd.s32 %v5547, 1
  %v5552 = vsel %vm5550, %v5551, %v5547
  %v5553 = vadd.s32 %v5548, %v5552
  %v5554 = vadd.s32 %v5553, 536870912
  %v5555 = vshrl.u32 %v5554, 30
  %v5556 = vshll.u32 %v5555, 30
  %v5557 = vsub.s32 %v5553, %v5556
  %vm5558 = vcmp.lt.s32.totalorder %v5557, 0
  %v5559 = vsub.s32 0, %v5557
  %v5560 = vsel %vm5558, %v5559, %v5557
  %v5561 = vclz %v5560
  %v5562 = vsub.s32 %v5561, 2
  %vm5563 = vcmp.gt.s32.totalorder 0, %v5562
  %v5564 = vsel %vm5563, 0, %v5562
  %v5565 = vsub.s32 32, %v5564
  %v5566 = vshll.u32 %v5557, %v5564
  %v5567 = vshrl.u32 %v5549, %v5565
  %v5568 = vor.u32 %v5566, %v5567
  %v5569 = vsub.s32 4294967266, %v5564
  %v5570 = vadd.s32 %v5569, 127
  %v5571 = vshll.u32 %v5570, 23
  %v5572 = vor.u32 4788187, %v5571
  %v5573 = vand.u32 2147483647, %v5572
  %v5575 = vcvt.s32.f32 %v5568
  %v5576 = vmul.f32 %v5575, %v5573
  %v5577 = vxor.u32 %v5576, 2147483648
  %v5578 = vsel %vm5457, %v5577, %v5576
  %v5579 = vsub.s32 4, %v5555
  %v5580 = vsel %vm5457, %v5579, %v5555
  %v5581 = vsel %vm5456, %v5454, %v5578
  %v5582 = vsel %vm5456, 0, %v5580
  %v5583 = vmul.f32 %v5581, %v5581
  %v5584 = vmul.f32 %v5583, -0.001358992
  %v5585 = vadd.f32 %v5584, 0.041655596
  %v5586 = vmul.f32 %v5583, %v5585
  %v5587 = vadd.f32 %v5586, -0.4999988
  %v5588 = vmul.f32 %v5583, %v5587
  %v5589 = vadd.f32 1.0, %v5588
  %v5590 = vmul.f32 %v5581, %v5581
  %v5591 = vmul.f32 %v5590, -0.00019511016
  %v5592 = vadd.f32 %v5591, 0.008332121
  %v5593 = vmul.f32 %v5590, %v5592
  %v5594 = vadd.f32 %v5593, -0.16666654
  %v5595 = vmul.f32 %v5590, %v5594
  %v5596 = vadd.f32 %v5595, 1.0
  %v5597 = vmul.f32 %v5596, %v5581
  %vm5598 = vweird.f32 %v5454
  %v5599 = vadd.s32 %v5582, 3
  %v5600 = vand.u32 %v5599, 3
  %vm5601 = vcmp.lt.s32.totalorder %v5600, 2
  %vm5602 = vcmp.eq.s32.totalorder %v5600, 0
  %v5603 = vxor.u32 %v5597, 2147483648
  %v5604 = vsel %vm5602, %v5589, %v5603
  %vm5605 = vcmp.eq.s32.totalorder %v5600, 2
  %v5606 = vxor.u32 %v5589, 2147483648
  %v5607 = vsel %vm5605, %v5606, %v5597
  %v5608 = vsel %vm5601, %v5604, %v5607
  %v5609 = vsel %vm5598, nan, %v5608
  %v5610 = vadd.f32 %v5444, %v5609
  %5611 = vset.pattern.permute.xlu0 26
  %5612 = vperm.xlu0 %5611, %v1288
  %v5613 = vpop.permute.xlu0 %5612
  %v5615 = vmul.f32 %v5613, %v1295
  %5616 = vset.pattern.permute.xlu0 26
  %5617 = vperm.xlu0 %5616, %v1298
  %v5618 = vpop.permute.xlu0 %5617
  %v5620 = vadd.f32 %v5615, %v5618
  %v5621 = vand.u32 2147483647, %v5620
  %vm5622 = vcmp.le.f32.partialorder %v5621, 0.7853982
  %vm5623 = vcmp.lt.s32.totalorder %v5620, 0
  %v5624 = vand.u32 %v5620, 2139095040
  %v5625 = vshrl.u32 %v5624, 23
  %v5626 = vsub.s32 %v5625, 127
  %v5627 = vand.u32 2147483647, %v5620
  %v5628 = vand.u32 %v5627, 8388607
  %v5629 = vor.u32 %v5628, 8388608
  %v5630 = vsub.s32 0, %v5629
  %v5631 = vadd.s32 %v5626, 1
  %vm5632 = vcmp.gt.s32.totalorder %v5631, 0
  %v5633 = vsel %vm5632, %v5631, 0
  %v5634 = vshrl.u32 %v5633, 5
  %v5635 = vand.u32 %v5633, 31
  %v5636 = vsub.s32 32, %v5635
  %v5637 = vshrl.u32 683565275, %v5636
  %v5638 = vshll.u32 683565275, %v5635
  %v5639 = vshrl.u32 2475754826, %v5636
  %v5640 = vor.u32 %v5638, %v5639
  %v5641 = vshll.u32 2475754826, %v5635
  %v5642 = vshrl.u32 2131351028, %v5636
  %v5643 = vor.u32 %v5641, %v5642
  %v5644 = vshll.u32 2131351028, %v5635
  %v5645 = vshrl.u32 2102212464, %v5636
  %v5646 = vor.u32 %v5644, %v5645
  %v5647 = vshll.u32 2102212464, %v5635
  %v5648 = vshrl.u32 920167782, %v5636
  %v5649 = vor.u32 %v5647, %v5648
  %v5650 = vshll.u32 920167782, %v5635
  %v5651 = vshrl.u32 1326507024, %v5636
  %v5652 = vor.u32 %v5650, %v5651
  %vm5653 = vcmp.lt.s32.totalorder %v5634, 1
  %vm5654 = vcmp.lt.s32.totalorder %v5634, 2
  %vm5655 = vcmp.lt.s32.totalorder %v5634, 3
  %vm5656 = vcmp.lt.s32.totalorder %v5634, 4
  %v5657 = vsel %vm5653, %v5637, %v5640
  %v5658 = vsel %vm5656, %v5646, 2102212464
  %v5659 = vsel %vm5655, %v5643, %v5658
  %v5660 = vsel %vm5654, %v5657, %v5659
  %v5661 = vsel %vm5653, %v5640, %v5643
  %v5662 = vsel %vm5656, %v5649, 920167782
  %v5663 = vsel %vm5655, %v5646, %v5662
  %v5664 = vsel %vm5654, %v5661, %v5663
  %v5665 = vsel %vm5653, %v5643, %v5646
  %v5666 = vsel %vm5656, %v5652, 1326507024
  %v5667 = vsel %vm5655, %v5649, %v5666
  %v5668 = vsel %vm5654, %v5665, %v5667
  %v5669 = vshll.u32 %v5629, 8
  %v5670 = vand.u32 %v5669, 65535
  %v5671 = vshrl.u32 %v5669, 16
  %v5672 = vand.u32 %v5668, 65535
  %v5673 = vshrl.u32 %v5668, 16
  %v5674 = vmul.u32 %v5670, %v5672
  %v5675 = vmul.u32 %v5670, %v5673
  %v5676 = vmul.u32 %v5671, %v5672
  %v5677 = vmul.u32 %v5671, %v5673
  %v5678 = vshll.u32 %v5675, 16
  %v5679 = vshrl.u32 %v5675, 16
  %v5680 = vshll.u32 %v5676, 16
  %v5681 = vshrl.u32 %v5676, 16
  %vm5682 = vc.u32 %v5674, %v5678
  %v5683 = vsel %vm5682, 1, 0
  %v5684 = vadd.s32 %v5674, %v5678
  %v5685 = vadd.s32 %v5677, %v5683
  %vm5686 = vc.u32 %v5684, %v5680
  %v5687 = vsel %vm5686, 1, 0
  %v5688 = vadd.s32 %v5684, %v5680
  %v5689 = vadd.s32 %v5685, %v5687
  %v5690 = vadd.s32 %v5689, %v5679
  %v5691 = vadd.s32 %v5690, %v5681
  %v5692 = vand.u32 %v5669, 65535
  %v5693 = vshrl.u32 %v5669, 16
  %v5694 = vand.u32 %v5664, 65535
  %v5695 = vshrl.u32 %v5664, 16
  %v5696 = vmul.u32 %v5692, %v5694
  %v5697 = vmul.u32 %v5692, %v5695
  %v5698 = vmul.u32 %v5693, %v5694
  %v5699 = vmul.u32 %v5693, %v5695
  %v5700 = vshll.u32 %v5697, 16
  %v5701 = vshrl.u32 %v5697, 16
  %v5702 = vshll.u32 %v5698, 16
  %v5703 = vshrl.u32 %v5698, 16
  %vm5704 = vc.u32 %v5696, %v5700
  %v5705 = vsel %vm5704, 1, 0
  %v5706 = vadd.s32 %v5696, %v5700
  %v5707 = vadd.s32 %v5699, %v5705
  %vm5708 = vc.u32 %v5706, %v5702
  %v5709 = vsel %vm5708, 1, 0
  %v5710 = vadd.s32 %v5706, %v5702
  %v5711 = vadd.s32 %v5707, %v5709
  %v5712 = vadd.s32 %v5711, %v5701
  %v5713 = vadd.s32 %v5712, %v5703
  %v5714 = vmul.u32 %v5669, %v5660
  %v5715 = vadd.s32 %v5691, %v5710
  %vm5716 = vc.u32 %v5691, %v5710
  %v5717 = vadd.s32 %v5713, 1
  %v5718 = vsel %vm5716, %v5717, %v5713
  %v5719 = vadd.s32 %v5714, %v5718
  %v5720 = vadd.s32 %v5719, 536870912
  %v5721 = vshrl.u32 %v5720, 30
  %v5722 = vshll.u32 %v5721, 30
  %v5723 = vsub.s32 %v5719, %v5722
  %vm5724 = vcmp.lt.s32.totalorder %v5723, 0
  %v5725 = vsub.s32 0, %v5723
  %v5726 = vsel %vm5724, %v5725, %v5723
  %v5727 = vclz %v5726
  %v5728 = vsub.s32 %v5727, 2
  %vm5729 = vcmp.gt.s32.totalorder 0, %v5728
  %v5730 = vsel %vm5729, 0, %v5728
  %v5731 = vsub.s32 32, %v5730
  %v5732 = vshll.u32 %v5723, %v5730
  %v5733 = vshrl.u32 %v5715, %v5731
  %v5734 = vor.u32 %v5732, %v5733
  %v5735 = vsub.s32 4294967266, %v5730
  %v5736 = vadd.s32 %v5735, 127
  %v5737 = vshll.u32 %v5736, 23
  %v5738 = vor.u32 4788187, %v5737
  %v5739 = vand.u32 2147483647, %v5738
  %v5741 = vcvt.s32.f32 %v5734
  %v5742 = vmul.f32 %v5741, %v5739
  %v5743 = vxor.u32 %v5742, 2147483648
  %v5744 = vsel %vm5623, %v5743, %v5742
  %v5745 = vsub.s32 4, %v5721
  %v5746 = vsel %vm5623, %v5745, %v5721
  %v5747 = vsel %vm5622, %v5620, %v5744
  %v5748 = vsel %vm5622, 0, %v5746
  %v5749 = vmul.f32 %v5747, %v5747
  %v5750 = vmul.f32 %v5749, -0.001358992
  %v5751 = vadd.f32 %v5750, 0.041655596
  %v5752 = vmul.f32 %v5749, %v5751
  %v5753 = vadd.f32 %v5752, -0.4999988
  %v5754 = vmul.f32 %v5749, %v5753
  %v5755 = vadd.f32 1.0, %v5754
  %v5756 = vmul.f32 %v5747, %v5747
  %v5757 = vmul.f32 %v5756, -0.00019511016
  %v5758 = vadd.f32 %v5757, 0.008332121
  %v5759 = vmul.f32 %v5756, %v5758
  %v5760 = vadd.f32 %v5759, -0.16666654
  %v5761 = vmul.f32 %v5756, %v5760
  %v5762 = vadd.f32 %v5761, 1.0
  %v5763 = vmul.f32 %v5762, %v5747
  %vm5764 = vweird.f32 %v5620
  %v5765 = vadd.s32 %v5748, 3
  %v5766 = vand.u32 %v5765, 3
  %vm5767 = vcmp.lt.s32.totalorder %v5766, 2
  %vm5768 = vcmp.eq.s32.totalorder %v5766, 0
  %v5769 = vxor.u32 %v5763, 2147483648
  %v5770 = vsel %vm5768, %v5755, %v5769
  %vm5771 = vcmp.eq.s32.totalorder %v5766, 2
  %v5772 = vxor.u32 %v5755, 2147483648
  %v5773 = vsel %vm5771, %v5772, %v5763
  %v5774 = vsel %vm5767, %v5770, %v5773
  %v5775 = vsel %vm5764, nan, %v5774
  %v5776 = vadd.f32 %v5610, %v5775
  %5777 = vset.pattern.permute.xlu0 27
  %5778 = vperm.xlu0 %5777, %v1288
  %v5779 = vpop.permute.xlu0 %5778
  %v5781 = vmul.f32 %v5779, %v1295
  %5782 = vset.pattern.permute.xlu0 27
  %5783 = vperm.xlu0 %5782, %v1298
  %v5784 = vpop.permute.xlu0 %5783
  %v5786 = vadd.f32 %v5781, %v5784
  %v5787 = vand.u32 2147483647, %v5786
  %vm5788 = vcmp.le.f32.partialorder %v5787, 0.7853982
  %vm5789 = vcmp.lt.s32.totalorder %v5786, 0
  %v5790 = vand.u32 %v5786, 2139095040
  %v5791 = vshrl.u32 %v5790, 23
  %v5792 = vsub.s32 %v5791, 127
  %v5793 = vand.u32 2147483647, %v5786
  %v5794 = vand.u32 %v5793, 8388607
  %v5795 = vor.u32 %v5794, 8388608
  %v5796 = vsub.s32 0, %v5795
  %v5797 = vadd.s32 %v5792, 1
  %vm5798 = vcmp.gt.s32.totalorder %v5797, 0
  %v5799 = vsel %vm5798, %v5797, 0
  %v5800 = vshrl.u32 %v5799, 5
  %v5801 = vand.u32 %v5799, 31
  %v5802 = vsub.s32 32, %v5801
  %v5803 = vshrl.u32 683565275, %v5802
  %v5804 = vshll.u32 683565275, %v5801
  %v5805 = vshrl.u32 2475754826, %v5802
  %v5806 = vor.u32 %v5804, %v5805
  %v5807 = vshll.u32 2475754826, %v5801
  %v5808 = vshrl.u32 2131351028, %v5802
  %v5809 = vor.u32 %v5807, %v5808
  %v5810 = vshll.u32 2131351028, %v5801
  %v5811 = vshrl.u32 2102212464, %v5802
  %v5812 = vor.u32 %v5810, %v5811
  %v5813 = vshll.u32 2102212464, %v5801
  %v5814 = vshrl.u32 920167782, %v5802
  %v5815 = vor.u32 %v5813, %v5814
  %v5816 = vshll.u32 920167782, %v5801
  %v5817 = vshrl.u32 1326507024, %v5802
  %v5818 = vor.u32 %v5816, %v5817
  %vm5819 = vcmp.lt.s32.totalorder %v5800, 1
  %vm5820 = vcmp.lt.s32.totalorder %v5800, 2
  %vm5821 = vcmp.lt.s32.totalorder %v5800, 3
  %vm5822 = vcmp.lt.s32.totalorder %v5800, 4
  %v5823 = vsel %vm5819, %v5803, %v5806
  %v5824 = vsel %vm5822, %v5812, 2102212464
  %v5825 = vsel %vm5821, %v5809, %v5824
  %v5826 = vsel %vm5820, %v5823, %v5825
  %v5827 = vsel %vm5819, %v5806, %v5809
  %v5828 = vsel %vm5822, %v5815, 920167782
  %v5829 = vsel %vm5821, %v5812, %v5828
  %v5830 = vsel %vm5820, %v5827, %v5829
  %v5831 = vsel %vm5819, %v5809, %v5812
  %v5832 = vsel %vm5822, %v5818, 1326507024
  %v5833 = vsel %vm5821, %v5815, %v5832
  %v5834 = vsel %vm5820, %v5831, %v5833
  %v5835 = vshll.u32 %v5795, 8
  %v5836 = vand.u32 %v5835, 65535
  %v5837 = vshrl.u32 %v5835, 16
  %v5838 = vand.u32 %v5834, 65535
  %v5839 = vshrl.u32 %v5834, 16
  %v5840 = vmul.u32 %v5836, %v5838
  %v5841 = vmul.u32 %v5836, %v5839
  %v5842 = vmul.u32 %v5837, %v5838
  %v5843 = vmul.u32 %v5837, %v5839
  %v5844 = vshll.u32 %v5841, 16
  %v5845 = vshrl.u32 %v5841, 16
  %v5846 = vshll.u32 %v5842, 16
  %v5847 = vshrl.u32 %v5842, 16
  %vm5848 = vc.u32 %v5840, %v5844
  %v5849 = vsel %vm5848, 1, 0
  %v5850 = vadd.s32 %v5840, %v5844
  %v5851 = vadd.s32 %v5843, %v5849
  %vm5852 = vc.u32 %v5850, %v5846
  %v5853 = vsel %vm5852, 1, 0
  %v5854 = vadd.s32 %v5850, %v5846
  %v5855 = vadd.s32 %v5851, %v5853
  %v5856 = vadd.s32 %v5855, %v5845
  %v5857 = vadd.s32 %v5856, %v5847
  %v5858 = vand.u32 %v5835, 65535
  %v5859 = vshrl.u32 %v5835, 16
  %v5860 = vand.u32 %v5830, 65535
  %v5861 = vshrl.u32 %v5830, 16
  %v5862 = vmul.u32 %v5858, %v5860
  %v5863 = vmul.u32 %v5858, %v5861
  %v5864 = vmul.u32 %v5859, %v5860
  %v5865 = vmul.u32 %v5859, %v5861
  %v5866 = vshll.u32 %v5863, 16
  %v5867 = vshrl.u32 %v5863, 16
  %v5868 = vshll.u32 %v5864, 16
  %v5869 = vshrl.u32 %v5864, 16
  %vm5870 = vc.u32 %v5862, %v5866
  %v5871 = vsel %vm5870, 1, 0
  %v5872 = vadd.s32 %v5862, %v5866
  %v5873 = vadd.s32 %v5865, %v5871
  %vm5874 = vc.u32 %v5872, %v5868
  %v5875 = vsel %vm5874, 1, 0
  %v5876 = vadd.s32 %v5872, %v5868
  %v5877 = vadd.s32 %v5873, %v5875
  %v5878 = vadd.s32 %v5877, %v5867
  %v5879 = vadd.s32 %v5878, %v5869
  %v5880 = vmul.u32 %v5835, %v5826
  %v5881 = vadd.s32 %v5857, %v5876
  %vm5882 = vc.u32 %v5857, %v5876
  %v5883 = vadd.s32 %v5879, 1
  %v5884 = vsel %vm5882, %v5883, %v5879
  %v5885 = vadd.s32 %v5880, %v5884
  %v5886 = vadd.s32 %v5885, 536870912
  %v5887 = vshrl.u32 %v5886, 30
  %v5888 = vshll.u32 %v5887, 30
  %v5889 = vsub.s32 %v5885, %v5888
  %vm5890 = vcmp.lt.s32.totalorder %v5889, 0
  %v5891 = vsub.s32 0, %v5889
  %v5892 = vsel %vm5890, %v5891, %v5889
  %v5893 = vclz %v5892
  %v5894 = vsub.s32 %v5893, 2
  %vm5895 = vcmp.gt.s32.totalorder 0, %v5894
  %v5896 = vsel %vm5895, 0, %v5894
  %v5897 = vsub.s32 32, %v5896
  %v5898 = vshll.u32 %v5889, %v5896
  %v5899 = vshrl.u32 %v5881, %v5897
  %v5900 = vor.u32 %v5898, %v5899
  %v5901 = vsub.s32 4294967266, %v5896
  %v5902 = vadd.s32 %v5901, 127
  %v5903 = vshll.u32 %v5902, 23
  %v5904 = vor.u32 4788187, %v5903
  %v5905 = vand.u32 2147483647, %v5904
  %v5907 = vcvt.s32.f32 %v5900
  %v5908 = vmul.f32 %v5907, %v5905
  %v5909 = vxor.u32 %v5908, 2147483648
  %v5910 = vsel %vm5789, %v5909, %v5908
  %v5911 = vsub.s32 4, %v5887
  %v5912 = vsel %vm5789, %v5911, %v5887
  %v5913 = vsel %vm5788, %v5786, %v5910
  %v5914 = vsel %vm5788, 0, %v5912
  %v5915 = vmul.f32 %v5913, %v5913
  %v5916 = vmul.f32 %v5915, -0.001358992
  %v5917 = vadd.f32 %v5916, 0.041655596
  %v5918 = vmul.f32 %v5915, %v5917
  %v5919 = vadd.f32 %v5918, -0.4999988
  %v5920 = vmul.f32 %v5915, %v5919
  %v5921 = vadd.f32 1.0, %v5920
  %v5922 = vmul.f32 %v5913, %v5913
  %v5923 = vmul.f32 %v5922, -0.00019511016
  %v5924 = vadd.f32 %v5923, 0.008332121
  %v5925 = vmul.f32 %v5922, %v5924
  %v5926 = vadd.f32 %v5925, -0.16666654
  %v5927 = vmul.f32 %v5922, %v5926
  %v5928 = vadd.f32 %v5927, 1.0
  %v5929 = vmul.f32 %v5928, %v5913
  %vm5930 = vweird.f32 %v5786
  %v5931 = vadd.s32 %v5914, 3
  %v5932 = vand.u32 %v5931, 3
  %vm5933 = vcmp.lt.s32.totalorder %v5932, 2
  %vm5934 = vcmp.eq.s32.totalorder %v5932, 0
  %v5935 = vxor.u32 %v5929, 2147483648
  %v5936 = vsel %vm5934, %v5921, %v5935
  %vm5937 = vcmp.eq.s32.totalorder %v5932, 2
  %v5938 = vxor.u32 %v5921, 2147483648
  %v5939 = vsel %vm5937, %v5938, %v5929
  %v5940 = vsel %vm5933, %v5936, %v5939
  %v5941 = vsel %vm5930, nan, %v5940
  %v5942 = vadd.f32 %v5776, %v5941
  %5943 = vset.pattern.permute.xlu0 28
  %5944 = vperm.xlu0 %5943, %v1288
  %v5945 = vpop.permute.xlu0 %5944
  %v5947 = vmul.f32 %v5945, %v1295
  %5948 = vset.pattern.permute.xlu0 28
  %5949 = vperm.xlu0 %5948, %v1298
  %v5950 = vpop.permute.xlu0 %5949
  %v5952 = vadd.f32 %v5947, %v5950
  %v5953 = vand.u32 2147483647, %v5952
  %vm5954 = vcmp.le.f32.partialorder %v5953, 0.7853982
  %vm5955 = vcmp.lt.s32.totalorder %v5952, 0
  %v5956 = vand.u32 %v5952, 2139095040
  %v5957 = vshrl.u32 %v5956, 23
  %v5958 = vsub.s32 %v5957, 127
  %v5959 = vand.u32 2147483647, %v5952
  %v5960 = vand.u32 %v5959, 8388607
  %v5961 = vor.u32 %v5960, 8388608
  %v5962 = vsub.s32 0, %v5961
  %v5963 = vadd.s32 %v5958, 1
  %vm5964 = vcmp.gt.s32.totalorder %v5963, 0
  %v5965 = vsel %vm5964, %v5963, 0
  %v5966 = vshrl.u32 %v5965, 5
  %v5967 = vand.u32 %v5965, 31
  %v5968 = vsub.s32 32, %v5967
  %v5969 = vshrl.u32 683565275, %v5968
  %v5970 = vshll.u32 683565275, %v5967
  %v5971 = vshrl.u32 2475754826, %v5968
  %v5972 = vor.u32 %v5970, %v5971
  %v5973 = vshll.u32 2475754826, %v5967
  %v5974 = vshrl.u32 2131351028, %v5968
  %v5975 = vor.u32 %v5973, %v5974
  %v5976 = vshll.u32 2131351028, %v5967
  %v5977 = vshrl.u32 2102212464, %v5968
  %v5978 = vor.u32 %v5976, %v5977
  %v5979 = vshll.u32 2102212464, %v5967
  %v5980 = vshrl.u32 920167782, %v5968
  %v5981 = vor.u32 %v5979, %v5980
  %v5982 = vshll.u32 920167782, %v5967
  %v5983 = vshrl.u32 1326507024, %v5968
  %v5984 = vor.u32 %v5982, %v5983
  %vm5985 = vcmp.lt.s32.totalorder %v5966, 1
  %vm5986 = vcmp.lt.s32.totalorder %v5966, 2
  %vm5987 = vcmp.lt.s32.totalorder %v5966, 3
  %vm5988 = vcmp.lt.s32.totalorder %v5966, 4
  %v5989 = vsel %vm5985, %v5969, %v5972
  %v5990 = vsel %vm5988, %v5978, 2102212464
  %v5991 = vsel %vm5987, %v5975, %v5990
  %v5992 = vsel %vm5986, %v5989, %v5991
  %v5993 = vsel %vm5985, %v5972, %v5975
  %v5994 = vsel %vm5988, %v5981, 920167782
  %v5995 = vsel %vm5987, %v5978, %v5994
  %v5996 = vsel %vm5986, %v5993, %v5995
  %v5997 = vsel %vm5985, %v5975, %v5978
  %v5998 = vsel %vm5988, %v5984, 1326507024
  %v5999 = vsel %vm5987, %v5981, %v5998
  %v6000 = vsel %vm5986, %v5997, %v5999
  %v6001 = vshll.u32 %v5961, 8
  %v6002 = vand.u32 %v6001, 65535
  %v6003 = vshrl.u32 %v6001, 16
  %v6004 = vand.u32 %v6000, 65535
  %v6005 = vshrl.u32 %v6000, 16
  %v6006 = vmul.u32 %v6002, %v6004
  %v6007 = vmul.u32 %v6002, %v6005
  %v6008 = vmul.u32 %v6003, %v6004
  %v6009 = vmul.u32 %v6003, %v6005
  %v6010 = vshll.u32 %v6007, 16
  %v6011 = vshrl.u32 %v6007, 16
  %v6012 = vshll.u32 %v6008, 16
  %v6013 = vshrl.u32 %v6008, 16
  %vm6014 = vc.u32 %v6006, %v6010
  %v6015 = vsel %vm6014, 1, 0
  %v6016 = vadd.s32 %v6006, %v6010
  %v6017 = vadd.s32 %v6009, %v6015
  %vm6018 = vc.u32 %v6016, %v6012
  %v6019 = vsel %vm6018, 1, 0
  %v6020 = vadd.s32 %v6016, %v6012
  %v6021 = vadd.s32 %v6017, %v6019
  %v6022 = vadd.s32 %v6021, %v6011
  %v6023 = vadd.s32 %v6022, %v6013
  %v6024 = vand.u32 %v6001, 65535
  %v6025 = vshrl.u32 %v6001, 16
  %v6026 = vand.u32 %v5996, 65535
  %v6027 = vshrl.u32 %v5996, 16
  %v6028 = vmul.u32 %v6024, %v6026
  %v6029 = vmul.u32 %v6024, %v6027
  %v6030 = vmul.u32 %v6025, %v6026
  %v6031 = vmul.u32 %v6025, %v6027
  %v6032 = vshll.u32 %v6029, 16
  %v6033 = vshrl.u32 %v6029, 16
  %v6034 = vshll.u32 %v6030, 16
  %v6035 = vshrl.u32 %v6030, 16
  %vm6036 = vc.u32 %v6028, %v6032
  %v6037 = vsel %vm6036, 1, 0
  %v6038 = vadd.s32 %v6028, %v6032
  %v6039 = vadd.s32 %v6031, %v6037
  %vm6040 = vc.u32 %v6038, %v6034
  %v6041 = vsel %vm6040, 1, 0
  %v6042 = vadd.s32 %v6038, %v6034
  %v6043 = vadd.s32 %v6039, %v6041
  %v6044 = vadd.s32 %v6043, %v6033
  %v6045 = vadd.s32 %v6044, %v6035
  %v6046 = vmul.u32 %v6001, %v5992
  %v6047 = vadd.s32 %v6023, %v6042
  %vm6048 = vc.u32 %v6023, %v6042
  %v6049 = vadd.s32 %v6045, 1
  %v6050 = vsel %vm6048, %v6049, %v6045
  %v6051 = vadd.s32 %v6046, %v6050
  %v6052 = vadd.s32 %v6051, 536870912
  %v6053 = vshrl.u32 %v6052, 30
  %v6054 = vshll.u32 %v6053, 30
  %v6055 = vsub.s32 %v6051, %v6054
  %vm6056 = vcmp.lt.s32.totalorder %v6055, 0
  %v6057 = vsub.s32 0, %v6055
  %v6058 = vsel %vm6056, %v6057, %v6055
  %v6059 = vclz %v6058
  %v6060 = vsub.s32 %v6059, 2
  %vm6061 = vcmp.gt.s32.totalorder 0, %v6060
  %v6062 = vsel %vm6061, 0, %v6060
  %v6063 = vsub.s32 32, %v6062
  %v6064 = vshll.u32 %v6055, %v6062
  %v6065 = vshrl.u32 %v6047, %v6063
  %v6066 = vor.u32 %v6064, %v6065
  %v6067 = vsub.s32 4294967266, %v6062
  %v6068 = vadd.s32 %v6067, 127
  %v6069 = vshll.u32 %v6068, 23
  %v6070 = vor.u32 4788187, %v6069
  %v6071 = vand.u32 2147483647, %v6070
  %v6073 = vcvt.s32.f32 %v6066
  %v6074 = vmul.f32 %v6073, %v6071
  %v6075 = vxor.u32 %v6074, 2147483648
  %v6076 = vsel %vm5955, %v6075, %v6074
  %v6077 = vsub.s32 4, %v6053
  %v6078 = vsel %vm5955, %v6077, %v6053
  %v6079 = vsel %vm5954, %v5952, %v6076
  %v6080 = vsel %vm5954, 0, %v6078
  %v6081 = vmul.f32 %v6079, %v6079
  %v6082 = vmul.f32 %v6081, -0.001358992
  %v6083 = vadd.f32 %v6082, 0.041655596
  %v6084 = vmul.f32 %v6081, %v6083
  %v6085 = vadd.f32 %v6084, -0.4999988
  %v6086 = vmul.f32 %v6081, %v6085
  %v6087 = vadd.f32 1.0, %v6086
  %v6088 = vmul.f32 %v6079, %v6079
  %v6089 = vmul.f32 %v6088, -0.00019511016
  %v6090 = vadd.f32 %v6089, 0.008332121
  %v6091 = vmul.f32 %v6088, %v6090
  %v6092 = vadd.f32 %v6091, -0.16666654
  %v6093 = vmul.f32 %v6088, %v6092
  %v6094 = vadd.f32 %v6093, 1.0
  %v6095 = vmul.f32 %v6094, %v6079
  %vm6096 = vweird.f32 %v5952
  %v6097 = vadd.s32 %v6080, 3
  %v6098 = vand.u32 %v6097, 3
  %vm6099 = vcmp.lt.s32.totalorder %v6098, 2
  %vm6100 = vcmp.eq.s32.totalorder %v6098, 0
  %v6101 = vxor.u32 %v6095, 2147483648
  %v6102 = vsel %vm6100, %v6087, %v6101
  %vm6103 = vcmp.eq.s32.totalorder %v6098, 2
  %v6104 = vxor.u32 %v6087, 2147483648
  %v6105 = vsel %vm6103, %v6104, %v6095
  %v6106 = vsel %vm6099, %v6102, %v6105
  %v6107 = vsel %vm6096, nan, %v6106
  %v6108 = vadd.f32 %v5942, %v6107
  %6109 = vset.pattern.permute.xlu0 29
  %6110 = vperm.xlu0 %6109, %v1288
  %v6111 = vpop.permute.xlu0 %6110
  %v6113 = vmul.f32 %v6111, %v1295
  %6114 = vset.pattern.permute.xlu0 29
  %6115 = vperm.xlu0 %6114, %v1298
  %v6116 = vpop.permute.xlu0 %6115
  %v6118 = vadd.f32 %v6113, %v6116
  %v6119 = vand.u32 2147483647, %v6118
  %vm6120 = vcmp.le.f32.partialorder %v6119, 0.7853982
  %vm6121 = vcmp.lt.s32.totalorder %v6118, 0
  %v6122 = vand.u32 %v6118, 2139095040
  %v6123 = vshrl.u32 %v6122, 23
  %v6124 = vsub.s32 %v6123, 127
  %v6125 = vand.u32 2147483647, %v6118
  %v6126 = vand.u32 %v6125, 8388607
  %v6127 = vor.u32 %v6126, 8388608
  %v6128 = vsub.s32 0, %v6127
  %v6129 = vadd.s32 %v6124, 1
  %vm6130 = vcmp.gt.s32.totalorder %v6129, 0
  %v6131 = vsel %vm6130, %v6129, 0
  %v6132 = vshrl.u32 %v6131, 5
  %v6133 = vand.u32 %v6131, 31
  %v6134 = vsub.s32 32, %v6133
  %v6135 = vshrl.u32 683565275, %v6134
  %v6136 = vshll.u32 683565275, %v6133
  %v6137 = vshrl.u32 2475754826, %v6134
  %v6138 = vor.u32 %v6136, %v6137
  %v6139 = vshll.u32 2475754826, %v6133
  %v6140 = vshrl.u32 2131351028, %v6134
  %v6141 = vor.u32 %v6139, %v6140
  %v6142 = vshll.u32 2131351028, %v6133
  %v6143 = vshrl.u32 2102212464, %v6134
  %v6144 = vor.u32 %v6142, %v6143
  %v6145 = vshll.u32 2102212464, %v6133
  %v6146 = vshrl.u32 920167782, %v6134
  %v6147 = vor.u32 %v6145, %v6146
  %v6148 = vshll.u32 920167782, %v6133
  %v6149 = vshrl.u32 1326507024, %v6134
  %v6150 = vor.u32 %v6148, %v6149
  %vm6151 = vcmp.lt.s32.totalorder %v6132, 1
  %vm6152 = vcmp.lt.s32.totalorder %v6132, 2
  %vm6153 = vcmp.lt.s32.totalorder %v6132, 3
  %vm6154 = vcmp.lt.s32.totalorder %v6132, 4
  %v6155 = vsel %vm6151, %v6135, %v6138
  %v6156 = vsel %vm6154, %v6144, 2102212464
  %v6157 = vsel %vm6153, %v6141, %v6156
  %v6158 = vsel %vm6152, %v6155, %v6157
  %v6159 = vsel %vm6151, %v6138, %v6141
  %v6160 = vsel %vm6154, %v6147, 920167782
  %v6161 = vsel %vm6153, %v6144, %v6160
  %v6162 = vsel %vm6152, %v6159, %v6161
  %v6163 = vsel %vm6151, %v6141, %v6144
  %v6164 = vsel %vm6154, %v6150, 1326507024
  %v6165 = vsel %vm6153, %v6147, %v6164
  %v6166 = vsel %vm6152, %v6163, %v6165
  %v6167 = vshll.u32 %v6127, 8
  %v6168 = vand.u32 %v6167, 65535
  %v6169 = vshrl.u32 %v6167, 16
  %v6170 = vand.u32 %v6166, 65535
  %v6171 = vshrl.u32 %v6166, 16
  %v6172 = vmul.u32 %v6168, %v6170
  %v6173 = vmul.u32 %v6168, %v6171
  %v6174 = vmul.u32 %v6169, %v6170
  %v6175 = vmul.u32 %v6169, %v6171
  %v6176 = vshll.u32 %v6173, 16
  %v6177 = vshrl.u32 %v6173, 16
  %v6178 = vshll.u32 %v6174, 16
  %v6179 = vshrl.u32 %v6174, 16
  %vm6180 = vc.u32 %v6172, %v6176
  %v6181 = vsel %vm6180, 1, 0
  %v6182 = vadd.s32 %v6172, %v6176
  %v6183 = vadd.s32 %v6175, %v6181
  %vm6184 = vc.u32 %v6182, %v6178
  %v6185 = vsel %vm6184, 1, 0
  %v6186 = vadd.s32 %v6182, %v6178
  %v6187 = vadd.s32 %v6183, %v6185
  %v6188 = vadd.s32 %v6187, %v6177
  %v6189 = vadd.s32 %v6188, %v6179
  %v6190 = vand.u32 %v6167, 65535
  %v6191 = vshrl.u32 %v6167, 16
  %v6192 = vand.u32 %v6162, 65535
  %v6193 = vshrl.u32 %v6162, 16
  %v6194 = vmul.u32 %v6190, %v6192
  %v6195 = vmul.u32 %v6190, %v6193
  %v6196 = vmul.u32 %v6191, %v6192
  %v6197 = vmul.u32 %v6191, %v6193
  %v6198 = vshll.u32 %v6195, 16
  %v6199 = vshrl.u32 %v6195, 16
  %v6200 = vshll.u32 %v6196, 16
  %v6201 = vshrl.u32 %v6196, 16
  %vm6202 = vc.u32 %v6194, %v6198
  %v6203 = vsel %vm6202, 1, 0
  %v6204 = vadd.s32 %v6194, %v6198
  %v6205 = vadd.s32 %v6197, %v6203
  %vm6206 = vc.u32 %v6204, %v6200
  %v6207 = vsel %vm6206, 1, 0
  %v6208 = vadd.s32 %v6204, %v6200
  %v6209 = vadd.s32 %v6205, %v6207
  %v6210 = vadd.s32 %v6209, %v6199
  %v6211 = vadd.s32 %v6210, %v6201
  %v6212 = vmul.u32 %v6167, %v6158
  %v6213 = vadd.s32 %v6189, %v6208
  %vm6214 = vc.u32 %v6189, %v6208
  %v6215 = vadd.s32 %v6211, 1
  %v6216 = vsel %vm6214, %v6215, %v6211
  %v6217 = vadd.s32 %v6212, %v6216
  %v6218 = vadd.s32 %v6217, 536870912
  %v6219 = vshrl.u32 %v6218, 30
  %v6220 = vshll.u32 %v6219, 30
  %v6221 = vsub.s32 %v6217, %v6220
  %vm6222 = vcmp.lt.s32.totalorder %v6221, 0
  %v6223 = vsub.s32 0, %v6221
  %v6224 = vsel %vm6222, %v6223, %v6221
  %v6225 = vclz %v6224
  %v6226 = vsub.s32 %v6225, 2
  %vm6227 = vcmp.gt.s32.totalorder 0, %v6226
  %v6228 = vsel %vm6227, 0, %v6226
  %v6229 = vsub.s32 32, %v6228
  %v6230 = vshll.u32 %v6221, %v6228
  %v6231 = vshrl.u32 %v6213, %v6229
  %v6232 = vor.u32 %v6230, %v6231
  %v6233 = vsub.s32 4294967266, %v6228
  %v6234 = vadd.s32 %v6233, 127
  %v6235 = vshll.u32 %v6234, 23
  %v6236 = vor.u32 4788187, %v6235
  %v6237 = vand.u32 2147483647, %v6236
  %v6239 = vcvt.s32.f32 %v6232
  %v6240 = vmul.f32 %v6239, %v6237
  %v6241 = vxor.u32 %v6240, 2147483648
  %v6242 = vsel %vm6121, %v6241, %v6240
  %v6243 = vsub.s32 4, %v6219
  %v6244 = vsel %vm6121, %v6243, %v6219
  %v6245 = vsel %vm6120, %v6118, %v6242
  %v6246 = vsel %vm6120, 0, %v6244
  %v6247 = vmul.f32 %v6245, %v6245
  %v6248 = vmul.f32 %v6247, -0.001358992
  %v6249 = vadd.f32 %v6248, 0.041655596
  %v6250 = vmul.f32 %v6247, %v6249
  %v6251 = vadd.f32 %v6250, -0.4999988
  %v6252 = vmul.f32 %v6247, %v6251
  %v6253 = vadd.f32 1.0, %v6252
  %v6254 = vmul.f32 %v6245, %v6245
  %v6255 = vmul.f32 %v6254, -0.00019511016
  %v6256 = vadd.f32 %v6255, 0.008332121
  %v6257 = vmul.f32 %v6254, %v6256
  %v6258 = vadd.f32 %v6257, -0.16666654
  %v6259 = vmul.f32 %v6254, %v6258
  %v6260 = vadd.f32 %v6259, 1.0
  %v6261 = vmul.f32 %v6260, %v6245
  %vm6262 = vweird.f32 %v6118
  %v6263 = vadd.s32 %v6246, 3
  %v6264 = vand.u32 %v6263, 3
  %vm6265 = vcmp.lt.s32.totalorder %v6264, 2
  %vm6266 = vcmp.eq.s32.totalorder %v6264, 0
  %v6267 = vxor.u32 %v6261, 2147483648
  %v6268 = vsel %vm6266, %v6253, %v6267
  %vm6269 = vcmp.eq.s32.totalorder %v6264, 2
  %v6270 = vxor.u32 %v6253, 2147483648
  %v6271 = vsel %vm6269, %v6270, %v6261
  %v6272 = vsel %vm6265, %v6268, %v6271
  %v6273 = vsel %vm6262, nan, %v6272
  %v6274 = vadd.f32 %v6108, %v6273
  %v6275 = vld [vmem:[%s12] sm:$0xff]
  %v6276 = vld [vmem:[%s12 + $0x8] sm:$0xff]
  %v6277 = vld [vmem:[%s12 + $0x10] sm:$0xff]
  %v6278 = vld [vmem:[%s12 + $0x18] sm:$0xff]
  %v6279 = vld [vmem:[%s12 + $0x20] sm:$0xff]
  %v6280 = vld [vmem:[%s12 + $0x28] sm:$0xff]
  %v6281 = vld [vmem:[%s12 + $0x30] sm:$0xff]
  %v6282 = vld [vmem:[%s12 + $0x38] sm:$0xff]
  %v6283 = vld [vmem:[%s12 + $0x40] sm:$0xff]
  %v6284 = vld [vmem:[%s12 + $0x48] sm:$0xff]
  %v6285 = vld [vmem:[%s12 + $0x50] sm:$0xff]
  %v6286 = vld [vmem:[%s12 + $0x58] sm:$0xff]
  %v6287 = vld [vmem:[%s12 + $0x60] sm:$0xff]
  %v6288 = vld [vmem:[%s12 + $0x68] sm:$0xff]
  %v6289 = vld [vmem:[%s12 + $0x70] sm:$0xff]
  %v6290 = vld [vmem:[%s12 + $0x78] sm:$0xff]
  %v6291 = vld [vmem:[%s12 + $0x80] sm:$0xff]
  %v6292 = vld [vmem:[%s12 + $0x88] sm:$0xff]
  %v6293 = vld [vmem:[%s12 + $0x90] sm:$0xff]
  %v6294 = vld [vmem:[%s12 + $0x98] sm:$0xff]
  %v6295 = vld [vmem:[%s12 + $0xa0] sm:$0xff]
  %v6296 = vld [vmem:[%s12 + $0xa8] sm:$0xff]
  %v6297 = vld [vmem:[%s12 + $0xb0] sm:$0xff]
  %v6298 = vld [vmem:[%s12 + $0xb8] sm:$0xff]
  %v6299 = vld [vmem:[%s12 + $0xc0] sm:$0xff]
  %v6300 = vld [vmem:[%s12 + $0xc8] sm:$0xff]
  %v6301 = vld [vmem:[%s12 + $0xd0] sm:$0xff]
  %v6302 = vld [vmem:[%s12 + $0xd8] sm:$0xff]
  %v6303 = vld [vmem:[%s12 + $0xe0] sm:$0xff]
  %v6304 = vld [vmem:[%s12 + $0xe8] sm:$0xff]
  %v6305 = vld [vmem:[%s12 + $0xf0] sm:$0xff]
  %v6306 = vld [vmem:[%s12 + $0xf8] sm:$0xff]
  %v6307 = vld [vmem:[%s12 + $0x100] sm:$0xff]
  %v6308 = vld [vmem:[%s12 + $0x108] sm:$0xff]
  %v6309 = vld [vmem:[%s12 + $0x110] sm:$0xff]
  %v6310 = vld [vmem:[%s12 + $0x118] sm:$0xff]
  %v6311 = vld [vmem:[%s12 + $0x120] sm:$0xff]
  %v6312 = vld [vmem:[%s12 + $0x128] sm:$0xff]
  %v6313 = vld [vmem:[%s12 + $0x130] sm:$0xff]
  %v6314 = vld [vmem:[%s12 + $0x138] sm:$0xff]
  %v6315 = vld [vmem:[%s12 + $0x140] sm:$0xff]
  %v6316 = vld [vmem:[%s12 + $0x148] sm:$0xff]
  %v6317 = vld [vmem:[%s12 + $0x150] sm:$0xff]
  %v6318 = vld [vmem:[%s12 + $0x158] sm:$0xff]
  %v6319 = vld [vmem:[%s12 + $0x160] sm:$0xff]
  %v6320 = vld [vmem:[%s12 + $0x168] sm:$0xff]
  %v6321 = vld [vmem:[%s12 + $0x170] sm:$0xff]
  %v6322 = vld [vmem:[%s12 + $0x178] sm:$0xff]
  %v6323 = vld [vmem:[%s12 + $0x180] sm:$0xf]
  %v6324 = vld [vmem:[%s12 + $0x188] sm:$0xf]
  %v6325 = vld [vmem:[%s12 + $0x190] sm:$0xf]
  %v6326 = vld [vmem:[%s12 + $0x198] sm:$0xf]
  %v6327 = vld [vmem:[%s13] sm:$0xf]
  %v6329 = vperm.slane %v6327, 0
  %v6330 = vperm.slane %v6327, 1
  %v6331 = vperm.slane %v6327, 2
  %v6332 = vperm.slane %v6327, 3
  %vm6337 = vcmask 818176
  %v6339 = vsel %vm6337, %v6274, 0
  %vm6341 = vcmask 1043456
  %v6343 = vsel %vm6341, %v6323, 0
  %v6346 = vsel %vm6341, %v6324, 0
  %v6349 = vsel %vm6341, %v6325, 0
  %v6352 = vsel %vm6341, %v6326, 0
  %6354 = vmatpush.msra.mxu0 0.0
  %6355 = vmatpush.msra.mxu0 0.0
  %6356 = vmatpush.msra.mxu0 0.0
  %6357 = vmatpush.msra.mxu0 %v6343
  %6358 = vmatpush.msra.mxu0 %v6319
  %6359 = vmatpush.msra.mxu0 %v6315
  %6360 = vmatpush.msra.mxu0 %v6311
  %6361 = vmatpush.msra.mxu0 %v6307
  %6362 = vmatpush.msra.mxu0 %v6303
  %6363 = vmatpush.msra.mxu0 %v6299
  %6364 = vmatpush.msra.mxu0 %v6295
  %6365 = vmatpush.msra.mxu0 %v6291
  %6366 = vmatpush.msra.mxu0 %v6287
  %6367 = vmatpush.msra.mxu0 %v6283
  %6368 = vmatpush.msra.mxu0 %v6279
  %6369 = vmatpush.msra.mxu0 %v6275
  %6370 = vmatmul.f32.gmra.mxu0 %v6339
  %v6371 = vpop.f32.mrf.mxu0
  %v6372 = vadd.f32 %v6329, %v6371
  %6373 = vdwg.mxu0
  %6374 = vmatpush.msra.mxu0 0.0
  %6375 = vmatpush.msra.mxu0 0.0
  %6376 = vmatpush.msra.mxu0 0.0
  %6377 = vmatpush.msra.mxu0 %v6346
  %6378 = vmatpush.msra.mxu0 %v6320
  %6379 = vmatpush.msra.mxu0 %v6316
  %6380 = vmatpush.msra.mxu0 %v6312
  %6381 = vmatpush.msra.mxu0 %v6308
  %6382 = vmatpush.msra.mxu0 %v6304
  %6383 = vmatpush.msra.mxu0 %v6300
  %6384 = vmatpush.msra.mxu0 %v6296
  %6385 = vmatpush.msra.mxu0 %v6292
  %6386 = vmatpush.msra.mxu0 %v6288
  %6387 = vmatpush.msra.mxu0 %v6284
  %6388 = vmatpush.msra.mxu0 %v6280
  %6389 = vmatpush.msra.mxu0 %v6276
  %6390 = vmatmul.f32.gmra.mxu0 %v6339
  %v6391 = vpop.f32.mrf.mxu0
  %v6392 = vadd.f32 %v6330, %v6391
  %6393 = vdwg.mxu0
  %6394 = vmatpush.msra.mxu0 0.0
  %6395 = vmatpush.msra.mxu0 0.0
  %6396 = vmatpush.msra.mxu0 0.0
  %6397 = vmatpush.msra.mxu0 %v6349
  %6398 = vmatpush.msra.mxu0 %v6321
  %6399 = vmatpush.msra.mxu0 %v6317
  %6400 = vmatpush.msra.mxu0 %v6313
  %6401 = vmatpush.msra.mxu0 %v6309
  %6402 = vmatpush.msra.mxu0 %v6305
  %6403 = vmatpush.msra.mxu0 %v6301
  %6404 = vmatpush.msra.mxu0 %v6297
  %6405 = vmatpush.msra.mxu0 %v6293
  %6406 = vmatpush.msra.mxu0 %v6289
  %6407 = vmatpush.msra.mxu0 %v6285
  %6408 = vmatpush.msra.mxu0 %v6281
  %6409 = vmatpush.msra.mxu0 %v6277
  %6410 = vmatmul.f32.gmra.mxu0 %v6339
  %v6411 = vpop.f32.mrf.mxu0
  %v6412 = vadd.f32 %v6331, %v6411
  %6413 = vdwg.mxu0
  %6414 = vmatpush.msra.mxu0 0.0
  %6415 = vmatpush.msra.mxu0 0.0
  %6416 = vmatpush.msra.mxu0 0.0
  %6417 = vmatpush.msra.mxu0 %v6352
  %6418 = vmatpush.msra.mxu0 %v6322
  %6419 = vmatpush.msra.mxu0 %v6318
  %6420 = vmatpush.msra.mxu0 %v6314
  %6421 = vmatpush.msra.mxu0 %v6310
  %6422 = vmatpush.msra.mxu0 %v6306
  %6423 = vmatpush.msra.mxu0 %v6302
  %6424 = vmatpush.msra.mxu0 %v6298
  %6425 = vmatpush.msra.mxu0 %v6294
  %6426 = vmatpush.msra.mxu0 %v6290
  %6427 = vmatpush.msra.mxu0 %v6286
  %6428 = vmatpush.msra.mxu0 %v6282
  %6429 = vmatpush.msra.mxu0 %v6278
  %6430 = vmatmul.f32.gmra.mxu0 %v6339
  %v6431 = vpop.f32.mrf.mxu0
  %v6432 = vadd.f32 %v6332, %v6431
  %6433 = vdwg.mxu0
  %v6434 = vsub.f32 0.0, %v6372
  %v6435 = vsub.f32 0.0, %v6392
  %v6436 = vsub.f32 0.0, %v6412
  %v6437 = vsub.f32 0.0, %v6432
  %v6438 = vmul.f32 %v6434, 1.442695
  %v6439 = vpow.pop %v6438
  %v6440 = vmul.f32 %v6435, 1.442695
  %v6441 = vpow.pop %v6440
  %v6442 = vmul.f32 %v6436, 1.442695
  %v6443 = vpow.pop %v6442
  %v6444 = vmul.f32 %v6437, 1.442695
  %v6445 = vpow.pop %v6444
  %v6446 = vadd.f32 %v6439, 1.0
  %v6447 = vadd.f32 %v6441, 1.0
  %v6448 = vadd.f32 %v6443, 1.0
  %v6449 = vadd.f32 %v6445, 1.0
  %v6450 = vrcp.pop %v6446
  %v6451 = vmul.f32 %v6446, %v6450
  %v6452 = vsub.f32 1.0, %v6451
  %v6453 = vmul.f32 %v6450, %v6452
  %v6454 = vadd.f32 %v6450, %v6453
  %vm6455 = vweird.f32 %v6446
  %vm6456 = vweird.f32 %v6450
  %vm6457 = vmor %vm6455, %vm6456
  %v6458 = vsel %vm6457, %v6450, %v6454
  %v6459 = vand.u32 2147483647, %v6446
  %vm6460 = vcmp.eq.f32.partialorder %v6459, 8.507059e+37
  %v6461 = vand.u32 %v6446, 2147483648
  %v6462 = vor.u32 1.1754944e-38, %v6461
  %v6463 = vsel %vm6460, %v6462, %v6458
  %v6464 = vrcp.pop %v6447
  %v6465 = vmul.f32 %v6447, %v6464
  %v6466 = vsub.f32 1.0, %v6465
  %v6467 = vmul.f32 %v6464, %v6466
  %v6468 = vadd.f32 %v6464, %v6467
  %vm6469 = vweird.f32 %v6447
  %vm6470 = vweird.f32 %v6464
  %vm6471 = vmor %vm6469, %vm6470
  %v6472 = vsel %vm6471, %v6464, %v6468
  %v6473 = vand.u32 2147483647, %v6447
  %vm6474 = vcmp.eq.f32.partialorder %v6473, 8.507059e+37
  %v6475 = vand.u32 %v6447, 2147483648
  %v6476 = vor.u32 1.1754944e-38, %v6475
  %v6477 = vsel %vm6474, %v6476, %v6472
  %v6478 = vrcp.pop %v6448
  %v6479 = vmul.f32 %v6448, %v6478
  %v6480 = vsub.f32 1.0, %v6479
  %v6481 = vmul.f32 %v6478, %v6480
  %v6482 = vadd.f32 %v6478, %v6481
  %vm6483 = vweird.f32 %v6448
  %vm6484 = vweird.f32 %v6478
  %vm6485 = vmor %vm6483, %vm6484
  %v6486 = vsel %vm6485, %v6478, %v6482
  %v6487 = vand.u32 2147483647, %v6448
  %vm6488 = vcmp.eq.f32.partialorder %v6487, 8.507059e+37
  %v6489 = vand.u32 %v6448, 2147483648
  %v6490 = vor.u32 1.1754944e-38, %v6489
  %v6491 = vsel %vm6488, %v6490, %v6486
  %v6492 = vrcp.pop %v6449
  %v6493 = vmul.f32 %v6449, %v6492
  %v6494 = vsub.f32 1.0, %v6493
  %v6495 = vmul.f32 %v6492, %v6494
  %v6496 = vadd.f32 %v6492, %v6495
  %vm6497 = vweird.f32 %v6449
  %vm6498 = vweird.f32 %v6492
  %vm6499 = vmor %vm6497, %vm6498
  %v6500 = vsel %vm6499, %v6492, %v6496
  %v6501 = vand.u32 2147483647, %v6449
  %vm6502 = vcmp.eq.f32.partialorder %v6501, 8.507059e+37
  %v6503 = vand.u32 %v6449, 2147483648
  %v6504 = vor.u32 1.1754944e-38, %v6503
  %v6505 = vsel %vm6502, %v6504, %v6500
  %v6506 = vld [vmem:[%s14] sm:$0xff]
  %v6507 = vld [vmem:[%s14 + $0x8] sm:$0xff]
  %v6508 = vld [vmem:[%s14 + $0x10] sm:$0xff]
  %v6509 = vld [vmem:[%s14 + $0x18] sm:$0xff]
  %v6510 = vld [vmem:[%s14 + $0x20] sm:$0xff]
  %v6511 = vld [vmem:[%s14 + $0x28] sm:$0xff]
  %v6512 = vld [vmem:[%s14 + $0x30] sm:$0xff]
  %v6513 = vld [vmem:[%s14 + $0x38] sm:$0xff]
  %v6514 = vld [vmem:[%s14 + $0x40] sm:$0xff]
  %v6515 = vld [vmem:[%s14 + $0x48] sm:$0xff]
  %v6516 = vld [vmem:[%s14 + $0x50] sm:$0xff]
  %v6517 = vld [vmem:[%s14 + $0x58] sm:$0xff]
  %v6518 = vld [vmem:[%s14 + $0x60] sm:$0xff]
  %v6519 = vld [vmem:[%s14 + $0x68] sm:$0xff]
  %v6520 = vld [vmem:[%s14 + $0x70] sm:$0xff]
  %v6521 = vld [vmem:[%s14 + $0x78] sm:$0xff]
  %v6522 = vld [vmem:[%s14 + $0x80] sm:$0xff]
  %v6523 = vld [vmem:[%s14 + $0x88] sm:$0xff]
  %v6524 = vld [vmem:[%s14 + $0x90] sm:$0xff]
  %v6525 = vld [vmem:[%s14 + $0x98] sm:$0xff]
  %v6526 = vld [vmem:[%s14 + $0xa0] sm:$0xff]
  %v6527 = vld [vmem:[%s14 + $0xa8] sm:$0xff]
  %v6528 = vld [vmem:[%s14 + $0xb0] sm:$0xff]
  %v6529 = vld [vmem:[%s14 + $0xb8] sm:$0xff]
  %v6530 = vld [vmem:[%s14 + $0xc0] sm:$0xff]
  %v6531 = vld [vmem:[%s14 + $0xc8] sm:$0xff]
  %v6532 = vld [vmem:[%s14 + $0xd0] sm:$0xff]
  %v6533 = vld [vmem:[%s14 + $0xd8] sm:$0xff]
  %v6534 = vld [vmem:[%s14 + $0xe0] sm:$0xff]
  %v6535 = vld [vmem:[%s14 + $0xe8] sm:$0xff]
  %v6536 = vld [vmem:[%s14 + $0xf0] sm:$0xff]
  %v6537 = vld [vmem:[%s14 + $0xf8] sm:$0xff]
  %v6538 = vld [vmem:[%s14 + $0x100] sm:$0xff]
  %v6539 = vld [vmem:[%s14 + $0x108] sm:$0xff]
  %v6540 = vld [vmem:[%s14 + $0x110] sm:$0xff]
  %v6541 = vld [vmem:[%s14 + $0x118] sm:$0xff]
  %v6542 = vld [vmem:[%s14 + $0x120] sm:$0xff]
  %v6543 = vld [vmem:[%s14 + $0x128] sm:$0xff]
  %v6544 = vld [vmem:[%s14 + $0x130] sm:$0xff]
  %v6545 = vld [vmem:[%s14 + $0x138] sm:$0xff]
  %v6546 = vld [vmem:[%s14 + $0x140] sm:$0xff]
  %v6547 = vld [vmem:[%s14 + $0x148] sm:$0xff]
  %v6548 = vld [vmem:[%s14 + $0x150] sm:$0xff]
  %v6549 = vld [vmem:[%s14 + $0x158] sm:$0xff]
  %v6550 = vld [vmem:[%s14 + $0x160] sm:$0xff]
  %v6551 = vld [vmem:[%s14 + $0x168] sm:$0xff]
  %v6552 = vld [vmem:[%s14 + $0x170] sm:$0xff]
  %v6553 = vld [vmem:[%s14 + $0x178] sm:$0xff]
  %v6554 = vld [vmem:[%s14 + $0x180] sm:$0xf]
  %v6555 = vld [vmem:[%s14 + $0x188] sm:$0xf]
  %v6556 = vld [vmem:[%s14 + $0x190] sm:$0xf]
  %v6557 = vld [vmem:[%s14 + $0x198] sm:$0xf]
  %v6558 = vld [vmem:[%s15] sm:$0xf]
  %v6560 = vperm.slane %v6558, 0
  %v6561 = vperm.slane %v6558, 1
  %v6562 = vperm.slane %v6558, 2
  %v6563 = vperm.slane %v6558, 3
  %v6569 = vsel %vm6341, %v6554, 0
  %v6572 = vsel %vm6341, %v6555, 0
  %v6575 = vsel %vm6341, %v6556, 0
  %v6578 = vsel %vm6341, %v6557, 0
  %6580 = vmatpush.msra.mxu0 0.0
  %6581 = vmatpush.msra.mxu0 0.0
  %6582 = vmatpush.msra.mxu0 0.0
  %6583 = vmatpush.msra.mxu0 %v6569
  %6584 = vmatpush.msra.mxu0 %v6550
  %6585 = vmatpush.msra.mxu0 %v6546
  %6586 = vmatpush.msra.mxu0 %v6542
  %6587 = vmatpush.msra.mxu0 %v6538
  %6588 = vmatpush.msra.mxu0 %v6534
  %6589 = vmatpush.msra.mxu0 %v6530
  %6590 = vmatpush.msra.mxu0 %v6526
  %6591 = vmatpush.msra.mxu0 %v6522
  %6592 = vmatpush.msra.mxu0 %v6518
  %6593 = vmatpush.msra.mxu0 %v6514
  %6594 = vmatpush.msra.mxu0 %v6510
  %6595 = vmatpush.msra.mxu0 %v6506
  %6596 = vmatmul.f32.gmra.mxu0 %v6339
  %v6597 = vpop.f32.mrf.mxu0
  %v6598 = vadd.f32 %v6560, %v6597
  %6599 = vdwg.mxu0
  %6600 = vmatpush.msra.mxu0 0.0
  %6601 = vmatpush.msra.mxu0 0.0
  %6602 = vmatpush.msra.mxu0 0.0
  %6603 = vmatpush.msra.mxu0 %v6572
  %6604 = vmatpush.msra.mxu0 %v6551
  %6605 = vmatpush.msra.mxu0 %v6547
  %6606 = vmatpush.msra.mxu0 %v6543
  %6607 = vmatpush.msra.mxu0 %v6539
  %6608 = vmatpush.msra.mxu0 %v6535
  %6609 = vmatpush.msra.mxu0 %v6531
  %6610 = vmatpush.msra.mxu0 %v6527
  %6611 = vmatpush.msra.mxu0 %v6523
  %6612 = vmatpush.msra.mxu0 %v6519
  %6613 = vmatpush.msra.mxu0 %v6515
  %6614 = vmatpush.msra.mxu0 %v6511
  %6615 = vmatpush.msra.mxu0 %v6507
  %6616 = vmatmul.f32.gmra.mxu0 %v6339
  %v6617 = vpop.f32.mrf.mxu0
  %v6618 = vadd.f32 %v6561, %v6617
  %6619 = vdwg.mxu0
  %6620 = vmatpush.msra.mxu0 0.0
  %6621 = vmatpush.msra.mxu0 0.0
  %6622 = vmatpush.msra.mxu0 0.0
  %6623 = vmatpush.msra.mxu0 %v6575
  %6624 = vmatpush.msra.mxu0 %v6552
  %6625 = vmatpush.msra.mxu0 %v6548
  %6626 = vmatpush.msra.mxu0 %v6544
  %6627 = vmatpush.msra.mxu0 %v6540
  %6628 = vmatpush.msra.mxu0 %v6536
  %6629 = vmatpush.msra.mxu0 %v6532
  %6630 = vmatpush.msra.mxu0 %v6528
  %6631 = vmatpush.msra.mxu0 %v6524
  %6632 = vmatpush.msra.mxu0 %v6520
  %6633 = vmatpush.msra.mxu0 %v6516
  %6634 = vmatpush.msra.mxu0 %v6512
  %6635 = vmatpush.msra.mxu0 %v6508
  %6636 = vmatmul.f32.gmra.mxu0 %v6339
  %v6637 = vpop.f32.mrf.mxu0
  %v6638 = vadd.f32 %v6562, %v6637
  %6639 = vdwg.mxu0
  %6640 = vmatpush.msra.mxu0 0.0
  %6641 = vmatpush.msra.mxu0 0.0
  %6642 = vmatpush.msra.mxu0 0.0
  %6643 = vmatpush.msra.mxu0 %v6578
  %6644 = vmatpush.msra.mxu0 %v6553
  %6645 = vmatpush.msra.mxu0 %v6549
  %6646 = vmatpush.msra.mxu0 %v6545
  %6647 = vmatpush.msra.mxu0 %v6541
  %6648 = vmatpush.msra.mxu0 %v6537
  %6649 = vmatpush.msra.mxu0 %v6533
  %6650 = vmatpush.msra.mxu0 %v6529
  %6651 = vmatpush.msra.mxu0 %v6525
  %6652 = vmatpush.msra.mxu0 %v6521
  %6653 = vmatpush.msra.mxu0 %v6517
  %6654 = vmatpush.msra.mxu0 %v6513
  %6655 = vmatpush.msra.mxu0 %v6509
  %6656 = vmatmul.f32.gmra.mxu0 %v6339
  %v6657 = vpop.f32.mrf.mxu0
  %v6658 = vadd.f32 %v6563, %v6657
  %6659 = vdwg.mxu0
  %v6660 = vmax.f32 %v6598, 0.0
  %v6661 = vmax.f32 %v6618, 0.0
  %v6662 = vmax.f32 %v6638, 0.0
  %v6663 = vmax.f32 %v6658, 0.0
  %v6664 = vmul.f32 %v6463, %v6660
  %v6665 = vmul.f32 %v6477, %v6661
  %v6666 = vmul.f32 %v6491, %v6662
  %v6667 = vmul.f32 %v6505, %v6663
  %v6668 = vld [vmem:[%s16] sm:$0xff]
  %v6669 = vld [vmem:[%s16 + $0x8] sm:$0xff]
  %v6670 = vld [vmem:[%s16 + $0x10] sm:$0xff]
  %v6671 = vld [vmem:[%s16 + $0x18] sm:$0xff]
  %v6672 = vld [vmem:[%s16 + $0x20] sm:$0xff]
  %v6673 = vld [vmem:[%s16 + $0x28] sm:$0xff]
  %v6674 = vld [vmem:[%s16 + $0x30] sm:$0xff]
  %v6675 = vld [vmem:[%s16 + $0x38] sm:$0xff]
  %v6676 = vld [vmem:[%s16 + $0x40] sm:$0xff]
  %v6677 = vld [vmem:[%s16 + $0x48] sm:$0xff]
  %v6678 = vld [vmem:[%s16 + $0x50] sm:$0xff]
  %v6679 = vld [vmem:[%s16 + $0x58] sm:$0xff]
  %v6680 = vld [vmem:[%s16 + $0x60] sm:$0xff]
  %v6681 = vld [vmem:[%s16 + $0x68] sm:$0xff]
  %v6682 = vld [vmem:[%s16 + $0x70] sm:$0xff]
  %v6683 = vld [vmem:[%s16 + $0x78] sm:$0xff]
  %v6684 = vld [vmem:[%s16 + $0x80] sm:$0xff]
  %v6685 = vld [vmem:[%s16 + $0x88] sm:$0xff]
  %v6686 = vld [vmem:[%s16 + $0x90] sm:$0xff]
  %v6687 = vld [vmem:[%s16 + $0x98] sm:$0xff]
  %v6688 = vld [vmem:[%s16 + $0xa0] sm:$0xff]
  %v6689 = vld [vmem:[%s16 + $0xa8] sm:$0xff]
  %v6690 = vld [vmem:[%s16 + $0xb0] sm:$0xff]
  %v6691 = vld [vmem:[%s16 + $0xb8] sm:$0xff]
  %v6692 = vld [vmem:[%s16 + $0xc0] sm:$0xff]
  %v6693 = vld [vmem:[%s16 + $0xc8] sm:$0xff]
  %v6694 = vld [vmem:[%s16 + $0xd0] sm:$0xff]
  %v6695 = vld [vmem:[%s16 + $0xd8] sm:$0xff]
  %v6696 = vld [vmem:[%s16 + $0xe0] sm:$0xff]
  %v6697 = vld [vmem:[%s16 + $0xe8] sm:$0xff]
  %v6698 = vld [vmem:[%s16 + $0xf0] sm:$0xff]
  %v6699 = vld [vmem:[%s16 + $0xf8] sm:$0xff]
  %v6700 = vld [vmem:[%s16 + $0x100] sm:$0xff]
  %v6701 = vld [vmem:[%s16 + $0x108] sm:$0xff]
  %v6702 = vld [vmem:[%s16 + $0x110] sm:$0xff]
  %v6703 = vld [vmem:[%s16 + $0x118] sm:$0xff]
  %v6704 = vld [vmem:[%s16 + $0x120] sm:$0xff]
  %v6705 = vld [vmem:[%s16 + $0x128] sm:$0xff]
  %v6706 = vld [vmem:[%s16 + $0x130] sm:$0xff]
  %v6707 = vld [vmem:[%s16 + $0x138] sm:$0xff]
  %v6708 = vld [vmem:[%s16 + $0x140] sm:$0xff]
  %v6709 = vld [vmem:[%s16 + $0x148] sm:$0xff]
  %v6710 = vld [vmem:[%s16 + $0x150] sm:$0xff]
  %v6711 = vld [vmem:[%s16 + $0x158] sm:$0xff]
  %v6712 = vld [vmem:[%s16 + $0x160] sm:$0xff]
  %v6713 = vld [vmem:[%s16 + $0x168] sm:$0xff]
  %v6714 = vld [vmem:[%s16 + $0x170] sm:$0xff]
  %v6715 = vld [vmem:[%s16 + $0x178] sm:$0xff]
  %v6716 = vld [vmem:[%s16 + $0x180] sm:$0xff]
  %v6717 = vld [vmem:[%s16 + $0x188] sm:$0xff]
  %v6718 = vld [vmem:[%s16 + $0x190] sm:$0xff]
  %v6719 = vld [vmem:[%s16 + $0x198] sm:$0xff]
  %v6720 = vld [vmem:[%s16 + $0x1a0] sm:$0xff]
  %v6721 = vld [vmem:[%s16 + $0x1a8] sm:$0xff]
  %v6722 = vld [vmem:[%s16 + $0x1b0] sm:$0xff]
  %v6723 = vld [vmem:[%s16 + $0x1b8] sm:$0xff]
  %v6724 = vld [vmem:[%s16 + $0x1c0] sm:$0xff]
  %v6725 = vld [vmem:[%s16 + $0x1c8] sm:$0xff]
  %v6726 = vld [vmem:[%s16 + $0x1d0] sm:$0xff]
  %v6727 = vld [vmem:[%s16 + $0x1d8] sm:$0xff]
  %v6728 = vld [vmem:[%s16 + $0x1e0] sm:$0xff]
  %v6729 = vld [vmem:[%s16 + $0x1e8] sm:$0xff]
  %v6730 = vld [vmem:[%s16 + $0x1f0] sm:$0xff]
  %v6731 = vld [vmem:[%s16 + $0x1f8] sm:$0xff]
  %v6732 = vld [vmem:[%s16 + $0x200] sm:$0xff]
  %v6733 = vld [vmem:[%s16 + $0x208] sm:$0xff]
  %v6734 = vld [vmem:[%s16 + $0x210] sm:$0xff]
  %v6735 = vld [vmem:[%s16 + $0x218] sm:$0xff]
  %v6736 = vld [vmem:[%s16 + $0x220] sm:$0xff]
  %v6737 = vld [vmem:[%s16 + $0x228] sm:$0xff]
  %v6738 = vld [vmem:[%s16 + $0x230] sm:$0xff]
  %v6739 = vld [vmem:[%s16 + $0x238] sm:$0xff]
  %v6740 = vld [vmem:[%s16 + $0x240] sm:$0xff]
  %v6741 = vld [vmem:[%s16 + $0x248] sm:$0xff]
  %v6742 = vld [vmem:[%s16 + $0x250] sm:$0xff]
  %v6743 = vld [vmem:[%s16 + $0x258] sm:$0xff]
  %v6744 = vld [vmem:[%s16 + $0x260] sm:$0xff]
  %v6745 = vld [vmem:[%s16 + $0x268] sm:$0xff]
  %v6746 = vld [vmem:[%s16 + $0x270] sm:$0xff]
  %v6747 = vld [vmem:[%s16 + $0x278] sm:$0xff]
  %v6748 = vld [vmem:[%s16 + $0x280] sm:$0xff]
  %v6749 = vld [vmem:[%s16 + $0x288] sm:$0xff]
  %v6750 = vld [vmem:[%s16 + $0x290] sm:$0xff]
  %v6751 = vld [vmem:[%s16 + $0x298] sm:$0xff]
  %v6752 = vld [vmem:[%s16 + $0x2a0] sm:$0xff]
  %v6753 = vld [vmem:[%s16 + $0x2a8] sm:$0xff]
  %v6754 = vld [vmem:[%s16 + $0x2b0] sm:$0xff]
  %v6755 = vld [vmem:[%s16 + $0x2b8] sm:$0xff]
  %v6756 = vld [vmem:[%s16 + $0x2c0] sm:$0xff]
  %v6757 = vld [vmem:[%s16 + $0x2c8] sm:$0xff]
  %v6758 = vld [vmem:[%s16 + $0x2d0] sm:$0xff]
  %v6759 = vld [vmem:[%s16 + $0x2d8] sm:$0xff]
  %v6760 = vld [vmem:[%s16 + $0x2e0] sm:$0xff]
  %v6761 = vld [vmem:[%s16 + $0x2e8] sm:$0xff]
  %v6762 = vld [vmem:[%s16 + $0x2f0] sm:$0xff]
  %v6763 = vld [vmem:[%s16 + $0x2f8] sm:$0xff]
  %v6764 = vld [vmem:[%s16 + $0x300] sm:$0xff]
  %v6765 = vld [vmem:[%s16 + $0x308] sm:$0xff]
  %v6766 = vld [vmem:[%s16 + $0x310] sm:$0xff]
  %v6767 = vld [vmem:[%s16 + $0x318] sm:$0xff]
  %v6768 = vld [vmem:[%s16 + $0x320] sm:$0xff]
  %v6769 = vld [vmem:[%s16 + $0x328] sm:$0xff]
  %v6770 = vld [vmem:[%s16 + $0x330] sm:$0xff]
  %v6771 = vld [vmem:[%s16 + $0x338] sm:$0xff]
  %v6772 = vld [vmem:[%s16 + $0x340] sm:$0xff]
  %v6773 = vld [vmem:[%s16 + $0x348] sm:$0xff]
  %v6774 = vld [vmem:[%s16 + $0x350] sm:$0xff]
  %v6775 = vld [vmem:[%s16 + $0x358] sm:$0xff]
  %v6776 = vld [vmem:[%s16 + $0x360] sm:$0xff]
  %v6777 = vld [vmem:[%s16 + $0x368] sm:$0xff]
  %v6778 = vld [vmem:[%s16 + $0x370] sm:$0xff]
  %v6779 = vld [vmem:[%s16 + $0x378] sm:$0xff]
  %v6780 = vld [vmem:[%s16 + $0x380] sm:$0xff]
  %v6781 = vld [vmem:[%s16 + $0x388] sm:$0xff]
  %v6782 = vld [vmem:[%s16 + $0x390] sm:$0xff]
  %v6783 = vld [vmem:[%s16 + $0x398] sm:$0xff]
  %v6784 = vld [vmem:[%s16 + $0x3a0] sm:$0xff]
  %v6785 = vld [vmem:[%s16 + $0x3a8] sm:$0xff]
  %v6786 = vld [vmem:[%s16 + $0x3b0] sm:$0xff]
  %v6787 = vld [vmem:[%s16 + $0x3b8] sm:$0xff]
  %v6788 = vld [vmem:[%s16 + $0x3c0] sm:$0xff]
  %v6789 = vld [vmem:[%s16 + $0x3c8] sm:$0xff]
  %v6790 = vld [vmem:[%s16 + $0x3d0] sm:$0xff]
  %v6791 = vld [vmem:[%s16 + $0x3d8] sm:$0xff]
  %v6792 = vld [vmem:[%s16 + $0x3e0] sm:$0xff]
  %v6793 = vld [vmem:[%s16 + $0x3e8] sm:$0xff]
  %v6794 = vld [vmem:[%s16 + $0x3f0] sm:$0xff]
  %v6795 = vld [vmem:[%s16 + $0x3f8] sm:$0xff]
  %v6796 = vld [vmem:[%s16 + $0x400] sm:$0xff]
  %v6797 = vld [vmem:[%s16 + $0x408] sm:$0xff]
  %v6798 = vld [vmem:[%s16 + $0x410] sm:$0xff]
  %v6799 = vld [vmem:[%s16 + $0x418] sm:$0xff]
  %v6800 = vld [vmem:[%s16 + $0x420] sm:$0xff]
  %v6801 = vld [vmem:[%s16 + $0x428] sm:$0xff]
  %v6802 = vld [vmem:[%s16 + $0x430] sm:$0xff]
  %v6803 = vld [vmem:[%s16 + $0x438] sm:$0xff]
  %v6804 = vld [vmem:[%s16 + $0x440] sm:$0xff]
  %v6805 = vld [vmem:[%s16 + $0x448] sm:$0xff]
  %v6806 = vld [vmem:[%s16 + $0x450] sm:$0xff]
  %v6807 = vld [vmem:[%s16 + $0x458] sm:$0xff]
  %v6808 = vld [vmem:[%s16 + $0x460] sm:$0xff]
  %v6809 = vld [vmem:[%s16 + $0x468] sm:$0xff]
  %v6810 = vld [vmem:[%s16 + $0x470] sm:$0xff]
  %v6811 = vld [vmem:[%s16 + $0x478] sm:$0xff]
  %v6812 = vld [vmem:[%s16 + $0x480] sm:$0xff]
  %v6813 = vld [vmem:[%s16 + $0x488] sm:$0xff]
  %v6814 = vld [vmem:[%s16 + $0x490] sm:$0xff]
  %v6815 = vld [vmem:[%s16 + $0x498] sm:$0xff]
  %v6816 = vld [vmem:[%s16 + $0x4a0] sm:$0xff]
  %v6817 = vld [vmem:[%s16 + $0x4a8] sm:$0xff]
  %v6818 = vld [vmem:[%s16 + $0x4b0] sm:$0xff]
  %v6819 = vld [vmem:[%s16 + $0x4b8] sm:$0xff]
  %v6820 = vld [vmem:[%s16 + $0x4c0] sm:$0xff]
  %v6821 = vld [vmem:[%s16 + $0x4c8] sm:$0xff]
  %v6822 = vld [vmem:[%s16 + $0x4d0] sm:$0xff]
  %v6823 = vld [vmem:[%s16 + $0x4d8] sm:$0xff]
  %v6824 = vld [vmem:[%s16 + $0x4e0] sm:$0xff]
  %v6825 = vld [vmem:[%s16 + $0x4e8] sm:$0xff]
  %v6826 = vld [vmem:[%s16 + $0x4f0] sm:$0xff]
  %v6827 = vld [vmem:[%s16 + $0x4f8] sm:$0xff]
  %v6828 = vld [vmem:[%s16 + $0x500] sm:$0xff]
  %v6829 = vld [vmem:[%s16 + $0x508] sm:$0xff]
  %v6830 = vld [vmem:[%s16 + $0x510] sm:$0xff]
  %v6831 = vld [vmem:[%s16 + $0x518] sm:$0xff]
  %v6832 = vld [vmem:[%s16 + $0x520] sm:$0xff]
  %v6833 = vld [vmem:[%s16 + $0x528] sm:$0xff]
  %v6834 = vld [vmem:[%s16 + $0x530] sm:$0xff]
  %v6835 = vld [vmem:[%s16 + $0x538] sm:$0xff]
  %v6836 = vld [vmem:[%s16 + $0x540] sm:$0xff]
  %v6837 = vld [vmem:[%s16 + $0x548] sm:$0xff]
  %v6838 = vld [vmem:[%s16 + $0x550] sm:$0xff]
  %v6839 = vld [vmem:[%s16 + $0x558] sm:$0xff]
  %v6840 = vld [vmem:[%s16 + $0x560] sm:$0xff]
  %v6841 = vld [vmem:[%s16 + $0x568] sm:$0xff]
  %v6842 = vld [vmem:[%s16 + $0x570] sm:$0xff]
  %v6843 = vld [vmem:[%s16 + $0x578] sm:$0xff]
  %v6844 = vld [vmem:[%s16 + $0x580] sm:$0xff]
  %v6845 = vld [vmem:[%s16 + $0x588] sm:$0xff]
  %v6846 = vld [vmem:[%s16 + $0x590] sm:$0xff]
  %v6847 = vld [vmem:[%s16 + $0x598] sm:$0xff]
  %v6848 = vld [vmem:[%s16 + $0x5a0] sm:$0xff]
  %v6849 = vld [vmem:[%s16 + $0x5a8] sm:$0xff]
  %v6850 = vld [vmem:[%s16 + $0x5b0] sm:$0xff]
  %v6851 = vld [vmem:[%s16 + $0x5b8] sm:$0xff]
  %v6852 = vld [vmem:[%s16 + $0x5c0] sm:$0xff]
  %v6853 = vld [vmem:[%s16 + $0x5c8] sm:$0xff]
  %v6854 = vld [vmem:[%s16 + $0x5d0] sm:$0xff]
  %v6855 = vld [vmem:[%s16 + $0x5d8] sm:$0xff]
  %v6856 = vld [vmem:[%s16 + $0x5e0] sm:$0xff]
  %v6857 = vld [vmem:[%s16 + $0x5e8] sm:$0xff]
  %v6858 = vld [vmem:[%s16 + $0x5f0] sm:$0xff]
  %v6859 = vld [vmem:[%s16 + $0x5f8] sm:$0xff]
  %v6860 = vld [vmem:[%s16 + $0x600] sm:$0xff]
  %v6861 = vld [vmem:[%s16 + $0x608] sm:$0xff]
  %v6862 = vld [vmem:[%s16 + $0x610] sm:$0xff]
  %v6863 = vld [vmem:[%s16 + $0x618] sm:$0xff]
  %v6864 = vld [vmem:[%s16 + $0x620] sm:$0xff]
  %v6865 = vld [vmem:[%s16 + $0x628] sm:$0xff]
  %v6866 = vld [vmem:[%s16 + $0x630] sm:$0xff]
  %v6867 = vld [vmem:[%s16 + $0x638] sm:$0xff]
  %v6868 = vld [vmem:[%s16 + $0x640] sm:$0xff]
  %v6869 = vld [vmem:[%s16 + $0x648] sm:$0xff]
  %v6870 = vld [vmem:[%s16 + $0x650] sm:$0xff]
  %v6871 = vld [vmem:[%s16 + $0x658] sm:$0xff]
  %v6872 = vld [vmem:[%s16 + $0x660] sm:$0xff]
  %v6873 = vld [vmem:[%s16 + $0x668] sm:$0xff]
  %v6874 = vld [vmem:[%s16 + $0x670] sm:$0xff]
  %v6875 = vld [vmem:[%s16 + $0x678] sm:$0xff]
  %v6876 = vld [vmem:[%s16 + $0x680] sm:$0xff]
  %v6877 = vld [vmem:[%s16 + $0x688] sm:$0xff]
  %v6878 = vld [vmem:[%s16 + $0x690] sm:$0xff]
  %v6879 = vld [vmem:[%s16 + $0x698] sm:$0xff]
  %v6880 = vld [vmem:[%s16 + $0x6a0] sm:$0xff]
  %v6881 = vld [vmem:[%s16 + $0x6a8] sm:$0xff]
  %v6882 = vld [vmem:[%s16 + $0x6b0] sm:$0xff]
  %v6883 = vld [vmem:[%s16 + $0x6b8] sm:$0xff]
  %v6884 = vld [vmem:[%s16 + $0x6c0] sm:$0xff]
  %v6885 = vld [vmem:[%s16 + $0x6c8] sm:$0xff]
  %v6886 = vld [vmem:[%s16 + $0x6d0] sm:$0xff]
  %v6887 = vld [vmem:[%s16 + $0x6d8] sm:$0xff]
  %v6888 = vld [vmem:[%s16 + $0x6e0] sm:$0xff]
  %v6889 = vld [vmem:[%s16 + $0x6e8] sm:$0xff]
  %v6890 = vld [vmem:[%s16 + $0x6f0] sm:$0xff]
  %v6891 = vld [vmem:[%s16 + $0x6f8] sm:$0xff]
  %v6892 = vld [vmem:[%s16 + $0x700] sm:$0xff]
  %v6893 = vld [vmem:[%s16 + $0x708] sm:$0xff]
  %v6894 = vld [vmem:[%s16 + $0x710] sm:$0xff]
  %v6895 = vld [vmem:[%s16 + $0x718] sm:$0xff]
  %v6896 = vld [vmem:[%s16 + $0x720] sm:$0xff]
  %v6897 = vld [vmem:[%s16 + $0x728] sm:$0xff]
  %v6898 = vld [vmem:[%s16 + $0x730] sm:$0xff]
  %v6899 = vld [vmem:[%s16 + $0x738] sm:$0xff]
  %v6900 = vld [vmem:[%s16 + $0x740] sm:$0xff]
  %v6901 = vld [vmem:[%s16 + $0x748] sm:$0xff]
  %v6902 = vld [vmem:[%s16 + $0x750] sm:$0xff]
  %v6903 = vld [vmem:[%s16 + $0x758] sm:$0xff]
  %v6904 = vld [vmem:[%s16 + $0x760] sm:$0xff]
  %v6905 = vld [vmem:[%s16 + $0x768] sm:$0xff]
  %v6906 = vld [vmem:[%s16 + $0x770] sm:$0xff]
  %v6907 = vld [vmem:[%s16 + $0x778] sm:$0xff]
  %v6908 = vld [vmem:[%s16 + $0x780] sm:$0xff]
  %v6909 = vld [vmem:[%s16 + $0x788] sm:$0xff]
  %v6910 = vld [vmem:[%s16 + $0x790] sm:$0xff]
  %v6911 = vld [vmem:[%s16 + $0x798] sm:$0xff]
  %v6912 = vld [vmem:[%s16 + $0x7a0] sm:$0xff]
  %v6913 = vld [vmem:[%s16 + $0x7a8] sm:$0xff]
  %v6914 = vld [vmem:[%s16 + $0x7b0] sm:$0xff]
  %v6915 = vld [vmem:[%s16 + $0x7b8] sm:$0xff]
  %v6916 = vld [vmem:[%s16 + $0x7c0] sm:$0xff]
  %v6917 = vld [vmem:[%s16 + $0x7c8] sm:$0xff]
  %v6918 = vld [vmem:[%s16 + $0x7d0] sm:$0xff]
  %v6919 = vld [vmem:[%s16 + $0x7d8] sm:$0xff]
  %v6920 = vld [vmem:[%s16 + $0x7e0] sm:$0xff]
  %v6921 = vld [vmem:[%s16 + $0x7e8] sm:$0xff]
  %v6922 = vld [vmem:[%s16 + $0x7f0] sm:$0xff]
  %v6923 = vld [vmem:[%s16 + $0x7f8] sm:$0xff]
  %v6924 = vld [vmem:[%s16 + $0x800] sm:$0xff]
  %v6925 = vld [vmem:[%s16 + $0x808] sm:$0xff]
  %v6926 = vld [vmem:[%s16 + $0x810] sm:$0xff]
  %v6927 = vld [vmem:[%s16 + $0x818] sm:$0xff]
  %v6928 = vld [vmem:[%s16 + $0x820] sm:$0xff]
  %v6929 = vld [vmem:[%s16 + $0x828] sm:$0xff]
  %v6930 = vld [vmem:[%s16 + $0x830] sm:$0xff]
  %v6931 = vld [vmem:[%s16 + $0x838] sm:$0xff]
  %v6932 = vld [vmem:[%s16 + $0x840] sm:$0xff]
  %v6933 = vld [vmem:[%s16 + $0x848] sm:$0xff]
  %v6934 = vld [vmem:[%s16 + $0x850] sm:$0xff]
  %v6935 = vld [vmem:[%s16 + $0x858] sm:$0xff]
  %v6936 = vld [vmem:[%s16 + $0x860] sm:$0xff]
  %v6937 = vld [vmem:[%s16 + $0x868] sm:$0xff]
  %v6938 = vld [vmem:[%s16 + $0x870] sm:$0xff]
  %v6939 = vld [vmem:[%s16 + $0x878] sm:$0xff]
  %v6940 = vld [vmem:[%s16 + $0x880] sm:$0xff]
  %v6941 = vld [vmem:[%s16 + $0x888] sm:$0xff]
  %v6942 = vld [vmem:[%s16 + $0x890] sm:$0xff]
  %v6943 = vld [vmem:[%s16 + $0x898] sm:$0xff]
  %v6944 = vld [vmem:[%s16 + $0x8a0] sm:$0xff]
  %v6945 = vld [vmem:[%s16 + $0x8a8] sm:$0xff]
  %v6946 = vld [vmem:[%s16 + $0x8b0] sm:$0xff]
  %v6947 = vld [vmem:[%s16 + $0x8b8] sm:$0xff]
  %v6948 = vld [vmem:[%s16 + $0x8c0] sm:$0xff]
  %v6949 = vld [vmem:[%s16 + $0x8c8] sm:$0xff]
  %v6950 = vld [vmem:[%s16 + $0x8d0] sm:$0xff]
  %v6951 = vld [vmem:[%s16 + $0x8d8] sm:$0xff]
  %v6952 = vld [vmem:[%s16 + $0x8e0] sm:$0xff]
  %v6953 = vld [vmem:[%s16 + $0x8e8] sm:$0xff]
  %v6954 = vld [vmem:[%s16 + $0x8f0] sm:$0xff]
  %v6955 = vld [vmem:[%s16 + $0x8f8] sm:$0xff]
  %v6956 = vld [vmem:[%s16 + $0x900] sm:$0xff]
  %v6957 = vld [vmem:[%s16 + $0x908] sm:$0xff]
  %v6958 = vld [vmem:[%s16 + $0x910] sm:$0xff]
  %v6959 = vld [vmem:[%s16 + $0x918] sm:$0xff]
  %v6960 = vld [vmem:[%s16 + $0x920] sm:$0xff]
  %v6961 = vld [vmem:[%s16 + $0x928] sm:$0xff]
  %v6962 = vld [vmem:[%s16 + $0x930] sm:$0xff]
  %v6963 = vld [vmem:[%s16 + $0x938] sm:$0xff]
  %v6964 = vld [vmem:[%s16 + $0x940] sm:$0xff]
  %v6965 = vld [vmem:[%s16 + $0x948] sm:$0xff]
  %v6966 = vld [vmem:[%s16 + $0x950] sm:$0xff]
  %v6967 = vld [vmem:[%s16 + $0x958] sm:$0xff]
  %v6968 = vld [vmem:[%s16 + $0x960] sm:$0xff]
  %v6969 = vld [vmem:[%s16 + $0x968] sm:$0xff]
  %v6970 = vld [vmem:[%s16 + $0x970] sm:$0xff]
  %v6971 = vld [vmem:[%s16 + $0x978] sm:$0xff]
  %v6972 = vld [vmem:[%s16 + $0x980] sm:$0xff]
  %v6973 = vld [vmem:[%s16 + $0x988] sm:$0xff]
  %v6974 = vld [vmem:[%s16 + $0x990] sm:$0xff]
  %v6975 = vld [vmem:[%s16 + $0x998] sm:$0xff]
  %v6976 = vld [vmem:[%s16 + $0x9a0] sm:$0xff]
  %v6977 = vld [vmem:[%s16 + $0x9a8] sm:$0xff]
  %v6978 = vld [vmem:[%s16 + $0x9b0] sm:$0xff]
  %v6979 = vld [vmem:[%s16 + $0x9b8] sm:$0xff]
  %v6980 = vld [vmem:[%s16 + $0x9c0] sm:$0xff]
  %v6981 = vld [vmem:[%s16 + $0x9c8] sm:$0xff]
  %v6982 = vld [vmem:[%s16 + $0x9d0] sm:$0xff]
  %v6983 = vld [vmem:[%s16 + $0x9d8] sm:$0xff]
  %v6984 = vld [vmem:[%s16 + $0x9e0] sm:$0xff]
  %v6985 = vld [vmem:[%s16 + $0x9e8] sm:$0xff]
  %v6986 = vld [vmem:[%s16 + $0x9f0] sm:$0xff]
  %v6987 = vld [vmem:[%s16 + $0x9f8] sm:$0xff]
  %v6988 = vld [vmem:[%s16 + $0xa00] sm:$0xff]
  %v6989 = vld [vmem:[%s16 + $0xa08] sm:$0xff]
  %v6990 = vld [vmem:[%s16 + $0xa10] sm:$0xff]
  %v6991 = vld [vmem:[%s16 + $0xa18] sm:$0xff]
  %v6992 = vld [vmem:[%s16 + $0xa20] sm:$0xff]
  %v6993 = vld [vmem:[%s16 + $0xa28] sm:$0xff]
  %v6994 = vld [vmem:[%s16 + $0xa30] sm:$0xff]
  %v6995 = vld [vmem:[%s16 + $0xa38] sm:$0xff]
  %v6996 = vld [vmem:[%s16 + $0xa40] sm:$0xff]
  %v6997 = vld [vmem:[%s16 + $0xa48] sm:$0xff]
  %v6998 = vld [vmem:[%s16 + $0xa50] sm:$0xff]
  %v6999 = vld [vmem:[%s16 + $0xa58] sm:$0xff]
  %v7000 = vld [vmem:[%s16 + $0xa60] sm:$0xff]
  %v7001 = vld [vmem:[%s16 + $0xa68] sm:$0xff]
  %v7002 = vld [vmem:[%s16 + $0xa70] sm:$0xff]
  %v7003 = vld [vmem:[%s16 + $0xa78] sm:$0xff]
  %v7004 = vld [vmem:[%s16 + $0xa80] sm:$0xff]
  %v7005 = vld [vmem:[%s16 + $0xa88] sm:$0xff]
  %v7006 = vld [vmem:[%s16 + $0xa90] sm:$0xff]
  %v7007 = vld [vmem:[%s16 + $0xa98] sm:$0xff]
  %v7008 = vld [vmem:[%s16 + $0xaa0] sm:$0xff]
  %v7009 = vld [vmem:[%s16 + $0xaa8] sm:$0xff]
  %v7010 = vld [vmem:[%s16 + $0xab0] sm:$0xff]
  %v7011 = vld [vmem:[%s16 + $0xab8] sm:$0xff]
  %v7012 = vld [vmem:[%s16 + $0xac0] sm:$0xff]
  %v7013 = vld [vmem:[%s16 + $0xac8] sm:$0xff]
  %v7014 = vld [vmem:[%s16 + $0xad0] sm:$0xff]
  %v7015 = vld [vmem:[%s16 + $0xad8] sm:$0xff]
  %v7016 = vld [vmem:[%s16 + $0xae0] sm:$0xff]
  %v7017 = vld [vmem:[%s16 + $0xae8] sm:$0xff]
  %v7018 = vld [vmem:[%s17] sm:$0xff]
  %v7020 = vperm.slane %v7018, 0
  %v7021 = vperm.slane %v7018, 1
  %v7022 = vperm.slane %v7018, 2
  %v7023 = vperm.slane %v7018, 3
  %v7024 = vperm.slane %v7018, 4
  %v7025 = vperm.slane %v7018, 5
  %v7026 = vperm.slane %v7018, 6
  %v7035 = vsel %vm563, %v6667, 0
  %7037 = vmatpush.msra.mxu0 %v6773
  %7038 = vmatpush.msra.mxu0 %v6766
  %7039 = vmatpush.msra.mxu0 %v6759
  %7040 = vmatpush.msra.mxu0 %v6752
  %7041 = vmatpush.msra.mxu0 %v6745
  %7042 = vmatpush.msra.mxu0 %v6738
  %7043 = vmatpush.msra.mxu0 %v6731
  %7044 = vmatpush.msra.mxu0 %v6724
  %7045 = vmatpush.msra.mxu0 %v6717
  %7046 = vmatpush.msra.mxu0 %v6710
  %7047 = vmatpush.msra.mxu0 %v6703
  %7048 = vmatpush.msra.mxu0 %v6696
  %7049 = vmatpush.msra.mxu0 %v6689
  %7050 = vmatpush.msra.mxu0 %v6682
  %7051 = vmatpush.msra.mxu0 %v6675
  %7052 = vmatpush.msra.mxu0 %v6668
  %7053 = vmatmul.f32.gmra.mxu0 %v6664
  %v7054 = vpop.f32.mrf.mxu0
  %v7055 = vadd.f32 %v7020, %v7054
  %7056 = vdwg.mxu0
  %7057 = vmatpush.msra.mxu0 %v6885
  %7058 = vmatpush.msra.mxu0 %v6878
  %7059 = vmatpush.msra.mxu0 %v6871
  %7060 = vmatpush.msra.mxu0 %v6864
  %7061 = vmatpush.msra.mxu0 %v6857
  %7062 = vmatpush.msra.mxu0 %v6850
  %7063 = vmatpush.msra.mxu0 %v6843
  %7064 = vmatpush.msra.mxu0 %v6836
  %7065 = vmatpush.msra.mxu0 %v6829
  %7066 = vmatpush.msra.mxu0 %v6822
  %7067 = vmatpush.msra.mxu0 %v6815
  %7068 = vmatpush.msra.mxu0 %v6808
  %7069 = vmatpush.msra.mxu0 %v6801
  %7070 = vmatpush.msra.mxu0 %v6794
  %7071 = vmatpush.msra.mxu0 %v6787
  %7072 = vmatpush.msra.mxu0 %v6780
  %7073 = vmatmul.f32.gmra.mxu0 %v6665
  %v7074 = vpop.f32.mrf.mxu0
  %v7075 = vadd.f32 %v7055, %v7074
  %7076 = vdwg.mxu0
  %7077 = vmatpush.msra.mxu0 %v6997
  %7078 = vmatpush.msra.mxu0 %v6990
  %7079 = vmatpush.msra.mxu0 %v6983
  %7080 = vmatpush.msra.mxu0 %v6976
  %7081 = vmatpush.msra.mxu0 %v6969
  %7082 = vmatpush.msra.mxu0 %v6962
  %7083 = vmatpush.msra.mxu0 %v6955
  %7084 = vmatpush.msra.mxu0 %v6948
  %7085 = vmatpush.msra.mxu0 %v6941
  %7086 = vmatpush.msra.mxu0 %v6934
  %7087 = vmatpush.msra.mxu0 %v6927
  %7088 = vmatpush.msra.mxu0 %v6920
  %7089 = vmatpush.msra.mxu0 %v6913
  %7090 = vmatpush.msra.mxu0 %v6906
  %7091 = vmatpush.msra.mxu0 %v6899
  %7092 = vmatpush.msra.mxu0 %v6892
  %7093 = vmatmul.f32.gmra.mxu0 %v6666
  %v7094 = vpop.f32.mrf.mxu0
  %v7095 = vadd.f32 %v7075, %v7094
  %7096 = vdwg.mxu0
  %7097 = vmatpush.msra.mxu0 0.0
  %7098 = vmatpush.msra.mxu0 0.0
  %7099 = vmatpush.msra.mxu0 0.0
  %7100 = vmatpush.msra.mxu0 0.0
  %7101 = vmatpush.msra.mxu0 0.0
  %7102 = vmatpush.msra.mxu0 0.0
  %7103 = vmatpush.msra.mxu0 0.0
  %7104 = vmatpush.msra.mxu0 0.0
  %7105 = vmatpush.msra.mxu0 0.0
  %7106 = vmatpush.msra.mxu0 0.0
  %7107 = vmatpush.msra.mxu0 0.0
  %7108 = vmatpush.msra.mxu0 0.0
  %7109 = vmatpush.msra.mxu0 0.0
  %7110 = vmatpush.msra.mxu0 0.0
  %7111 = vmatpush.msra.mxu0 %v7011
  %7112 = vmatpush.msra.mxu0 %v7004
  %7113 = vmatmul.f32.gmra.mxu0 %v7035
  %v7114 = vpop.f32.mrf.mxu0
  %v7115 = vadd.f32 %v7095, %v7114
  %7116 = vdwg.mxu0
  %7117 = vmatpush.msra.mxu0 %v6774
  %7118 = vmatpush.msra.mxu0 %v6767
  %7119 = vmatpush.msra.mxu0 %v6760
  %7120 = vmatpush.msra.mxu0 %v6753
  %7121 = vmatpush.msra.mxu0 %v6746
  %7122 = vmatpush.msra.mxu0 %v6739
  %7123 = vmatpush.msra.mxu0 %v6732
  %7124 = vmatpush.msra.mxu0 %v6725
  %7125 = vmatpush.msra.mxu0 %v6718
  %7126 = vmatpush.msra.mxu0 %v6711
  %7127 = vmatpush.msra.mxu0 %v6704
  %7128 = vmatpush.msra.mxu0 %v6697
  %7129 = vmatpush.msra.mxu0 %v6690
  %7130 = vmatpush.msra.mxu0 %v6683
  %7131 = vmatpush.msra.mxu0 %v6676
  %7132 = vmatpush.msra.mxu0 %v6669
  %7133 = vmatmul.f32.gmra.mxu0 %v6664
  %v7134 = vpop.f32.mrf.mxu0
  %v7135 = vadd.f32 %v7021, %v7134
  %7136 = vdwg.mxu0
  %7137 = vmatpush.msra.mxu0 %v6886
  %7138 = vmatpush.msra.mxu0 %v6879
  %7139 = vmatpush.msra.mxu0 %v6872
  %7140 = vmatpush.msra.mxu0 %v6865
  %7141 = vmatpush.msra.mxu0 %v6858
  %7142 = vmatpush.msra.mxu0 %v6851
  %7143 = vmatpush.msra.mxu0 %v6844
  %7144 = vmatpush.msra.mxu0 %v6837
  %7145 = vmatpush.msra.mxu0 %v6830
  %7146 = vmatpush.msra.mxu0 %v6823
  %7147 = vmatpush.msra.mxu0 %v6816
  %7148 = vmatpush.msra.mxu0 %v6809
  %7149 = vmatpush.msra.mxu0 %v6802
  %7150 = vmatpush.msra.mxu0 %v6795
  %7151 = vmatpush.msra.mxu0 %v6788
  %7152 = vmatpush.msra.mxu0 %v6781
  %7153 = vmatmul.f32.gmra.mxu0 %v6665
  %v7154 = vpop.f32.mrf.mxu0
  %v7155 = vadd.f32 %v7135, %v7154
  %7156 = vdwg.mxu0
  %7157 = vmatpush.msra.mxu0 %v6998
  %7158 = vmatpush.msra.mxu0 %v6991
  %7159 = vmatpush.msra.mxu0 %v6984
  %7160 = vmatpush.msra.mxu0 %v6977
  %7161 = vmatpush.msra.mxu0 %v6970
  %7162 = vmatpush.msra.mxu0 %v6963
  %7163 = vmatpush.msra.mxu0 %v6956
  %7164 = vmatpush.msra.mxu0 %v6949
  %7165 = vmatpush.msra.mxu0 %v6942
  %7166 = vmatpush.msra.mxu0 %v6935
  %7167 = vmatpush.msra.mxu0 %v6928
  %7168 = vmatpush.msra.mxu0 %v6921
  %7169 = vmatpush.msra.mxu0 %v6914
  %7170 = vmatpush.msra.mxu0 %v6907
  %7171 = vmatpush.msra.mxu0 %v6900
  %7172 = vmatpush.msra.mxu0 %v6893
  %7173 = vmatmul.f32.gmra.mxu0 %v6666
  %v7174 = vpop.f32.mrf.mxu0
  %v7175 = vadd.f32 %v7155, %v7174
  %7176 = vdwg.mxu0
  %7177 = vmatpush.msra.mxu0 0.0
  %7178 = vmatpush.msra.mxu0 0.0
  %7179 = vmatpush.msra.mxu0 0.0
  %7180 = vmatpush.msra.mxu0 0.0
  %7181 = vmatpush.msra.mxu0 0.0
  %7182 = vmatpush.msra.mxu0 0.0
  %7183 = vmatpush.msra.mxu0 0.0
  %7184 = vmatpush.msra.mxu0 0.0
  %7185 = vmatpush.msra.mxu0 0.0
  %7186 = vmatpush.msra.mxu0 0.0
  %7187 = vmatpush.msra.mxu0 0.0
  %7188 = vmatpush.msra.mxu0 0.0
  %7189 = vmatpush.msra.mxu0 0.0
  %7190 = vmatpush.msra.mxu0 0.0
  %7191 = vmatpush.msra.mxu0 %v7012
  %7192 = vmatpush.msra.mxu0 %v7005
  %7193 = vmatmul.f32.gmra.mxu0 %v7035
  %v7194 = vpop.f32.mrf.mxu0
  %v7195 = vadd.f32 %v7175, %v7194
  %7196 = vdwg.mxu0
  %7197 = vmatpush.msra.mxu0 %v6775
  %7198 = vmatpush.msra.mxu0 %v6768
  %7199 = vmatpush.msra.mxu0 %v6761
  %7200 = vmatpush.msra.mxu0 %v6754
  %7201 = vmatpush.msra.mxu0 %v6747
  %7202 = vmatpush.msra.mxu0 %v6740
  %7203 = vmatpush.msra.mxu0 %v6733
  %7204 = vmatpush.msra.mxu0 %v6726
  %7205 = vmatpush.msra.mxu0 %v6719
  %7206 = vmatpush.msra.mxu0 %v6712
  %7207 = vmatpush.msra.mxu0 %v6705
  %7208 = vmatpush.msra.mxu0 %v6698
  %7209 = vmatpush.msra.mxu0 %v6691
  %7210 = vmatpush.msra.mxu0 %v6684
  %7211 = vmatpush.msra.mxu0 %v6677
  %7212 = vmatpush.msra.mxu0 %v6670
  %7213 = vmatmul.f32.gmra.mxu0 %v6664
  %v7214 = vpop.f32.mrf.mxu0
  %v7215 = vadd.f32 %v7022, %v7214
  %7216 = vdwg.mxu0
  %7217 = vmatpush.msra.mxu0 %v6887
  %7218 = vmatpush.msra.mxu0 %v6880
  %7219 = vmatpush.msra.mxu0 %v6873
  %7220 = vmatpush.msra.mxu0 %v6866
  %7221 = vmatpush.msra.mxu0 %v6859
  %7222 = vmatpush.msra.mxu0 %v6852
  %7223 = vmatpush.msra.mxu0 %v6845
  %7224 = vmatpush.msra.mxu0 %v6838
  %7225 = vmatpush.msra.mxu0 %v6831
  %7226 = vmatpush.msra.mxu0 %v6824
  %7227 = vmatpush.msra.mxu0 %v6817
  %7228 = vmatpush.msra.mxu0 %v6810
  %7229 = vmatpush.msra.mxu0 %v6803
  %7230 = vmatpush.msra.mxu0 %v6796
  %7231 = vmatpush.msra.mxu0 %v6789
  %7232 = vmatpush.msra.mxu0 %v6782
  %7233 = vmatmul.f32.gmra.mxu0 %v6665
  %v7234 = vpop.f32.mrf.mxu0
  %v7235 = vadd.f32 %v7215, %v7234
  %7236 = vdwg.mxu0
  %7237 = vmatpush.msra.mxu0 %v6999
  %7238 = vmatpush.msra.mxu0 %v6992
  %7239 = vmatpush.msra.mxu0 %v6985
  %7240 = vmatpush.msra.mxu0 %v6978
  %7241 = vmatpush.msra.mxu0 %v6971
  %7242 = vmatpush.msra.mxu0 %v6964
  %7243 = vmatpush.msra.mxu0 %v6957
  %7244 = vmatpush.msra.mxu0 %v6950
  %7245 = vmatpush.msra.mxu0 %v6943
  %7246 = vmatpush.msra.mxu0 %v6936
  %7247 = vmatpush.msra.mxu0 %v6929
  %7248 = vmatpush.msra.mxu0 %v6922
  %7249 = vmatpush.msra.mxu0 %v6915
  %7250 = vmatpush.msra.mxu0 %v6908
  %7251 = vmatpush.msra.mxu0 %v6901
  %7252 = vmatpush.msra.mxu0 %v6894
  %7253 = vmatmul.f32.gmra.mxu0 %v6666
  %v7254 = vpop.f32.mrf.mxu0
  %v7255 = vadd.f32 %v7235, %v7254
  %7256 = vdwg.mxu0
  %7257 = vmatpush.msra.mxu0 0.0
  %7258 = vmatpush.msra.mxu0 0.0
  %7259 = vmatpush.msra.mxu0 0.0
  %7260 = vmatpush.msra.mxu0 0.0
  %7261 = vmatpush.msra.mxu0 0.0
  %7262 = vmatpush.msra.mxu0 0.0
  %7263 = vmatpush.msra.mxu0 0.0
  %7264 = vmatpush.msra.mxu0 0.0
  %7265 = vmatpush.msra.mxu0 0.0
  %7266 = vmatpush.msra.mxu0 0.0
  %7267 = vmatpush.msra.mxu0 0.0
  %7268 = vmatpush.msra.mxu0 0.0
  %7269 = vmatpush.msra.mxu0 0.0
  %7270 = vmatpush.msra.mxu0 0.0
  %7271 = vmatpush.msra.mxu0 %v7013
  %7272 = vmatpush.msra.mxu0 %v7006
  %7273 = vmatmul.f32.gmra.mxu0 %v7035
  %v7274 = vpop.f32.mrf.mxu0
  %v7275 = vadd.f32 %v7255, %v7274
  %7276 = vdwg.mxu0
  %7277 = vmatpush.msra.mxu0 %v6776
  %7278 = vmatpush.msra.mxu0 %v6769
  %7279 = vmatpush.msra.mxu0 %v6762
  %7280 = vmatpush.msra.mxu0 %v6755
  %7281 = vmatpush.msra.mxu0 %v6748
  %7282 = vmatpush.msra.mxu0 %v6741
  %7283 = vmatpush.msra.mxu0 %v6734
  %7284 = vmatpush.msra.mxu0 %v6727
  %7285 = vmatpush.msra.mxu0 %v6720
  %7286 = vmatpush.msra.mxu0 %v6713
  %7287 = vmatpush.msra.mxu0 %v6706
  %7288 = vmatpush.msra.mxu0 %v6699
  %7289 = vmatpush.msra.mxu0 %v6692
  %7290 = vmatpush.msra.mxu0 %v6685
  %7291 = vmatpush.msra.mxu0 %v6678
  %7292 = vmatpush.msra.mxu0 %v6671
  %7293 = vmatmul.f32.gmra.mxu0 %v6664
  %v7294 = vpop.f32.mrf.mxu0
  %v7295 = vadd.f32 %v7023, %v7294
  %7296 = vdwg.mxu0
  %7297 = vmatpush.msra.mxu0 %v6888
  %7298 = vmatpush.msra.mxu0 %v6881
  %7299 = vmatpush.msra.mxu0 %v6874
  %7300 = vmatpush.msra.mxu0 %v6867
  %7301 = vmatpush.msra.mxu0 %v6860
  %7302 = vmatpush.msra.mxu0 %v6853
  %7303 = vmatpush.msra.mxu0 %v6846
  %7304 = vmatpush.msra.mxu0 %v6839
  %7305 = vmatpush.msra.mxu0 %v6832
  %7306 = vmatpush.msra.mxu0 %v6825
  %7307 = vmatpush.msra.mxu0 %v6818
  %7308 = vmatpush.msra.mxu0 %v6811
  %7309 = vmatpush.msra.mxu0 %v6804
  %7310 = vmatpush.msra.mxu0 %v6797
  %7311 = vmatpush.msra.mxu0 %v6790
  %7312 = vmatpush.msra.mxu0 %v6783
  %7313 = vmatmul.f32.gmra.mxu0 %v6665
  %v7314 = vpop.f32.mrf.mxu0
  %v7315 = vadd.f32 %v7295, %v7314
  %7316 = vdwg.mxu0
  %7317 = vmatpush.msra.mxu0 %v7000
  %7318 = vmatpush.msra.mxu0 %v6993
  %7319 = vmatpush.msra.mxu0 %v6986
  %7320 = vmatpush.msra.mxu0 %v6979
  %7321 = vmatpush.msra.mxu0 %v6972
  %7322 = vmatpush.msra.mxu0 %v6965
  %7323 = vmatpush.msra.mxu0 %v6958
  %7324 = vmatpush.msra.mxu0 %v6951
  %7325 = vmatpush.msra.mxu0 %v6944
  %7326 = vmatpush.msra.mxu0 %v6937
  %7327 = vmatpush.msra.mxu0 %v6930
  %7328 = vmatpush.msra.mxu0 %v6923
  %7329 = vmatpush.msra.mxu0 %v6916
  %7330 = vmatpush.msra.mxu0 %v6909
  %7331 = vmatpush.msra.mxu0 %v6902
  %7332 = vmatpush.msra.mxu0 %v6895
  %7333 = vmatmul.f32.gmra.mxu0 %v6666
  %v7334 = vpop.f32.mrf.mxu0
  %v7335 = vadd.f32 %v7315, %v7334
  %7336 = vdwg.mxu0
  %7337 = vmatpush.msra.mxu0 0.0
  %7338 = vmatpush.msra.mxu0 0.0
  %7339 = vmatpush.msra.mxu0 0.0
  %7340 = vmatpush.msra.mxu0 0.0
  %7341 = vmatpush.msra.mxu0 0.0
  %7342 = vmatpush.msra.mxu0 0.0
  %7343 = vmatpush.msra.mxu0 0.0
  %7344 = vmatpush.msra.mxu0 0.0
  %7345 = vmatpush.msra.mxu0 0.0
  %7346 = vmatpush.msra.mxu0 0.0
  %7347 = vmatpush.msra.mxu0 0.0
  %7348 = vmatpush.msra.mxu0 0.0
  %7349 = vmatpush.msra.mxu0 0.0
  %7350 = vmatpush.msra.mxu0 0.0
  %7351 = vmatpush.msra.mxu0 %v7014
  %7352 = vmatpush.msra.mxu0 %v7007
  %7353 = vmatmul.f32.gmra.mxu0 %v7035
  %v7354 = vpop.f32.mrf.mxu0
  %v7355 = vadd.f32 %v7335, %v7354
  %7356 = vdwg.mxu0
  %7357 = vmatpush.msra.mxu0 %v6777
  %7358 = vmatpush.msra.mxu0 %v6770
  %7359 = vmatpush.msra.mxu0 %v6763
  %7360 = vmatpush.msra.mxu0 %v6756
  %7361 = vmatpush.msra.mxu0 %v6749
  %7362 = vmatpush.msra.mxu0 %v6742
  %7363 = vmatpush.msra.mxu0 %v6735
  %7364 = vmatpush.msra.mxu0 %v6728
  %7365 = vmatpush.msra.mxu0 %v6721
  %7366 = vmatpush.msra.mxu0 %v6714
  %7367 = vmatpush.msra.mxu0 %v6707
  %7368 = vmatpush.msra.mxu0 %v6700
  %7369 = vmatpush.msra.mxu0 %v6693
  %7370 = vmatpush.msra.mxu0 %v6686
  %7371 = vmatpush.msra.mxu0 %v6679
  %7372 = vmatpush.msra.mxu0 %v6672
  %7373 = vmatmul.f32.gmra.mxu0 %v6664
  %v7374 = vpop.f32.mrf.mxu0
  %v7375 = vadd.f32 %v7024, %v7374
  %7376 = vdwg.mxu0
  %7377 = vmatpush.msra.mxu0 %v6889
  %7378 = vmatpush.msra.mxu0 %v6882
  %7379 = vmatpush.msra.mxu0 %v6875
  %7380 = vmatpush.msra.mxu0 %v6868
  %7381 = vmatpush.msra.mxu0 %v6861
  %7382 = vmatpush.msra.mxu0 %v6854
  %7383 = vmatpush.msra.mxu0 %v6847
  %7384 = vmatpush.msra.mxu0 %v6840
  %7385 = vmatpush.msra.mxu0 %v6833
  %7386 = vmatpush.msra.mxu0 %v6826
  %7387 = vmatpush.msra.mxu0 %v6819
  %7388 = vmatpush.msra.mxu0 %v6812
  %7389 = vmatpush.msra.mxu0 %v6805
  %7390 = vmatpush.msra.mxu0 %v6798
  %7391 = vmatpush.msra.mxu0 %v6791
  %7392 = vmatpush.msra.mxu0 %v6784
  %7393 = vmatmul.f32.gmra.mxu0 %v6665
  %v7394 = vpop.f32.mrf.mxu0
  %v7395 = vadd.f32 %v7375, %v7394
  %7396 = vdwg.mxu0
  %7397 = vmatpush.msra.mxu0 %v7001
  %7398 = vmatpush.msra.mxu0 %v6994
  %7399 = vmatpush.msra.mxu0 %v6987
  %7400 = vmatpush.msra.mxu0 %v6980
  %7401 = vmatpush.msra.mxu0 %v6973
  %7402 = vmatpush.msra.mxu0 %v6966
  %7403 = vmatpush.msra.mxu0 %v6959
  %7404 = vmatpush.msra.mxu0 %v6952
  %7405 = vmatpush.msra.mxu0 %v6945
  %7406 = vmatpush.msra.mxu0 %v6938
  %7407 = vmatpush.msra.mxu0 %v6931
  %7408 = vmatpush.msra.mxu0 %v6924
  %7409 = vmatpush.msra.mxu0 %v6917
  %7410 = vmatpush.msra.mxu0 %v6910
  %7411 = vmatpush.msra.mxu0 %v6903
  %7412 = vmatpush.msra.mxu0 %v6896
  %7413 = vmatmul.f32.gmra.mxu0 %v6666
  %v7414 = vpop.f32.mrf.mxu0
  %v7415 = vadd.f32 %v7395, %v7414
  %7416 = vdwg.mxu0
  %7417 = vmatpush.msra.mxu0 0.0
  %7418 = vmatpush.msra.mxu0 0.0
  %7419 = vmatpush.msra.mxu0 0.0
  %7420 = vmatpush.msra.mxu0 0.0
  %7421 = vmatpush.msra.mxu0 0.0
  %7422 = vmatpush.msra.mxu0 0.0
  %7423 = vmatpush.msra.mxu0 0.0
  %7424 = vmatpush.msra.mxu0 0.0
  %7425 = vmatpush.msra.mxu0 0.0
  %7426 = vmatpush.msra.mxu0 0.0
  %7427 = vmatpush.msra.mxu0 0.0
  %7428 = vmatpush.msra.mxu0 0.0
  %7429 = vmatpush.msra.mxu0 0.0
  %7430 = vmatpush.msra.mxu0 0.0
  %7431 = vmatpush.msra.mxu0 %v7015
  %7432 = vmatpush.msra.mxu0 %v7008
  %7433 = vmatmul.f32.gmra.mxu0 %v7035
  %v7434 = vpop.f32.mrf.mxu0
  %v7435 = vadd.f32 %v7415, %v7434
  %7436 = vdwg.mxu0
  %7437 = vmatpush.msra.mxu0 %v6778
  %7438 = vmatpush.msra.mxu0 %v6771
  %7439 = vmatpush.msra.mxu0 %v6764
  %7440 = vmatpush.msra.mxu0 %v6757
  %7441 = vmatpush.msra.mxu0 %v6750
  %7442 = vmatpush.msra.mxu0 %v6743
  %7443 = vmatpush.msra.mxu0 %v6736
  %7444 = vmatpush.msra.mxu0 %v6729
  %7445 = vmatpush.msra.mxu0 %v6722
  %7446 = vmatpush.msra.mxu0 %v6715
  %7447 = vmatpush.msra.mxu0 %v6708
  %7448 = vmatpush.msra.mxu0 %v6701
  %7449 = vmatpush.msra.mxu0 %v6694
  %7450 = vmatpush.msra.mxu0 %v6687
  %7451 = vmatpush.msra.mxu0 %v6680
  %7452 = vmatpush.msra.mxu0 %v6673
  %7453 = vmatmul.f32.gmra.mxu0 %v6664
  %v7454 = vpop.f32.mrf.mxu0
  %v7455 = vadd.f32 %v7025, %v7454
  %7456 = vdwg.mxu0
  %7457 = vmatpush.msra.mxu0 %v6890
  %7458 = vmatpush.msra.mxu0 %v6883
  %7459 = vmatpush.msra.mxu0 %v6876
  %7460 = vmatpush.msra.mxu0 %v6869
  %7461 = vmatpush.msra.mxu0 %v6862
  %7462 = vmatpush.msra.mxu0 %v6855
  %7463 = vmatpush.msra.mxu0 %v6848
  %7464 = vmatpush.msra.mxu0 %v6841
  %7465 = vmatpush.msra.mxu0 %v6834
  %7466 = vmatpush.msra.mxu0 %v6827
  %7467 = vmatpush.msra.mxu0 %v6820
  %7468 = vmatpush.msra.mxu0 %v6813
  %7469 = vmatpush.msra.mxu0 %v6806
  %7470 = vmatpush.msra.mxu0 %v6799
  %7471 = vmatpush.msra.mxu0 %v6792
  %7472 = vmatpush.msra.mxu0 %v6785
  %7473 = vmatmul.f32.gmra.mxu0 %v6665
  %v7474 = vpop.f32.mrf.mxu0
  %v7475 = vadd.f32 %v7455, %v7474
  %7476 = vdwg.mxu0
  %7477 = vmatpush.msra.mxu0 %v7002
  %7478 = vmatpush.msra.mxu0 %v6995
  %7479 = vmatpush.msra.mxu0 %v6988
  %7480 = vmatpush.msra.mxu0 %v6981
  %7481 = vmatpush.msra.mxu0 %v6974
  %7482 = vmatpush.msra.mxu0 %v6967
  %7483 = vmatpush.msra.mxu0 %v6960
  %7484 = vmatpush.msra.mxu0 %v6953
  %7485 = vmatpush.msra.mxu0 %v6946
  %7486 = vmatpush.msra.mxu0 %v6939
  %7487 = vmatpush.msra.mxu0 %v6932
  %7488 = vmatpush.msra.mxu0 %v6925
  %7489 = vmatpush.msra.mxu0 %v6918
  %7490 = vmatpush.msra.mxu0 %v6911
  %7491 = vmatpush.msra.mxu0 %v6904
  %7492 = vmatpush.msra.mxu0 %v6897
  %7493 = vmatmul.f32.gmra.mxu0 %v6666
  %v7494 = vpop.f32.mrf.mxu0
  %v7495 = vadd.f32 %v7475, %v7494
  %7496 = vdwg.mxu0
  %7497 = vmatpush.msra.mxu0 0.0
  %7498 = vmatpush.msra.mxu0 0.0
  %7499 = vmatpush.msra.mxu0 0.0
  %7500 = vmatpush.msra.mxu0 0.0
  %7501 = vmatpush.msra.mxu0 0.0
  %7502 = vmatpush.msra.mxu0 0.0
  %7503 = vmatpush.msra.mxu0 0.0
  %7504 = vmatpush.msra.mxu0 0.0
  %7505 = vmatpush.msra.mxu0 0.0
  %7506 = vmatpush.msra.mxu0 0.0
  %7507 = vmatpush.msra.mxu0 0.0
  %7508 = vmatpush.msra.mxu0 0.0
  %7509 = vmatpush.msra.mxu0 0.0
  %7510 = vmatpush.msra.mxu0 0.0
  %7511 = vmatpush.msra.mxu0 %v7016
  %7512 = vmatpush.msra.mxu0 %v7009
  %7513 = vmatmul.f32.gmra.mxu0 %v7035
  %v7514 = vpop.f32.mrf.mxu0
  %v7515 = vadd.f32 %v7495, %v7514
  %7516 = vdwg.mxu0
  %7517 = vmatpush.msra.mxu0 %v6779
  %7518 = vmatpush.msra.mxu0 %v6772
  %7519 = vmatpush.msra.mxu0 %v6765
  %7520 = vmatpush.msra.mxu0 %v6758
  %7521 = vmatpush.msra.mxu0 %v6751
  %7522 = vmatpush.msra.mxu0 %v6744
  %7523 = vmatpush.msra.mxu0 %v6737
  %7524 = vmatpush.msra.mxu0 %v6730
  %7525 = vmatpush.msra.mxu0 %v6723
  %7526 = vmatpush.msra.mxu0 %v6716
  %7527 = vmatpush.msra.mxu0 %v6709
  %7528 = vmatpush.msra.mxu0 %v6702
  %7529 = vmatpush.msra.mxu0 %v6695
  %7530 = vmatpush.msra.mxu0 %v6688
  %7531 = vmatpush.msra.mxu0 %v6681
  %7532 = vmatpush.msra.mxu0 %v6674
  %7533 = vmatmul.f32.gmra.mxu0 %v6664
  %v7534 = vpop.f32.mrf.mxu0
  %v7535 = vadd.f32 %v7026, %v7534
  %7536 = vdwg.mxu0
  %7537 = vmatpush.msra.mxu0 %v6891
  %7538 = vmatpush.msra.mxu0 %v6884
  %7539 = vmatpush.msra.mxu0 %v6877
  %7540 = vmatpush.msra.mxu0 %v6870
  %7541 = vmatpush.msra.mxu0 %v6863
  %7542 = vmatpush.msra.mxu0 %v6856
  %7543 = vmatpush.msra.mxu0 %v6849
  %7544 = vmatpush.msra.mxu0 %v6842
  %7545 = vmatpush.msra.mxu0 %v6835
  %7546 = vmatpush.msra.mxu0 %v6828
  %7547 = vmatpush.msra.mxu0 %v6821
  %7548 = vmatpush.msra.mxu0 %v6814
  %7549 = vmatpush.msra.mxu0 %v6807
  %7550 = vmatpush.msra.mxu0 %v6800
  %7551 = vmatpush.msra.mxu0 %v6793
  %7552 = vmatpush.msra.mxu0 %v6786
  %7553 = vmatmul.f32.gmra.mxu0 %v6665
  %v7554 = vpop.f32.mrf.mxu0
  %v7555 = vadd.f32 %v7535, %v7554
  %7556 = vdwg.mxu0
  %7557 = vmatpush.msra.mxu0 %v7003
  %7558 = vmatpush.msra.mxu0 %v6996
  %7559 = vmatpush.msra.mxu0 %v6989
  %7560 = vmatpush.msra.mxu0 %v6982
  %7561 = vmatpush.msra.mxu0 %v6975
  %7562 = vmatpush.msra.mxu0 %v6968
  %7563 = vmatpush.msra.mxu0 %v6961
  %7564 = vmatpush.msra.mxu0 %v6954
  %7565 = vmatpush.msra.mxu0 %v6947
  %7566 = vmatpush.msra.mxu0 %v6940
  %7567 = vmatpush.msra.mxu0 %v6933
  %7568 = vmatpush.msra.mxu0 %v6926
  %7569 = vmatpush.msra.mxu0 %v6919
  %7570 = vmatpush.msra.mxu0 %v6912
  %7571 = vmatpush.msra.mxu0 %v6905
  %7572 = vmatpush.msra.mxu0 %v6898
  %7573 = vmatmul.f32.gmra.mxu0 %v6666
  %v7574 = vpop.f32.mrf.mxu0
  %v7575 = vadd.f32 %v7555, %v7574
  %7576 = vdwg.mxu0
  %7577 = vmatpush.msra.mxu0 0.0
  %7578 = vmatpush.msra.mxu0 0.0
  %7579 = vmatpush.msra.mxu0 0.0
  %7580 = vmatpush.msra.mxu0 0.0
  %7581 = vmatpush.msra.mxu0 0.0
  %7582 = vmatpush.msra.mxu0 0.0
  %7583 = vmatpush.msra.mxu0 0.0
  %7584 = vmatpush.msra.mxu0 0.0
  %7585 = vmatpush.msra.mxu0 0.0
  %7586 = vmatpush.msra.mxu0 0.0
  %7587 = vmatpush.msra.mxu0 0.0
  %7588 = vmatpush.msra.mxu0 0.0
  %7589 = vmatpush.msra.mxu0 0.0
  %7590 = vmatpush.msra.mxu0 0.0
  %7591 = vmatpush.msra.mxu0 %v7017
  %7592 = vmatpush.msra.mxu0 %v7010
  %7593 = vmatmul.f32.gmra.mxu0 %v7035
  %v7594 = vpop.f32.mrf.mxu0
  %v7595 = vadd.f32 %v7575, %v7594
  %7596 = vdwg.mxu0
  %v7597 = vsub.f32 0.0, %v7115
  %v7598 = vsub.f32 0.0, %v7195
  %v7599 = vsub.f32 0.0, %v7275
  %v7600 = vsub.f32 0.0, %v7355
  %v7601 = vsub.f32 0.0, %v7435
  %v7602 = vsub.f32 0.0, %v7515
  %v7603 = vsub.f32 0.0, %v7595
  %v7604 = vmul.f32 %v7597, 1.442695
  %v7605 = vpow.pop %v7604
  %v7606 = vmul.f32 %v7598, 1.442695
  %v7607 = vpow.pop %v7606
  %v7608 = vmul.f32 %v7599, 1.442695
  %v7609 = vpow.pop %v7608
  %v7610 = vmul.f32 %v7600, 1.442695
  %v7611 = vpow.pop %v7610
  %v7612 = vmul.f32 %v7601, 1.442695
  %v7613 = vpow.pop %v7612
  %v7614 = vmul.f32 %v7602, 1.442695
  %v7615 = vpow.pop %v7614
  %v7616 = vmul.f32 %v7603, 1.442695
  %v7617 = vpow.pop %v7616
  %v7618 = vadd.f32 %v7605, 1.0
  %v7619 = vadd.f32 %v7607, 1.0
  %v7620 = vadd.f32 %v7609, 1.0
  %v7621 = vadd.f32 %v7611, 1.0
  %v7622 = vadd.f32 %v7613, 1.0
  %v7623 = vadd.f32 %v7615, 1.0
  %v7624 = vadd.f32 %v7617, 1.0
  %v7625 = vrcp.pop %v7618
  %v7626 = vrcp.pop %v7619
  %v7627 = vrcp.pop %v7620
  %v7628 = vrcp.pop %v7621
  %v7629 = vrcp.pop %v7622
  %v7630 = vrcp.pop %v7623
  %v7631 = vrcp.pop %v7624
  %7632 = vst [vmem:[%s18] sm:$0xff] %v7625
  %7633 = vst [vmem:[%s18 + $0x8] sm:$0xff] %v7626
  %7634 = vst [vmem:[%s18 + $0x10] sm:$0xff] %v7627
  %7635 = vst [vmem:[%s18 + $0x18] sm:$0xff] %v7628
  %7636 = vst [vmem:[%s18 + $0x20] sm:$0xff] %v7629
  %7637 = vst [vmem:[%s18 + $0x28] sm:$0xff] %v7630
  %7638 = vst [vmem:[%s18 + $0x30] sm:$0xff] %v7631
  %7639 = vst [vmem:[%s19] sm:$0xff] %v153
  %7640 = vst [vmem:[%s20] sm:$0xff] %v1285
  // Predicated region
  $region74: #{vae_forward.1} parent=0 // pred_check
    _
  $region75: #{vae_forward.1} parent=0 // pred_check_branch
    %7642 = sbr.rel (0) target = $region77
  $region76: #{vae_forward.1} parent=0 // pred_region
    _
  $region77: #{vae_forward.1} parent=0 // pred_fallthru
    _
  // Predicated region
  $region78: #{vae_forward.1} parent=0 // pred_check
    _
  $region79: #{vae_forward.1} parent=0 // pred_check_branch
    %7644 = sbr.rel (0) target = $region81
  $region80: #{vae_forward.1} parent=0 // pred_region
    _
  $region81: #{vae_forward.1} parent=0 // pred_fallthru
    _
  // Predicated region
  $region82: #{vae_forward.1} parent=0 // pred_check
    _
  $region83: #{vae_forward.1} parent=0 // pred_check_branch
    %7646 = sbr.rel (0) target = $region85
  $region84: #{vae_forward.1} parent=0 // pred_region
    _
  $region85: #{vae_forward.1} parent=0 // pred_fallthru
    _
  // Predicated region
  $region86: #{vae_forward.1} parent=0 // pred_check
    _
  $region87: #{vae_forward.1} parent=0 // pred_check_branch
    %7648 = sbr.rel (0) target = $region89
  $region88: #{vae_forward.1} parent=0 // pred_region
    _
  $region89: #{vae_forward.1} parent=0 // pred_fallthru
    _
  // Predicated region
  $region90: #{vae_forward.1} parent=0 // pred_check
    _
  $region91: #{vae_forward.1} parent=0 // pred_check_branch
    %7650 = sbr.rel (0) target = $region93
  $region92: #{vae_forward.1} parent=0 // pred_region
    _
  $region93: #{vae_forward.1} parent=0 // pred_fallthru
    _
  // Predicated region
  $region94: #{vae_forward.1} parent=0 // pred_check
    _
  $region95: #{vae_forward.1} parent=0 // pred_check_branch
    %7652 = sbr.rel (0) target = $region97
  $region96: #{vae_forward.1} parent=0 // pred_region
    _
  $region97: #{vae_forward.1} parent=0 // pred_fallthru
    _

</llo_original>
